<compile_context>
chip_gen: v7x
topology: tpu7x:2x2x1
jax: 0.10.0
libtpu: 0.0.40
codegen_flags: <defaults>
</compile_context>

<pallas_src>
import math

import jax
import jax.numpy as jnp
from jax import lax
from jax.experimental import pallas as pl
from jax.experimental.pallas import tpu as pltpu

EPS = 1e-6  # RMSNorm epsilon


# ------------------------------------------------------------------ kernel helpers
def _rms_norm(x2d, w_row):
    # x2d: (M, D) f32, w_row: (1, D) f32 — statistics kept in f32
    ms = jnp.mean(x2d * x2d, axis=-1, keepdims=True)
    return x2d * lax.rsqrt(ms + EPS) * w_row


# ------------------------------------------------------------------ stacked decoder kernel
def decoder_stack_kernel(x_ref, cos_ref, sin_ref, n1_ref, n2_ref, nf_ref,
                         wqkv_ref, wo_ref, wgu_ref, wd_ref,
                         out_ref, res_ref):
    l = pl.program_id(0)
    n_layers = pl.num_programs(0)

    M, D = x_ref.shape                 # M = B*T
    B, T, hd = cos_ref.shape
    H = D // hd
    F = wd_ref.shape[1]

    # Layer 0: load the embedding activations into the resident residual scratch.
    @pl.when(l == 0)
    def _():
        res_ref[...] = x_ref[...]

    x = res_ref[...]                   # (M, D) f32 residual stream
    cos = cos_ref[...]                 # (B, T, hd) f32
    sin_s = sin_ref[...]               # (B, T, hd) f32, rotate-half sign pre-folded

    # ---------------- attention branch ----------------
    xn = _rms_norm(x, n1_ref[0]).astype(jnp.bfloat16)                        # (M, D)
    # Fused q/k/v projection: one (M, D) @ (D, 3D) matmul; 1/sqrt(hd) folded into wq.
    qkv = jnp.dot(xn, wqkv_ref[0], preferred_element_type=jnp.float32)       # (M, 3D) f32

    # Per-head slices at 128-aligned lane offsets; RoPE applied in (B, T, hd) layout.
    qs, ks, vs = [], [], []
    for h in range(H):
        q_h = qkv[:, h * hd:(h + 1) * hd].reshape(B, T, hd)
        k_h = qkv[:, D + h * hd:D + (h + 1) * hd].reshape(B, T, hd)
        v_h = qkv[:, 2 * D + h * hd:2 * D + (h + 1) * hd].reshape(B, T, hd)
        # rotate_half(x) == roll(x, hd/2, lanes) * sign ; sign folded into sin table.
        q_h = q_h * cos + pltpu.roll(q_h, shift=hd // 2, axis=2) * sin_s
        k_h = k_h * cos + pltpu.roll(k_h, shift=hd // 2, axis=2) * sin_s
        qs.append(q_h.astype(jnp.bfloat16))
        ks.append(k_h.astype(jnp.bfloat16))
        vs.append(v_h.astype(jnp.bfloat16))

    # Batched attention core over (head, batch): shapes (H*B, T, hd) / (H*B, T, T).
    q = jnp.stack(qs, axis=0).reshape(H * B, T, hd)
    k = jnp.stack(ks, axis=0).reshape(H * B, T, hd)
    v = jnp.stack(vs, axis=0).reshape(H * B, T, hd)

    scores = jnp.einsum('nqd,nkd->nqk', q, k,
                        preferred_element_type=jnp.float32)                  # (H*B, T, T)

    row = lax.broadcasted_iota(jnp.int32, (T, T), 0)
    col = lax.broadcasted_iota(jnp.int32, (T, T), 1)
    scores = jnp.where((col > row)[None], -10000.0, scores)                  # triu(diag=1)

    m = jnp.max(scores, axis=-1, keepdims=True)
    p = jnp.exp(scores - m)
    p = p * pl.reciprocal(jnp.sum(p, axis=-1, keepdims=True), approx=True)

    o = jnp.einsum('nqk,nkd->nqd', p.astype(jnp.bfloat16), v,
                   preferred_element_type=jnp.float32)                       # (H*B, T, hd)

    # Re-merge heads with an aligned lane concat (torch '(n d)' order), then one matmul.
    o_parts = [o[h * B:(h + 1) * B].reshape(M, hd) for h in range(H)]
    o_cat = jnp.concatenate(o_parts, axis=-1).astype(jnp.bfloat16)           # (M, D)
    attn_out = jnp.dot(o_cat, wo_ref[0], preferred_element_type=jnp.float32)

    h1 = x + attn_out                                                        # f32 residual

    # ---------------- FFN branch (SwiGLU) ----------------
    h1n = _rms_norm(h1, n2_ref[0]).astype(jnp.bfloat16)
    gu = jnp.dot(h1n, wgu_ref[0], preferred_element_type=jnp.float32)        # (M, 2F) f32
    g = gu[:, :F]
    u = gu[:, F:]
    act = g * u * pl.reciprocal(1.0 + jnp.exp(-g), approx=True)              # silu(g) * u
    ffn_out = jnp.dot(act.astype(jnp.bfloat16), wd_ref[0],
                      preferred_element_type=jnp.float32)

    new_res = h1 + ffn_out
    res_ref[...] = new_res

    # Last layer: fuse the final RMSNorm so the lm_head is a pure matmul (norm is not
    # recomputed per vocab tile) and emit bf16 activations (halves HBM traffic).
    @pl.when(l == n_layers - 1)
    def _():
        out_ref[...] = _rms_norm(new_res, nf_ref[...]).astype(out_ref.dtype)


# ------------------------------------------------------------------ lm head kernel (pure matmul)
def lm_head_kernel(xn_ref, wh_ref, out_ref):
    out_ref[...] = jnp.dot(xn_ref[...], wh_ref[...],
                           preferred_element_type=jnp.float32)


# ------------------------------------------------------------------ pallas_call wrappers
def decoder_stack(x2, cos, sin_s, stack, final_norm):
    M, D = x2.shape
    B, T, hd = cos.shape
    L = stack["wqkv"].shape[0]
    F = stack["w_down"].shape[1]

    in_specs = [
        pl.BlockSpec((M, D), lambda l: (0, 0)),             # x (embeddings, f32)
        pl.BlockSpec((B, T, hd), lambda l: (0, 0, 0)),      # cos
        pl.BlockSpec((B, T, hd), lambda l: (0, 0, 0)),      # sin (sign folded)
        pl.BlockSpec((1, 1, D), lambda l: (l, 0, 0)),       # norm1 (L, 1, D)
        pl.BlockSpec((1, 1, D), lambda l: (l, 0, 0)),       # norm2 (L, 1, D)
        pl.BlockSpec((1, D), lambda l: (0, 0)),             # final norm (1, D)
        pl.BlockSpec((1, D, 3 * D), lambda l: (l, 0, 0)),   # wqkv (L, D, 3D)
        pl.BlockSpec((1, D, D), lambda l: (l, 0, 0)),       # wo   (L, D, D)
        pl.BlockSpec((1, D, 2 * F), lambda l: (l, 0, 0)),   # w_gate|w_up (L, D, 2F)
        pl.BlockSpec((1, F, D), lambda l: (l, 0, 0)),       # w_down (L, F, D)
    ]
    return pl.pallas_call(
        decoder_stack_kernel,
        out_shape=jax.ShapeDtypeStruct((M, D), jnp.bfloat16),
        grid=(L,),
        in_specs=in_specs,
        out_specs=pl.BlockSpec((M, D), lambda l: (0, 0)),
        scratch_shapes=[pltpu.VMEM((M, D), jnp.float32)],   # residual, resident across layers
        compiler_params=pltpu.CompilerParams(
            dimension_semantics=("arbitrary",),             # layers are sequential
            vmem_limit_bytes=32 * 1024 * 1024),
    )(x2, cos, sin_s, stack["norm1"], stack["norm2"], final_norm,
      stack["wqkv"], stack["wo"], stack["wgu"], stack["w_down"])


def lm_head(xn, w_head, *, tm=256, tn=512):
    # xn: (M, D) bf16, already RMS-normalized by the decoder-stack epilogue.
    M, D = xn.shape
    V = w_head.shape[-1]
    tm = min(tm, M)
    tn = min(tn, V)
    grid = (pl.cdiv(M, tm), pl.cdiv(V, tn))
    # TODO(synk): at production vocab/D, add a K grid axis with an f32 VMEM accumulator.
    return pl.pallas_call(
        lm_head_kernel,
        out_shape=jax.ShapeDtypeStruct((M, V), jnp.float32),
        grid=grid,
        in_specs=[
            pl.BlockSpec((tm, D), lambda i, j: (i, 0)),
            pl.BlockSpec((D, tn), lambda i, j: (0, j)),
        ],
        out_specs=pl.BlockSpec((tm, tn), lambda i, j: (i, j)),
        compiler_params=pltpu.CompilerParams(
            dimension_semantics=("parallel", "parallel"),
            vmem_limit_bytes=32 * 1024 * 1024),
    )(xn, w_head)


# ------------------------------------------------------------------ rope tables (plain JAX, matches get_cos_sin)
def get_cos_sin(maxlen, head_dim, base=10000.0):
    assert head_dim % 2 == 0
    theta = 1.0 / base ** (jnp.arange(0, head_dim, 2, dtype=jnp.float32) / head_dim)
    pos = jnp.arange(maxlen, dtype=jnp.float32)[:, None]
    ang = pos * theta[None, :]
    cos = jnp.tile(jnp.cos(ang), (1, 2))   # (maxlen, head_dim)
    sin = jnp.tile(jnp.sin(ang), (1, 2))
    return cos, sin


# ------------------------------------------------------------------ parameter init (deterministic, synthetic)
def init_params(key, attn_dim, ffn_dim, num_heads, num_layers, vocab_size, maxlen):
    head_dim = attn_dim // num_heads
    scale = 0.02
    keys = jax.random.split(key, 2 + 7 * num_layers)
    ki = iter(keys)

    embedding = scale * jax.random.normal(next(ki), (vocab_size, attn_dim), jnp.float32)
    lm_head_w = (scale * jax.random.normal(next(ki), (attn_dim, vocab_size),
                                           jnp.float32)).astype(jnp.bfloat16)

    wqkv_l, wo_l, wgu_l, wd_l = [], [], [], []
    for _ in range(num_layers):
        wq = scale * jax.random.normal(next(ki), (attn_dim, attn_dim), jnp.float32)
        wk = scale * jax.random.normal(next(ki), (attn_dim, attn_dim), jnp.float32)
        wv = scale * jax.random.normal(next(ki), (attn_dim, attn_dim), jnp.float32)
        wo = scale * jax.random.normal(next(ki), (attn_dim, attn_dim), jnp.float32)
        wg = scale * jax.random.normal(next(ki), (attn_dim, ffn_dim), jnp.float32)
        wu = scale * jax.random.normal(next(ki), (attn_dim, ffn_dim), jnp.float32)
        wd = scale * jax.random.normal(next(ki), (ffn_dim, attn_dim), jnp.float32)
        # Fused qkv slab; 1/sqrt(head_dim) folded into wq (RoPE is linear, so it commutes).
        wqkv = jnp.concatenate([wq / math.sqrt(head_dim), wk, wv], axis=1)
        wgu = jnp.concatenate([wg, wu], axis=1)
        wqkv_l.append(wqkv.astype(jnp.bfloat16))
        wo_l.append(wo.astype(jnp.bfloat16))
        wgu_l.append(wgu.astype(jnp.bfloat16))
        wd_l.append(wd.astype(jnp.bfloat16))

    stack = {
        "wqkv": jnp.stack(wqkv_l),                                   # (L, D, 3D) bf16
        "wo": jnp.stack(wo_l),                                       # (L, D, D)  bf16
        "wgu": jnp.stack(wgu_l),                                     # (L, D, 2F) bf16
        "w_down": jnp.stack(wd_l),                                   # (L, F, D)  bf16
        "norm1": jnp.ones((num_layers, 1, attn_dim), jnp.float32),   # RMSNorm weights
        "norm2": jnp.ones((num_layers, 1, attn_dim), jnp.float32),
    }

    cos, sin = get_cos_sin(maxlen, head_dim, 10000.0)
    # Fold the rotate-half sign (-1 on first half, +1 on second half) into the sin table.
    sign = jnp.concatenate([-jnp.ones((head_dim // 2,), jnp.float32),
                            jnp.ones((head_dim // 2,), jnp.float32)])
    return {
        "embedding": embedding,
        "lm_head_w": lm_head_w,
        "final_norm": jnp.ones((1, attn_dim), jnp.float32),
        "stack": stack,
        "cos_table": cos,                    # (maxlen, head_dim)
        "sin_signed_table": sin * sign[None],
    }


# ------------------------------------------------------------------ full forward
def transformer_forward(params, input_ids, position_ids):
    # Embedding / rope-table gathers are plain-JAX glue; all matmul hot paths are Pallas.
    B, T = input_ids.shape
    D = params["embedding"].shape[-1]
    x = jnp.take(params["embedding"], input_ids, axis=0)             # (B, T, D) f32
    cos = jnp.take(params["cos_table"], position_ids, axis=0)        # (B, T, hd) f32
    sin_s = jnp.take(params["sin_signed_table"], position_ids, axis=0)

    xn = decoder_stack(x.reshape(B * T, D), cos, sin_s,
                       params["stack"], params["final_norm"])         # (B*T, D) bf16, normed
    logits = lm_head(xn, params["lm_head_w"])                         # (B*T, V) f32
    V = logits.shape[-1]
    return logits.reshape(B, T, V)


# ------------------------------------------------------------------ main
if __name__ == "__main__":
    # Small but TPU lane-aligned shapes (T, head_dim multiples of 128; B*T = 256).
    B, T = 2, 128
    attn_dim, ffn_dim, num_heads, num_layers = 256, 512, 2, 2
    vocab_size, maxlen = 512, 256

    key = jax.random.PRNGKey(0)
    pkey, ikey = jax.random.split(key)

    params = init_params(pkey, attn_dim, ffn_dim, num_heads, num_layers, vocab_size, maxlen)

    input_ids = jax.random.randint(ikey, (B, T), 0, vocab_size, dtype=jnp.int32)
    position_ids = jnp.broadcast_to(jnp.arange(T, dtype=jnp.int32)[None, :], (B, T))

    fwd = jax.jit(transformer_forward)
    logits = jax.block_until_ready(fwd(params, input_ids, position_ids))

    assert logits.shape == (B, T, vocab_size), logits.shape
    assert bool(jnp.all(jnp.isfinite(logits)))
    print("KERNEL_OK")
</pallas_src>

<mosaic_0001>
module attributes {stable_mosaic.version = 11 : i64} {
  func.func @decoder_stack_kernel(%arg0: i32, %arg1: memref<256x256xf32, #tpu.memory_space<vmem>>, %arg2: memref<2x128x128xf32, #tpu.memory_space<vmem>>, %arg3: memref<2x128x128xf32, #tpu.memory_space<vmem>>, %arg4: memref<1x1x256xf32, #tpu.memory_space<vmem>>, %arg5: memref<1x1x256xf32, #tpu.memory_space<vmem>>, %arg6: memref<1x256xf32, #tpu.memory_space<vmem>>, %arg7: memref<1x256x768xbf16, #tpu.memory_space<vmem>>, %arg8: memref<1x256x256xbf16, #tpu.memory_space<vmem>>, %arg9: memref<1x256x1024xbf16, #tpu.memory_space<vmem>>, %arg10: memref<1x512x256xbf16, #tpu.memory_space<vmem>>, %arg11: memref<256x256xbf16, #tpu.memory_space<vmem>>, %arg12: memref<256x256xf32, #tpu.memory_space<vmem>>) attributes {dimension_semantics = [#tpu.dimension_semantics<arbitrary>], iteration_bounds = array<i64: 2>, scalar_prefetch = 0 : i64, scratch_operands = 1 : i64, tpu.core_type = #tpu.core_type<tc>, window_params = [{pipeline_mode = #tpu.pipeline_mode<synchronous>, transform_indices = @transform_0, window_bounds = array<i64: 256, 256>}, {pipeline_mode = #tpu.pipeline_mode<synchronous>, transform_indices = @transform_1, window_bounds = array<i64: 2, 128, 128>}, {pipeline_mode = #tpu.pipeline_mode<synchronous>, transform_indices = @transform_2, window_bounds = array<i64: 2, 128, 128>}, {transform_indices = @transform_3, window_bounds = array<i64: 1, 1, 256>}, {transform_indices = @transform_4, window_bounds = array<i64: 1, 1, 256>}, {pipeline_mode = #tpu.pipeline_mode<synchronous>, transform_indices = @transform_5, window_bounds = array<i64: 1, 256>}, {transform_indices = @transform_6, window_bounds = array<i64: 1, 256, 768>}, {transform_indices = @transform_7, window_bounds = array<i64: 1, 256, 256>}, {transform_indices = @transform_8, window_bounds = array<i64: 1, 256, 1024>}, {transform_indices = @transform_9, window_bounds = array<i64: 1, 512, 256>}, {pipeline_mode = #tpu.pipeline_mode<synchronous>, transform_indices = @transform_10, window_bounds = array<i64: 256, 256>}]} {
    %c0_i32 = arith.constant 0 : i32
    %0 = arith.cmpi eq, %arg0, %c0_i32 : i32
    %1 = arith.extui %0 : i1 to i32
    %c0_i32_0 = arith.constant 0 : i32
    %2 = arith.cmpi ne, %1, %c0_i32_0 : i32
    scf.if %2 {
      %c0_48 = arith.constant 0 : index
      %c0_49 = arith.constant 0 : index
      %138 = vector.load %arg1[%c0_48, %c0_49] : memref<256x256xf32, #tpu.memory_space<vmem>>, vector<256x256xf32>
      %c0_50 = arith.constant 0 : index
      %c0_51 = arith.constant 0 : index
      %139 = vector.load %arg12[%c0_50, %c0_51] : memref<256x256xf32, #tpu.memory_space<vmem>>, vector<256x256xf32>
      tpu.vector_store %arg12[%c0_50, %c0_51], %138 {strides = array<i32>} : memref<256x256xf32, #tpu.memory_space<vmem>>, vector<256x256xf32>,
    } else {
    }
    %c0 = arith.constant 0 : index
    %c0_1 = arith.constant 0 : index
    %3 = vector.load %arg12[%c0, %c0_1] : memref<256x256xf32, #tpu.memory_space<vmem>>, vector<256x256xf32>
    %c0_2 = arith.constant 0 : index
    %c0_3 = arith.constant 0 : index
    %c0_4 = arith.constant 0 : index
    %4 = vector.load %arg2[%c0_2, %c0_3, %c0_4] : memref<2x128x128xf32, #tpu.memory_space<vmem>>, vector<2x128x128xf32>
    %c0_5 = arith.constant 0 : index
    %c0_6 = arith.constant 0 : index
    %c0_7 = arith.constant 0 : index
    %5 = vector.load %arg3[%c0_5, %c0_6, %c0_7] : memref<2x128x128xf32, #tpu.memory_space<vmem>>, vector<2x128x128xf32>
    %c0_8 = arith.constant 0 : index
    %c0_9 = arith.constant 0 : index
    %c0_10 = arith.constant 0 : index
    %6 = vector.load %arg4[%c0_8, %c0_9, %c0_10] : memref<1x1x256xf32, #tpu.memory_space<vmem>>, vector<1x1x256xf32>
    %7 = vector.shape_cast %6 : vector<1x1x256xf32> to vector<1x256xf32>
    %8 = arith.mulf %3, %3 : vector<256x256xf32>
    %cst = arith.constant dense<0.000000e+00> : vector<256xf32>
    %9 = vector.multi_reduction <add>, %8, %cst [1] : vector<256x256xf32> to vector<256xf32>
    %10 = vector.shape_cast %9 : vector<256xf32> to vector<256x1xf32>
    %cst_11 = arith.constant 2.560000e+02 : f32
    %11 = vector.broadcast %cst_11 : f32 to vector<256x1xf32>
    %12 = arith.divf %10, %11 : vector<256x1xf32>
    %cst_12 = arith.constant 9.99999997E-7 : f32
    %13 = vector.broadcast %cst_12 : f32 to vector<256x1xf32>
    %14 = arith.addf %12, %13 : vector<256x1xf32>
    %15 = math.rsqrt %14 : vector<256x1xf32>
    %16 = vector.broadcast %15 : vector<256x1xf32> to vector<256x256xf32>
    %17 = arith.mulf %3, %16 : vector<256x256xf32>
    %18 = vector.broadcast %7 : vector<1x256xf32> to vector<256x256xf32>
    %19 = arith.mulf %17, %18 : vector<256x256xf32>
    %20 = arith.truncf %19 : vector<256x256xf32> to vector<256x256xbf16>
    %c0_13 = arith.constant 0 : index
    %c0_14 = arith.constant 0 : index
    %c0_15 = arith.constant 0 : index
    %21 = vector.load %arg7[%c0_13, %c0_14, %c0_15] : memref<1x256x768xbf16, #tpu.memory_space<vmem>>, vector<1x256x768xbf16>
    %22 = vector.shape_cast %21 : vector<1x256x768xbf16> to vector<256x768xbf16>
    %cst_16 = arith.constant dense<0.000000e+00> : vector<256x768xf32>
    %23 = tpu.matmul %20, %22, %cst_16 {dimension_numbers = #tpu.dot_dimension_numbers<[1], [0], [0], [1], [0, 0, 1, 1], [], []>} : vector<256x256xbf16>, vector<256x768xbf16>, vector<256x768xf32> -> vector<256x768xf32>
    %24 = vector.extract_strided_slice %23 {offsets = [0, 0], sizes = [256, 128], strides = [1, 1]} : vector<256x768xf32> to vector<256x128xf32>
    %25 = vector.shape_cast %24 : vector<256x128xf32> to vector<2x128x128xf32>
    %26 = vector.extract_strided_slice %23 {offsets = [0, 256], sizes = [256, 128], strides = [1, 1]} : vector<256x768xf32> to vector<256x128xf32>
    %27 = vector.shape_cast %26 : vector<256x128xf32> to vector<2x128x128xf32>
    %28 = vector.extract_strided_slice %23 {offsets = [0, 512], sizes = [256, 128], strides = [1, 1]} : vector<256x768xf32> to vector<256x128xf32>
    %29 = vector.shape_cast %28 : vector<256x128xf32> to vector<2x128x128xf32>
    %30 = arith.mulf %25, %4 : vector<2x128x128xf32>
    %c64_i32 = arith.constant 64 : i32
    %31 = tpu.dynamic_rotate %25 by %c64_i32 dim 2 : vector<2x128x128xf32>, i32 -> vector<2x128x128xf32>
    %32 = arith.mulf %31, %5 : vector<2x128x128xf32>
    %33 = arith.addf %30, %32 : vector<2x128x128xf32>
    %34 = arith.mulf %27, %4 : vector<2x128x128xf32>
    %c64_i32_17 = arith.constant 64 : i32
    %35 = tpu.dynamic_rotate %27 by %c64_i32_17 dim 2 : vector<2x128x128xf32>, i32 -> vector<2x128x128xf32>
    %36 = arith.mulf %35, %5 : vector<2x128x128xf32>
    %37 = arith.addf %34, %36 : vector<2x128x128xf32>
    %38 = arith.truncf %33 : vector<2x128x128xf32> to vector<2x128x128xbf16>
    %39 = arith.truncf %37 : vector<2x128x128xf32> to vector<2x128x128xbf16>
    %40 = arith.truncf %29 : vector<2x128x128xf32> to vector<2x128x128xbf16>
    %41 = vector.extract_strided_slice %23 {offsets = [0, 128], sizes = [256, 128], strides = [1, 1]} : vector<256x768xf32> to vector<256x128xf32>
    %42 = vector.shape_cast %41 : vector<256x128xf32> to vector<2x128x128xf32>
    %43 = vector.extract_strided_slice %23 {offsets = [0, 384], sizes = [256, 128], strides = [1, 1]} : vector<256x768xf32> to vector<256x128xf32>
    %44 = vector.shape_cast %43 : vector<256x128xf32> to vector<2x128x128xf32>
    %45 = vector.extract_strided_slice %23 {offsets = [0, 640], sizes = [256, 128], strides = [1, 1]} : vector<256x768xf32> to vector<256x128xf32>
    %46 = vector.shape_cast %45 : vector<256x128xf32> to vector<2x128x128xf32>
    %47 = arith.mulf %42, %4 : vector<2x128x128xf32>
    %c64_i32_18 = arith.constant 64 : i32
    %48 = tpu.dynamic_rotate %42 by %c64_i32_18 dim 2 : vector<2x128x128xf32>, i32 -> vector<2x128x128xf32>
    %49 = arith.mulf %48, %5 : vector<2x128x128xf32>
    %50 = arith.addf %47, %49 : vector<2x128x128xf32>
    %51 = arith.mulf %44, %4 : vector<2x128x128xf32>
    %c64_i32_19 = arith.constant 64 : i32
    %52 = tpu.dynamic_rotate %44 by %c64_i32_19 dim 2 : vector<2x128x128xf32>, i32 -> vector<2x128x128xf32>
    %53 = arith.mulf %52, %5 : vector<2x128x128xf32>
    %54 = arith.addf %51, %53 : vector<2x128x128xf32>
    %55 = arith.truncf %50 : vector<2x128x128xf32> to vector<2x128x128xbf16>
    %56 = arith.truncf %54 : vector<2x128x128xf32> to vector<2x128x128xbf16>
    %57 = arith.truncf %46 : vector<2x128x128xf32> to vector<2x128x128xbf16>
    %58 = vector.shape_cast %38 : vector<2x128x128xbf16> to vector<1x2x128x128xbf16>
    %59 = vector.shape_cast %55 : vector<2x128x128xbf16> to vector<1x2x128x128xbf16>
    %60 = tpu.concatenate %58, %59 in 0 : vector<1x2x128x128xbf16>, vector<1x2x128x128xbf16> -> vector<2x2x128x128xbf16>
    %61 = vector.shape_cast %60 : vector<2x2x128x128xbf16> to vector<4x128x128xbf16>
    %62 = vector.shape_cast %39 : vector<2x128x128xbf16> to vector<1x2x128x128xbf16>
    %63 = vector.shape_cast %56 : vector<2x128x128xbf16> to vector<1x2x128x128xbf16>
    %64 = tpu.concatenate %62, %63 in 0 : vector<1x2x128x128xbf16>, vector<1x2x128x128xbf16> -> vector<2x2x128x128xbf16>
    %65 = vector.shape_cast %64 : vector<2x2x128x128xbf16> to vector<4x128x128xbf16>
    %66 = vector.shape_cast %40 : vector<2x128x128xbf16> to vector<1x2x128x128xbf16>
    %67 = vector.shape_cast %57 : vector<2x128x128xbf16> to vector<1x2x128x128xbf16>
    %68 = tpu.concatenate %66, %67 in 0 : vector<1x2x128x128xbf16>, vector<1x2x128x128xbf16> -> vector<2x2x128x128xbf16>
    %69 = vector.shape_cast %68 : vector<2x2x128x128xbf16> to vector<4x128x128xbf16>
    "tpu.trace_start"() <{level = 10 : i32, message = "nqd,nkd->nqk"}> : () -> ()
    %cst_20 = arith.constant dense<0.000000e+00> : vector<4x128x128xf32>
    %70 = tpu.matmul %61, %65, %cst_20 {dimension_numbers = #tpu.dot_dimension_numbers<[2], [2], [1], [1], [0, 0, 0, 1, 1, 1], [0], [0]>} : vector<4x128x128xbf16>, vector<4x128x128xbf16>, vector<4x128x128xf32> -> vector<4x128x128xf32>
    "tpu.trace_stop"() : () -> ()
    %71 = tpu.iota {dimensions = array<i32: 0>} : vector<128x128xi32>
    %72 = tpu.iota {dimensions = array<i32: 1>} : vector<128x128xi32>
    %73 = arith.cmpi sgt, %72, %71 : vector<128x128xi32>
    %74 = vector.shape_cast %73 : vector<128x128xi1> to vector<1x128x128xi1>
    %cst_21 = arith.constant -1.000000e+04 : f32
    %75 = vector.shape_cast %74 : vector<1x128x128xi1> to vector<1x128x128xi1>
    %76 = vector.broadcast %75 : vector<1x128x128xi1> to vector<4x128x128xi1>
    %77 = vector.broadcast %cst_21 : f32 to vector<4x128x128xf32>
    %78 = arith.select %76, %77, %70 : vector<4x128x128xi1>, vector<4x128x128xf32>
    %cst_22 = arith.constant dense<0xFF800000> : vector<4x128xf32>
    %79 = vector.multi_reduction <maximumf>, %78, %cst_22 [2] : vector<4x128x128xf32> to vector<4x128xf32>
    %80 = vector.shape_cast %79 : vector<4x128xf32> to vector<4x128x1xf32>
    %81 = vector.broadcast %80 : vector<4x128x1xf32> to vector<4x128x128xf32>
    %82 = arith.subf %78, %81 : vector<4x128x128xf32>
    %83 = math.exp %82 : vector<4x128x128xf32>
    %cst_23 = arith.constant dense<0.000000e+00> : vector<4x128xf32>
    %84 = vector.multi_reduction <add>, %83, %cst_23 [2] : vector<4x128x128xf32> to vector<4x128xf32>
    %85 = vector.shape_cast %84 : vector<4x128xf32> to vector<4x128x1xf32>
    %86 = tpu.reciprocal %85 {approx = true} : vector<4x128x1xf32> -> vector<4x128x1xf32>
    %87 = vector.broadcast %86 : vector<4x128x1xf32> to vector<4x128x128xf32>
    %88 = arith.mulf %83, %87 : vector<4x128x128xf32>
    %89 = arith.truncf %88 : vector<4x128x128xf32> to vector<4x128x128xbf16>
    "tpu.trace_start"() <{level = 10 : i32, message = "nqk,nkd->nqd"}> : () -> ()
    %cst_24 = arith.constant dense<0.000000e+00> : vector<4x128x128xf32>
    %90 = tpu.matmul %89, %69, %cst_24 {dimension_numbers = #tpu.dot_dimension_numbers<[2], [1], [1], [2], [0, 0, 0, 1, 1, 2], [0], [0]>} : vector<4x128x128xbf16>, vector<4x128x128xbf16>, vector<4x128x128xf32> -> vector<4x128x128xf32>
    "tpu.trace_stop"() : () -> ()
    %91 = vector.extract_strided_slice %90 {offsets = [0, 0, 0], sizes = [2, 128, 128], strides = [1, 1, 1]} : vector<4x128x128xf32> to vector<2x128x128xf32>
    %92 = vector.shape_cast %91 : vector<2x128x128xf32> to vector<256x128xf32>
    %93 = vector.extract_strided_slice %90 {offsets = [2, 0, 0], sizes = [2, 128, 128], strides = [1, 1, 1]} : vector<4x128x128xf32> to vector<2x128x128xf32>
    %94 = vector.shape_cast %93 : vector<2x128x128xf32> to vector<256x128xf32>
    %95 = tpu.concatenate %92, %94 in 1 : vector<256x128xf32>, vector<256x128xf32> -> vector<256x256xf32>
    %96 = arith.truncf %95 : vector<256x256xf32> to vector<256x256xbf16>
    %c0_25 = arith.constant 0 : index
    %c0_26 = arith.constant 0 : index
    %c0_27 = arith.constant 0 : index
    %97 = vector.load %arg8[%c0_25, %c0_26, %c0_27] : memref<1x256x256xbf16, #tpu.memory_space<vmem>>, vector<1x256x256xbf16>
    %98 = vector.shape_cast %97 : vector<1x256x256xbf16> to vector<256x256xbf16>
    %cst_28 = arith.constant dense<0.000000e+00> : vector<256x256xf32>
    %99 = tpu.matmul %96, %98, %cst_28 {dimension_numbers = #tpu.dot_dimension_numbers<[1], [0], [0], [1], [0, 0, 1, 1], [], []>} : vector<256x256xbf16>, vector<256x256xbf16>, vector<256x256xf32> -> vector<256x256xf32>
    %100 = arith.addf %3, %99 : vector<256x256xf32>
    %c0_29 = arith.constant 0 : index
    %c0_30 = arith.constant 0 : index
    %c0_31 = arith.constant 0 : index
    %101 = vector.load %arg5[%c0_29, %c0_30, %c0_31] : memref<1x1x256xf32, #tpu.memory_space<vmem>>, vector<1x1x256xf32>
    %102 = vector.shape_cast %101 : vector<1x1x256xf32> to vector<1x256xf32>
    %103 = arith.mulf %100, %100 : vector<256x256xf32>
    %cst_32 = arith.constant dense<0.000000e+00> : vector<256xf32>
    %104 = vector.multi_reduction <add>, %103, %cst_32 [1] : vector<256x256xf32> to vector<256xf32>
    %105 = vector.shape_cast %104 : vector<256xf32> to vector<256x1xf32>
    %cst_33 = arith.constant 2.560000e+02 : f32
    %106 = vector.broadcast %cst_33 : f32 to vector<256x1xf32>
    %107 = arith.divf %105, %106 : vector<256x1xf32>
    %cst_34 = arith.constant 9.99999997E-7 : f32
    %108 = vector.broadcast %cst_34 : f32 to vector<256x1xf32>
    %109 = arith.addf %107, %108 : vector<256x1xf32>
    %110 = math.rsqrt %109 : vector<256x1xf32>
    %111 = vector.broadcast %110 : vector<256x1xf32> to vector<256x256xf32>
    %112 = arith.mulf %100, %111 : vector<256x256xf32>
    %113 = vector.broadcast %102 : vector<1x256xf32> to vector<256x256xf32>
    %114 = arith.mulf %112, %113 : vector<256x256xf32>
    %115 = arith.truncf %114 : vector<256x256xf32> to vector<256x256xbf16>
    %c0_35 = arith.constant 0 : index
    %c0_36 = arith.constant 0 : index
    %c0_37 = arith.constant 0 : index
    %116 = vector.load %arg9[%c0_35, %c0_36, %c0_37] : memref<1x256x1024xbf16, #tpu.memory_space<vmem>>, vector<1x256x1024xbf16>
    %117 = vector.shape_cast %116 : vector<1x256x1024xbf16> to vector<256x1024xbf16>
    %cst_38 = arith.constant dense<0.000000e+00> : vector<256x1024xf32>
    %118 = tpu.matmul %115, %117, %cst_38 {dimension_numbers = #tpu.dot_dimension_numbers<[1], [0], [0], [1], [0, 0, 1, 1], [], []>} : vector<256x256xbf16>, vector<256x1024xbf16>, vector<256x1024xf32> -> vector<256x1024xf32>
    %119 = vector.extract_strided_slice %118 {offsets = [0, 0], sizes = [256, 512], strides = [1, 1]} : vector<256x1024xf32> to vector<256x512xf32>
    %120 = vector.extract_strided_slice %118 {offsets = [0, 512], sizes = [256, 512], strides = [1, 1]} : vector<256x1024xf32> to vector<256x512xf32>
    %121 = arith.mulf %119, %120 : vector<256x512xf32>
    %cst_39 = arith.constant 0.000000e+00 : f32
    %122 = vector.broadcast %cst_39 : f32 to vector<256x512xf32>
    %123 = arith.subf %122, %119 : vector<256x512xf32>
    %124 = math.exp %123 : vector<256x512xf32>
    %cst_40 = arith.constant 1.000000e+00 : f32
    %125 = vector.broadcast %cst_40 : f32 to vector<256x512xf32>
    %126 = arith.addf %125, %124 : vector<256x512xf32>
    %127 = tpu.reciprocal %126 {approx = true} : vector<256x512xf32> -> vector<256x512xf32>
    %128 = arith.mulf %121, %127 : vector<256x512xf32>
    %129 = arith.truncf %128 : vector<256x512xf32> to vector<256x512xbf16>
    %c0_41 = arith.constant 0 : index
    %c0_42 = arith.constant 0 : index
    %c0_43 = arith.constant 0 : index
    %130 = vector.load %arg10[%c0_41, %c0_42, %c0_43] : memref<1x512x256xbf16, #tpu.memory_space<vmem>>, vector<1x512x256xbf16>
    %131 = vector.shape_cast %130 : vector<1x512x256xbf16> to vector<512x256xbf16>
    %cst_44 = arith.constant dense<0.000000e+00> : vector<256x256xf32>
    %132 = tpu.matmul %129, %131, %cst_44 {dimension_numbers = #tpu.dot_dimension_numbers<[1], [0], [0], [1], [0, 0, 1, 1], [], []>} : vector<256x512xbf16>, vector<512x256xbf16>, vector<256x256xf32> -> vector<256x256xf32>
    %133 = arith.addf %100, %132 : vector<256x256xf32>
    %c0_45 = arith.constant 0 : index
    %c0_46 = arith.constant 0 : index
    %134 = vector.load %arg12[%c0_45, %c0_46] : memref<256x256xf32, #tpu.memory_space<vmem>>, vector<256x256xf32>
    tpu.vector_store %arg12[%c0_45, %c0_46], %133 {strides = array<i32>} : memref<256x256xf32, #tpu.memory_space<vmem>>, vector<256x256xf32>,
    %c1_i32 = arith.constant 1 : i32
    %135 = arith.cmpi eq, %arg0, %c1_i32 : i32
    %136 = arith.extui %135 : i1 to i32
    %c0_i32_47 = arith.constant 0 : i32
    %137 = arith.cmpi ne, %136, %c0_i32_47 : i32
    scf.if %137 {
      %c0_48 = arith.constant 0 : index
      %c0_49 = arith.constant 0 : index
      %138 = vector.load %arg6[%c0_48, %c0_49] : memref<1x256xf32, #tpu.memory_space<vmem>>, vector<1x256xf32>
      %139 = arith.mulf %133, %133 : vector<256x256xf32>
      %cst_50 = arith.constant dense<0.000000e+00> : vector<256xf32>
      %140 = vector.multi_reduction <add>, %139, %cst_50 [1] : vector<256x256xf32> to vector<256xf32>
      %141 = vector.shape_cast %140 : vector<256xf32> to vector<256x1xf32>
      %cst_51 = arith.constant 2.560000e+02 : f32
      %142 = vector.broadcast %cst_51 : f32 to vector<256x1xf32>
      %143 = arith.divf %141, %142 : vector<256x1xf32>
      %cst_52 = arith.constant 9.99999997E-7 : f32
      %144 = vector.broadcast %cst_52 : f32 to vector<256x1xf32>
      %145 = arith.addf %143, %144 : vector<256x1xf32>
      %146 = math.rsqrt %145 : vector<256x1xf32>
      %147 = vector.broadcast %146 : vector<256x1xf32> to vector<256x256xf32>
      %148 = arith.mulf %133, %147 : vector<256x256xf32>
      %149 = vector.broadcast %138 : vector<1x256xf32> to vector<256x256xf32>
      %150 = arith.mulf %148, %149 : vector<256x256xf32>
      %151 = arith.truncf %150 : vector<256x256xf32> to vector<256x256xbf16>
      %c0_53 = arith.constant 0 : index
      %c0_54 = arith.constant 0 : index
      %152 = vector.load %arg11[%c0_53, %c0_54] : memref<256x256xbf16, #tpu.memory_space<vmem>>, vector<256x256xbf16>
      tpu.vector_store %arg11[%c0_53, %c0_54], %151 {strides = array<i32>} : memref<256x256xbf16, #tpu.memory_space<vmem>>, vector<256x256xbf16>,
    } else {
    }
    return
  }
  func.func @transform_0(%arg0: i32) -> (i32, i32) {
    %c0_i32 = arith.constant 0 : i32
    %c0_i32_0 = arith.constant 0 : i32
    %c0_i32_1 = arith.constant 0 : i32
    return %c0_i32, %c0_i32_0 : i32, i32
  }
  func.func @transform_1(%arg0: i32) -> (i32, i32, i32) {
    %c0_i32 = arith.constant 0 : i32
    %c0_i32_0 = arith.constant 0 : i32
    %c0_i32_1 = arith.constant 0 : i32
    %c0_i32_2 = arith.constant 0 : i32
    return %c0_i32, %c0_i32_0, %c0_i32_1 : i32, i32, i32
  }
  func.func @transform_2(%arg0: i32) -> (i32, i32, i32) {
    %c0_i32 = arith.constant 0 : i32
    %c0_i32_0 = arith.constant 0 : i32
    %c0_i32_1 = arith.constant 0 : i32
    %c0_i32_2 = arith.constant 0 : i32
    return %c0_i32, %c0_i32_0, %c0_i32_1 : i32, i32, i32
  }
  func.func @transform_3(%arg0: i32) -> (i32, i32, i32) {
    %c0_i32 = arith.constant 0 : i32
    %c0_i32_0 = arith.constant 0 : i32
    %c0_i32_1 = arith.constant 0 : i32
    return %arg0, %c0_i32, %c0_i32_0 : i32, i32, i32
  }
  func.func @transform_4(%arg0: i32) -> (i32, i32, i32) {
    %c0_i32 = arith.constant 0 : i32
    %c0_i32_0 = arith.constant 0 : i32
    %c0_i32_1 = arith.constant 0 : i32
    return %arg0, %c0_i32, %c0_i32_0 : i32, i32, i32
  }
  func.func @transform_5(%arg0: i32) -> (i32, i32) {
    %c0_i32 = arith.constant 0 : i32
    %c0_i32_0 = arith.constant 0 : i32
    %c0_i32_1 = arith.constant 0 : i32
    return %c0_i32, %c0_i32_0 : i32, i32
  }
  func.func @transform_6(%arg0: i32) -> (i32, i32, i32) {
    %c0_i32 = arith.constant 0 : i32
    %c0_i32_0 = arith.constant 0 : i32
    %c0_i32_1 = arith.constant 0 : i32
    return %arg0, %c0_i32, %c0_i32_0 : i32, i32, i32
  }
  func.func @transform_7(%arg0: i32) -> (i32, i32, i32) {
    %c0_i32 = arith.constant 0 : i32
    %c0_i32_0 = arith.constant 0 : i32
    %c0_i32_1 = arith.constant 0 : i32
    return %arg0, %c0_i32, %c0_i32_0 : i32, i32, i32
  }
  func.func @transform_8(%arg0: i32) -> (i32, i32, i32) {
    %c0_i32 = arith.constant 0 : i32
    %c0_i32_0 = arith.constant 0 : i32
    %c0_i32_1 = arith.constant 0 : i32
    return %arg0, %c0_i32, %c0_i32_0 : i32, i32, i32
  }
  func.func @transform_9(%arg0: i32) -> (i32, i32, i32) {
    %c0_i32 = arith.constant 0 : i32
    %c0_i32_0 = arith.constant 0 : i32
    %c0_i32_1 = arith.constant 0 : i32
    return %arg0, %c0_i32, %c0_i32_0 : i32, i32, i32
  }
  func.func @transform_10(%arg0: i32) -> (i32, i32) {
    %c0_i32 = arith.constant 0 : i32
    %c0_i32_0 = arith.constant 0 : i32
    %c0_i32_1 = arith.constant 0 : i32
    return %c0_i32, %c0_i32_0 : i32, i32
  }
}

module attributes {stable_mosaic.version = 11 : i64} {
  func.func @lm_head_kernel(%arg0: i32, %arg1: i32, %arg2: memref<256x256xbf16, #tpu.memory_space<vmem>>, %arg3: memref<256x512xbf16, #tpu.memory_space<vmem>>, %arg4: memref<256x512xf32, #tpu.memory_space<vmem>>) attributes {dimension_semantics = [#tpu.dimension_semantics<parallel>, #tpu.dimension_semantics<parallel>], iteration_bounds = array<i64: 1, 1>, scalar_prefetch = 0 : i64, scratch_operands = 0 : i64, tpu.core_type = #tpu.core_type<tc>, window_params = [{transform_indices = @transform_0, window_bounds = array<i64: 256, 256>}, {transform_indices = @transform_1, window_bounds = array<i64: 256, 512>}, {transform_indices = @transform_2, window_bounds = array<i64: 256, 512>}]} {
    %c0 = arith.constant 0 : index
    %c0_0 = arith.constant 0 : index
    %0 = vector.load %arg2[%c0, %c0_0] : memref<256x256xbf16, #tpu.memory_space<vmem>>, vector<256x256xbf16>
    %c0_1 = arith.constant 0 : index
    %c0_2 = arith.constant 0 : index
    %1 = vector.load %arg3[%c0_1, %c0_2] : memref<256x512xbf16, #tpu.memory_space<vmem>>, vector<256x512xbf16>
    %cst = arith.constant dense<0.000000e+00> : vector<256x512xf32>
    %2 = tpu.matmul %0, %1, %cst {dimension_numbers = #tpu.dot_dimension_numbers<[1], [0], [0], [1], [0, 0, 1, 1], [], []>} : vector<256x256xbf16>, vector<256x512xbf16>, vector<256x512xf32> -> vector<256x512xf32>
    %c0_3 = arith.constant 0 : index
    %c0_4 = arith.constant 0 : index
    %3 = vector.load %arg4[%c0_3, %c0_4] : memref<256x512xf32, #tpu.memory_space<vmem>>, vector<256x512xf32>
    tpu.vector_store %arg4[%c0_3, %c0_4], %2 {strides = array<i32>} : memref<256x512xf32, #tpu.memory_space<vmem>>, vector<256x512xf32>,
    return
  }
  func.func @transform_0(%arg0: i32, %arg1: i32) -> (i32, i32) {
    %c0_i32 = arith.constant 0 : i32
    %c0_i32_0 = arith.constant 0 : i32
    return %arg0, %c0_i32 : i32, i32
  }
  func.func @transform_1(%arg0: i32, %arg1: i32) -> (i32, i32) {
    %c0_i32 = arith.constant 0 : i32
    %c0_i32_0 = arith.constant 0 : i32
    return %c0_i32, %arg1 : i32, i32
  }
  func.func @transform_2(%arg0: i32, %arg1: i32) -> (i32, i32) {
    %c0_i32 = arith.constant 0 : i32
    return %arg0, %arg1 : i32, i32
  }
}

</mosaic_0001>

<llo_original>
// kernel: transformer_forward.3
$region0: #{transformer_forward.3}
  #allocation0 [shape = 'u32[]', space=smem, size = 0x4, offset = 0x4, fixed_abs, tag = 'smem constant byte address 0x4 - core index']
  #allocation1 [shape = 'u32[144,128]{1,0:T(1,128)}', space=vmem, size = 0x12000, scoped, tag = 'internal scratch']
  %s0 = inlined_call_operand.vmem [shape: bf16[256,256], index: 0, kind: input, shape index: {}]
  %s1 = inlined_call_operand.vmem [shape: bf16[256,512], index: 1, kind: input, shape index: {}]
  %s2 = inlined_call_operand.hbm [shape: f32[256,512], index: 2, kind: output, shape index: {}]
  %s3 = sld [smem:[#allocation0]]
  $region18: #{transformer_forward.3} parent=0
    _
  %s5 = ssub.s32 1, %s3
  %s6 = scalar_select 0, %s5, %s3
  $region1: #{transformer_forward.3} parent=0
    #allocation2 [shape = 'u8[524288]{0}', space=vmem, size = 0x80000, scoped, tag = 'output window, operand 0, single buffered']
    #allocation3 [shape = 's32[1]{0}', space=sflag, size = 0x4, scoped, tag = 'scoped memory for transformer_forward.3']
    %7 = vsyncpa [#allocation3], 0
    // Predicated region
    $region2: #{transformer_forward.3} parent=1 // pred_check
      _
    $region3: #{transformer_forward.3} parent=1 // pred_check_branch
      %9 = sbr.rel (0) target = $region5
    $region4: #{transformer_forward.3} parent=1 // pred_region
      _
    $region5: #{transformer_forward.3} parent=1 // pred_fallthru
      _
    // Predicated region
    $region6: #{transformer_forward.3} parent=1 // pred_check
      _
    $region7: #{transformer_forward.3} parent=1 // pred_check_branch
      %11 = sbr.rel (0) target = $region9
    $region8: #{transformer_forward.3} parent=1 // pred_region
      _
    $region9: #{transformer_forward.3} parent=1 // pred_fallthru
      _
    %v12 = vld [vmem:[%s0] sm:$0xff]
    %v13 = vld [vmem:[%s0 + $0x8] sm:$0xff]
    %v14 = vld [vmem:[%s0 + $0x10] sm:$0xff]
    %v15 = vld [vmem:[%s0 + $0x18] sm:$0xff]
    %v16 = vld [vmem:[%s0 + $0x20] sm:$0xff]
    %v17 = vld [vmem:[%s0 + $0x28] sm:$0xff]
    %v18 = vld [vmem:[%s0 + $0x30] sm:$0xff]
    %v19 = vld [vmem:[%s0 + $0x38] sm:$0xff]
    %v20 = vld [vmem:[%s0 + $0x40] sm:$0xff]
    %v21 = vld [vmem:[%s0 + $0x48] sm:$0xff]
    %v22 = vld [vmem:[%s0 + $0x50] sm:$0xff]
    %v23 = vld [vmem:[%s0 + $0x58] sm:$0xff]
    %v24 = vld [vmem:[%s0 + $0x60] sm:$0xff]
    %v25 = vld [vmem:[%s0 + $0x68] sm:$0xff]
    %v26 = vld [vmem:[%s0 + $0x70] sm:$0xff]
    %v27 = vld [vmem:[%s0 + $0x78] sm:$0xff]
    %v28 = vld [vmem:[%s0 + $0x80] sm:$0xff]
    %v29 = vld [vmem:[%s0 + $0x88] sm:$0xff]
    %v30 = vld [vmem:[%s0 + $0x90] sm:$0xff]
    %v31 = vld [vmem:[%s0 + $0x98] sm:$0xff]
    %v32 = vld [vmem:[%s0 + $0xa0] sm:$0xff]
    %v33 = vld [vmem:[%s0 + $0xa8] sm:$0xff]
    %v34 = vld [vmem:[%s0 + $0xb0] sm:$0xff]
    %v35 = vld [vmem:[%s0 + $0xb8] sm:$0xff]
    %v36 = vld [vmem:[%s0 + $0xc0] sm:$0xff]
    %v37 = vld [vmem:[%s0 + $0xc8] sm:$0xff]
    %v38 = vld [vmem:[%s0 + $0xd0] sm:$0xff]
    %v39 = vld [vmem:[%s0 + $0xd8] sm:$0xff]
    %v40 = vld [vmem:[%s0 + $0xe0] sm:$0xff]
    %v41 = vld [vmem:[%s0 + $0xe8] sm:$0xff]
    %v42 = vld [vmem:[%s0 + $0xf0] sm:$0xff]
    %v43 = vld [vmem:[%s0 + $0xf8] sm:$0xff]
    %v44 = vld [vmem:[%s1] sm:$0xff]
    %v45 = vld [vmem:[%s1 + $0x8] sm:$0xff]
    %v46 = vld [vmem:[%s1 + $0x10] sm:$0xff]
    %v47 = vld [vmem:[%s1 + $0x18] sm:$0xff]
    %v48 = vld [vmem:[%s1 + $0x20] sm:$0xff]
    %v49 = vld [vmem:[%s1 + $0x28] sm:$0xff]
    %v50 = vld [vmem:[%s1 + $0x30] sm:$0xff]
    %v51 = vld [vmem:[%s1 + $0x38] sm:$0xff]
    %v52 = vld [vmem:[%s1 + $0x40] sm:$0xff]
    %v53 = vld [vmem:[%s1 + $0x48] sm:$0xff]
    %v54 = vld [vmem:[%s1 + $0x50] sm:$0xff]
    %v55 = vld [vmem:[%s1 + $0x58] sm:$0xff]
    %v56 = vld [vmem:[%s1 + $0x60] sm:$0xff]
    %v57 = vld [vmem:[%s1 + $0x68] sm:$0xff]
    %v58 = vld [vmem:[%s1 + $0x70] sm:$0xff]
    %v59 = vld [vmem:[%s1 + $0x78] sm:$0xff]
    %v60 = vld [vmem:[%s1 + $0x80] sm:$0xff]
    %v61 = vld [vmem:[%s1 + $0x88] sm:$0xff]
    %v62 = vld [vmem:[%s1 + $0x90] sm:$0xff]
    %v63 = vld [vmem:[%s1 + $0x98] sm:$0xff]
    %v64 = vld [vmem:[%s1 + $0xa0] sm:$0xff]
    %v65 = vld [vmem:[%s1 + $0xa8] sm:$0xff]
    %v66 = vld [vmem:[%s1 + $0xb0] sm:$0xff]
    %v67 = vld [vmem:[%s1 + $0xb8] sm:$0xff]
    %v68 = vld [vmem:[%s1 + $0xc0] sm:$0xff]
    %v69 = vld [vmem:[%s1 + $0xc8] sm:$0xff]
    %v70 = vld [vmem:[%s1 + $0xd0] sm:$0xff]
    %v71 = vld [vmem:[%s1 + $0xd8] sm:$0xff]
    %v72 = vld [vmem:[%s1 + $0xe0] sm:$0xff]
    %v73 = vld [vmem:[%s1 + $0xe8] sm:$0xff]
    %v74 = vld [vmem:[%s1 + $0xf0] sm:$0xff]
    %v75 = vld [vmem:[%s1 + $0xf8] sm:$0xff]
    %v76 = vld [vmem:[%s1 + $0x100] sm:$0xff]
    %v77 = vld [vmem:[%s1 + $0x108] sm:$0xff]
    %v78 = vld [vmem:[%s1 + $0x110] sm:$0xff]
    %v79 = vld [vmem:[%s1 + $0x118] sm:$0xff]
    %v80 = vld [vmem:[%s1 + $0x120] sm:$0xff]
    %v81 = vld [vmem:[%s1 + $0x128] sm:$0xff]
    %v82 = vld [vmem:[%s1 + $0x130] sm:$0xff]
    %v83 = vld [vmem:[%s1 + $0x138] sm:$0xff]
    %v84 = vld [vmem:[%s1 + $0x140] sm:$0xff]
    %v85 = vld [vmem:[%s1 + $0x148] sm:$0xff]
    %v86 = vld [vmem:[%s1 + $0x150] sm:$0xff]
    %v87 = vld [vmem:[%s1 + $0x158] sm:$0xff]
    %v88 = vld [vmem:[%s1 + $0x160] sm:$0xff]
    %v89 = vld [vmem:[%s1 + $0x168] sm:$0xff]
    %v90 = vld [vmem:[%s1 + $0x170] sm:$0xff]
    %v91 = vld [vmem:[%s1 + $0x178] sm:$0xff]
    %v92 = vld [vmem:[%s1 + $0x180] sm:$0xff]
    %v93 = vld [vmem:[%s1 + $0x188] sm:$0xff]
    %v94 = vld [vmem:[%s1 + $0x190] sm:$0xff]
    %v95 = vld [vmem:[%s1 + $0x198] sm:$0xff]
    %v96 = vld [vmem:[%s1 + $0x1a0] sm:$0xff]
    %v97 = vld [vmem:[%s1 + $0x1a8] sm:$0xff]
    %v98 = vld [vmem:[%s1 + $0x1b0] sm:$0xff]
    %v99 = vld [vmem:[%s1 + $0x1b8] sm:$0xff]
    %v100 = vld [vmem:[%s1 + $0x1c0] sm:$0xff]
    %v101 = vld [vmem:[%s1 + $0x1c8] sm:$0xff]
    %v102 = vld [vmem:[%s1 + $0x1d0] sm:$0xff]
    %v103 = vld [vmem:[%s1 + $0x1d8] sm:$0xff]
    %v104 = vld [vmem:[%s1 + $0x1e0] sm:$0xff]
    %v105 = vld [vmem:[%s1 + $0x1e8] sm:$0xff]
    %v106 = vld [vmem:[%s1 + $0x1f0] sm:$0xff]
    %v107 = vld [vmem:[%s1 + $0x1f8] sm:$0xff]
    %v140 = vunpack.c.l.b16 %v12
    %v141 = vunpack.c.h.b16 %v12
    %v142 = vunpack.c.l.b16 %v13
    %v143 = vunpack.c.h.b16 %v13
    %v144 = vunpack.c.l.b16 %v14
    %v145 = vunpack.c.h.b16 %v14
    %v146 = vunpack.c.l.b16 %v15
    %v147 = vunpack.c.h.b16 %v15
    %v148 = vunpack.c.l.b16 %v16
    %v149 = vunpack.c.h.b16 %v16
    %v150 = vunpack.c.l.b16 %v17
    %v151 = vunpack.c.h.b16 %v17
    %v152 = vunpack.c.l.b16 %v18
    %v153 = vunpack.c.h.b16 %v18
    %v154 = vunpack.c.l.b16 %v19
    %v155 = vunpack.c.h.b16 %v19
    %v156 = vunpack.c.l.b16 %v20
    %v157 = vunpack.c.h.b16 %v20
    %v158 = vunpack.c.l.b16 %v21
    %v159 = vunpack.c.h.b16 %v21
    %v160 = vunpack.c.l.b16 %v22
    %v161 = vunpack.c.h.b16 %v22
    %v162 = vunpack.c.l.b16 %v23
    %v163 = vunpack.c.h.b16 %v23
    %v164 = vunpack.c.l.b16 %v24
    %v165 = vunpack.c.h.b16 %v24
    %v166 = vunpack.c.l.b16 %v25
    %v167 = vunpack.c.h.b16 %v25
    %v168 = vunpack.c.l.b16 %v26
    %v169 = vunpack.c.h.b16 %v26
    %v170 = vunpack.c.l.b16 %v27
    %v171 = vunpack.c.h.b16 %v27
    %v172 = vunpack.c.l.b16 %v28
    %v173 = vunpack.c.h.b16 %v28
    %v174 = vunpack.c.l.b16 %v29
    %v175 = vunpack.c.h.b16 %v29
    %v176 = vunpack.c.l.b16 %v30
    %v177 = vunpack.c.h.b16 %v30
    %v178 = vunpack.c.l.b16 %v31
    %v179 = vunpack.c.h.b16 %v31
    %v180 = vunpack.c.l.b16 %v32
    %v181 = vunpack.c.h.b16 %v32
    %v182 = vunpack.c.l.b16 %v33
    %v183 = vunpack.c.h.b16 %v33
    %v184 = vunpack.c.l.b16 %v34
    %v185 = vunpack.c.h.b16 %v34
    %v186 = vunpack.c.l.b16 %v35
    %v187 = vunpack.c.h.b16 %v35
    %v188 = vunpack.c.l.b16 %v36
    %v189 = vunpack.c.h.b16 %v36
    %v190 = vunpack.c.l.b16 %v37
    %v191 = vunpack.c.h.b16 %v37
    %v192 = vunpack.c.l.b16 %v38
    %v193 = vunpack.c.h.b16 %v38
    %v194 = vunpack.c.l.b16 %v39
    %v195 = vunpack.c.h.b16 %v39
    %v196 = vunpack.c.l.b16 %v40
    %v197 = vunpack.c.h.b16 %v40
    %v198 = vunpack.c.l.b16 %v41
    %v199 = vunpack.c.h.b16 %v41
    %v200 = vunpack.c.l.b16 %v42
    %v201 = vunpack.c.h.b16 %v42
    %v202 = vunpack.c.l.b16 %v43
    %v203 = vunpack.c.h.b16 %v43
    %v204 = vpack.c.b16 %v142, %v140
    %v205 = vpack.c.b16 %v143, %v141
    %v206 = vpack.c.b16 %v146, %v144
    %v207 = vpack.c.b16 %v147, %v145
    %v208 = vpack.c.b16 %v150, %v148
    %v209 = vpack.c.b16 %v151, %v149
    %v210 = vpack.c.b16 %v154, %v152
    %v211 = vpack.c.b16 %v155, %v153
    %v212 = vpack.c.b16 %v158, %v156
    %v213 = vpack.c.b16 %v159, %v157
    %v214 = vpack.c.b16 %v162, %v160
    %v215 = vpack.c.b16 %v163, %v161
    %v216 = vpack.c.b16 %v166, %v164
    %v217 = vpack.c.b16 %v167, %v165
    %v218 = vpack.c.b16 %v170, %v168
    %v219 = vpack.c.b16 %v171, %v169
    %v220 = vpack.c.b16 %v174, %v172
    %v221 = vpack.c.b16 %v175, %v173
    %v222 = vpack.c.b16 %v178, %v176
    %v223 = vpack.c.b16 %v179, %v177
    %v224 = vpack.c.b16 %v182, %v180
    %v225 = vpack.c.b16 %v183, %v181
    %v226 = vpack.c.b16 %v186, %v184
    %v227 = vpack.c.b16 %v187, %v185
    %v228 = vpack.c.b16 %v190, %v188
    %v229 = vpack.c.b16 %v191, %v189
    %v230 = vpack.c.b16 %v194, %v192
    %v231 = vpack.c.b16 %v195, %v193
    %v232 = vpack.c.b16 %v198, %v196
    %v233 = vpack.c.b16 %v199, %v197
    %v234 = vpack.c.b16 %v202, %v200
    %v235 = vpack.c.b16 %v203, %v201
    %v332 = vunpack.c.l.b16 %v44
    %v333 = vunpack.c.h.b16 %v44
    %v334 = vunpack.c.l.b16 %v45
    %v335 = vunpack.c.h.b16 %v45
    %v336 = vunpack.c.l.b16 %v46
    %v337 = vunpack.c.h.b16 %v46
    %v338 = vunpack.c.l.b16 %v47
    %v339 = vunpack.c.h.b16 %v47
    %v340 = vunpack.c.l.b16 %v48
    %v341 = vunpack.c.h.b16 %v48
    %v342 = vunpack.c.l.b16 %v49
    %v343 = vunpack.c.h.b16 %v49
    %v344 = vunpack.c.l.b16 %v50
    %v345 = vunpack.c.h.b16 %v50
    %v346 = vunpack.c.l.b16 %v51
    %v347 = vunpack.c.h.b16 %v51
    %v348 = vunpack.c.l.b16 %v52
    %v349 = vunpack.c.h.b16 %v52
    %v350 = vunpack.c.l.b16 %v53
    %v351 = vunpack.c.h.b16 %v53
    %v352 = vunpack.c.l.b16 %v54
    %v353 = vunpack.c.h.b16 %v54
    %v354 = vunpack.c.l.b16 %v55
    %v355 = vunpack.c.h.b16 %v55
    %v356 = vunpack.c.l.b16 %v56
    %v357 = vunpack.c.h.b16 %v56
    %v358 = vunpack.c.l.b16 %v57
    %v359 = vunpack.c.h.b16 %v57
    %v360 = vunpack.c.l.b16 %v58
    %v361 = vunpack.c.h.b16 %v58
    %v362 = vunpack.c.l.b16 %v59
    %v363 = vunpack.c.h.b16 %v59
    %v364 = vunpack.c.l.b16 %v60
    %v365 = vunpack.c.h.b16 %v60
    %v366 = vunpack.c.l.b16 %v61
    %v367 = vunpack.c.h.b16 %v61
    %v368 = vunpack.c.l.b16 %v62
    %v369 = vunpack.c.h.b16 %v62
    %v370 = vunpack.c.l.b16 %v63
    %v371 = vunpack.c.h.b16 %v63
    %v372 = vunpack.c.l.b16 %v64
    %v373 = vunpack.c.h.b16 %v64
    %v374 = vunpack.c.l.b16 %v65
    %v375 = vunpack.c.h.b16 %v65
    %v376 = vunpack.c.l.b16 %v66
    %v377 = vunpack.c.h.b16 %v66
    %v378 = vunpack.c.l.b16 %v67
    %v379 = vunpack.c.h.b16 %v67
    %v380 = vunpack.c.l.b16 %v68
    %v381 = vunpack.c.h.b16 %v68
    %v382 = vunpack.c.l.b16 %v69
    %v383 = vunpack.c.h.b16 %v69
    %v384 = vunpack.c.l.b16 %v70
    %v385 = vunpack.c.h.b16 %v70
    %v386 = vunpack.c.l.b16 %v71
    %v387 = vunpack.c.h.b16 %v71
    %v388 = vunpack.c.l.b16 %v72
    %v389 = vunpack.c.h.b16 %v72
    %v390 = vunpack.c.l.b16 %v73
    %v391 = vunpack.c.h.b16 %v73
    %v392 = vunpack.c.l.b16 %v74
    %v393 = vunpack.c.h.b16 %v74
    %v394 = vunpack.c.l.b16 %v75
    %v395 = vunpack.c.h.b16 %v75
    %v396 = vunpack.c.l.b16 %v76
    %v397 = vunpack.c.h.b16 %v76
    %v398 = vunpack.c.l.b16 %v77
    %v399 = vunpack.c.h.b16 %v77
    %v400 = vunpack.c.l.b16 %v78
    %v401 = vunpack.c.h.b16 %v78
    %v402 = vunpack.c.l.b16 %v79
    %v403 = vunpack.c.h.b16 %v79
    %v404 = vunpack.c.l.b16 %v80
    %v405 = vunpack.c.h.b16 %v80
    %v406 = vunpack.c.l.b16 %v81
    %v407 = vunpack.c.h.b16 %v81
    %v408 = vunpack.c.l.b16 %v82
    %v409 = vunpack.c.h.b16 %v82
    %v410 = vunpack.c.l.b16 %v83
    %v411 = vunpack.c.h.b16 %v83
    %v412 = vunpack.c.l.b16 %v84
    %v413 = vunpack.c.h.b16 %v84
    %v414 = vunpack.c.l.b16 %v85
    %v415 = vunpack.c.h.b16 %v85
    %v416 = vunpack.c.l.b16 %v86
    %v417 = vunpack.c.h.b16 %v86
    %v418 = vunpack.c.l.b16 %v87
    %v419 = vunpack.c.h.b16 %v87
    %v420 = vunpack.c.l.b16 %v88
    %v421 = vunpack.c.h.b16 %v88
    %v422 = vunpack.c.l.b16 %v89
    %v423 = vunpack.c.h.b16 %v89
    %v424 = vunpack.c.l.b16 %v90
    %v425 = vunpack.c.h.b16 %v90
    %v426 = vunpack.c.l.b16 %v91
    %v427 = vunpack.c.h.b16 %v91
    %v428 = vunpack.c.l.b16 %v92
    %v429 = vunpack.c.h.b16 %v92
    %v430 = vunpack.c.l.b16 %v93
    %v431 = vunpack.c.h.b16 %v93
    %v432 = vunpack.c.l.b16 %v94
    %v433 = vunpack.c.h.b16 %v94
    %v434 = vunpack.c.l.b16 %v95
    %v435 = vunpack.c.h.b16 %v95
    %v436 = vunpack.c.l.b16 %v96
    %v437 = vunpack.c.h.b16 %v96
    %v438 = vunpack.c.l.b16 %v97
    %v439 = vunpack.c.h.b16 %v97
    %v440 = vunpack.c.l.b16 %v98
    %v441 = vunpack.c.h.b16 %v98
    %v442 = vunpack.c.l.b16 %v99
    %v443 = vunpack.c.h.b16 %v99
    %v444 = vunpack.c.l.b16 %v100
    %v445 = vunpack.c.h.b16 %v100
    %v446 = vunpack.c.l.b16 %v101
    %v447 = vunpack.c.h.b16 %v101
    %v448 = vunpack.c.l.b16 %v102
    %v449 = vunpack.c.h.b16 %v102
    %v450 = vunpack.c.l.b16 %v103
    %v451 = vunpack.c.h.b16 %v103
    %v452 = vunpack.c.l.b16 %v104
    %v453 = vunpack.c.h.b16 %v104
    %v454 = vunpack.c.l.b16 %v105
    %v455 = vunpack.c.h.b16 %v105
    %v456 = vunpack.c.l.b16 %v106
    %v457 = vunpack.c.h.b16 %v106
    %v458 = vunpack.c.l.b16 %v107
    %v459 = vunpack.c.h.b16 %v107
    %v460 = vpack.c.b16 %v336, %v332
    %v461 = vpack.c.b16 %v337, %v333
    %v462 = vpack.c.b16 %v338, %v334
    %v463 = vpack.c.b16 %v339, %v335
    %v464 = vpack.c.b16 %v344, %v340
    %v465 = vpack.c.b16 %v345, %v341
    %v466 = vpack.c.b16 %v346, %v342
    %v467 = vpack.c.b16 %v347, %v343
    %v468 = vpack.c.b16 %v352, %v348
    %v469 = vpack.c.b16 %v353, %v349
    %v470 = vpack.c.b16 %v354, %v350
    %v471 = vpack.c.b16 %v355, %v351
    %v472 = vpack.c.b16 %v360, %v356
    %v473 = vpack.c.b16 %v361, %v357
    %v474 = vpack.c.b16 %v362, %v358
    %v475 = vpack.c.b16 %v363, %v359
    %v476 = vpack.c.b16 %v368, %v364
    %v477 = vpack.c.b16 %v369, %v365
    %v478 = vpack.c.b16 %v370, %v366
    %v479 = vpack.c.b16 %v371, %v367
    %v480 = vpack.c.b16 %v376, %v372
    %v481 = vpack.c.b16 %v377, %v373
    %v482 = vpack.c.b16 %v378, %v374
    %v483 = vpack.c.b16 %v379, %v375
    %v484 = vpack.c.b16 %v384, %v380
    %v485 = vpack.c.b16 %v385, %v381
    %v486 = vpack.c.b16 %v386, %v382
    %v487 = vpack.c.b16 %v387, %v383
    %v488 = vpack.c.b16 %v392, %v388
    %v489 = vpack.c.b16 %v393, %v389
    %v490 = vpack.c.b16 %v394, %v390
    %v491 = vpack.c.b16 %v395, %v391
    %v492 = vpack.c.b16 %v400, %v396
    %v493 = vpack.c.b16 %v401, %v397
    %v494 = vpack.c.b16 %v402, %v398
    %v495 = vpack.c.b16 %v403, %v399
    %v496 = vpack.c.b16 %v408, %v404
    %v497 = vpack.c.b16 %v409, %v405
    %v498 = vpack.c.b16 %v410, %v406
    %v499 = vpack.c.b16 %v411, %v407
    %v500 = vpack.c.b16 %v416, %v412
    %v501 = vpack.c.b16 %v417, %v413
    %v502 = vpack.c.b16 %v418, %v414
    %v503 = vpack.c.b16 %v419, %v415
    %v504 = vpack.c.b16 %v424, %v420
    %v505 = vpack.c.b16 %v425, %v421
    %v506 = vpack.c.b16 %v426, %v422
    %v507 = vpack.c.b16 %v427, %v423
    %v508 = vpack.c.b16 %v432, %v428
    %v509 = vpack.c.b16 %v433, %v429
    %v510 = vpack.c.b16 %v434, %v430
    %v511 = vpack.c.b16 %v435, %v431
    %v512 = vpack.c.b16 %v440, %v436
    %v513 = vpack.c.b16 %v441, %v437
    %v514 = vpack.c.b16 %v442, %v438
    %v515 = vpack.c.b16 %v443, %v439
    %v516 = vpack.c.b16 %v448, %v444
    %v517 = vpack.c.b16 %v449, %v445
    %v518 = vpack.c.b16 %v450, %v446
    %v519 = vpack.c.b16 %v451, %v447
    %v520 = vpack.c.b16 %v456, %v452
    %v521 = vpack.c.b16 %v457, %v453
    %v522 = vpack.c.b16 %v458, %v454
    %v523 = vpack.c.b16 %v459, %v455
    %588 = vmatprep.subr.bf16.mxu0 %v461
    %589 = vmatpush1.bf16.msra.mxu0 %v460
    %590 = vmatprep.subr.bf16.mxu0 %v465
    %591 = vmatpush1.bf16.msra.mxu0 %v464
    %592 = vmatprep.subr.bf16.mxu0 %v469
    %593 = vmatpush1.bf16.msra.mxu0 %v468
    %594 = vmatprep.subr.bf16.mxu0 %v473
    %595 = vmatpush1.bf16.msra.mxu0 %v472
    %596 = vmatprep.subr.bf16.mxu0 %v477
    %597 = vmatpush1.bf16.msra.mxu0 %v476
    %598 = vmatprep.subr.bf16.mxu0 %v481
    %599 = vmatpush1.bf16.msra.mxu0 %v480
    %600 = vmatprep.subr.bf16.mxu0 %v485
    %601 = vmatpush1.bf16.msra.mxu0 %v484
    %602 = vmatprep.subr.bf16.mxu0 %v489
    %603 = vmatpush1.bf16.msra.mxu0 %v488
    %604 = vmatprep.subr.bf16.mxu0 %v493
    %605 = vmatpush1.bf16.msra.mxu0 %v492
    %606 = vmatprep.subr.bf16.mxu0 %v497
    %607 = vmatpush1.bf16.msra.mxu0 %v496
    %608 = vmatprep.subr.bf16.mxu0 %v501
    %609 = vmatpush1.bf16.msra.mxu0 %v500
    %610 = vmatprep.subr.bf16.mxu0 %v505
    %611 = vmatpush1.bf16.msra.mxu0 %v504
    %612 = vmatprep.subr.bf16.mxu0 %v509
    %613 = vmatpush1.bf16.msra.mxu0 %v508
    %614 = vmatprep.subr.bf16.mxu0 %v513
    %615 = vmatpush1.bf16.msra.mxu0 %v512
    %616 = vmatprep.subr.bf16.mxu0 %v517
    %617 = vmatpush1.bf16.msra.mxu0 %v516
    %618 = vmatprep.subr.bf16.mxu0 %v521
    %619 = vmatpush1.bf16.msra.mxu0 %v520
    %620 = vmatprep.mubr.bf16.mxu0 %v205
    %621 = vmatmul.mubr.bf16.gmra.mrb[0].mxu0 %v204
    %v622 = vpop.f32.mrb[0].mxu0
    %v623 = vadd.f32 0.0, %v622
    %v624 = vpop.f32.mrb[0].mxu0
    %v625 = vadd.f32 0.0, %v624
    %v626 = vpop.f32.mrb[0].mxu0
    %v627 = vadd.f32 0.0, %v626
    %v628 = vpop.f32.mrb[0].mxu0
    %v629 = vadd.f32 0.0, %v628
    %630 = vmatprep.mubr.bf16.mxu0 %v207
    %631 = vmatmul.mubr.bf16.gmra.mrb[0].mxu0 %v206
    %v632 = vpop.f32.mrb[0].mxu0
    %v633 = vadd.f32 0.0, %v632
    %v634 = vpop.f32.mrb[0].mxu0
    %v635 = vadd.f32 0.0, %v634
    %v636 = vpop.f32.mrb[0].mxu0
    %v637 = vadd.f32 0.0, %v636
    %v638 = vpop.f32.mrb[0].mxu0
    %v639 = vadd.f32 0.0, %v638
    %640 = vmatprep.mubr.bf16.mxu0 %v209
    %641 = vmatmul.mubr.bf16.gmra.mrb[0].mxu0 %v208
    %v642 = vpop.f32.mrb[0].mxu0
    %v643 = vadd.f32 0.0, %v642
    %v644 = vpop.f32.mrb[0].mxu0
    %v645 = vadd.f32 0.0, %v644
    %v646 = vpop.f32.mrb[0].mxu0
    %v647 = vadd.f32 0.0, %v646
    %v648 = vpop.f32.mrb[0].mxu0
    %v649 = vadd.f32 0.0, %v648
    %650 = vmatprep.mubr.bf16.mxu0 %v211
    %651 = vmatmul.mubr.bf16.gmra.mrb[0].mxu0 %v210
    %v652 = vpop.f32.mrb[0].mxu0
    %v653 = vadd.f32 0.0, %v652
    %v654 = vpop.f32.mrb[0].mxu0
    %v655 = vadd.f32 0.0, %v654
    %v656 = vpop.f32.mrb[0].mxu0
    %v657 = vadd.f32 0.0, %v656
    %v658 = vpop.f32.mrb[0].mxu0
    %v659 = vadd.f32 0.0, %v658
    %660 = vmatprep.mubr.bf16.mxu0 %v213
    %661 = vmatmul.mubr.bf16.gmra.mrb[0].mxu0 %v212
    %v662 = vpop.f32.mrb[0].mxu0
    %v663 = vadd.f32 0.0, %v662
    %v664 = vpop.f32.mrb[0].mxu0
    %v665 = vadd.f32 0.0, %v664
    %v666 = vpop.f32.mrb[0].mxu0
    %v667 = vadd.f32 0.0, %v666
    %v668 = vpop.f32.mrb[0].mxu0
    %v669 = vadd.f32 0.0, %v668
    %670 = vmatprep.mubr.bf16.mxu0 %v215
    %671 = vmatmul.mubr.bf16.gmra.mrb[0].mxu0 %v214
    %v672 = vpop.f32.mrb[0].mxu0
    %v673 = vadd.f32 0.0, %v672
    %v674 = vpop.f32.mrb[0].mxu0
    %v675 = vadd.f32 0.0, %v674
    %v676 = vpop.f32.mrb[0].mxu0
    %v677 = vadd.f32 0.0, %v676
    %v678 = vpop.f32.mrb[0].mxu0
    %v679 = vadd.f32 0.0, %v678
    %680 = vmatprep.mubr.bf16.mxu0 %v217
    %681 = vmatmul.mubr.bf16.gmra.mrb[0].mxu0 %v216
    %v682 = vpop.f32.mrb[0].mxu0
    %v683 = vadd.f32 0.0, %v682
    %v684 = vpop.f32.mrb[0].mxu0
    %v685 = vadd.f32 0.0, %v684
    %v686 = vpop.f32.mrb[0].mxu0
    %v687 = vadd.f32 0.0, %v686
    %v688 = vpop.f32.mrb[0].mxu0
    %v689 = vadd.f32 0.0, %v688
    %690 = vmatprep.mubr.bf16.mxu0 %v219
    %691 = vmatmul.mubr.bf16.gmra.mrb[0].mxu0 %v218
    %v692 = vpop.f32.mrb[0].mxu0
    %v693 = vadd.f32 0.0, %v692
    %v694 = vpop.f32.mrb[0].mxu0
    %v695 = vadd.f32 0.0, %v694
    %v696 = vpop.f32.mrb[0].mxu0
    %v697 = vadd.f32 0.0, %v696
    %v698 = vpop.f32.mrb[0].mxu0
    %v699 = vadd.f32 0.0, %v698
    %700 = vmatprep.mubr.bf16.mxu0 %v221
    %701 = vmatmul.mubr.bf16.gmra.mrb[0].mxu0 %v220
    %v702 = vpop.f32.mrb[0].mxu0
    %v703 = vadd.f32 0.0, %v702
    %v704 = vpop.f32.mrb[0].mxu0
    %v705 = vadd.f32 0.0, %v704
    %v706 = vpop.f32.mrb[0].mxu0
    %v707 = vadd.f32 0.0, %v706
    %v708 = vpop.f32.mrb[0].mxu0
    %v709 = vadd.f32 0.0, %v708
    %710 = vmatprep.mubr.bf16.mxu0 %v223
    %711 = vmatmul.mubr.bf16.gmra.mrb[0].mxu0 %v222
    %v712 = vpop.f32.mrb[0].mxu0
    %v713 = vadd.f32 0.0, %v712
    %v714 = vpop.f32.mrb[0].mxu0
    %v715 = vadd.f32 0.0, %v714
    %v716 = vpop.f32.mrb[0].mxu0
    %v717 = vadd.f32 0.0, %v716
    %v718 = vpop.f32.mrb[0].mxu0
    %v719 = vadd.f32 0.0, %v718
    %720 = vmatprep.mubr.bf16.mxu0 %v225
    %721 = vmatmul.mubr.bf16.gmra.mrb[0].mxu0 %v224
    %v722 = vpop.f32.mrb[0].mxu0
    %v723 = vadd.f32 0.0, %v722
    %v724 = vpop.f32.mrb[0].mxu0
    %v725 = vadd.f32 0.0, %v724
    %v726 = vpop.f32.mrb[0].mxu0
    %v727 = vadd.f32 0.0, %v726
    %v728 = vpop.f32.mrb[0].mxu0
    %v729 = vadd.f32 0.0, %v728
    %730 = vmatprep.mubr.bf16.mxu0 %v227
    %731 = vmatmul.mubr.bf16.gmra.mrb[0].mxu0 %v226
    %v732 = vpop.f32.mrb[0].mxu0
    %v733 = vadd.f32 0.0, %v732
    %v734 = vpop.f32.mrb[0].mxu0
    %v735 = vadd.f32 0.0, %v734
    %v736 = vpop.f32.mrb[0].mxu0
    %v737 = vadd.f32 0.0, %v736
    %v738 = vpop.f32.mrb[0].mxu0
    %v739 = vadd.f32 0.0, %v738
    %740 = vmatprep.mubr.bf16.mxu0 %v229
    %741 = vmatmul.mubr.bf16.gmra.mrb[0].mxu0 %v228
    %v742 = vpop.f32.mrb[0].mxu0
    %v743 = vadd.f32 0.0, %v742
    %v744 = vpop.f32.mrb[0].mxu0
    %v745 = vadd.f32 0.0, %v744
    %v746 = vpop.f32.mrb[0].mxu0
    %v747 = vadd.f32 0.0, %v746
    %v748 = vpop.f32.mrb[0].mxu0
    %v749 = vadd.f32 0.0, %v748
    %750 = vmatprep.mubr.bf16.mxu0 %v231
    %751 = vmatmul.mubr.bf16.gmra.mrb[0].mxu0 %v230
    %v752 = vpop.f32.mrb[0].mxu0
    %v753 = vadd.f32 0.0, %v752
    %v754 = vpop.f32.mrb[0].mxu0
    %v755 = vadd.f32 0.0, %v754
    %v756 = vpop.f32.mrb[0].mxu0
    %v757 = vadd.f32 0.0, %v756
    %v758 = vpop.f32.mrb[0].mxu0
    %v759 = vadd.f32 0.0, %v758
    %760 = vmatprep.mubr.bf16.mxu0 %v233
    %761 = vmatmul.mubr.bf16.gmra.mrb[0].mxu0 %v232
    %v762 = vpop.f32.mrb[0].mxu0
    %v763 = vadd.f32 0.0, %v762
    %v764 = vpop.f32.mrb[0].mxu0
    %v765 = vadd.f32 0.0, %v764
    %v766 = vpop.f32.mrb[0].mxu0
    %v767 = vadd.f32 0.0, %v766
    %v768 = vpop.f32.mrb[0].mxu0
    %v769 = vadd.f32 0.0, %v768
    %770 = vmatprep.mubr.bf16.mxu0 %v235
    %771 = vmatmul.mubr.bf16.gmra.mrb[0].mxu0 %v234
    %v772 = vpop.f32.mrb[0].mxu0
    %v773 = vadd.f32 0.0, %v772
    %v774 = vpop.f32.mrb[0].mxu0
    %v775 = vadd.f32 0.0, %v774
    %v776 = vpop.f32.mrb[0].mxu0
    %v777 = vadd.f32 0.0, %v776
    %v778 = vpop.f32.mrb[0].mxu0
    %v779 = vadd.f32 0.0, %v778
    %780 = vdwg.mxu0
    %781 = vmatprep.subr.bf16.mxu0 %v463
    %782 = vmatpush1.bf16.msra.mxu0 %v462
    %783 = vmatprep.subr.bf16.mxu0 %v467
    %784 = vmatpush1.bf16.msra.mxu0 %v466
    %785 = vmatprep.subr.bf16.mxu0 %v471
    %786 = vmatpush1.bf16.msra.mxu0 %v470
    %787 = vmatprep.subr.bf16.mxu0 %v475
    %788 = vmatpush1.bf16.msra.mxu0 %v474
    %789 = vmatprep.subr.bf16.mxu0 %v479
    %790 = vmatpush1.bf16.msra.mxu0 %v478
    %791 = vmatprep.subr.bf16.mxu0 %v483
    %792 = vmatpush1.bf16.msra.mxu0 %v482
    %793 = vmatprep.subr.bf16.mxu0 %v487
    %794 = vmatpush1.bf16.msra.mxu0 %v486
    %795 = vmatprep.subr.bf16.mxu0 %v491
    %796 = vmatpush1.bf16.msra.mxu0 %v490
    %797 = vmatprep.subr.bf16.mxu0 %v495
    %798 = vmatpush1.bf16.msra.mxu0 %v494
    %799 = vmatprep.subr.bf16.mxu0 %v499
    %800 = vmatpush1.bf16.msra.mxu0 %v498
    %801 = vmatprep.subr.bf16.mxu0 %v503
    %802 = vmatpush1.bf16.msra.mxu0 %v502
    %803 = vmatprep.subr.bf16.mxu0 %v507
    %804 = vmatpush1.bf16.msra.mxu0 %v506
    %805 = vmatprep.subr.bf16.mxu0 %v511
    %806 = vmatpush1.bf16.msra.mxu0 %v510
    %807 = vmatprep.subr.bf16.mxu0 %v515
    %808 = vmatpush1.bf16.msra.mxu0 %v514
    %809 = vmatprep.subr.bf16.mxu0 %v519
    %810 = vmatpush1.bf16.msra.mxu0 %v518
    %811 = vmatprep.subr.bf16.mxu0 %v523
    %812 = vmatpush1.bf16.msra.mxu0 %v522
    %813 = vmatprep.mubr.bf16.mxu0 %v205
    %814 = vmatmul.mubr.bf16.gmra.mrb[0].mxu0 %v204
    %v815 = vpop.f32.mrb[0].mxu0
    %v816 = vadd.f32 0.0, %v815
    %v817 = vpop.f32.mrb[0].mxu0
    %v818 = vadd.f32 0.0, %v817
    %v819 = vpop.f32.mrb[0].mxu0
    %v820 = vadd.f32 0.0, %v819
    %v821 = vpop.f32.mrb[0].mxu0
    %v822 = vadd.f32 0.0, %v821
    %823 = vmatprep.mubr.bf16.mxu0 %v207
    %824 = vmatmul.mubr.bf16.gmra.mrb[0].mxu0 %v206
    %v825 = vpop.f32.mrb[0].mxu0
    %v826 = vadd.f32 0.0, %v825
    %v827 = vpop.f32.mrb[0].mxu0
    %v828 = vadd.f32 0.0, %v827
    %v829 = vpop.f32.mrb[0].mxu0
    %v830 = vadd.f32 0.0, %v829
    %v831 = vpop.f32.mrb[0].mxu0
    %v832 = vadd.f32 0.0, %v831
    %833 = vmatprep.mubr.bf16.mxu0 %v209
    %834 = vmatmul.mubr.bf16.gmra.mrb[0].mxu0 %v208
    %v835 = vpop.f32.mrb[0].mxu0
    %v836 = vadd.f32 0.0, %v835
    %v837 = vpop.f32.mrb[0].mxu0
    %v838 = vadd.f32 0.0, %v837
    %v839 = vpop.f32.mrb[0].mxu0
    %v840 = vadd.f32 0.0, %v839
    %v841 = vpop.f32.mrb[0].mxu0
    %v842 = vadd.f32 0.0, %v841
    %843 = vmatprep.mubr.bf16.mxu0 %v211
    %844 = vmatmul.mubr.bf16.gmra.mrb[0].mxu0 %v210
    %v845 = vpop.f32.mrb[0].mxu0
    %v846 = vadd.f32 0.0, %v845
    %v847 = vpop.f32.mrb[0].mxu0
    %v848 = vadd.f32 0.0, %v847
    %v849 = vpop.f32.mrb[0].mxu0
    %v850 = vadd.f32 0.0, %v849
    %v851 = vpop.f32.mrb[0].mxu0
    %v852 = vadd.f32 0.0, %v851
    %853 = vmatprep.mubr.bf16.mxu0 %v213
    %854 = vmatmul.mubr.bf16.gmra.mrb[0].mxu0 %v212
    %v855 = vpop.f32.mrb[0].mxu0
    %v856 = vadd.f32 0.0, %v855
    %v857 = vpop.f32.mrb[0].mxu0
    %v858 = vadd.f32 0.0, %v857
    %v859 = vpop.f32.mrb[0].mxu0
    %v860 = vadd.f32 0.0, %v859
    %v861 = vpop.f32.mrb[0].mxu0
    %v862 = vadd.f32 0.0, %v861
    %863 = vmatprep.mubr.bf16.mxu0 %v215
    %864 = vmatmul.mubr.bf16.gmra.mrb[0].mxu0 %v214
    %v865 = vpop.f32.mrb[0].mxu0
    %v866 = vadd.f32 0.0, %v865
    %v867 = vpop.f32.mrb[0].mxu0
    %v868 = vadd.f32 0.0, %v867
    %v869 = vpop.f32.mrb[0].mxu0
    %v870 = vadd.f32 0.0, %v869
    %v871 = vpop.f32.mrb[0].mxu0
    %v872 = vadd.f32 0.0, %v871
    %873 = vmatprep.mubr.bf16.mxu0 %v217
    %874 = vmatmul.mubr.bf16.gmra.mrb[0].mxu0 %v216
    %v875 = vpop.f32.mrb[0].mxu0
    %v876 = vadd.f32 0.0, %v875
    %v877 = vpop.f32.mrb[0].mxu0
    %v878 = vadd.f32 0.0, %v877
    %v879 = vpop.f32.mrb[0].mxu0
    %v880 = vadd.f32 0.0, %v879
    %v881 = vpop.f32.mrb[0].mxu0
    %v882 = vadd.f32 0.0, %v881
    %883 = vmatprep.mubr.bf16.mxu0 %v219
    %884 = vmatmul.mubr.bf16.gmra.mrb[0].mxu0 %v218
    %v885 = vpop.f32.mrb[0].mxu0
    %v886 = vadd.f32 0.0, %v885
    %v887 = vpop.f32.mrb[0].mxu0
    %v888 = vadd.f32 0.0, %v887
    %v889 = vpop.f32.mrb[0].mxu0
    %v890 = vadd.f32 0.0, %v889
    %v891 = vpop.f32.mrb[0].mxu0
    %v892 = vadd.f32 0.0, %v891
    %893 = vmatprep.mubr.bf16.mxu0 %v221
    %894 = vmatmul.mubr.bf16.gmra.mrb[0].mxu0 %v220
    %v895 = vpop.f32.mrb[0].mxu0
    %v896 = vadd.f32 0.0, %v895
    %v897 = vpop.f32.mrb[0].mxu0
    %v898 = vadd.f32 0.0, %v897
    %v899 = vpop.f32.mrb[0].mxu0
    %v900 = vadd.f32 0.0, %v899
    %v901 = vpop.f32.mrb[0].mxu0
    %v902 = vadd.f32 0.0, %v901
    %903 = vmatprep.mubr.bf16.mxu0 %v223
    %904 = vmatmul.mubr.bf16.gmra.mrb[0].mxu0 %v222
    %v905 = vpop.f32.mrb[0].mxu0
    %v906 = vadd.f32 0.0, %v905
    %v907 = vpop.f32.mrb[0].mxu0
    %v908 = vadd.f32 0.0, %v907
    %v909 = vpop.f32.mrb[0].mxu0
    %v910 = vadd.f32 0.0, %v909
    %v911 = vpop.f32.mrb[0].mxu0
    %v912 = vadd.f32 0.0, %v911
    %913 = vmatprep.mubr.bf16.mxu0 %v225
    %914 = vmatmul.mubr.bf16.gmra.mrb[0].mxu0 %v224
    %v915 = vpop.f32.mrb[0].mxu0
    %v916 = vadd.f32 0.0, %v915
    %v917 = vpop.f32.mrb[0].mxu0
    %v918 = vadd.f32 0.0, %v917
    %v919 = vpop.f32.mrb[0].mxu0
    %v920 = vadd.f32 0.0, %v919
    %v921 = vpop.f32.mrb[0].mxu0
    %v922 = vadd.f32 0.0, %v921
    %923 = vmatprep.mubr.bf16.mxu0 %v227
    %924 = vmatmul.mubr.bf16.gmra.mrb[0].mxu0 %v226
    %v925 = vpop.f32.mrb[0].mxu0
    %v926 = vadd.f32 0.0, %v925
    %v927 = vpop.f32.mrb[0].mxu0
    %v928 = vadd.f32 0.0, %v927
    %v929 = vpop.f32.mrb[0].mxu0
    %v930 = vadd.f32 0.0, %v929
    %v931 = vpop.f32.mrb[0].mxu0
    %v932 = vadd.f32 0.0, %v931
    %933 = vmatprep.mubr.bf16.mxu0 %v229
    %934 = vmatmul.mubr.bf16.gmra.mrb[0].mxu0 %v228
    %v935 = vpop.f32.mrb[0].mxu0
    %v936 = vadd.f32 0.0, %v935
    %v937 = vpop.f32.mrb[0].mxu0
    %v938 = vadd.f32 0.0, %v937
    %v939 = vpop.f32.mrb[0].mxu0
    %v940 = vadd.f32 0.0, %v939
    %v941 = vpop.f32.mrb[0].mxu0
    %v942 = vadd.f32 0.0, %v941
    %943 = vmatprep.mubr.bf16.mxu0 %v231
    %944 = vmatmul.mubr.bf16.gmra.mrb[0].mxu0 %v230
    %v945 = vpop.f32.mrb[0].mxu0
    %v946 = vadd.f32 0.0, %v945
    %v947 = vpop.f32.mrb[0].mxu0
    %v948 = vadd.f32 0.0, %v947
    %v949 = vpop.f32.mrb[0].mxu0
    %v950 = vadd.f32 0.0, %v949
    %v951 = vpop.f32.mrb[0].mxu0
    %v952 = vadd.f32 0.0, %v951
    %953 = vmatprep.mubr.bf16.mxu0 %v233
    %954 = vmatmul.mubr.bf16.gmra.mrb[0].mxu0 %v232
    %v955 = vpop.f32.mrb[0].mxu0
    %v956 = vadd.f32 0.0, %v955
    %v957 = vpop.f32.mrb[0].mxu0
    %v958 = vadd.f32 0.0, %v957
    %v959 = vpop.f32.mrb[0].mxu0
    %v960 = vadd.f32 0.0, %v959
    %v961 = vpop.f32.mrb[0].mxu0
    %v962 = vadd.f32 0.0, %v961
    %963 = vmatprep.mubr.bf16.mxu0 %v235
    %964 = vmatmul.mubr.bf16.gmra.mrb[0].mxu0 %v234
    %v965 = vpop.f32.mrb[0].mxu0
    %v966 = vadd.f32 0.0, %v965
    %v967 = vpop.f32.mrb[0].mxu0
    %v968 = vadd.f32 0.0, %v967
    %v969 = vpop.f32.mrb[0].mxu0
    %v970 = vadd.f32 0.0, %v969
    %v971 = vpop.f32.mrb[0].mxu0
    %v972 = vadd.f32 0.0, %v971
    %973 = vdwg.mxu0
    %974 = vst [vmem:[#allocation2] sm:$0xff] %v623
    %975 = vst [vmem:[#allocation2 + $0x8] sm:$0xff] %v625
    %976 = vst [vmem:[#allocation2 + $0x10] sm:$0xff] %v816
    %977 = vst [vmem:[#allocation2 + $0x18] sm:$0xff] %v818
    %978 = vst [vmem:[#allocation2 + $0x20] sm:$0xff] %v627
    %979 = vst [vmem:[#allocation2 + $0x28] sm:$0xff] %v629
    %980 = vst [vmem:[#allocation2 + $0x30] sm:$0xff] %v820
    %981 = vst [vmem:[#allocation2 + $0x38] sm:$0xff] %v822
    %982 = vst [vmem:[#allocation2 + $0x40] sm:$0xff] %v633
    %983 = vst [vmem:[#allocation2 + $0x48] sm:$0xff] %v635
    %984 = vst [vmem:[#allocation2 + $0x50] sm:$0xff] %v826
    %985 = vst [vmem:[#allocation2 + $0x58] sm:$0xff] %v828
    %986 = vst [vmem:[#allocation2 + $0x60] sm:$0xff] %v637
    %987 = vst [vmem:[#allocation2 + $0x68] sm:$0xff] %v639
    %988 = vst [vmem:[#allocation2 + $0x70] sm:$0xff] %v830
    %989 = vst [vmem:[#allocation2 + $0x78] sm:$0xff] %v832
    %990 = vst [vmem:[#allocation2 + $0x80] sm:$0xff] %v643
    %991 = vst [vmem:[#allocation2 + $0x88] sm:$0xff] %v645
    %992 = vst [vmem:[#allocation2 + $0x90] sm:$0xff] %v836
    %993 = vst [vmem:[#allocation2 + $0x98] sm:$0xff] %v838
    %994 = vst [vmem:[#allocation2 + $0xa0] sm:$0xff] %v647
    %995 = vst [vmem:[#allocation2 + $0xa8] sm:$0xff] %v649
    %996 = vst [vmem:[#allocation2 + $0xb0] sm:$0xff] %v840
    %997 = vst [vmem:[#allocation2 + $0xb8] sm:$0xff] %v842
    %998 = vst [vmem:[#allocation2 + $0xc0] sm:$0xff] %v653
    %999 = vst [vmem:[#allocation2 + $0xc8] sm:$0xff] %v655
    %1000 = vst [vmem:[#allocation2 + $0xd0] sm:$0xff] %v846
    %1001 = vst [vmem:[#allocation2 + $0xd8] sm:$0xff] %v848
    %1002 = vst [vmem:[#allocation2 + $0xe0] sm:$0xff] %v657
    %1003 = vst [vmem:[#allocation2 + $0xe8] sm:$0xff] %v659
    %1004 = vst [vmem:[#allocation2 + $0xf0] sm:$0xff] %v850
    %1005 = vst [vmem:[#allocation2 + $0xf8] sm:$0xff] %v852
    %1006 = vst [vmem:[#allocation2 + $0x100] sm:$0xff] %v663
    %1007 = vst [vmem:[#allocation2 + $0x108] sm:$0xff] %v665
    %1008 = vst [vmem:[#allocation2 + $0x110] sm:$0xff] %v856
    %1009 = vst [vmem:[#allocation2 + $0x118] sm:$0xff] %v858
    %1010 = vst [vmem:[#allocation2 + $0x120] sm:$0xff] %v667
    %1011 = vst [vmem:[#allocation2 + $0x128] sm:$0xff] %v669
    %1012 = vst [vmem:[#allocation2 + $0x130] sm:$0xff] %v860
    %1013 = vst [vmem:[#allocation2 + $0x138] sm:$0xff] %v862
    %1014 = vst [vmem:[#allocation2 + $0x140] sm:$0xff] %v673
    %1015 = vst [vmem:[#allocation2 + $0x148] sm:$0xff] %v675
    %1016 = vst [vmem:[#allocation2 + $0x150] sm:$0xff] %v866
    %1017 = vst [vmem:[#allocation2 + $0x158] sm:$0xff] %v868
    %1018 = vst [vmem:[#allocation2 + $0x160] sm:$0xff] %v677
    %1019 = vst [vmem:[#allocation2 + $0x168] sm:$0xff] %v679
    %1020 = vst [vmem:[#allocation2 + $0x170] sm:$0xff] %v870
    %1021 = vst [vmem:[#allocation2 + $0x178] sm:$0xff] %v872
    %1022 = vst [vmem:[#allocation2 + $0x180] sm:$0xff] %v683
    %1023 = vst [vmem:[#allocation2 + $0x188] sm:$0xff] %v685
    %1024 = vst [vmem:[#allocation2 + $0x190] sm:$0xff] %v876
    %1025 = vst [vmem:[#allocation2 + $0x198] sm:$0xff] %v878
    %1026 = vst [vmem:[#allocation2 + $0x1a0] sm:$0xff] %v687
    %1027 = vst [vmem:[#allocation2 + $0x1a8] sm:$0xff] %v689
    %1028 = vst [vmem:[#allocation2 + $0x1b0] sm:$0xff] %v880
    %1029 = vst [vmem:[#allocation2 + $0x1b8] sm:$0xff] %v882
    %1030 = vst [vmem:[#allocation2 + $0x1c0] sm:$0xff] %v693
    %1031 = vst [vmem:[#allocation2 + $0x1c8] sm:$0xff] %v695
    %1032 = vst [vmem:[#allocation2 + $0x1d0] sm:$0xff] %v886
    %1033 = vst [vmem:[#allocation2 + $0x1d8] sm:$0xff] %v888
    %1034 = vst [vmem:[#allocation2 + $0x1e0] sm:$0xff] %v697
    %1035 = vst [vmem:[#allocation2 + $0x1e8] sm:$0xff] %v699
    %1036 = vst [vmem:[#allocation2 + $0x1f0] sm:$0xff] %v890
    %1037 = vst [vmem:[#allocation2 + $0x1f8] sm:$0xff] %v892
    %1038 = vst [vmem:[#allocation2 + $0x200] sm:$0xff] %v703
    %1039 = vst [vmem:[#allocation2 + $0x208] sm:$0xff] %v705
    %1040 = vst [vmem:[#allocation2 + $0x210] sm:$0xff] %v896
    %1041 = vst [vmem:[#allocation2 + $0x218] sm:$0xff] %v898
    %1042 = vst [vmem:[#allocation2 + $0x220] sm:$0xff] %v707
    %1043 = vst [vmem:[#allocation2 + $0x228] sm:$0xff] %v709
    %1044 = vst [vmem:[#allocation2 + $0x230] sm:$0xff] %v900
    %1045 = vst [vmem:[#allocation2 + $0x238] sm:$0xff] %v902
    %1046 = vst [vmem:[#allocation2 + $0x240] sm:$0xff] %v713
    %1047 = vst [vmem:[#allocation2 + $0x248] sm:$0xff] %v715
    %1048 = vst [vmem:[#allocation2 + $0x250] sm:$0xff] %v906
    %1049 = vst [vmem:[#allocation2 + $0x258] sm:$0xff] %v908
    %1050 = vst [vmem:[#allocation2 + $0x260] sm:$0xff] %v717
    %1051 = vst [vmem:[#allocation2 + $0x268] sm:$0xff] %v719
    %1052 = vst [vmem:[#allocation2 + $0x270] sm:$0xff] %v910
    %1053 = vst [vmem:[#allocation2 + $0x278] sm:$0xff] %v912
    %1054 = vst [vmem:[#allocation2 + $0x280] sm:$0xff] %v723
    %1055 = vst [vmem:[#allocation2 + $0x288] sm:$0xff] %v725
    %1056 = vst [vmem:[#allocation2 + $0x290] sm:$0xff] %v916
    %1057 = vst [vmem:[#allocation2 + $0x298] sm:$0xff] %v918
    %1058 = vst [vmem:[#allocation2 + $0x2a0] sm:$0xff] %v727
    %1059 = vst [vmem:[#allocation2 + $0x2a8] sm:$0xff] %v729
    %1060 = vst [vmem:[#allocation2 + $0x2b0] sm:$0xff] %v920
    %1061 = vst [vmem:[#allocation2 + $0x2b8] sm:$0xff] %v922
    %1062 = vst [vmem:[#allocation2 + $0x2c0] sm:$0xff] %v733
    %1063 = vst [vmem:[#allocation2 + $0x2c8] sm:$0xff] %v735
    %1064 = vst [vmem:[#allocation2 + $0x2d0] sm:$0xff] %v926
    %1065 = vst [vmem:[#allocation2 + $0x2d8] sm:$0xff] %v928
    %1066 = vst [vmem:[#allocation2 + $0x2e0] sm:$0xff] %v737
    %1067 = vst [vmem:[#allocation2 + $0x2e8] sm:$0xff] %v739
    %1068 = vst [vmem:[#allocation2 + $0x2f0] sm:$0xff] %v930
    %1069 = vst [vmem:[#allocation2 + $0x2f8] sm:$0xff] %v932
    %1070 = vst [vmem:[#allocation2 + $0x300] sm:$0xff] %v743
    %1071 = vst [vmem:[#allocation2 + $0x308] sm:$0xff] %v745
    %1072 = vst [vmem:[#allocation2 + $0x310] sm:$0xff] %v936
    %1073 = vst [vmem:[#allocation2 + $0x318] sm:$0xff] %v938
    %1074 = vst [vmem:[#allocation2 + $0x320] sm:$0xff] %v747
    %1075 = vst [vmem:[#allocation2 + $0x328] sm:$0xff] %v749
    %1076 = vst [vmem:[#allocation2 + $0x330] sm:$0xff] %v940
    %1077 = vst [vmem:[#allocation2 + $0x338] sm:$0xff] %v942
    %1078 = vst [vmem:[#allocation2 + $0x340] sm:$0xff] %v753
    %1079 = vst [vmem:[#allocation2 + $0x348] sm:$0xff] %v755
    %1080 = vst [vmem:[#allocation2 + $0x350] sm:$0xff] %v946
    %1081 = vst [vmem:[#allocation2 + $0x358] sm:$0xff] %v948
    %1082 = vst [vmem:[#allocation2 + $0x360] sm:$0xff] %v757
    %1083 = vst [vmem:[#allocation2 + $0x368] sm:$0xff] %v759
    %1084 = vst [vmem:[#allocation2 + $0x370] sm:$0xff] %v950
    %1085 = vst [vmem:[#allocation2 + $0x378] sm:$0xff] %v952
    %1086 = vst [vmem:[#allocation2 + $0x380] sm:$0xff] %v763
    %1087 = vst [vmem:[#allocation2 + $0x388] sm:$0xff] %v765
    %1088 = vst [vmem:[#allocation2 + $0x390] sm:$0xff] %v956
    %1089 = vst [vmem:[#allocation2 + $0x398] sm:$0xff] %v958
    %1090 = vst [vmem:[#allocation2 + $0x3a0] sm:$0xff] %v767
    %1091 = vst [vmem:[#allocation2 + $0x3a8] sm:$0xff] %v769
    %1092 = vst [vmem:[#allocation2 + $0x3b0] sm:$0xff] %v960
    %1093 = vst [vmem:[#allocation2 + $0x3b8] sm:$0xff] %v962
    %1094 = vst [vmem:[#allocation2 + $0x3c0] sm:$0xff] %v773
    %1095 = vst [vmem:[#allocation2 + $0x3c8] sm:$0xff] %v775
    %1096 = vst [vmem:[#allocation2 + $0x3d0] sm:$0xff] %v966
    %1097 = vst [vmem:[#allocation2 + $0x3d8] sm:$0xff] %v968
    %1098 = vst [vmem:[#allocation2 + $0x3e0] sm:$0xff] %v777
    %1099 = vst [vmem:[#allocation2 + $0x3e8] sm:$0xff] %v779
    %1100 = vst [vmem:[#allocation2 + $0x3f0] sm:$0xff] %v970
    %1101 = vst [vmem:[#allocation2 + $0x3f8] sm:$0xff] %v972
    // Predicated region
    $region10: #{transformer_forward.3} parent=1 // pred_check
      _
    $region11: #{transformer_forward.3} parent=1 // pred_check_branch
      %1103 = sbr.rel (0) target = $region13
    $region12: #{transformer_forward.3} parent=1 // pred_region
      %s1105 = ssub.s32 16384, 16384
      %1106 = vsyncadd [#allocation3], %s1105
      %s1107 = sshll.u32 [#allocation2], 4
      %s1108 = int_to_ptr.vmem [resolvable:$true] %s1107
      %1113 = dma.vmem_to_hbm [thread:$0]  %s1108, 16384, %s2, [#allocation3], 512, 512, 32
    $region13: #{transformer_forward.3} parent=1 // pred_fallthru
      _
    // Predicated region
    $region14: #{transformer_forward.3} parent=1 // pred_check
      _
    $region15: #{transformer_forward.3} parent=1 // pred_check_branch
      %1115 = sbr.rel (0) target = $region17
    $region16: #{transformer_forward.3} parent=1 // pred_region
      %1116 = dma.done [#allocation3], 16384
    $region17: #{transformer_forward.3} parent=1 // pred_fallthru
      _
    %1117 = vsyncpa [#allocation3], 1

// kernel: transformer_forward.2
$region0: #{transformer_forward.2}
  #allocation0 [shape = 'u32[]', space=smem, size = 0x4, offset = 0x4, fixed_abs, tag = 'smem constant byte address 0x4 - core index']
  #allocation1 [shape = 'u32[144,128]{1,0:T(1,128)}', space=vmem, size = 0x12000, scoped, tag = 'internal scratch']
  #allocation2 [shape = 'f32[256,256]{1,0:T(8,128)}', space=vmem, size = 0x40000, scoped, tag = 'scratch operand']
  %s0 = inlined_call_operand.vmem [shape: f32[256,256], index: 0, kind: input, shape index: {}]
  %s1 = inlined_call_operand.vmem [shape: f32[2,128,128], index: 1, kind: input, shape index: {}]
  %s2 = inlined_call_operand.vmem [shape: f32[2,128,128], index: 2, kind: input, shape index: {}]
  %s3 = inlined_call_operand.vmem [shape: f32[2,1,256], index: 3, kind: input, shape index: {}]
  %s4 = inlined_call_operand.vmem [shape: f32[2,1,256], index: 4, kind: input, shape index: {}]
  %s5 = inlined_call_operand.vmem [shape: f32[1,256], index: 5, kind: input, shape index: {}]
  %s6 = inlined_call_operand.vmem [shape: bf16[2,256,768], index: 6, kind: input, shape index: {}]
  %s7 = inlined_call_operand.vmem [shape: bf16[2,256,256], index: 7, kind: input, shape index: {}]
  %s8 = inlined_call_operand.vmem [shape: bf16[2,256,1024], index: 8, kind: input, shape index: {}]
  %s9 = inlined_call_operand.vmem [shape: bf16[2,512,256], index: 9, kind: input, shape index: {}]
  %s10 = inlined_call_operand.vmem [shape: bf16[256,256], index: 10, kind: output, shape index: {}]
  %s11 = sld [smem:[#allocation0]]
  $region81: #{transformer_forward.2} parent=0
    _
  %s13 = ssub.s32 1, %s11
  %s14 = scalar_select 0, %s13, %s11
  loop: start=0, step=1, limit=4
  $region2: #{transformer_forward.2} parent=0 // loop_pre_header
    _
  $region3: #{transformer_forward.2} parent=0 // loop_header
    %s16 = sphi 0, %s20
    %p17 = scmp.ge.s32.totalorder %s16, 4
    %s24 = sphi 0, %s24
    %s26 = sphi 0, %s24
    %s27 = sphi 0, %s26
    %s41 = sphi 0, %s27
    %s45 = sphi 0, %s45
    %s47 = sphi 0, %s45
    %s48 = sphi 0, %s47
    %s62 = sphi 0, %s48
    %s66 = sphi 0, %s66
    %s68 = sphi 0, %s66
    %s69 = sphi 0, %s68
    %s83 = sphi 0, %s69
    %s89 = sphi 0, %s91
    %s92 = sphi 0, %s89
    %s93 = sphi 0, %s92
    %s109 = sphi 0, %s93
    %s115 = sphi 0, %s117
    %s118 = sphi 0, %s115
    %s119 = sphi 0, %s118
    %s135 = sphi 0, %s119
    %s139 = sphi 0, %s139
    %s141 = sphi 0, %s139
    %s142 = sphi 0, %s141
    %s156 = sphi 0, %s142
    %s162 = sphi 0, %s164
    %s165 = sphi 0, %s162
    %s166 = sphi 0, %s165
    %s182 = sphi 0, %s166
    %s188 = sphi 0, %s190
    %s191 = sphi 0, %s188
    %s192 = sphi 0, %s191
    %s208 = sphi 0, %s192
    %s214 = sphi 0, %s216
    %s217 = sphi 0, %s214
    %s218 = sphi 0, %s217
    %s234 = sphi 0, %s218
    %s240 = sphi 0, %s242
    %s243 = sphi 0, %s240
    %s244 = sphi 0, %s243
    %s260 = sphi 0, %s244
    %s264 = sphi 0, %s264
    %s266 = sphi 0, %s264
    %s267 = sphi 0, %s266
    %s281 = sphi 0, %s267
  $region4: #{transformer_forward.2} parent=0 // loop_header_branch
    %19 = sbr.rel (%p17) target = $region8
  $region5: #{transformer_forward.2} parent=0 // loop_body
    %s21 = ssub.s32 %s16, 1
    %s22 = ssub.s32 %s16, 2
    %s23 = sadd.s32 %s16, 1
    %s25 = sadd.s32 %s24, 1
    %p28 = scmp.eq.s32.totalorder %s16, 1
    %p29 = scmp.ne.s32.totalorder %s24, %s26
    %p30 = scmp.eq.s32.totalorder %s16, 0
    %p31 = por %p29, %p30
    %p32 = scmp.ne.s32.totalorder %s24, %s26
    %p33 = scmp.eq.s32.totalorder %s21, 1
    %p34 = por %p32, %p33
    %p35 = scmp.ne.s32.totalorder %s26, %s27
    %p36 = scmp.eq.s32.totalorder %s21, 0
    %p37 = por %p35, %p36
    %p38 = scmp.ne.s32.totalorder %s26, %s27
    %p39 = scmp.eq.s32.totalorder %s22, 1
    %p40 = por %p38, %p39
    %p42 = scmp.ne.s32.totalorder %s27, %s41
    %p43 = scmp.eq.s32.totalorder %s22, 0
    %p44 = por %p42, %p43
    %s46 = sadd.s32 %s45, 1
    %p49 = scmp.eq.s32.totalorder %s16, 1
    %p50 = scmp.ne.s32.totalorder %s45, %s47
    %p51 = scmp.eq.s32.totalorder %s16, 0
    %p52 = por %p50, %p51
    %p53 = scmp.ne.s32.totalorder %s45, %s47
    %p54 = scmp.eq.s32.totalorder %s21, 1
    %p55 = por %p53, %p54
    %p56 = scmp.ne.s32.totalorder %s47, %s48
    %p57 = scmp.eq.s32.totalorder %s21, 0
    %p58 = por %p56, %p57
    %p59 = scmp.ne.s32.totalorder %s47, %s48
    %p60 = scmp.eq.s32.totalorder %s22, 1
    %p61 = por %p59, %p60
    %p63 = scmp.ne.s32.totalorder %s48, %s62
    %p64 = scmp.eq.s32.totalorder %s22, 0
    %p65 = por %p63, %p64
    %s67 = sadd.s32 %s66, 1
    %p70 = scmp.eq.s32.totalorder %s16, 1
    %p71 = scmp.ne.s32.totalorder %s66, %s68
    %p72 = scmp.eq.s32.totalorder %s16, 0
    %p73 = por %p71, %p72
    %p74 = scmp.ne.s32.totalorder %s66, %s68
    %p75 = scmp.eq.s32.totalorder %s21, 1
    %p76 = por %p74, %p75
    %p77 = scmp.ne.s32.totalorder %s68, %s69
    %p78 = scmp.eq.s32.totalorder %s21, 0
    %p79 = por %p77, %p78
    %p80 = scmp.ne.s32.totalorder %s68, %s69
    %p81 = scmp.eq.s32.totalorder %s22, 1
    %p82 = por %p80, %p81
    %p84 = scmp.ne.s32.totalorder %s69, %s83
    %p85 = scmp.eq.s32.totalorder %s22, 0
    %p86 = por %p84, %p85
    %s87 = ssub.s32 %s16, %s23
    %p88 = scmp.eq.s32.totalorder %s87, 0
    %s90 = sadd.s32 %s89, 1
    %s91 = scalar_select %p88, %s89, %s90
    %p94 = pneg %p88
    %p95 = scmp.eq.s32.totalorder %s16, 1
    %p96 = por %p94, %p95
    %p97 = scmp.ne.s32.totalorder %s89, %s92
    %p98 = scmp.eq.s32.totalorder %s16, 0
    %p99 = por %p97, %p98
    %p100 = scmp.ne.s32.totalorder %s89, %s92
    %p101 = scmp.eq.s32.totalorder %s21, 1
    %p102 = por %p100, %p101
    %p103 = scmp.ne.s32.totalorder %s92, %s93
    %p104 = scmp.eq.s32.totalorder %s21, 0
    %p105 = por %p103, %p104
    %p106 = scmp.ne.s32.totalorder %s92, %s93
    %p107 = scmp.eq.s32.totalorder %s22, 1
    %p108 = por %p106, %p107
    %p110 = scmp.ne.s32.totalorder %s93, %s109
    %p111 = scmp.eq.s32.totalorder %s22, 0
    %p112 = por %p110, %p111
    %s113 = ssub.s32 %s16, %s23
    %p114 = scmp.eq.s32.totalorder %s113, 0
    %s116 = sadd.s32 %s115, 1
    %s117 = scalar_select %p114, %s115, %s116
    %p120 = pneg %p114
    %p121 = scmp.eq.s32.totalorder %s16, 1
    %p122 = por %p120, %p121
    %p123 = scmp.ne.s32.totalorder %s115, %s118
    %p124 = scmp.eq.s32.totalorder %s16, 0
    %p125 = por %p123, %p124
    %p126 = scmp.ne.s32.totalorder %s115, %s118
    %p127 = scmp.eq.s32.totalorder %s21, 1
    %p128 = por %p126, %p127
    %p129 = scmp.ne.s32.totalorder %s118, %s119
    %p130 = scmp.eq.s32.totalorder %s21, 0
    %p131 = por %p129, %p130
    %p132 = scmp.ne.s32.totalorder %s118, %s119
    %p133 = scmp.eq.s32.totalorder %s22, 1
    %p134 = por %p132, %p133
    %p136 = scmp.ne.s32.totalorder %s119, %s135
    %p137 = scmp.eq.s32.totalorder %s22, 0
    %p138 = por %p136, %p137
    %s140 = sadd.s32 %s139, 1
    %p143 = scmp.eq.s32.totalorder %s16, 1
    %p144 = scmp.ne.s32.totalorder %s139, %s141
    %p145 = scmp.eq.s32.totalorder %s16, 0
    %p146 = por %p144, %p145
    %p147 = scmp.ne.s32.totalorder %s139, %s141
    %p148 = scmp.eq.s32.totalorder %s21, 1
    %p149 = por %p147, %p148
    %p150 = scmp.ne.s32.totalorder %s141, %s142
    %p151 = scmp.eq.s32.totalorder %s21, 0
    %p152 = por %p150, %p151
    %p153 = scmp.ne.s32.totalorder %s141, %s142
    %p154 = scmp.eq.s32.totalorder %s22, 1
    %p155 = por %p153, %p154
    %p157 = scmp.ne.s32.totalorder %s142, %s156
    %p158 = scmp.eq.s32.totalorder %s22, 0
    %p159 = por %p157, %p158
    %s160 = ssub.s32 %s16, %s23
    %p161 = scmp.eq.s32.totalorder %s160, 0
    %s163 = sadd.s32 %s162, 1
    %s164 = scalar_select %p161, %s162, %s163
    %p167 = pneg %p161
    %p168 = scmp.eq.s32.totalorder %s16, 1
    %p169 = por %p167, %p168
    %p170 = scmp.ne.s32.totalorder %s162, %s165
    %p171 = scmp.eq.s32.totalorder %s16, 0
    %p172 = por %p170, %p171
    %p173 = scmp.ne.s32.totalorder %s162, %s165
    %p174 = scmp.eq.s32.totalorder %s21, 1
    %p175 = por %p173, %p174
    %p176 = scmp.ne.s32.totalorder %s165, %s166
    %p177 = scmp.eq.s32.totalorder %s21, 0
    %p178 = por %p176, %p177
    %p179 = scmp.ne.s32.totalorder %s165, %s166
    %p180 = scmp.eq.s32.totalorder %s22, 1
    %p181 = por %p179, %p180
    %p183 = scmp.ne.s32.totalorder %s166, %s182
    %p184 = scmp.eq.s32.totalorder %s22, 0
    %p185 = por %p183, %p184
    %s186 = ssub.s32 %s16, %s23
    %p187 = scmp.eq.s32.totalorder %s186, 0
    %s189 = sadd.s32 %s188, 1
    %s190 = scalar_select %p187, %s188, %s189
    %p193 = pneg %p187
    %p194 = scmp.eq.s32.totalorder %s16, 1
    %p195 = por %p193, %p194
    %p196 = scmp.ne.s32.totalorder %s188, %s191
    %p197 = scmp.eq.s32.totalorder %s16, 0
    %p198 = por %p196, %p197
    %p199 = scmp.ne.s32.totalorder %s188, %s191
    %p200 = scmp.eq.s32.totalorder %s21, 1
    %p201 = por %p199, %p200
    %p202 = scmp.ne.s32.totalorder %s191, %s192
    %p203 = scmp.eq.s32.totalorder %s21, 0
    %p204 = por %p202, %p203
    %p205 = scmp.ne.s32.totalorder %s191, %s192
    %p206 = scmp.eq.s32.totalorder %s22, 1
    %p207 = por %p205, %p206
    %p209 = scmp.ne.s32.totalorder %s192, %s208
    %p210 = scmp.eq.s32.totalorder %s22, 0
    %p211 = por %p209, %p210
    %s212 = ssub.s32 %s16, %s23
    %p213 = scmp.eq.s32.totalorder %s212, 0
    %s215 = sadd.s32 %s214, 1
    %s216 = scalar_select %p213, %s214, %s215
    %p219 = pneg %p213
    %p220 = scmp.eq.s32.totalorder %s16, 1
    %p221 = por %p219, %p220
    %p222 = scmp.ne.s32.totalorder %s214, %s217
    %p223 = scmp.eq.s32.totalorder %s16, 0
    %p224 = por %p222, %p223
    %p225 = scmp.ne.s32.totalorder %s214, %s217
    %p226 = scmp.eq.s32.totalorder %s21, 1
    %p227 = por %p225, %p226
    %p228 = scmp.ne.s32.totalorder %s217, %s218
    %p229 = scmp.eq.s32.totalorder %s21, 0
    %p230 = por %p228, %p229
    %p231 = scmp.ne.s32.totalorder %s217, %s218
    %p232 = scmp.eq.s32.totalorder %s22, 1
    %p233 = por %p231, %p232
    %p235 = scmp.ne.s32.totalorder %s218, %s234
    %p236 = scmp.eq.s32.totalorder %s22, 0
    %p237 = por %p235, %p236
    %s238 = ssub.s32 %s16, %s23
    %p239 = scmp.eq.s32.totalorder %s238, 0
    %s241 = sadd.s32 %s240, 1
    %s242 = scalar_select %p239, %s240, %s241
    %p245 = pneg %p239
    %p246 = scmp.eq.s32.totalorder %s16, 1
    %p247 = por %p245, %p246
    %p248 = scmp.ne.s32.totalorder %s240, %s243
    %p249 = scmp.eq.s32.totalorder %s16, 0
    %p250 = por %p248, %p249
    %p251 = scmp.ne.s32.totalorder %s240, %s243
    %p252 = scmp.eq.s32.totalorder %s21, 1
    %p253 = por %p251, %p252
    %p254 = scmp.ne.s32.totalorder %s243, %s244
    %p255 = scmp.eq.s32.totalorder %s21, 0
    %p256 = por %p254, %p255
    %p257 = scmp.ne.s32.totalorder %s243, %s244
    %p258 = scmp.eq.s32.totalorder %s22, 1
    %p259 = por %p257, %p258
    %p261 = scmp.ne.s32.totalorder %s244, %s260
    %p262 = scmp.eq.s32.totalorder %s22, 0
    %p263 = por %p261, %p262
    %s265 = sadd.s32 %s264, 1
    %p268 = scmp.eq.s32.totalorder %s16, 1
    %p269 = scmp.ne.s32.totalorder %s264, %s266
    %p270 = scmp.eq.s32.totalorder %s16, 0
    %p271 = por %p269, %p270
    %p272 = scmp.ne.s32.totalorder %s264, %s266
    %p273 = scmp.eq.s32.totalorder %s21, 1
    %p274 = por %p272, %p273
    %p275 = scmp.ne.s32.totalorder %s266, %s267
    %p276 = scmp.eq.s32.totalorder %s21, 0
    %p277 = por %p275, %p276
    %p278 = scmp.ne.s32.totalorder %s266, %s267
    %p279 = scmp.eq.s32.totalorder %s22, 1
    %p280 = por %p278, %p279
    %p282 = scmp.ne.s32.totalorder %s267, %s281
    %p283 = scmp.eq.s32.totalorder %s22, 0
    %p284 = por %p282, %p283
    %p285 = scmp.le.s32.totalorder 1, %s16
    %p286 = scmp.lt.s32.totalorder %s16, 3
    %p287 = pnand %p285, %p286
    %p288 = pneg %p287
    // Predicated region
    $region9: #{transformer_forward.2} parent=5 // pred_check
      _
    $region10: #{transformer_forward.2} parent=5 // pred_check_branch
      %290 = sbr.rel (%p287) target = $region12
    $region11: #{transformer_forward.2} parent=5 // pred_region
      %s291 = ssub.s32 %s16, 1
      // Predicated region
      $region13: #{transformer_forward.2} parent=11 // pred_check
        %p292 = pneg %p37
      $region14: #{transformer_forward.2} parent=11 // pred_check_branch
        %294 = sbr.rel (%p292) target = $region16
      $region15: #{transformer_forward.2} parent=11 // pred_region
        _
      $region16: #{transformer_forward.2} parent=11 // pred_fallthru
        _
      // Predicated region
      $region17: #{transformer_forward.2} parent=11 // pred_check
        %p295 = pneg %p58
      $region18: #{transformer_forward.2} parent=11 // pred_check_branch
        %297 = sbr.rel (%p295) target = $region20
      $region19: #{transformer_forward.2} parent=11 // pred_region
        _
      $region20: #{transformer_forward.2} parent=11 // pred_fallthru
        _
      // Predicated region
      $region21: #{transformer_forward.2} parent=11 // pred_check
        %p298 = pneg %p79
      $region22: #{transformer_forward.2} parent=11 // pred_check_branch
        %300 = sbr.rel (%p298) target = $region24
      $region23: #{transformer_forward.2} parent=11 // pred_region
        _
      $region24: #{transformer_forward.2} parent=11 // pred_fallthru
        _
      // Predicated region
      $region25: #{transformer_forward.2} parent=11 // pred_check
        %p301 = pneg %p152
      $region26: #{transformer_forward.2} parent=11 // pred_check_branch
        %303 = sbr.rel (%p301) target = $region28
      $region27: #{transformer_forward.2} parent=11 // pred_region
        _
      $region28: #{transformer_forward.2} parent=11 // pred_fallthru
        _
    $region12: #{transformer_forward.2} parent=5 // pred_fallthru
      _
    %p304 = scmp.lt.s32.totalorder %s16, 2
    // Predicated region
    $region29: #{transformer_forward.2} parent=5 // pred_check
      %p305 = pneg %p304
    $region30: #{transformer_forward.2} parent=5 // pred_check_branch
      %307 = sbr.rel (%p305) target = $region32
    $region31: #{transformer_forward.2} parent=5 // pred_region
      // Predicated region
      $region33: #{transformer_forward.2} parent=31 // pred_check
        %p308 = pneg %p99
      $region34: #{transformer_forward.2} parent=31 // pred_check_branch
        %310 = sbr.rel (%p308) target = $region36
      $region35: #{transformer_forward.2} parent=31 // pred_region
        %p311 = scmp.lt.s32.totalorder %s16, 1
        %s312 = scalar_select %p311, %s16, 1
        %s313 = smul.addr %s312, 2
        %s314 = scalar_lea.vmem %s3, %s313
      $region36: #{transformer_forward.2} parent=31 // pred_fallthru
        _
      // Predicated region
      $region37: #{transformer_forward.2} parent=31 // pred_check
        %p315 = pneg %p125
      $region38: #{transformer_forward.2} parent=31 // pred_check_branch
        %317 = sbr.rel (%p315) target = $region40
      $region39: #{transformer_forward.2} parent=31 // pred_region
        %p318 = scmp.lt.s32.totalorder %s16, 1
        %s319 = scalar_select %p318, %s16, 1
        %s320 = smul.addr %s319, 2
        %s321 = scalar_lea.vmem %s4, %s320
      $region40: #{transformer_forward.2} parent=31 // pred_fallthru
        _
      // Predicated region
      $region41: #{transformer_forward.2} parent=31 // pred_check
        %p322 = pneg %p172
      $region42: #{transformer_forward.2} parent=31 // pred_check_branch
        %324 = sbr.rel (%p322) target = $region44
      $region43: #{transformer_forward.2} parent=31 // pred_region
        %p325 = scmp.lt.s32.totalorder %s16, 1
        %s326 = scalar_select %p325, %s16, 1
        %s327 = smul.addr %s326, 192
        %s328 = smul.addr %s327, 4
        %s329 = scalar_lea.vmem %s6, %s328
      $region44: #{transformer_forward.2} parent=31 // pred_fallthru
        _
      // Predicated region
      $region45: #{transformer_forward.2} parent=31 // pred_check
        %p330 = pneg %p198
      $region46: #{transformer_forward.2} parent=31 // pred_check_branch
        %332 = sbr.rel (%p330) target = $region48
      $region47: #{transformer_forward.2} parent=31 // pred_region
        %p333 = scmp.lt.s32.totalorder %s16, 1
        %s334 = scalar_select %p333, %s16, 1
        %s335 = smul.addr %s334, 64
        %s336 = smul.addr %s335, 4
        %s337 = scalar_lea.vmem %s7, %s336
      $region48: #{transformer_forward.2} parent=31 // pred_fallthru
        _
      // Predicated region
      $region49: #{transformer_forward.2} parent=31 // pred_check
        %p338 = pneg %p224
      $region50: #{transformer_forward.2} parent=31 // pred_check_branch
        %340 = sbr.rel (%p338) target = $region52
      $region51: #{transformer_forward.2} parent=31 // pred_region
        %p341 = scmp.lt.s32.totalorder %s16, 1
        %s342 = scalar_select %p341, %s16, 1
        %s343 = smul.addr %s342, 256
        %s344 = smul.addr %s343, 4
        %s345 = scalar_lea.vmem %s8, %s344
      $region52: #{transformer_forward.2} parent=31 // pred_fallthru
        _
      // Predicated region
      $region53: #{transformer_forward.2} parent=31 // pred_check
        %p346 = pneg %p250
      $region54: #{transformer_forward.2} parent=31 // pred_check_branch
        %348 = sbr.rel (%p346) target = $region56
      $region55: #{transformer_forward.2} parent=31 // pred_region
        %p349 = scmp.lt.s32.totalorder %s16, 1
        %s350 = scalar_select %p349, %s16, 1
        %s351 = smul.addr %s350, 128
        %s352 = smul.addr %s351, 4
        %s353 = scalar_lea.vmem %s9, %s352
      $region56: #{transformer_forward.2} parent=31 // pred_fallthru
        _
    $region32: #{transformer_forward.2} parent=5 // pred_fallthru
      _
    %p354 = scmp.le.s32.totalorder 1, %s16
    %p355 = scmp.lt.s32.totalorder %s16, 3
    %p356 = pnand %p354, %p355
    %p357 = pneg %p356
    // Predicated region
    $region57: #{transformer_forward.2} parent=5 // pred_check
      _
    $region58: #{transformer_forward.2} parent=5 // pred_check_branch
      %359 = sbr.rel (%p356) target = $region60
    $region59: #{transformer_forward.2} parent=5 // pred_region
      %s360 = ssub.s32 %s16, 1
      %p361 = pneg %p37
      %p362 = pneg %p34
      %p363 = pneg %p58
      %p364 = pneg %p55
      %p365 = pneg %p79
      %p366 = pneg %p76
      %p367 = scmp.lt.s32.totalorder %s21, 1
      %s368 = scalar_select %p367, %s21, 1
      %s369 = smul.addr %s368, 2
      %s370 = scalar_lea.vmem %s3, %s369
      %p371 = pneg %p105
      %p372 = pneg %p102
      %p373 = scmp.lt.s32.totalorder %s21, 1
      %s374 = scalar_select %p373, %s21, 1
      %s375 = smul.addr %s374, 2
      %s376 = scalar_lea.vmem %s4, %s375
      %p377 = pneg %p131
      %p378 = pneg %p128
      %p379 = pneg %p152
      %p380 = pneg %p149
      %p381 = scmp.lt.s32.totalorder %s21, 1
      %s382 = scalar_select %p381, %s21, 1
      %s383 = smul.addr %s382, 192
      %s384 = smul.addr %s383, 4
      %s385 = scalar_lea.vmem %s6, %s384
      %p386 = pneg %p178
      %p387 = pneg %p175
      %p388 = scmp.lt.s32.totalorder %s21, 1
      %s389 = scalar_select %p388, %s21, 1
      %s390 = smul.addr %s389, 64
      %s391 = smul.addr %s390, 4
      %s392 = scalar_lea.vmem %s7, %s391
      %p393 = pneg %p204
      %p394 = pneg %p201
      %p395 = scmp.lt.s32.totalorder %s21, 1
      %s396 = scalar_select %p395, %s21, 1
      %s397 = smul.addr %s396, 256
      %s398 = smul.addr %s397, 4
      %s399 = scalar_lea.vmem %s8, %s398
      %p400 = pneg %p230
      %p401 = pneg %p227
      %p402 = scmp.lt.s32.totalorder %s21, 1
      %s403 = scalar_select %p402, %s21, 1
      %s404 = smul.addr %s403, 128
      %s405 = smul.addr %s404, 4
      %s406 = scalar_lea.vmem %s9, %s405
      %p407 = pneg %p256
      %p408 = pneg %p253
      %p409 = pneg %p277
      %p410 = pneg %p274
      %p411 = scmp.lt.s32.totalorder %s21, 1
      %s412 = scalar_select %p411, %s21, 1
      %s413 = smul.addr %s412, 2
      %s414 = scalar_lea.vmem %s3, %s413
      %p415 = scmp.lt.s32.totalorder %s21, 1
      %s416 = scalar_select %p415, %s21, 1
      %s417 = smul.addr %s416, 2
      %s418 = scalar_lea.vmem %s4, %s417
      %p419 = scmp.lt.s32.totalorder %s21, 1
      %s420 = scalar_select %p419, %s21, 1
      %s421 = smul.addr %s420, 192
      %s422 = smul.addr %s421, 4
      %s423 = scalar_lea.vmem %s6, %s422
      %p424 = scmp.lt.s32.totalorder %s21, 1
      %s425 = scalar_select %p424, %s21, 1
      %s426 = smul.addr %s425, 64
      %s427 = smul.addr %s426, 4
      %s428 = scalar_lea.vmem %s7, %s427
      %p429 = scmp.lt.s32.totalorder %s21, 1
      %s430 = scalar_select %p429, %s21, 1
      %s431 = smul.addr %s430, 256
      %s432 = smul.addr %s431, 4
      %s433 = scalar_lea.vmem %s8, %s432
      %p434 = scmp.lt.s32.totalorder %s21, 1
      %s435 = scalar_select %p434, %s21, 1
      %s436 = smul.addr %s435, 128
      %s437 = smul.addr %s436, 4
      %s438 = scalar_lea.vmem %s9, %s437
      %p440 = scmp.eq.s32.totalorder %s21, 0
      // Predicated region
      $region61: #{transformer_forward.2} parent=59 // pred_check
        %p441 = pneg %p440
      $region62: #{transformer_forward.2} parent=59 // pred_check_branch
        %443 = sbr.rel (%p441) target = $region64
      $region63: #{transformer_forward.2} parent=59 // pred_region
        %v444 = vld [vmem:[%s0] sm:$0xff]
        %v445 = vld [vmem:[%s0 + $0x8] sm:$0xff]
        %v446 = vld [vmem:[%s0 + $0x10] sm:$0xff]
        %v447 = vld [vmem:[%s0 + $0x18] sm:$0xff]
        %v448 = vld [vmem:[%s0 + $0x20] sm:$0xff]
        %v449 = vld [vmem:[%s0 + $0x28] sm:$0xff]
        %v450 = vld [vmem:[%s0 + $0x30] sm:$0xff]
        %v451 = vld [vmem:[%s0 + $0x38] sm:$0xff]
        %v452 = vld [vmem:[%s0 + $0x40] sm:$0xff]
        %v453 = vld [vmem:[%s0 + $0x48] sm:$0xff]
        %v454 = vld [vmem:[%s0 + $0x50] sm:$0xff]
        %v455 = vld [vmem:[%s0 + $0x58] sm:$0xff]
        %v456 = vld [vmem:[%s0 + $0x60] sm:$0xff]
        %v457 = vld [vmem:[%s0 + $0x68] sm:$0xff]
        %v458 = vld [vmem:[%s0 + $0x70] sm:$0xff]
        %v459 = vld [vmem:[%s0 + $0x78] sm:$0xff]
        %v460 = vld [vmem:[%s0 + $0x80] sm:$0xff]
        %v461 = vld [vmem:[%s0 + $0x88] sm:$0xff]
        %v462 = vld [vmem:[%s0 + $0x90] sm:$0xff]
        %v463 = vld [vmem:[%s0 + $0x98] sm:$0xff]
        %v464 = vld [vmem:[%s0 + $0xa0] sm:$0xff]
        %v465 = vld [vmem:[%s0 + $0xa8] sm:$0xff]
        %v466 = vld [vmem:[%s0 + $0xb0] sm:$0xff]
        %v467 = vld [vmem:[%s0 + $0xb8] sm:$0xff]
        %v468 = vld [vmem:[%s0 + $0xc0] sm:$0xff]
        %v469 = vld [vmem:[%s0 + $0xc8] sm:$0xff]
        %v470 = vld [vmem:[%s0 + $0xd0] sm:$0xff]
        %v471 = vld [vmem:[%s0 + $0xd8] sm:$0xff]
        %v472 = vld [vmem:[%s0 + $0xe0] sm:$0xff]
        %v473 = vld [vmem:[%s0 + $0xe8] sm:$0xff]
        %v474 = vld [vmem:[%s0 + $0xf0] sm:$0xff]
        %v475 = vld [vmem:[%s0 + $0xf8] sm:$0xff]
        %v476 = vld [vmem:[%s0 + $0x100] sm:$0xff]
        %v477 = vld [vmem:[%s0 + $0x108] sm:$0xff]
        %v478 = vld [vmem:[%s0 + $0x110] sm:$0xff]
        %v479 = vld [vmem:[%s0 + $0x118] sm:$0xff]
        %v480 = vld [vmem:[%s0 + $0x120] sm:$0xff]
        %v481 = vld [vmem:[%s0 + $0x128] sm:$0xff]
        %v482 = vld [vmem:[%s0 + $0x130] sm:$0xff]
        %v483 = vld [vmem:[%s0 + $0x138] sm:$0xff]
        %v484 = vld [vmem:[%s0 + $0x140] sm:$0xff]
        %v485 = vld [vmem:[%s0 + $0x148] sm:$0xff]
        %v486 = vld [vmem:[%s0 + $0x150] sm:$0xff]
        %v487 = vld [vmem:[%s0 + $0x158] sm:$0xff]
        %v488 = vld [vmem:[%s0 + $0x160] sm:$0xff]
        %v489 = vld [vmem:[%s0 + $0x168] sm:$0xff]
        %v490 = vld [vmem:[%s0 + $0x170] sm:$0xff]
        %v491 = vld [vmem:[%s0 + $0x178] sm:$0xff]
        %v492 = vld [vmem:[%s0 + $0x180] sm:$0xff]
        %v493 = vld [vmem:[%s0 + $0x188] sm:$0xff]
        %v494 = vld [vmem:[%s0 + $0x190] sm:$0xff]
        %v495 = vld [vmem:[%s0 + $0x198] sm:$0xff]
        %v496 = vld [vmem:[%s0 + $0x1a0] sm:$0xff]
        %v497 = vld [vmem:[%s0 + $0x1a8] sm:$0xff]
        %v498 = vld [vmem:[%s0 + $0x1b0] sm:$0xff]
        %v499 = vld [vmem:[%s0 + $0x1b8] sm:$0xff]
        %v500 = vld [vmem:[%s0 + $0x1c0] sm:$0xff]
        %v501 = vld [vmem:[%s0 + $0x1c8] sm:$0xff]
        %v502 = vld [vmem:[%s0 + $0x1d0] sm:$0xff]
        %v503 = vld [vmem:[%s0 + $0x1d8] sm:$0xff]
        %v504 = vld [vmem:[%s0 + $0x1e0] sm:$0xff]
        %v505 = vld [vmem:[%s0 + $0x1e8] sm:$0xff]
        %v506 = vld [vmem:[%s0 + $0x1f0] sm:$0xff]
        %v507 = vld [vmem:[%s0 + $0x1f8] sm:$0xff]
        %508 = vst [vmem:[#allocation2] sm:$0xff] %v444
        %509 = vst [vmem:[#allocation2 + $0x8] sm:$0xff] %v445
        %510 = vst [vmem:[#allocation2 + $0x10] sm:$0xff] %v446
        %511 = vst [vmem:[#allocation2 + $0x18] sm:$0xff] %v447
        %512 = vst [vmem:[#allocation2 + $0x20] sm:$0xff] %v448
        %513 = vst [vmem:[#allocation2 + $0x28] sm:$0xff] %v449
        %514 = vst [vmem:[#allocation2 + $0x30] sm:$0xff] %v450
        %515 = vst [vmem:[#allocation2 + $0x38] sm:$0xff] %v451
        %516 = vst [vmem:[#allocation2 + $0x40] sm:$0xff] %v452
        %517 = vst [vmem:[#allocation2 + $0x48] sm:$0xff] %v453
        %518 = vst [vmem:[#allocation2 + $0x50] sm:$0xff] %v454
        %519 = vst [vmem:[#allocation2 + $0x58] sm:$0xff] %v455
        %520 = vst [vmem:[#allocation2 + $0x60] sm:$0xff] %v456
        %521 = vst [vmem:[#allocation2 + $0x68] sm:$0xff] %v457
        %522 = vst [vmem:[#allocation2 + $0x70] sm:$0xff] %v458
        %523 = vst [vmem:[#allocation2 + $0x78] sm:$0xff] %v459
        %524 = vst [vmem:[#allocation2 + $0x80] sm:$0xff] %v460
        %525 = vst [vmem:[#allocation2 + $0x88] sm:$0xff] %v461
        %526 = vst [vmem:[#allocation2 + $0x90] sm:$0xff] %v462
        %527 = vst [vmem:[#allocation2 + $0x98] sm:$0xff] %v463
        %528 = vst [vmem:[#allocation2 + $0xa0] sm:$0xff] %v464
        %529 = vst [vmem:[#allocation2 + $0xa8] sm:$0xff] %v465
        %530 = vst [vmem:[#allocation2 + $0xb0] sm:$0xff] %v466
        %531 = vst [vmem:[#allocation2 + $0xb8] sm:$0xff] %v467
        %532 = vst [vmem:[#allocation2 + $0xc0] sm:$0xff] %v468
        %533 = vst [vmem:[#allocation2 + $0xc8] sm:$0xff] %v469
        %534 = vst [vmem:[#allocation2 + $0xd0] sm:$0xff] %v470
        %535 = vst [vmem:[#allocation2 + $0xd8] sm:$0xff] %v471
        %536 = vst [vmem:[#allocation2 + $0xe0] sm:$0xff] %v472
        %537 = vst [vmem:[#allocation2 + $0xe8] sm:$0xff] %v473
        %538 = vst [vmem:[#allocation2 + $0xf0] sm:$0xff] %v474
        %539 = vst [vmem:[#allocation2 + $0xf8] sm:$0xff] %v475
        %540 = vst [vmem:[#allocation2 + $0x100] sm:$0xff] %v476
        %541 = vst [vmem:[#allocation2 + $0x108] sm:$0xff] %v477
        %542 = vst [vmem:[#allocation2 + $0x110] sm:$0xff] %v478
        %543 = vst [vmem:[#allocation2 + $0x118] sm:$0xff] %v479
        %544 = vst [vmem:[#allocation2 + $0x120] sm:$0xff] %v480
        %545 = vst [vmem:[#allocation2 + $0x128] sm:$0xff] %v481
        %546 = vst [vmem:[#allocation2 + $0x130] sm:$0xff] %v482
        %547 = vst [vmem:[#allocation2 + $0x138] sm:$0xff] %v483
        %548 = vst [vmem:[#allocation2 + $0x140] sm:$0xff] %v484
        %549 = vst [vmem:[#allocation2 + $0x148] sm:$0xff] %v485
        %550 = vst [vmem:[#allocation2 + $0x150] sm:$0xff] %v486
        %551 = vst [vmem:[#allocation2 + $0x158] sm:$0xff] %v487
        %552 = vst [vmem:[#allocation2 + $0x160] sm:$0xff] %v488
        %553 = vst [vmem:[#allocation2 + $0x168] sm:$0xff] %v489
        %554 = vst [vmem:[#allocation2 + $0x170] sm:$0xff] %v490
        %555 = vst [vmem:[#allocation2 + $0x178] sm:$0xff] %v491
        %556 = vst [vmem:[#allocation2 + $0x180] sm:$0xff] %v492
        %557 = vst [vmem:[#allocation2 + $0x188] sm:$0xff] %v493
        %558 = vst [vmem:[#allocation2 + $0x190] sm:$0xff] %v494
        %559 = vst [vmem:[#allocation2 + $0x198] sm:$0xff] %v495
        %560 = vst [vmem:[#allocation2 + $0x1a0] sm:$0xff] %v496
        %561 = vst [vmem:[#allocation2 + $0x1a8] sm:$0xff] %v497
        %562 = vst [vmem:[#allocation2 + $0x1b0] sm:$0xff] %v498
        %563 = vst [vmem:[#allocation2 + $0x1b8] sm:$0xff] %v499
        %564 = vst [vmem:[#allocation2 + $0x1c0] sm:$0xff] %v500
        %565 = vst [vmem:[#allocation2 + $0x1c8] sm:$0xff] %v501
        %566 = vst [vmem:[#allocation2 + $0x1d0] sm:$0xff] %v502
        %567 = vst [vmem:[#allocation2 + $0x1d8] sm:$0xff] %v503
        %568 = vst [vmem:[#allocation2 + $0x1e0] sm:$0xff] %v504
        %569 = vst [vmem:[#allocation2 + $0x1e8] sm:$0xff] %v505
        %570 = vst [vmem:[#allocation2 + $0x1f0] sm:$0xff] %v506
        %571 = vst [vmem:[#allocation2 + $0x1f8] sm:$0xff] %v507
      $region64: #{transformer_forward.2} parent=59 // pred_fallthru
        _
      %v572 = vld [vmem:[#allocation2] sm:$0xff]
      %v573 = vld [vmem:[#allocation2 + $0x8] sm:$0xff]
      %v574 = vld [vmem:[#allocation2 + $0x10] sm:$0xff]
      %v575 = vld [vmem:[#allocation2 + $0x18] sm:$0xff]
      %v576 = vld [vmem:[#allocation2 + $0x20] sm:$0xff]
      %v577 = vld [vmem:[#allocation2 + $0x28] sm:$0xff]
      %v578 = vld [vmem:[#allocation2 + $0x30] sm:$0xff]
      %v579 = vld [vmem:[#allocation2 + $0x38] sm:$0xff]
      %v580 = vld [vmem:[#allocation2 + $0x40] sm:$0xff]
      %v581 = vld [vmem:[#allocation2 + $0x48] sm:$0xff]
      %v582 = vld [vmem:[#allocation2 + $0x50] sm:$0xff]
      %v583 = vld [vmem:[#allocation2 + $0x58] sm:$0xff]
      %v584 = vld [vmem:[#allocation2 + $0x60] sm:$0xff]
      %v585 = vld [vmem:[#allocation2 + $0x68] sm:$0xff]
      %v586 = vld [vmem:[#allocation2 + $0x70] sm:$0xff]
      %v587 = vld [vmem:[#allocation2 + $0x78] sm:$0xff]
      %v588 = vld [vmem:[#allocation2 + $0x80] sm:$0xff]
      %v589 = vld [vmem:[#allocation2 + $0x88] sm:$0xff]
      %v590 = vld [vmem:[#allocation2 + $0x90] sm:$0xff]
      %v591 = vld [vmem:[#allocation2 + $0x98] sm:$0xff]
      %v592 = vld [vmem:[#allocation2 + $0xa0] sm:$0xff]
      %v593 = vld [vmem:[#allocation2 + $0xa8] sm:$0xff]
      %v594 = vld [vmem:[#allocation2 + $0xb0] sm:$0xff]
      %v595 = vld [vmem:[#allocation2 + $0xb8] sm:$0xff]
      %v596 = vld [vmem:[#allocation2 + $0xc0] sm:$0xff]
      %v597 = vld [vmem:[#allocation2 + $0xc8] sm:$0xff]
      %v598 = vld [vmem:[#allocation2 + $0xd0] sm:$0xff]
      %v599 = vld [vmem:[#allocation2 + $0xd8] sm:$0xff]
      %v600 = vld [vmem:[#allocation2 + $0xe0] sm:$0xff]
      %v601 = vld [vmem:[#allocation2 + $0xe8] sm:$0xff]
      %v602 = vld [vmem:[#allocation2 + $0xf0] sm:$0xff]
      %v603 = vld [vmem:[#allocation2 + $0xf8] sm:$0xff]
      %v604 = vld [vmem:[#allocation2 + $0x100] sm:$0xff]
      %v605 = vld [vmem:[#allocation2 + $0x108] sm:$0xff]
      %v606 = vld [vmem:[#allocation2 + $0x110] sm:$0xff]
      %v607 = vld [vmem:[#allocation2 + $0x118] sm:$0xff]
      %v608 = vld [vmem:[#allocation2 + $0x120] sm:$0xff]
      %v609 = vld [vmem:[#allocation2 + $0x128] sm:$0xff]
      %v610 = vld [vmem:[#allocation2 + $0x130] sm:$0xff]
      %v611 = vld [vmem:[#allocation2 + $0x138] sm:$0xff]
      %v612 = vld [vmem:[#allocation2 + $0x140] sm:$0xff]
      %v613 = vld [vmem:[#allocation2 + $0x148] sm:$0xff]
      %v614 = vld [vmem:[#allocation2 + $0x150] sm:$0xff]
      %v615 = vld [vmem:[#allocation2 + $0x158] sm:$0xff]
      %v616 = vld [vmem:[#allocation2 + $0x160] sm:$0xff]
      %v617 = vld [vmem:[#allocation2 + $0x168] sm:$0xff]
      %v618 = vld [vmem:[#allocation2 + $0x170] sm:$0xff]
      %v619 = vld [vmem:[#allocation2 + $0x178] sm:$0xff]
      %v620 = vld [vmem:[#allocation2 + $0x180] sm:$0xff]
      %v621 = vld [vmem:[#allocation2 + $0x188] sm:$0xff]
      %v622 = vld [vmem:[#allocation2 + $0x190] sm:$0xff]
      %v623 = vld [vmem:[#allocation2 + $0x198] sm:$0xff]
      %v624 = vld [vmem:[#allocation2 + $0x1a0] sm:$0xff]
      %v625 = vld [vmem:[#allocation2 + $0x1a8] sm:$0xff]
      %v626 = vld [vmem:[#allocation2 + $0x1b0] sm:$0xff]
      %v627 = vld [vmem:[#allocation2 + $0x1b8] sm:$0xff]
      %v628 = vld [vmem:[#allocation2 + $0x1c0] sm:$0xff]
      %v629 = vld [vmem:[#allocation2 + $0x1c8] sm:$0xff]
      %v630 = vld [vmem:[#allocation2 + $0x1d0] sm:$0xff]
      %v631 = vld [vmem:[#allocation2 + $0x1d8] sm:$0xff]
      %v632 = vld [vmem:[#allocation2 + $0x1e0] sm:$0xff]
      %v633 = vld [vmem:[#allocation2 + $0x1e8] sm:$0xff]
      %v634 = vld [vmem:[#allocation2 + $0x1f0] sm:$0xff]
      %v635 = vld [vmem:[#allocation2 + $0x1f8] sm:$0xff]
      %v636 = vld [vmem:[%s1] sm:$0xff]
      %v637 = vld [vmem:[%s1 + $0x8] sm:$0xff]
      %v638 = vld [vmem:[%s1 + $0x10] sm:$0xff]
      %v639 = vld [vmem:[%s1 + $0x18] sm:$0xff]
      %v640 = vld [vmem:[%s1 + $0x20] sm:$0xff]
      %v641 = vld [vmem:[%s1 + $0x28] sm:$0xff]
      %v642 = vld [vmem:[%s1 + $0x30] sm:$0xff]
      %v643 = vld [vmem:[%s1 + $0x38] sm:$0xff]
      %v644 = vld [vmem:[%s1 + $0x40] sm:$0xff]
      %v645 = vld [vmem:[%s1 + $0x48] sm:$0xff]
      %v646 = vld [vmem:[%s1 + $0x50] sm:$0xff]
      %v647 = vld [vmem:[%s1 + $0x58] sm:$0xff]
      %v648 = vld [vmem:[%s1 + $0x60] sm:$0xff]
      %v649 = vld [vmem:[%s1 + $0x68] sm:$0xff]
      %v650 = vld [vmem:[%s1 + $0x70] sm:$0xff]
      %v651 = vld [vmem:[%s1 + $0x78] sm:$0xff]
      %v652 = vld [vmem:[%s1 + $0x80] sm:$0xff]
      %v653 = vld [vmem:[%s1 + $0x88] sm:$0xff]
      %v654 = vld [vmem:[%s1 + $0x90] sm:$0xff]
      %v655 = vld [vmem:[%s1 + $0x98] sm:$0xff]
      %v656 = vld [vmem:[%s1 + $0xa0] sm:$0xff]
      %v657 = vld [vmem:[%s1 + $0xa8] sm:$0xff]
      %v658 = vld [vmem:[%s1 + $0xb0] sm:$0xff]
      %v659 = vld [vmem:[%s1 + $0xb8] sm:$0xff]
      %v660 = vld [vmem:[%s1 + $0xc0] sm:$0xff]
      %v661 = vld [vmem:[%s1 + $0xc8] sm:$0xff]
      %v662 = vld [vmem:[%s1 + $0xd0] sm:$0xff]
      %v663 = vld [vmem:[%s1 + $0xd8] sm:$0xff]
      %v664 = vld [vmem:[%s1 + $0xe0] sm:$0xff]
      %v665 = vld [vmem:[%s1 + $0xe8] sm:$0xff]
      %v666 = vld [vmem:[%s1 + $0xf0] sm:$0xff]
      %v667 = vld [vmem:[%s1 + $0xf8] sm:$0xff]
      %v668 = vld [vmem:[%s2] sm:$0xff]
      %v669 = vld [vmem:[%s2 + $0x8] sm:$0xff]
      %v670 = vld [vmem:[%s2 + $0x10] sm:$0xff]
      %v671 = vld [vmem:[%s2 + $0x18] sm:$0xff]
      %v672 = vld [vmem:[%s2 + $0x20] sm:$0xff]
      %v673 = vld [vmem:[%s2 + $0x28] sm:$0xff]
      %v674 = vld [vmem:[%s2 + $0x30] sm:$0xff]
      %v675 = vld [vmem:[%s2 + $0x38] sm:$0xff]
      %v676 = vld [vmem:[%s2 + $0x40] sm:$0xff]
      %v677 = vld [vmem:[%s2 + $0x48] sm:$0xff]
      %v678 = vld [vmem:[%s2 + $0x50] sm:$0xff]
      %v679 = vld [vmem:[%s2 + $0x58] sm:$0xff]
      %v680 = vld [vmem:[%s2 + $0x60] sm:$0xff]
      %v681 = vld [vmem:[%s2 + $0x68] sm:$0xff]
      %v682 = vld [vmem:[%s2 + $0x70] sm:$0xff]
      %v683 = vld [vmem:[%s2 + $0x78] sm:$0xff]
      %v684 = vld [vmem:[%s2 + $0x80] sm:$0xff]
      %v685 = vld [vmem:[%s2 + $0x88] sm:$0xff]
      %v686 = vld [vmem:[%s2 + $0x90] sm:$0xff]
      %v687 = vld [vmem:[%s2 + $0x98] sm:$0xff]
      %v688 = vld [vmem:[%s2 + $0xa0] sm:$0xff]
      %v689 = vld [vmem:[%s2 + $0xa8] sm:$0xff]
      %v690 = vld [vmem:[%s2 + $0xb0] sm:$0xff]
      %v691 = vld [vmem:[%s2 + $0xb8] sm:$0xff]
      %v692 = vld [vmem:[%s2 + $0xc0] sm:$0xff]
      %v693 = vld [vmem:[%s2 + $0xc8] sm:$0xff]
      %v694 = vld [vmem:[%s2 + $0xd0] sm:$0xff]
      %v695 = vld [vmem:[%s2 + $0xd8] sm:$0xff]
      %v696 = vld [vmem:[%s2 + $0xe0] sm:$0xff]
      %v697 = vld [vmem:[%s2 + $0xe8] sm:$0xff]
      %v698 = vld [vmem:[%s2 + $0xf0] sm:$0xff]
      %v699 = vld [vmem:[%s2 + $0xf8] sm:$0xff]
      %v700 = vld [vmem:[%s414] sm:$0x3]
      %v701 = vmul.f32 %v572, %v572
      %v702 = vmul.f32 %v573, %v573
      %v703 = vmul.f32 %v574, %v574
      %v704 = vmul.f32 %v575, %v575
      %v705 = vmul.f32 %v576, %v576
      %v706 = vmul.f32 %v577, %v577
      %v707 = vmul.f32 %v578, %v578
      %v708 = vmul.f32 %v579, %v579
      %v709 = vmul.f32 %v580, %v580
      %v710 = vmul.f32 %v581, %v581
      %v711 = vmul.f32 %v582, %v582
      %v712 = vmul.f32 %v583, %v583
      %v713 = vmul.f32 %v584, %v584
      %v714 = vmul.f32 %v585, %v585
      %v715 = vmul.f32 %v586, %v586
      %v716 = vmul.f32 %v587, %v587
      %v717 = vmul.f32 %v588, %v588
      %v718 = vmul.f32 %v589, %v589
      %v719 = vmul.f32 %v590, %v590
      %v720 = vmul.f32 %v591, %v591
      %v721 = vmul.f32 %v592, %v592
      %v722 = vmul.f32 %v593, %v593
      %v723 = vmul.f32 %v594, %v594
      %v724 = vmul.f32 %v595, %v595
      %v725 = vmul.f32 %v596, %v596
      %v726 = vmul.f32 %v597, %v597
      %v727 = vmul.f32 %v598, %v598
      %v728 = vmul.f32 %v599, %v599
      %v729 = vmul.f32 %v600, %v600
      %v730 = vmul.f32 %v601, %v601
      %v731 = vmul.f32 %v602, %v602
      %v732 = vmul.f32 %v603, %v603
      %v733 = vmul.f32 %v604, %v604
      %v734 = vmul.f32 %v605, %v605
      %v735 = vmul.f32 %v606, %v606
      %v736 = vmul.f32 %v607, %v607
      %v737 = vmul.f32 %v608, %v608
      %v738 = vmul.f32 %v609, %v609
      %v739 = vmul.f32 %v610, %v610
      %v740 = vmul.f32 %v611, %v611
      %v741 = vmul.f32 %v612, %v612
      %v742 = vmul.f32 %v613, %v613
      %v743 = vmul.f32 %v614, %v614
      %v744 = vmul.f32 %v615, %v615
      %v745 = vmul.f32 %v616, %v616
      %v746 = vmul.f32 %v617, %v617
      %v747 = vmul.f32 %v618, %v618
      %v748 = vmul.f32 %v619, %v619
      %v749 = vmul.f32 %v620, %v620
      %v750 = vmul.f32 %v621, %v621
      %v751 = vmul.f32 %v622, %v622
      %v752 = vmul.f32 %v623, %v623
      %v753 = vmul.f32 %v624, %v624
      %v754 = vmul.f32 %v625, %v625
      %v755 = vmul.f32 %v626, %v626
      %v756 = vmul.f32 %v627, %v627
      %v757 = vmul.f32 %v628, %v628
      %v758 = vmul.f32 %v629, %v629
      %v759 = vmul.f32 %v630, %v630
      %v760 = vmul.f32 %v631, %v631
      %v761 = vmul.f32 %v632, %v632
      %v762 = vmul.f32 %v633, %v633
      %v763 = vmul.f32 %v634, %v634
      %v764 = vmul.f32 %v635, %v635
      %v765 = vadd.f32 %v701, %v702
      %766 = vadd.xlane.f32.xlu0 %v765
      %v767 = vpop.xlane.xlu0 %766
      %v768 = vadd.f32 %v703, %v704
      %769 = vadd.xlane.f32.xlu0 %v768
      %v770 = vpop.xlane.xlu0 %769
      %v771 = vadd.f32 %v705, %v706
      %772 = vadd.xlane.f32.xlu0 %v771
      %v773 = vpop.xlane.xlu0 %772
      %v774 = vadd.f32 %v707, %v708
      %775 = vadd.xlane.f32.xlu0 %v774
      %v776 = vpop.xlane.xlu0 %775
      %v777 = vadd.f32 %v709, %v710
      %778 = vadd.xlane.f32.xlu0 %v777
      %v779 = vpop.xlane.xlu0 %778
      %v780 = vadd.f32 %v711, %v712
      %781 = vadd.xlane.f32.xlu0 %v780
      %v782 = vpop.xlane.xlu0 %781
      %v783 = vadd.f32 %v713, %v714
      %784 = vadd.xlane.f32.xlu0 %v783
      %v785 = vpop.xlane.xlu0 %784
      %v786 = vadd.f32 %v715, %v716
      %787 = vadd.xlane.f32.xlu0 %v786
      %v788 = vpop.xlane.xlu0 %787
      %v789 = vadd.f32 %v717, %v718
      %790 = vadd.xlane.f32.xlu0 %v789
      %v791 = vpop.xlane.xlu0 %790
      %v792 = vadd.f32 %v719, %v720
      %793 = vadd.xlane.f32.xlu0 %v792
      %v794 = vpop.xlane.xlu0 %793
      %v795 = vadd.f32 %v721, %v722
      %796 = vadd.xlane.f32.xlu0 %v795
      %v797 = vpop.xlane.xlu0 %796
      %v798 = vadd.f32 %v723, %v724
      %799 = vadd.xlane.f32.xlu0 %v798
      %v800 = vpop.xlane.xlu0 %799
      %v801 = vadd.f32 %v725, %v726
      %802 = vadd.xlane.f32.xlu0 %v801
      %v803 = vpop.xlane.xlu0 %802
      %v804 = vadd.f32 %v727, %v728
      %805 = vadd.xlane.f32.xlu0 %v804
      %v806 = vpop.xlane.xlu0 %805
      %v807 = vadd.f32 %v729, %v730
      %808 = vadd.xlane.f32.xlu0 %v807
      %v809 = vpop.xlane.xlu0 %808
      %v810 = vadd.f32 %v731, %v732
      %811 = vadd.xlane.f32.xlu0 %v810
      %v812 = vpop.xlane.xlu0 %811
      %v813 = vadd.f32 %v733, %v734
      %814 = vadd.xlane.f32.xlu0 %v813
      %v815 = vpop.xlane.xlu0 %814
      %v816 = vadd.f32 %v735, %v736
      %817 = vadd.xlane.f32.xlu0 %v816
      %v818 = vpop.xlane.xlu0 %817
      %v819 = vadd.f32 %v737, %v738
      %820 = vadd.xlane.f32.xlu0 %v819
      %v821 = vpop.xlane.xlu0 %820
      %v822 = vadd.f32 %v739, %v740
      %823 = vadd.xlane.f32.xlu0 %v822
      %v824 = vpop.xlane.xlu0 %823
      %v825 = vadd.f32 %v741, %v742
      %826 = vadd.xlane.f32.xlu0 %v825
      %v827 = vpop.xlane.xlu0 %826
      %v828 = vadd.f32 %v743, %v744
      %829 = vadd.xlane.f32.xlu0 %v828
      %v830 = vpop.xlane.xlu0 %829
      %v831 = vadd.f32 %v745, %v746
      %832 = vadd.xlane.f32.xlu0 %v831
      %v833 = vpop.xlane.xlu0 %832
      %v834 = vadd.f32 %v747, %v748
      %835 = vadd.xlane.f32.xlu0 %v834
      %v836 = vpop.xlane.xlu0 %835
      %v837 = vadd.f32 %v749, %v750
      %838 = vadd.xlane.f32.xlu0 %v837
      %v839 = vpop.xlane.xlu0 %838
      %v840 = vadd.f32 %v751, %v752
      %841 = vadd.xlane.f32.xlu0 %v840
      %v842 = vpop.xlane.xlu0 %841
      %v843 = vadd.f32 %v753, %v754
      %844 = vadd.xlane.f32.xlu0 %v843
      %v845 = vpop.xlane.xlu0 %844
      %v846 = vadd.f32 %v755, %v756
      %847 = vadd.xlane.f32.xlu0 %v846
      %v848 = vpop.xlane.xlu0 %847
      %v849 = vadd.f32 %v757, %v758
      %850 = vadd.xlane.f32.xlu0 %v849
      %v851 = vpop.xlane.xlu0 %850
      %v852 = vadd.f32 %v759, %v760
      %853 = vadd.xlane.f32.xlu0 %v852
      %v854 = vpop.xlane.xlu0 %853
      %v855 = vadd.f32 %v761, %v762
      %856 = vadd.xlane.f32.xlu0 %v855
      %v857 = vpop.xlane.xlu0 %856
      %v858 = vadd.f32 %v763, %v764
      %859 = vadd.xlane.f32.xlu0 %v858
      %v860 = vpop.xlane.xlu0 %859
      %v861 = vrcp.pop 256.0
      %v862 = vmul.f32 %v767, %v861
      %v863 = vmul.f32 %v770, %v861
      %v864 = vmul.f32 %v773, %v861
      %v865 = vmul.f32 %v776, %v861
      %v866 = vmul.f32 %v779, %v861
      %v867 = vmul.f32 %v782, %v861
      %v868 = vmul.f32 %v785, %v861
      %v869 = vmul.f32 %v788, %v861
      %v870 = vmul.f32 %v791, %v861
      %v871 = vmul.f32 %v794, %v861
      %v872 = vmul.f32 %v797, %v861
      %v873 = vmul.f32 %v800, %v861
      %v874 = vmul.f32 %v803, %v861
      %v875 = vmul.f32 %v806, %v861
      %v876 = vmul.f32 %v809, %v861
      %v877 = vmul.f32 %v812, %v861
      %v878 = vmul.f32 %v815, %v861
      %v879 = vmul.f32 %v818, %v861
      %v880 = vmul.f32 %v821, %v861
      %v881 = vmul.f32 %v824, %v861
      %v882 = vmul.f32 %v827, %v861
      %v883 = vmul.f32 %v830, %v861
      %v884 = vmul.f32 %v833, %v861
      %v885 = vmul.f32 %v836, %v861
      %v886 = vmul.f32 %v839, %v861
      %v887 = vmul.f32 %v842, %v861
      %v888 = vmul.f32 %v845, %v861
      %v889 = vmul.f32 %v848, %v861
      %v890 = vmul.f32 %v851, %v861
      %v891 = vmul.f32 %v854, %v861
      %v892 = vmul.f32 %v857, %v861
      %v893 = vmul.f32 %v860, %v861
      %v894 = vadd.f32 %v862, 1e-06
      %v895 = vadd.f32 %v863, 1e-06
      %v896 = vadd.f32 %v864, 1e-06
      %v897 = vadd.f32 %v865, 1e-06
      %v898 = vadd.f32 %v866, 1e-06
      %v899 = vadd.f32 %v867, 1e-06
      %v900 = vadd.f32 %v868, 1e-06
      %v901 = vadd.f32 %v869, 1e-06
      %v902 = vadd.f32 %v870, 1e-06
      %v903 = vadd.f32 %v871, 1e-06
      %v904 = vadd.f32 %v872, 1e-06
      %v905 = vadd.f32 %v873, 1e-06
      %v906 = vadd.f32 %v874, 1e-06
      %v907 = vadd.f32 %v875, 1e-06
      %v908 = vadd.f32 %v876, 1e-06
      %v909 = vadd.f32 %v877, 1e-06
      %v910 = vadd.f32 %v878, 1e-06
      %v911 = vadd.f32 %v879, 1e-06
      %v912 = vadd.f32 %v880, 1e-06
      %v913 = vadd.f32 %v881, 1e-06
      %v914 = vadd.f32 %v882, 1e-06
      %v915 = vadd.f32 %v883, 1e-06
      %v916 = vadd.f32 %v884, 1e-06
      %v917 = vadd.f32 %v885, 1e-06
      %v918 = vadd.f32 %v886, 1e-06
      %v919 = vadd.f32 %v887, 1e-06
      %v920 = vadd.f32 %v888, 1e-06
      %v921 = vadd.f32 %v889, 1e-06
      %v922 = vadd.f32 %v890, 1e-06
      %v923 = vadd.f32 %v891, 1e-06
      %v924 = vadd.f32 %v892, 1e-06
      %v925 = vadd.f32 %v893, 1e-06
      %v926 = vrsqrt.pop %v894
      %v927 = vrsqrt.pop %v895
      %v928 = vrsqrt.pop %v896
      %v929 = vrsqrt.pop %v897
      %v930 = vrsqrt.pop %v898
      %v931 = vrsqrt.pop %v899
      %v932 = vrsqrt.pop %v900
      %v933 = vrsqrt.pop %v901
      %v934 = vrsqrt.pop %v902
      %v935 = vrsqrt.pop %v903
      %v936 = vrsqrt.pop %v904
      %v937 = vrsqrt.pop %v905
      %v938 = vrsqrt.pop %v906
      %v939 = vrsqrt.pop %v907
      %v940 = vrsqrt.pop %v908
      %v941 = vrsqrt.pop %v909
      %v942 = vrsqrt.pop %v910
      %v943 = vrsqrt.pop %v911
      %v944 = vrsqrt.pop %v912
      %v945 = vrsqrt.pop %v913
      %v946 = vrsqrt.pop %v914
      %v947 = vrsqrt.pop %v915
      %v948 = vrsqrt.pop %v916
      %v949 = vrsqrt.pop %v917
      %v950 = vrsqrt.pop %v918
      %v951 = vrsqrt.pop %v919
      %v952 = vrsqrt.pop %v920
      %v953 = vrsqrt.pop %v921
      %v954 = vrsqrt.pop %v922
      %v955 = vrsqrt.pop %v923
      %v956 = vrsqrt.pop %v924
      %v957 = vrsqrt.pop %v925
      %v958 = vmul.f32 %v572, %v926
      %v959 = vmul.f32 %v573, %v926
      %v960 = vmul.f32 %v574, %v927
      %v961 = vmul.f32 %v575, %v927
      %v962 = vmul.f32 %v576, %v928
      %v963 = vmul.f32 %v577, %v928
      %v964 = vmul.f32 %v578, %v929
      %v965 = vmul.f32 %v579, %v929
      %v966 = vmul.f32 %v580, %v930
      %v967 = vmul.f32 %v581, %v930
      %v968 = vmul.f32 %v582, %v931
      %v969 = vmul.f32 %v583, %v931
      %v970 = vmul.f32 %v584, %v932
      %v971 = vmul.f32 %v585, %v932
      %v972 = vmul.f32 %v586, %v933
      %v973 = vmul.f32 %v587, %v933
      %v974 = vmul.f32 %v588, %v934
      %v975 = vmul.f32 %v589, %v934
      %v976 = vmul.f32 %v590, %v935
      %v977 = vmul.f32 %v591, %v935
      %v978 = vmul.f32 %v592, %v936
      %v979 = vmul.f32 %v593, %v936
      %v980 = vmul.f32 %v594, %v937
      %v981 = vmul.f32 %v595, %v937
      %v982 = vmul.f32 %v596, %v938
      %v983 = vmul.f32 %v597, %v938
      %v984 = vmul.f32 %v598, %v939
      %v985 = vmul.f32 %v599, %v939
      %v986 = vmul.f32 %v600, %v940
      %v987 = vmul.f32 %v601, %v940
      %v988 = vmul.f32 %v602, %v941
      %v989 = vmul.f32 %v603, %v941
      %v990 = vmul.f32 %v604, %v942
      %v991 = vmul.f32 %v605, %v942
      %v992 = vmul.f32 %v606, %v943
      %v993 = vmul.f32 %v607, %v943
      %v994 = vmul.f32 %v608, %v944
      %v995 = vmul.f32 %v609, %v944
      %v996 = vmul.f32 %v610, %v945
      %v997 = vmul.f32 %v611, %v945
      %v998 = vmul.f32 %v612, %v946
      %v999 = vmul.f32 %v613, %v946
      %v1000 = vmul.f32 %v614, %v947
      %v1001 = vmul.f32 %v615, %v947
      %v1002 = vmul.f32 %v616, %v948
      %v1003 = vmul.f32 %v617, %v948
      %v1004 = vmul.f32 %v618, %v949
      %v1005 = vmul.f32 %v619, %v949
      %v1006 = vmul.f32 %v620, %v950
      %v1007 = vmul.f32 %v621, %v950
      %v1008 = vmul.f32 %v622, %v951
      %v1009 = vmul.f32 %v623, %v951
      %v1010 = vmul.f32 %v624, %v952
      %v1011 = vmul.f32 %v625, %v952
      %v1012 = vmul.f32 %v626, %v953
      %v1013 = vmul.f32 %v627, %v953
      %v1014 = vmul.f32 %v628, %v954
      %v1015 = vmul.f32 %v629, %v954
      %v1016 = vmul.f32 %v630, %v955
      %v1017 = vmul.f32 %v631, %v955
      %v1018 = vmul.f32 %v632, %v956
      %v1019 = vmul.f32 %v633, %v956
      %v1020 = vmul.f32 %v634, %v957
      %v1021 = vmul.f32 %v635, %v957
      %v1023 = vlaneseq
      %v1024 = vshrl.u32 %v1023, 7
      %v1025 = vsub.s32 0, %v1024
      %v1026 = vrot.slane %v700, %v1025
      %v1027 = vlaneseq
      %v1028 = vshrl.u32 %v1027, 7
      %v1029 = vsub.s32 1, %v1028
      %v1030 = vrot.slane %v700, %v1029
      %v1033 = vmul.f32 %v958, %v1026
      %v1034 = vmul.f32 %v959, %v1030
      %v1035 = vmul.f32 %v960, %v1026
      %v1036 = vmul.f32 %v961, %v1030
      %v1037 = vmul.f32 %v962, %v1026
      %v1038 = vmul.f32 %v963, %v1030
      %v1039 = vmul.f32 %v964, %v1026
      %v1040 = vmul.f32 %v965, %v1030
      %v1041 = vmul.f32 %v966, %v1026
      %v1042 = vmul.f32 %v967, %v1030
      %v1043 = vmul.f32 %v968, %v1026
      %v1044 = vmul.f32 %v969, %v1030
      %v1045 = vmul.f32 %v970, %v1026
      %v1046 = vmul.f32 %v971, %v1030
      %v1047 = vmul.f32 %v972, %v1026
      %v1048 = vmul.f32 %v973, %v1030
      %v1049 = vmul.f32 %v974, %v1026
      %v1050 = vmul.f32 %v975, %v1030
      %v1051 = vmul.f32 %v976, %v1026
      %v1052 = vmul.f32 %v977, %v1030
      %v1053 = vmul.f32 %v978, %v1026
      %v1054 = vmul.f32 %v979, %v1030
      %v1055 = vmul.f32 %v980, %v1026
      %v1056 = vmul.f32 %v981, %v1030
      %v1057 = vmul.f32 %v982, %v1026
      %v1058 = vmul.f32 %v983, %v1030
      %v1059 = vmul.f32 %v984, %v1026
      %v1060 = vmul.f32 %v985, %v1030
      %v1061 = vmul.f32 %v986, %v1026
      %v1062 = vmul.f32 %v987, %v1030
      %v1063 = vmul.f32 %v988, %v1026
      %v1064 = vmul.f32 %v989, %v1030
      %v1065 = vmul.f32 %v990, %v1026
      %v1066 = vmul.f32 %v991, %v1030
      %v1067 = vmul.f32 %v992, %v1026
      %v1068 = vmul.f32 %v993, %v1030
      %v1069 = vmul.f32 %v994, %v1026
      %v1070 = vmul.f32 %v995, %v1030
      %v1071 = vmul.f32 %v996, %v1026
      %v1072 = vmul.f32 %v997, %v1030
      %v1073 = vmul.f32 %v998, %v1026
      %v1074 = vmul.f32 %v999, %v1030
      %v1075 = vmul.f32 %v1000, %v1026
      %v1076 = vmul.f32 %v1001, %v1030
      %v1077 = vmul.f32 %v1002, %v1026
      %v1078 = vmul.f32 %v1003, %v1030
      %v1079 = vmul.f32 %v1004, %v1026
      %v1080 = vmul.f32 %v1005, %v1030
      %v1081 = vmul.f32 %v1006, %v1026
      %v1082 = vmul.f32 %v1007, %v1030
      %v1083 = vmul.f32 %v1008, %v1026
      %v1084 = vmul.f32 %v1009, %v1030
      %v1085 = vmul.f32 %v1010, %v1026
      %v1086 = vmul.f32 %v1011, %v1030
      %v1087 = vmul.f32 %v1012, %v1026
      %v1088 = vmul.f32 %v1013, %v1030
      %v1089 = vmul.f32 %v1014, %v1026
      %v1090 = vmul.f32 %v1015, %v1030
      %v1091 = vmul.f32 %v1016, %v1026
      %v1092 = vmul.f32 %v1017, %v1030
      %v1093 = vmul.f32 %v1018, %v1026
      %v1094 = vmul.f32 %v1019, %v1030
      %v1095 = vmul.f32 %v1020, %v1026
      %v1096 = vmul.f32 %v1021, %v1030
      %v1097 = vpack.c.bf16 %v1035, %v1033
      %v1098 = vpack.c.bf16 %v1036, %v1034
      %v1099 = vpack.c.bf16 %v1039, %v1037
      %v1100 = vpack.c.bf16 %v1040, %v1038
      %v1101 = vpack.c.bf16 %v1043, %v1041
      %v1102 = vpack.c.bf16 %v1044, %v1042
      %v1103 = vpack.c.bf16 %v1047, %v1045
      %v1104 = vpack.c.bf16 %v1048, %v1046
      %v1105 = vpack.c.bf16 %v1051, %v1049
      %v1106 = vpack.c.bf16 %v1052, %v1050
      %v1107 = vpack.c.bf16 %v1055, %v1053
      %v1108 = vpack.c.bf16 %v1056, %v1054
      %v1109 = vpack.c.bf16 %v1059, %v1057
      %v1110 = vpack.c.bf16 %v1060, %v1058
      %v1111 = vpack.c.bf16 %v1063, %v1061
      %v1112 = vpack.c.bf16 %v1064, %v1062
      %v1113 = vpack.c.bf16 %v1067, %v1065
      %v1114 = vpack.c.bf16 %v1068, %v1066
      %v1115 = vpack.c.bf16 %v1071, %v1069
      %v1116 = vpack.c.bf16 %v1072, %v1070
      %v1117 = vpack.c.bf16 %v1075, %v1073
      %v1118 = vpack.c.bf16 %v1076, %v1074
      %v1119 = vpack.c.bf16 %v1079, %v1077
      %v1120 = vpack.c.bf16 %v1080, %v1078
      %v1121 = vpack.c.bf16 %v1083, %v1081
      %v1122 = vpack.c.bf16 %v1084, %v1082
      %v1123 = vpack.c.bf16 %v1087, %v1085
      %v1124 = vpack.c.bf16 %v1088, %v1086
      %v1125 = vpack.c.bf16 %v1091, %v1089
      %v1126 = vpack.c.bf16 %v1092, %v1090
      %v1127 = vpack.c.bf16 %v1095, %v1093
      %v1128 = vpack.c.bf16 %v1096, %v1094
      %v1129 = vld [vmem:[%s423] sm:$0xff]
      %v1130 = vld [vmem:[%s423 + $0x8] sm:$0xff]
      %v1131 = vld [vmem:[%s423 + $0x10] sm:$0xff]
      %v1132 = vld [vmem:[%s423 + $0x18] sm:$0xff]
      %v1133 = vld [vmem:[%s423 + $0x20] sm:$0xff]
      %v1134 = vld [vmem:[%s423 + $0x28] sm:$0xff]
      %v1135 = vld [vmem:[%s423 + $0x30] sm:$0xff]
      %v1136 = vld [vmem:[%s423 + $0x38] sm:$0xff]
      %v1137 = vld [vmem:[%s423 + $0x40] sm:$0xff]
      %v1138 = vld [vmem:[%s423 + $0x48] sm:$0xff]
      %v1139 = vld [vmem:[%s423 + $0x50] sm:$0xff]
      %v1140 = vld [vmem:[%s423 + $0x58] sm:$0xff]
      %v1141 = vld [vmem:[%s423 + $0x60] sm:$0xff]
      %v1142 = vld [vmem:[%s423 + $0x68] sm:$0xff]
      %v1143 = vld [vmem:[%s423 + $0x70] sm:$0xff]
      %v1144 = vld [vmem:[%s423 + $0x78] sm:$0xff]
      %v1145 = vld [vmem:[%s423 + $0x80] sm:$0xff]
      %v1146 = vld [vmem:[%s423 + $0x88] sm:$0xff]
      %v1147 = vld [vmem:[%s423 + $0x90] sm:$0xff]
      %v1148 = vld [vmem:[%s423 + $0x98] sm:$0xff]
      %v1149 = vld [vmem:[%s423 + $0xa0] sm:$0xff]
      %v1150 = vld [vmem:[%s423 + $0xa8] sm:$0xff]
      %v1151 = vld [vmem:[%s423 + $0xb0] sm:$0xff]
      %v1152 = vld [vmem:[%s423 + $0xb8] sm:$0xff]
      %v1153 = vld [vmem:[%s423 + $0xc0] sm:$0xff]
      %v1154 = vld [vmem:[%s423 + $0xc8] sm:$0xff]
      %v1155 = vld [vmem:[%s423 + $0xd0] sm:$0xff]
      %v1156 = vld [vmem:[%s423 + $0xd8] sm:$0xff]
      %v1157 = vld [vmem:[%s423 + $0xe0] sm:$0xff]
      %v1158 = vld [vmem:[%s423 + $0xe8] sm:$0xff]
      %v1159 = vld [vmem:[%s423 + $0xf0] sm:$0xff]
      %v1160 = vld [vmem:[%s423 + $0xf8] sm:$0xff]
      %v1161 = vld [vmem:[%s423 + $0x100] sm:$0xff]
      %v1162 = vld [vmem:[%s423 + $0x108] sm:$0xff]
      %v1163 = vld [vmem:[%s423 + $0x110] sm:$0xff]
      %v1164 = vld [vmem:[%s423 + $0x118] sm:$0xff]
      %v1165 = vld [vmem:[%s423 + $0x120] sm:$0xff]
      %v1166 = vld [vmem:[%s423 + $0x128] sm:$0xff]
      %v1167 = vld [vmem:[%s423 + $0x130] sm:$0xff]
      %v1168 = vld [vmem:[%s423 + $0x138] sm:$0xff]
      %v1169 = vld [vmem:[%s423 + $0x140] sm:$0xff]
      %v1170 = vld [vmem:[%s423 + $0x148] sm:$0xff]
      %v1171 = vld [vmem:[%s423 + $0x150] sm:$0xff]
      %v1172 = vld [vmem:[%s423 + $0x158] sm:$0xff]
      %v1173 = vld [vmem:[%s423 + $0x160] sm:$0xff]
      %v1174 = vld [vmem:[%s423 + $0x168] sm:$0xff]
      %v1175 = vld [vmem:[%s423 + $0x170] sm:$0xff]
      %v1176 = vld [vmem:[%s423 + $0x178] sm:$0xff]
      %v1177 = vld [vmem:[%s423 + $0x180] sm:$0xff]
      %v1178 = vld [vmem:[%s423 + $0x188] sm:$0xff]
      %v1179 = vld [vmem:[%s423 + $0x190] sm:$0xff]
      %v1180 = vld [vmem:[%s423 + $0x198] sm:$0xff]
      %v1181 = vld [vmem:[%s423 + $0x1a0] sm:$0xff]
      %v1182 = vld [vmem:[%s423 + $0x1a8] sm:$0xff]
      %v1183 = vld [vmem:[%s423 + $0x1b0] sm:$0xff]
      %v1184 = vld [vmem:[%s423 + $0x1b8] sm:$0xff]
      %v1185 = vld [vmem:[%s423 + $0x1c0] sm:$0xff]
      %v1186 = vld [vmem:[%s423 + $0x1c8] sm:$0xff]
      %v1187 = vld [vmem:[%s423 + $0x1d0] sm:$0xff]
      %v1188 = vld [vmem:[%s423 + $0x1d8] sm:$0xff]
      %v1189 = vld [vmem:[%s423 + $0x1e0] sm:$0xff]
      %v1190 = vld [vmem:[%s423 + $0x1e8] sm:$0xff]
      %v1191 = vld [vmem:[%s423 + $0x1f0] sm:$0xff]
      %v1192 = vld [vmem:[%s423 + $0x1f8] sm:$0xff]
      %v1193 = vld [vmem:[%s423 + $0x200] sm:$0xff]
      %v1194 = vld [vmem:[%s423 + $0x208] sm:$0xff]
      %v1195 = vld [vmem:[%s423 + $0x210] sm:$0xff]
      %v1196 = vld [vmem:[%s423 + $0x218] sm:$0xff]
      %v1197 = vld [vmem:[%s423 + $0x220] sm:$0xff]
      %v1198 = vld [vmem:[%s423 + $0x228] sm:$0xff]
      %v1199 = vld [vmem:[%s423 + $0x230] sm:$0xff]
      %v1200 = vld [vmem:[%s423 + $0x238] sm:$0xff]
      %v1201 = vld [vmem:[%s423 + $0x240] sm:$0xff]
      %v1202 = vld [vmem:[%s423 + $0x248] sm:$0xff]
      %v1203 = vld [vmem:[%s423 + $0x250] sm:$0xff]
      %v1204 = vld [vmem:[%s423 + $0x258] sm:$0xff]
      %v1205 = vld [vmem:[%s423 + $0x260] sm:$0xff]
      %v1206 = vld [vmem:[%s423 + $0x268] sm:$0xff]
      %v1207 = vld [vmem:[%s423 + $0x270] sm:$0xff]
      %v1208 = vld [vmem:[%s423 + $0x278] sm:$0xff]
      %v1209 = vld [vmem:[%s423 + $0x280] sm:$0xff]
      %v1210 = vld [vmem:[%s423 + $0x288] sm:$0xff]
      %v1211 = vld [vmem:[%s423 + $0x290] sm:$0xff]
      %v1212 = vld [vmem:[%s423 + $0x298] sm:$0xff]
      %v1213 = vld [vmem:[%s423 + $0x2a0] sm:$0xff]
      %v1214 = vld [vmem:[%s423 + $0x2a8] sm:$0xff]
      %v1215 = vld [vmem:[%s423 + $0x2b0] sm:$0xff]
      %v1216 = vld [vmem:[%s423 + $0x2b8] sm:$0xff]
      %v1217 = vld [vmem:[%s423 + $0x2c0] sm:$0xff]
      %v1218 = vld [vmem:[%s423 + $0x2c8] sm:$0xff]
      %v1219 = vld [vmem:[%s423 + $0x2d0] sm:$0xff]
      %v1220 = vld [vmem:[%s423 + $0x2d8] sm:$0xff]
      %v1221 = vld [vmem:[%s423 + $0x2e0] sm:$0xff]
      %v1222 = vld [vmem:[%s423 + $0x2e8] sm:$0xff]
      %v1223 = vld [vmem:[%s423 + $0x2f0] sm:$0xff]
      %v1224 = vld [vmem:[%s423 + $0x2f8] sm:$0xff]
      %v1321 = vunpack.c.l.b16 %v1129
      %v1322 = vunpack.c.h.b16 %v1129
      %v1323 = vunpack.c.l.b16 %v1130
      %v1324 = vunpack.c.h.b16 %v1130
      %v1325 = vunpack.c.l.b16 %v1131
      %v1326 = vunpack.c.h.b16 %v1131
      %v1327 = vunpack.c.l.b16 %v1132
      %v1328 = vunpack.c.h.b16 %v1132
      %v1329 = vunpack.c.l.b16 %v1133
      %v1330 = vunpack.c.h.b16 %v1133
      %v1331 = vunpack.c.l.b16 %v1134
      %v1332 = vunpack.c.h.b16 %v1134
      %v1333 = vunpack.c.l.b16 %v1135
      %v1334 = vunpack.c.h.b16 %v1135
      %v1335 = vunpack.c.l.b16 %v1136
      %v1336 = vunpack.c.h.b16 %v1136
      %v1337 = vunpack.c.l.b16 %v1137
      %v1338 = vunpack.c.h.b16 %v1137
      %v1339 = vunpack.c.l.b16 %v1138
      %v1340 = vunpack.c.h.b16 %v1138
      %v1341 = vunpack.c.l.b16 %v1139
      %v1342 = vunpack.c.h.b16 %v1139
      %v1343 = vunpack.c.l.b16 %v1140
      %v1344 = vunpack.c.h.b16 %v1140
      %v1345 = vunpack.c.l.b16 %v1141
      %v1346 = vunpack.c.h.b16 %v1141
      %v1347 = vunpack.c.l.b16 %v1142
      %v1348 = vunpack.c.h.b16 %v1142
      %v1349 = vunpack.c.l.b16 %v1143
      %v1350 = vunpack.c.h.b16 %v1143
      %v1351 = vunpack.c.l.b16 %v1144
      %v1352 = vunpack.c.h.b16 %v1144
      %v1353 = vunpack.c.l.b16 %v1145
      %v1354 = vunpack.c.h.b16 %v1145
      %v1355 = vunpack.c.l.b16 %v1146
      %v1356 = vunpack.c.h.b16 %v1146
      %v1357 = vunpack.c.l.b16 %v1147
      %v1358 = vunpack.c.h.b16 %v1147
      %v1359 = vunpack.c.l.b16 %v1148
      %v1360 = vunpack.c.h.b16 %v1148
      %v1361 = vunpack.c.l.b16 %v1149
      %v1362 = vunpack.c.h.b16 %v1149
      %v1363 = vunpack.c.l.b16 %v1150
      %v1364 = vunpack.c.h.b16 %v1150
      %v1365 = vunpack.c.l.b16 %v1151
      %v1366 = vunpack.c.h.b16 %v1151
      %v1367 = vunpack.c.l.b16 %v1152
      %v1368 = vunpack.c.h.b16 %v1152
      %v1369 = vunpack.c.l.b16 %v1153
      %v1370 = vunpack.c.h.b16 %v1153
      %v1371 = vunpack.c.l.b16 %v1154
      %v1372 = vunpack.c.h.b16 %v1154
      %v1373 = vunpack.c.l.b16 %v1155
      %v1374 = vunpack.c.h.b16 %v1155
      %v1375 = vunpack.c.l.b16 %v1156
      %v1376 = vunpack.c.h.b16 %v1156
      %v1377 = vunpack.c.l.b16 %v1157
      %v1378 = vunpack.c.h.b16 %v1157
      %v1379 = vunpack.c.l.b16 %v1158
      %v1380 = vunpack.c.h.b16 %v1158
      %v1381 = vunpack.c.l.b16 %v1159
      %v1382 = vunpack.c.h.b16 %v1159
      %v1383 = vunpack.c.l.b16 %v1160
      %v1384 = vunpack.c.h.b16 %v1160
      %v1385 = vunpack.c.l.b16 %v1161
      %v1386 = vunpack.c.h.b16 %v1161
      %v1387 = vunpack.c.l.b16 %v1162
      %v1388 = vunpack.c.h.b16 %v1162
      %v1389 = vunpack.c.l.b16 %v1163
      %v1390 = vunpack.c.h.b16 %v1163
      %v1391 = vunpack.c.l.b16 %v1164
      %v1392 = vunpack.c.h.b16 %v1164
      %v1393 = vunpack.c.l.b16 %v1165
      %v1394 = vunpack.c.h.b16 %v1165
      %v1395 = vunpack.c.l.b16 %v1166
      %v1396 = vunpack.c.h.b16 %v1166
      %v1397 = vunpack.c.l.b16 %v1167
      %v1398 = vunpack.c.h.b16 %v1167
      %v1399 = vunpack.c.l.b16 %v1168
      %v1400 = vunpack.c.h.b16 %v1168
      %v1401 = vunpack.c.l.b16 %v1169
      %v1402 = vunpack.c.h.b16 %v1169
      %v1403 = vunpack.c.l.b16 %v1170
      %v1404 = vunpack.c.h.b16 %v1170
      %v1405 = vunpack.c.l.b16 %v1171
      %v1406 = vunpack.c.h.b16 %v1171
      %v1407 = vunpack.c.l.b16 %v1172
      %v1408 = vunpack.c.h.b16 %v1172
      %v1409 = vunpack.c.l.b16 %v1173
      %v1410 = vunpack.c.h.b16 %v1173
      %v1411 = vunpack.c.l.b16 %v1174
      %v1412 = vunpack.c.h.b16 %v1174
      %v1413 = vunpack.c.l.b16 %v1175
      %v1414 = vunpack.c.h.b16 %v1175
      %v1415 = vunpack.c.l.b16 %v1176
      %v1416 = vunpack.c.h.b16 %v1176
      %v1417 = vunpack.c.l.b16 %v1177
      %v1418 = vunpack.c.h.b16 %v1177
      %v1419 = vunpack.c.l.b16 %v1178
      %v1420 = vunpack.c.h.b16 %v1178
      %v1421 = vunpack.c.l.b16 %v1179
      %v1422 = vunpack.c.h.b16 %v1179
      %v1423 = vunpack.c.l.b16 %v1180
      %v1424 = vunpack.c.h.b16 %v1180
      %v1425 = vunpack.c.l.b16 %v1181
      %v1426 = vunpack.c.h.b16 %v1181
      %v1427 = vunpack.c.l.b16 %v1182
      %v1428 = vunpack.c.h.b16 %v1182
      %v1429 = vunpack.c.l.b16 %v1183
      %v1430 = vunpack.c.h.b16 %v1183
      %v1431 = vunpack.c.l.b16 %v1184
      %v1432 = vunpack.c.h.b16 %v1184
      %v1433 = vunpack.c.l.b16 %v1185
      %v1434 = vunpack.c.h.b16 %v1185
      %v1435 = vunpack.c.l.b16 %v1186
      %v1436 = vunpack.c.h.b16 %v1186
      %v1437 = vunpack.c.l.b16 %v1187
      %v1438 = vunpack.c.h.b16 %v1187
      %v1439 = vunpack.c.l.b16 %v1188
      %v1440 = vunpack.c.h.b16 %v1188
      %v1441 = vunpack.c.l.b16 %v1189
      %v1442 = vunpack.c.h.b16 %v1189
      %v1443 = vunpack.c.l.b16 %v1190
      %v1444 = vunpack.c.h.b16 %v1190
      %v1445 = vunpack.c.l.b16 %v1191
      %v1446 = vunpack.c.h.b16 %v1191
      %v1447 = vunpack.c.l.b16 %v1192
      %v1448 = vunpack.c.h.b16 %v1192
      %v1449 = vunpack.c.l.b16 %v1193
      %v1450 = vunpack.c.h.b16 %v1193
      %v1451 = vunpack.c.l.b16 %v1194
      %v1452 = vunpack.c.h.b16 %v1194
      %v1453 = vunpack.c.l.b16 %v1195
      %v1454 = vunpack.c.h.b16 %v1195
      %v1455 = vunpack.c.l.b16 %v1196
      %v1456 = vunpack.c.h.b16 %v1196
      %v1457 = vunpack.c.l.b16 %v1197
      %v1458 = vunpack.c.h.b16 %v1197
      %v1459 = vunpack.c.l.b16 %v1198
      %v1460 = vunpack.c.h.b16 %v1198
      %v1461 = vunpack.c.l.b16 %v1199
      %v1462 = vunpack.c.h.b16 %v1199
      %v1463 = vunpack.c.l.b16 %v1200
      %v1464 = vunpack.c.h.b16 %v1200
      %v1465 = vunpack.c.l.b16 %v1201
      %v1466 = vunpack.c.h.b16 %v1201
      %v1467 = vunpack.c.l.b16 %v1202
      %v1468 = vunpack.c.h.b16 %v1202
      %v1469 = vunpack.c.l.b16 %v1203
      %v1470 = vunpack.c.h.b16 %v1203
      %v1471 = vunpack.c.l.b16 %v1204
      %v1472 = vunpack.c.h.b16 %v1204
      %v1473 = vunpack.c.l.b16 %v1205
      %v1474 = vunpack.c.h.b16 %v1205
      %v1475 = vunpack.c.l.b16 %v1206
      %v1476 = vunpack.c.h.b16 %v1206
      %v1477 = vunpack.c.l.b16 %v1207
      %v1478 = vunpack.c.h.b16 %v1207
      %v1479 = vunpack.c.l.b16 %v1208
      %v1480 = vunpack.c.h.b16 %v1208
      %v1481 = vunpack.c.l.b16 %v1209
      %v1482 = vunpack.c.h.b16 %v1209
      %v1483 = vunpack.c.l.b16 %v1210
      %v1484 = vunpack.c.h.b16 %v1210
      %v1485 = vunpack.c.l.b16 %v1211
      %v1486 = vunpack.c.h.b16 %v1211
      %v1487 = vunpack.c.l.b16 %v1212
      %v1488 = vunpack.c.h.b16 %v1212
      %v1489 = vunpack.c.l.b16 %v1213
      %v1490 = vunpack.c.h.b16 %v1213
      %v1491 = vunpack.c.l.b16 %v1214
      %v1492 = vunpack.c.h.b16 %v1214
      %v1493 = vunpack.c.l.b16 %v1215
      %v1494 = vunpack.c.h.b16 %v1215
      %v1495 = vunpack.c.l.b16 %v1216
      %v1496 = vunpack.c.h.b16 %v1216
      %v1497 = vunpack.c.l.b16 %v1217
      %v1498 = vunpack.c.h.b16 %v1217
      %v1499 = vunpack.c.l.b16 %v1218
      %v1500 = vunpack.c.h.b16 %v1218
      %v1501 = vunpack.c.l.b16 %v1219
      %v1502 = vunpack.c.h.b16 %v1219
      %v1503 = vunpack.c.l.b16 %v1220
      %v1504 = vunpack.c.h.b16 %v1220
      %v1505 = vunpack.c.l.b16 %v1221
      %v1506 = vunpack.c.h.b16 %v1221
      %v1507 = vunpack.c.l.b16 %v1222
      %v1508 = vunpack.c.h.b16 %v1222
      %v1509 = vunpack.c.l.b16 %v1223
      %v1510 = vunpack.c.h.b16 %v1223
      %v1511 = vunpack.c.l.b16 %v1224
      %v1512 = vunpack.c.h.b16 %v1224
      %v1513 = vpack.c.b16 %v1327, %v1321
      %v1514 = vpack.c.b16 %v1328, %v1322
      %v1515 = vpack.c.b16 %v1329, %v1323
      %v1516 = vpack.c.b16 %v1330, %v1324
      %v1517 = vpack.c.b16 %v1331, %v1325
      %v1518 = vpack.c.b16 %v1332, %v1326
      %v1519 = vpack.c.b16 %v1339, %v1333
      %v1520 = vpack.c.b16 %v1340, %v1334
      %v1521 = vpack.c.b16 %v1341, %v1335
      %v1522 = vpack.c.b16 %v1342, %v1336
      %v1523 = vpack.c.b16 %v1343, %v1337
      %v1524 = vpack.c.b16 %v1344, %v1338
      %v1525 = vpack.c.b16 %v1351, %v1345
      %v1526 = vpack.c.b16 %v1352, %v1346
      %v1527 = vpack.c.b16 %v1353, %v1347
      %v1528 = vpack.c.b16 %v1354, %v1348
      %v1529 = vpack.c.b16 %v1355, %v1349
      %v1530 = vpack.c.b16 %v1356, %v1350
      %v1531 = vpack.c.b16 %v1363, %v1357
      %v1532 = vpack.c.b16 %v1364, %v1358
      %v1533 = vpack.c.b16 %v1365, %v1359
      %v1534 = vpack.c.b16 %v1366, %v1360
      %v1535 = vpack.c.b16 %v1367, %v1361
      %v1536 = vpack.c.b16 %v1368, %v1362
      %v1537 = vpack.c.b16 %v1375, %v1369
      %v1538 = vpack.c.b16 %v1376, %v1370
      %v1539 = vpack.c.b16 %v1377, %v1371
      %v1540 = vpack.c.b16 %v1378, %v1372
      %v1541 = vpack.c.b16 %v1379, %v1373
      %v1542 = vpack.c.b16 %v1380, %v1374
      %v1543 = vpack.c.b16 %v1387, %v1381
      %v1544 = vpack.c.b16 %v1388, %v1382
      %v1545 = vpack.c.b16 %v1389, %v1383
      %v1546 = vpack.c.b16 %v1390, %v1384
      %v1547 = vpack.c.b16 %v1391, %v1385
      %v1548 = vpack.c.b16 %v1392, %v1386
      %v1549 = vpack.c.b16 %v1399, %v1393
      %v1550 = vpack.c.b16 %v1400, %v1394
      %v1551 = vpack.c.b16 %v1401, %v1395
      %v1552 = vpack.c.b16 %v1402, %v1396
      %v1553 = vpack.c.b16 %v1403, %v1397
      %v1554 = vpack.c.b16 %v1404, %v1398
      %v1555 = vpack.c.b16 %v1411, %v1405
      %v1556 = vpack.c.b16 %v1412, %v1406
      %v1557 = vpack.c.b16 %v1413, %v1407
      %v1558 = vpack.c.b16 %v1414, %v1408
      %v1559 = vpack.c.b16 %v1415, %v1409
      %v1560 = vpack.c.b16 %v1416, %v1410
      %v1561 = vpack.c.b16 %v1423, %v1417
      %v1562 = vpack.c.b16 %v1424, %v1418
      %v1563 = vpack.c.b16 %v1425, %v1419
      %v1564 = vpack.c.b16 %v1426, %v1420
      %v1565 = vpack.c.b16 %v1427, %v1421
      %v1566 = vpack.c.b16 %v1428, %v1422
      %v1567 = vpack.c.b16 %v1435, %v1429
      %v1568 = vpack.c.b16 %v1436, %v1430
      %v1569 = vpack.c.b16 %v1437, %v1431
      %v1570 = vpack.c.b16 %v1438, %v1432
      %v1571 = vpack.c.b16 %v1439, %v1433
      %v1572 = vpack.c.b16 %v1440, %v1434
      %v1573 = vpack.c.b16 %v1447, %v1441
      %v1574 = vpack.c.b16 %v1448, %v1442
      %v1575 = vpack.c.b16 %v1449, %v1443
      %v1576 = vpack.c.b16 %v1450, %v1444
      %v1577 = vpack.c.b16 %v1451, %v1445
      %v1578 = vpack.c.b16 %v1452, %v1446
      %v1579 = vpack.c.b16 %v1459, %v1453
      %v1580 = vpack.c.b16 %v1460, %v1454
      %v1581 = vpack.c.b16 %v1461, %v1455
      %v1582 = vpack.c.b16 %v1462, %v1456
      %v1583 = vpack.c.b16 %v1463, %v1457
      %v1584 = vpack.c.b16 %v1464, %v1458
      %v1585 = vpack.c.b16 %v1471, %v1465
      %v1586 = vpack.c.b16 %v1472, %v1466
      %v1587 = vpack.c.b16 %v1473, %v1467
      %v1588 = vpack.c.b16 %v1474, %v1468
      %v1589 = vpack.c.b16 %v1475, %v1469
      %v1590 = vpack.c.b16 %v1476, %v1470
      %v1591 = vpack.c.b16 %v1483, %v1477
      %v1592 = vpack.c.b16 %v1484, %v1478
      %v1593 = vpack.c.b16 %v1485, %v1479
      %v1594 = vpack.c.b16 %v1486, %v1480
      %v1595 = vpack.c.b16 %v1487, %v1481
      %v1596 = vpack.c.b16 %v1488, %v1482
      %v1597 = vpack.c.b16 %v1495, %v1489
      %v1598 = vpack.c.b16 %v1496, %v1490
      %v1599 = vpack.c.b16 %v1497, %v1491
      %v1600 = vpack.c.b16 %v1498, %v1492
      %v1601 = vpack.c.b16 %v1499, %v1493
      %v1602 = vpack.c.b16 %v1500, %v1494
      %v1603 = vpack.c.b16 %v1507, %v1501
      %v1604 = vpack.c.b16 %v1508, %v1502
      %v1605 = vpack.c.b16 %v1509, %v1503
      %v1606 = vpack.c.b16 %v1510, %v1504
      %v1607 = vpack.c.b16 %v1511, %v1505
      %v1608 = vpack.c.b16 %v1512, %v1506
      %1705 = vmatprep.subr.bf16.mxu0 %v1514
      %1706 = vmatpush1.bf16.msra.mxu0 %v1513
      %1707 = vmatprep.subr.bf16.mxu0 %v1520
      %1708 = vmatpush1.bf16.msra.mxu0 %v1519
      %1709 = vmatprep.subr.bf16.mxu0 %v1526
      %1710 = vmatpush1.bf16.msra.mxu0 %v1525
      %1711 = vmatprep.subr.bf16.mxu0 %v1532
      %1712 = vmatpush1.bf16.msra.mxu0 %v1531
      %1713 = vmatprep.subr.bf16.mxu0 %v1538
      %1714 = vmatpush1.bf16.msra.mxu0 %v1537
      %1715 = vmatprep.subr.bf16.mxu0 %v1544
      %1716 = vmatpush1.bf16.msra.mxu0 %v1543
      %1717 = vmatprep.subr.bf16.mxu0 %v1550
      %1718 = vmatpush1.bf16.msra.mxu0 %v1549
      %1719 = vmatprep.subr.bf16.mxu0 %v1556
      %1720 = vmatpush1.bf16.msra.mxu0 %v1555
      %1721 = vmatprep.subr.bf16.mxu0 %v1562
      %1722 = vmatpush1.bf16.msra.mxu0 %v1561
      %1723 = vmatprep.subr.bf16.mxu0 %v1568
      %1724 = vmatpush1.bf16.msra.mxu0 %v1567
      %1725 = vmatprep.subr.bf16.mxu0 %v1574
      %1726 = vmatpush1.bf16.msra.mxu0 %v1573
      %1727 = vmatprep.subr.bf16.mxu0 %v1580
      %1728 = vmatpush1.bf16.msra.mxu0 %v1579
      %1729 = vmatprep.subr.bf16.mxu0 %v1586
      %1730 = vmatpush1.bf16.msra.mxu0 %v1585
      %1731 = vmatprep.subr.bf16.mxu0 %v1592
      %1732 = vmatpush1.bf16.msra.mxu0 %v1591
      %1733 = vmatprep.subr.bf16.mxu0 %v1598
      %1734 = vmatpush1.bf16.msra.mxu0 %v1597
      %1735 = vmatprep.subr.bf16.mxu0 %v1604
      %1736 = vmatpush1.bf16.msra.mxu0 %v1603
      %1737 = vmatprep.mubr.bf16.mxu0 %v1098
      %1738 = vmatmul.mubr.bf16.gmra.mrb[0].mxu0 %v1097
      %v1739 = vpop.f32.mrb[0].mxu0
      %v1740 = vadd.f32 0.0, %v1739
      %v1741 = vpop.f32.mrb[0].mxu0
      %v1742 = vadd.f32 0.0, %v1741
      %v1743 = vpop.f32.mrb[0].mxu0
      %v1744 = vadd.f32 0.0, %v1743
      %v1745 = vpop.f32.mrb[0].mxu0
      %v1746 = vadd.f32 0.0, %v1745
      %1747 = vmatprep.mubr.bf16.mxu0 %v1100
      %1748 = vmatmul.mubr.bf16.gmra.mrb[0].mxu0 %v1099
      %v1749 = vpop.f32.mrb[0].mxu0
      %v1750 = vadd.f32 0.0, %v1749
      %v1751 = vpop.f32.mrb[0].mxu0
      %v1752 = vadd.f32 0.0, %v1751
      %v1753 = vpop.f32.mrb[0].mxu0
      %v1754 = vadd.f32 0.0, %v1753
      %v1755 = vpop.f32.mrb[0].mxu0
      %v1756 = vadd.f32 0.0, %v1755
      %1757 = vmatprep.mubr.bf16.mxu0 %v1102
      %1758 = vmatmul.mubr.bf16.gmra.mrb[0].mxu0 %v1101
      %v1759 = vpop.f32.mrb[0].mxu0
      %v1760 = vadd.f32 0.0, %v1759
      %v1761 = vpop.f32.mrb[0].mxu0
      %v1762 = vadd.f32 0.0, %v1761
      %v1763 = vpop.f32.mrb[0].mxu0
      %v1764 = vadd.f32 0.0, %v1763
      %v1765 = vpop.f32.mrb[0].mxu0
      %v1766 = vadd.f32 0.0, %v1765
      %1767 = vmatprep.mubr.bf16.mxu0 %v1104
      %1768 = vmatmul.mubr.bf16.gmra.mrb[0].mxu0 %v1103
      %v1769 = vpop.f32.mrb[0].mxu0
      %v1770 = vadd.f32 0.0, %v1769
      %v1771 = vpop.f32.mrb[0].mxu0
      %v1772 = vadd.f32 0.0, %v1771
      %v1773 = vpop.f32.mrb[0].mxu0
      %v1774 = vadd.f32 0.0, %v1773
      %v1775 = vpop.f32.mrb[0].mxu0
      %v1776 = vadd.f32 0.0, %v1775
      %1777 = vmatprep.mubr.bf16.mxu0 %v1106
      %1778 = vmatmul.mubr.bf16.gmra.mrb[0].mxu0 %v1105
      %v1779 = vpop.f32.mrb[0].mxu0
      %v1780 = vadd.f32 0.0, %v1779
      %v1781 = vpop.f32.mrb[0].mxu0
      %v1782 = vadd.f32 0.0, %v1781
      %v1783 = vpop.f32.mrb[0].mxu0
      %v1784 = vadd.f32 0.0, %v1783
      %v1785 = vpop.f32.mrb[0].mxu0
      %v1786 = vadd.f32 0.0, %v1785
      %1787 = vmatprep.mubr.bf16.mxu0 %v1108
      %1788 = vmatmul.mubr.bf16.gmra.mrb[0].mxu0 %v1107
      %v1789 = vpop.f32.mrb[0].mxu0
      %v1790 = vadd.f32 0.0, %v1789
      %v1791 = vpop.f32.mrb[0].mxu0
      %v1792 = vadd.f32 0.0, %v1791
      %v1793 = vpop.f32.mrb[0].mxu0
      %v1794 = vadd.f32 0.0, %v1793
      %v1795 = vpop.f32.mrb[0].mxu0
      %v1796 = vadd.f32 0.0, %v1795
      %1797 = vmatprep.mubr.bf16.mxu0 %v1110
      %1798 = vmatmul.mubr.bf16.gmra.mrb[0].mxu0 %v1109
      %v1799 = vpop.f32.mrb[0].mxu0
      %v1800 = vadd.f32 0.0, %v1799
      %v1801 = vpop.f32.mrb[0].mxu0
      %v1802 = vadd.f32 0.0, %v1801
      %v1803 = vpop.f32.mrb[0].mxu0
      %v1804 = vadd.f32 0.0, %v1803
      %v1805 = vpop.f32.mrb[0].mxu0
      %v1806 = vadd.f32 0.0, %v1805
      %1807 = vmatprep.mubr.bf16.mxu0 %v1112
      %1808 = vmatmul.mubr.bf16.gmra.mrb[0].mxu0 %v1111
      %v1809 = vpop.f32.mrb[0].mxu0
      %v1810 = vadd.f32 0.0, %v1809
      %v1811 = vpop.f32.mrb[0].mxu0
      %v1812 = vadd.f32 0.0, %v1811
      %v1813 = vpop.f32.mrb[0].mxu0
      %v1814 = vadd.f32 0.0, %v1813
      %v1815 = vpop.f32.mrb[0].mxu0
      %v1816 = vadd.f32 0.0, %v1815
      %1817 = vmatprep.mubr.bf16.mxu0 %v1114
      %1818 = vmatmul.mubr.bf16.gmra.mrb[0].mxu0 %v1113
      %v1819 = vpop.f32.mrb[0].mxu0
      %v1820 = vadd.f32 0.0, %v1819
      %v1821 = vpop.f32.mrb[0].mxu0
      %v1822 = vadd.f32 0.0, %v1821
      %v1823 = vpop.f32.mrb[0].mxu0
      %v1824 = vadd.f32 0.0, %v1823
      %v1825 = vpop.f32.mrb[0].mxu0
      %v1826 = vadd.f32 0.0, %v1825
      %1827 = vmatprep.mubr.bf16.mxu0 %v1116
      %1828 = vmatmul.mubr.bf16.gmra.mrb[0].mxu0 %v1115
      %v1829 = vpop.f32.mrb[0].mxu0
      %v1830 = vadd.f32 0.0, %v1829
      %v1831 = vpop.f32.mrb[0].mxu0
      %v1832 = vadd.f32 0.0, %v1831
      %v1833 = vpop.f32.mrb[0].mxu0
      %v1834 = vadd.f32 0.0, %v1833
      %v1835 = vpop.f32.mrb[0].mxu0
      %v1836 = vadd.f32 0.0, %v1835
      %1837 = vmatprep.mubr.bf16.mxu0 %v1118
      %1838 = vmatmul.mubr.bf16.gmra.mrb[0].mxu0 %v1117
      %v1839 = vpop.f32.mrb[0].mxu0
      %v1840 = vadd.f32 0.0, %v1839
      %v1841 = vpop.f32.mrb[0].mxu0
      %v1842 = vadd.f32 0.0, %v1841
      %v1843 = vpop.f32.mrb[0].mxu0
      %v1844 = vadd.f32 0.0, %v1843
      %v1845 = vpop.f32.mrb[0].mxu0
      %v1846 = vadd.f32 0.0, %v1845
      %1847 = vmatprep.mubr.bf16.mxu0 %v1120
      %1848 = vmatmul.mubr.bf16.gmra.mrb[0].mxu0 %v1119
      %v1849 = vpop.f32.mrb[0].mxu0
      %v1850 = vadd.f32 0.0, %v1849
      %v1851 = vpop.f32.mrb[0].mxu0
      %v1852 = vadd.f32 0.0, %v1851
      %v1853 = vpop.f32.mrb[0].mxu0
      %v1854 = vadd.f32 0.0, %v1853
      %v1855 = vpop.f32.mrb[0].mxu0
      %v1856 = vadd.f32 0.0, %v1855
      %1857 = vmatprep.mubr.bf16.mxu0 %v1122
      %1858 = vmatmul.mubr.bf16.gmra.mrb[0].mxu0 %v1121
      %v1859 = vpop.f32.mrb[0].mxu0
      %v1860 = vadd.f32 0.0, %v1859
      %v1861 = vpop.f32.mrb[0].mxu0
      %v1862 = vadd.f32 0.0, %v1861
      %v1863 = vpop.f32.mrb[0].mxu0
      %v1864 = vadd.f32 0.0, %v1863
      %v1865 = vpop.f32.mrb[0].mxu0
      %v1866 = vadd.f32 0.0, %v1865
      %1867 = vmatprep.mubr.bf16.mxu0 %v1124
      %1868 = vmatmul.mubr.bf16.gmra.mrb[0].mxu0 %v1123
      %v1869 = vpop.f32.mrb[0].mxu0
      %v1870 = vadd.f32 0.0, %v1869
      %v1871 = vpop.f32.mrb[0].mxu0
      %v1872 = vadd.f32 0.0, %v1871
      %v1873 = vpop.f32.mrb[0].mxu0
      %v1874 = vadd.f32 0.0, %v1873
      %v1875 = vpop.f32.mrb[0].mxu0
      %v1876 = vadd.f32 0.0, %v1875
      %1877 = vmatprep.mubr.bf16.mxu0 %v1126
      %1878 = vmatmul.mubr.bf16.gmra.mrb[0].mxu0 %v1125
      %v1879 = vpop.f32.mrb[0].mxu0
      %v1880 = vadd.f32 0.0, %v1879
      %v1881 = vpop.f32.mrb[0].mxu0
      %v1882 = vadd.f32 0.0, %v1881
      %v1883 = vpop.f32.mrb[0].mxu0
      %v1884 = vadd.f32 0.0, %v1883
      %v1885 = vpop.f32.mrb[0].mxu0
      %v1886 = vadd.f32 0.0, %v1885
      %1887 = vmatprep.mubr.bf16.mxu0 %v1128
      %1888 = vmatmul.mubr.bf16.gmra.mrb[0].mxu0 %v1127
      %v1889 = vpop.f32.mrb[0].mxu0
      %v1890 = vadd.f32 0.0, %v1889
      %v1891 = vpop.f32.mrb[0].mxu0
      %v1892 = vadd.f32 0.0, %v1891
      %v1893 = vpop.f32.mrb[0].mxu0
      %v1894 = vadd.f32 0.0, %v1893
      %v1895 = vpop.f32.mrb[0].mxu0
      %v1896 = vadd.f32 0.0, %v1895
      %1897 = vdwg.mxu0
      %1898 = vmatprep.subr.bf16.mxu0 %v1516
      %1899 = vmatpush1.bf16.msra.mxu0 %v1515
      %1900 = vmatprep.subr.bf16.mxu0 %v1522
      %1901 = vmatpush1.bf16.msra.mxu0 %v1521
      %1902 = vmatprep.subr.bf16.mxu0 %v1528
      %1903 = vmatpush1.bf16.msra.mxu0 %v1527
      %1904 = vmatprep.subr.bf16.mxu0 %v1534
      %1905 = vmatpush1.bf16.msra.mxu0 %v1533
      %1906 = vmatprep.subr.bf16.mxu0 %v1540
      %1907 = vmatpush1.bf16.msra.mxu0 %v1539
      %1908 = vmatprep.subr.bf16.mxu0 %v1546
      %1909 = vmatpush1.bf16.msra.mxu0 %v1545
      %1910 = vmatprep.subr.bf16.mxu0 %v1552
      %1911 = vmatpush1.bf16.msra.mxu0 %v1551
      %1912 = vmatprep.subr.bf16.mxu0 %v1558
      %1913 = vmatpush1.bf16.msra.mxu0 %v1557
      %1914 = vmatprep.subr.bf16.mxu0 %v1564
      %1915 = vmatpush1.bf16.msra.mxu0 %v1563
      %1916 = vmatprep.subr.bf16.mxu0 %v1570
      %1917 = vmatpush1.bf16.msra.mxu0 %v1569
      %1918 = vmatprep.subr.bf16.mxu0 %v1576
      %1919 = vmatpush1.bf16.msra.mxu0 %v1575
      %1920 = vmatprep.subr.bf16.mxu0 %v1582
      %1921 = vmatpush1.bf16.msra.mxu0 %v1581
      %1922 = vmatprep.subr.bf16.mxu0 %v1588
      %1923 = vmatpush1.bf16.msra.mxu0 %v1587
      %1924 = vmatprep.subr.bf16.mxu0 %v1594
      %1925 = vmatpush1.bf16.msra.mxu0 %v1593
      %1926 = vmatprep.subr.bf16.mxu0 %v1600
      %1927 = vmatpush1.bf16.msra.mxu0 %v1599
      %1928 = vmatprep.subr.bf16.mxu0 %v1606
      %1929 = vmatpush1.bf16.msra.mxu0 %v1605
      %1930 = vmatprep.mubr.bf16.mxu0 %v1098
      %1931 = vmatmul.mubr.bf16.gmra.mrb[0].mxu0 %v1097
      %v1932 = vpop.f32.mrb[0].mxu0
      %v1933 = vadd.f32 0.0, %v1932
      %v1934 = vpop.f32.mrb[0].mxu0
      %v1935 = vadd.f32 0.0, %v1934
      %v1936 = vpop.f32.mrb[0].mxu0
      %v1937 = vadd.f32 0.0, %v1936
      %v1938 = vpop.f32.mrb[0].mxu0
      %v1939 = vadd.f32 0.0, %v1938
      %1940 = vmatprep.mubr.bf16.mxu0 %v1100
      %1941 = vmatmul.mubr.bf16.gmra.mrb[0].mxu0 %v1099
      %v1942 = vpop.f32.mrb[0].mxu0
      %v1943 = vadd.f32 0.0, %v1942
      %v1944 = vpop.f32.mrb[0].mxu0
      %v1945 = vadd.f32 0.0, %v1944
      %v1946 = vpop.f32.mrb[0].mxu0
      %v1947 = vadd.f32 0.0, %v1946
      %v1948 = vpop.f32.mrb[0].mxu0
      %v1949 = vadd.f32 0.0, %v1948
      %1950 = vmatprep.mubr.bf16.mxu0 %v1102
      %1951 = vmatmul.mubr.bf16.gmra.mrb[0].mxu0 %v1101
      %v1952 = vpop.f32.mrb[0].mxu0
      %v1953 = vadd.f32 0.0, %v1952
      %v1954 = vpop.f32.mrb[0].mxu0
      %v1955 = vadd.f32 0.0, %v1954
      %v1956 = vpop.f32.mrb[0].mxu0
      %v1957 = vadd.f32 0.0, %v1956
      %v1958 = vpop.f32.mrb[0].mxu0
      %v1959 = vadd.f32 0.0, %v1958
      %1960 = vmatprep.mubr.bf16.mxu0 %v1104
      %1961 = vmatmul.mubr.bf16.gmra.mrb[0].mxu0 %v1103
      %v1962 = vpop.f32.mrb[0].mxu0
      %v1963 = vadd.f32 0.0, %v1962
      %v1964 = vpop.f32.mrb[0].mxu0
      %v1965 = vadd.f32 0.0, %v1964
      %v1966 = vpop.f32.mrb[0].mxu0
      %v1967 = vadd.f32 0.0, %v1966
      %v1968 = vpop.f32.mrb[0].mxu0
      %v1969 = vadd.f32 0.0, %v1968
      %1970 = vmatprep.mubr.bf16.mxu0 %v1106
      %1971 = vmatmul.mubr.bf16.gmra.mrb[0].mxu0 %v1105
      %v1972 = vpop.f32.mrb[0].mxu0
      %v1973 = vadd.f32 0.0, %v1972
      %v1974 = vpop.f32.mrb[0].mxu0
      %v1975 = vadd.f32 0.0, %v1974
      %v1976 = vpop.f32.mrb[0].mxu0
      %v1977 = vadd.f32 0.0, %v1976
      %v1978 = vpop.f32.mrb[0].mxu0
      %v1979 = vadd.f32 0.0, %v1978
      %1980 = vmatprep.mubr.bf16.mxu0 %v1108
      %1981 = vmatmul.mubr.bf16.gmra.mrb[0].mxu0 %v1107
      %v1982 = vpop.f32.mrb[0].mxu0
      %v1983 = vadd.f32 0.0, %v1982
      %v1984 = vpop.f32.mrb[0].mxu0
      %v1985 = vadd.f32 0.0, %v1984
      %v1986 = vpop.f32.mrb[0].mxu0
      %v1987 = vadd.f32 0.0, %v1986
      %v1988 = vpop.f32.mrb[0].mxu0
      %v1989 = vadd.f32 0.0, %v1988
      %1990 = vmatprep.mubr.bf16.mxu0 %v1110
      %1991 = vmatmul.mubr.bf16.gmra.mrb[0].mxu0 %v1109
      %v1992 = vpop.f32.mrb[0].mxu0
      %v1993 = vadd.f32 0.0, %v1992
      %v1994 = vpop.f32.mrb[0].mxu0
      %v1995 = vadd.f32 0.0, %v1994
      %v1996 = vpop.f32.mrb[0].mxu0
      %v1997 = vadd.f32 0.0, %v1996
      %v1998 = vpop.f32.mrb[0].mxu0
      %v1999 = vadd.f32 0.0, %v1998
      %2000 = vmatprep.mubr.bf16.mxu0 %v1112
      %2001 = vmatmul.mubr.bf16.gmra.mrb[0].mxu0 %v1111
      %v2002 = vpop.f32.mrb[0].mxu0
      %v2003 = vadd.f32 0.0, %v2002
      %v2004 = vpop.f32.mrb[0].mxu0
      %v2005 = vadd.f32 0.0, %v2004
      %v2006 = vpop.f32.mrb[0].mxu0
      %v2007 = vadd.f32 0.0, %v2006
      %v2008 = vpop.f32.mrb[0].mxu0
      %v2009 = vadd.f32 0.0, %v2008
      %2010 = vmatprep.mubr.bf16.mxu0 %v1114
      %2011 = vmatmul.mubr.bf16.gmra.mrb[0].mxu0 %v1113
      %v2012 = vpop.f32.mrb[0].mxu0
      %v2013 = vadd.f32 0.0, %v2012
      %v2014 = vpop.f32.mrb[0].mxu0
      %v2015 = vadd.f32 0.0, %v2014
      %v2016 = vpop.f32.mrb[0].mxu0
      %v2017 = vadd.f32 0.0, %v2016
      %v2018 = vpop.f32.mrb[0].mxu0
      %v2019 = vadd.f32 0.0, %v2018
      %2020 = vmatprep.mubr.bf16.mxu0 %v1116
      %2021 = vmatmul.mubr.bf16.gmra.mrb[0].mxu0 %v1115
      %v2022 = vpop.f32.mrb[0].mxu0
      %v2023 = vadd.f32 0.0, %v2022
      %v2024 = vpop.f32.mrb[0].mxu0
      %v2025 = vadd.f32 0.0, %v2024
      %v2026 = vpop.f32.mrb[0].mxu0
      %v2027 = vadd.f32 0.0, %v2026
      %v2028 = vpop.f32.mrb[0].mxu0
      %v2029 = vadd.f32 0.0, %v2028
      %2030 = vmatprep.mubr.bf16.mxu0 %v1118
      %2031 = vmatmul.mubr.bf16.gmra.mrb[0].mxu0 %v1117
      %v2032 = vpop.f32.mrb[0].mxu0
      %v2033 = vadd.f32 0.0, %v2032
      %v2034 = vpop.f32.mrb[0].mxu0
      %v2035 = vadd.f32 0.0, %v2034
      %v2036 = vpop.f32.mrb[0].mxu0
      %v2037 = vadd.f32 0.0, %v2036
      %v2038 = vpop.f32.mrb[0].mxu0
      %v2039 = vadd.f32 0.0, %v2038
      %2040 = vmatprep.mubr.bf16.mxu0 %v1120
      %2041 = vmatmul.mubr.bf16.gmra.mrb[0].mxu0 %v1119
      %v2042 = vpop.f32.mrb[0].mxu0
      %v2043 = vadd.f32 0.0, %v2042
      %v2044 = vpop.f32.mrb[0].mxu0
      %v2045 = vadd.f32 0.0, %v2044
      %v2046 = vpop.f32.mrb[0].mxu0
      %v2047 = vadd.f32 0.0, %v2046
      %v2048 = vpop.f32.mrb[0].mxu0
      %v2049 = vadd.f32 0.0, %v2048
      %2050 = vmatprep.mubr.bf16.mxu0 %v1122
      %2051 = vmatmul.mubr.bf16.gmra.mrb[0].mxu0 %v1121
      %v2052 = vpop.f32.mrb[0].mxu0
      %v2053 = vadd.f32 0.0, %v2052
      %v2054 = vpop.f32.mrb[0].mxu0
      %v2055 = vadd.f32 0.0, %v2054
      %v2056 = vpop.f32.mrb[0].mxu0
      %v2057 = vadd.f32 0.0, %v2056
      %v2058 = vpop.f32.mrb[0].mxu0
      %v2059 = vadd.f32 0.0, %v2058
      %2060 = vmatprep.mubr.bf16.mxu0 %v1124
      %2061 = vmatmul.mubr.bf16.gmra.mrb[0].mxu0 %v1123
      %v2062 = vpop.f32.mrb[0].mxu0
      %v2063 = vadd.f32 0.0, %v2062
      %v2064 = vpop.f32.mrb[0].mxu0
      %v2065 = vadd.f32 0.0, %v2064
      %v2066 = vpop.f32.mrb[0].mxu0
      %v2067 = vadd.f32 0.0, %v2066
      %v2068 = vpop.f32.mrb[0].mxu0
      %v2069 = vadd.f32 0.0, %v2068
      %2070 = vmatprep.mubr.bf16.mxu0 %v1126
      %2071 = vmatmul.mubr.bf16.gmra.mrb[0].mxu0 %v1125
      %v2072 = vpop.f32.mrb[0].mxu0
      %v2073 = vadd.f32 0.0, %v2072
      %v2074 = vpop.f32.mrb[0].mxu0
      %v2075 = vadd.f32 0.0, %v2074
      %v2076 = vpop.f32.mrb[0].mxu0
      %v2077 = vadd.f32 0.0, %v2076
      %v2078 = vpop.f32.mrb[0].mxu0
      %v2079 = vadd.f32 0.0, %v2078
      %2080 = vmatprep.mubr.bf16.mxu0 %v1128
      %2081 = vmatmul.mubr.bf16.gmra.mrb[0].mxu0 %v1127
      %v2082 = vpop.f32.mrb[0].mxu0
      %v2083 = vadd.f32 0.0, %v2082
      %v2084 = vpop.f32.mrb[0].mxu0
      %v2085 = vadd.f32 0.0, %v2084
      %v2086 = vpop.f32.mrb[0].mxu0
      %v2087 = vadd.f32 0.0, %v2086
      %v2088 = vpop.f32.mrb[0].mxu0
      %v2089 = vadd.f32 0.0, %v2088
      %2090 = vdwg.mxu0
      %2091 = vmatprep.subr.bf16.mxu0 %v1518
      %2092 = vmatpush1.bf16.msra.mxu0 %v1517
      %2093 = vmatprep.subr.bf16.mxu0 %v1524
      %2094 = vmatpush1.bf16.msra.mxu0 %v1523
      %2095 = vmatprep.subr.bf16.mxu0 %v1530
      %2096 = vmatpush1.bf16.msra.mxu0 %v1529
      %2097 = vmatprep.subr.bf16.mxu0 %v1536
      %2098 = vmatpush1.bf16.msra.mxu0 %v1535
      %2099 = vmatprep.subr.bf16.mxu0 %v1542
      %2100 = vmatpush1.bf16.msra.mxu0 %v1541
      %2101 = vmatprep.subr.bf16.mxu0 %v1548
      %2102 = vmatpush1.bf16.msra.mxu0 %v1547
      %2103 = vmatprep.subr.bf16.mxu0 %v1554
      %2104 = vmatpush1.bf16.msra.mxu0 %v1553
      %2105 = vmatprep.subr.bf16.mxu0 %v1560
      %2106 = vmatpush1.bf16.msra.mxu0 %v1559
      %2107 = vmatprep.subr.bf16.mxu0 %v1566
      %2108 = vmatpush1.bf16.msra.mxu0 %v1565
      %2109 = vmatprep.subr.bf16.mxu0 %v1572
      %2110 = vmatpush1.bf16.msra.mxu0 %v1571
      %2111 = vmatprep.subr.bf16.mxu0 %v1578
      %2112 = vmatpush1.bf16.msra.mxu0 %v1577
      %2113 = vmatprep.subr.bf16.mxu0 %v1584
      %2114 = vmatpush1.bf16.msra.mxu0 %v1583
      %2115 = vmatprep.subr.bf16.mxu0 %v1590
      %2116 = vmatpush1.bf16.msra.mxu0 %v1589
      %2117 = vmatprep.subr.bf16.mxu0 %v1596
      %2118 = vmatpush1.bf16.msra.mxu0 %v1595
      %2119 = vmatprep.subr.bf16.mxu0 %v1602
      %2120 = vmatpush1.bf16.msra.mxu0 %v1601
      %2121 = vmatprep.subr.bf16.mxu0 %v1608
      %2122 = vmatpush1.bf16.msra.mxu0 %v1607
      %2123 = vmatprep.mubr.bf16.mxu0 %v1098
      %2124 = vmatmul.mubr.bf16.gmra.mrb[0].mxu0 %v1097
      %v2125 = vpop.f32.mrb[0].mxu0
      %v2126 = vadd.f32 0.0, %v2125
      %v2127 = vpop.f32.mrb[0].mxu0
      %v2128 = vadd.f32 0.0, %v2127
      %v2129 = vpop.f32.mrb[0].mxu0
      %v2130 = vadd.f32 0.0, %v2129
      %v2131 = vpop.f32.mrb[0].mxu0
      %v2132 = vadd.f32 0.0, %v2131
      %2133 = vmatprep.mubr.bf16.mxu0 %v1100
      %2134 = vmatmul.mubr.bf16.gmra.mrb[0].mxu0 %v1099
      %v2135 = vpop.f32.mrb[0].mxu0
      %v2136 = vadd.f32 0.0, %v2135
      %v2137 = vpop.f32.mrb[0].mxu0
      %v2138 = vadd.f32 0.0, %v2137
      %v2139 = vpop.f32.mrb[0].mxu0
      %v2140 = vadd.f32 0.0, %v2139
      %v2141 = vpop.f32.mrb[0].mxu0
      %v2142 = vadd.f32 0.0, %v2141
      %2143 = vmatprep.mubr.bf16.mxu0 %v1102
      %2144 = vmatmul.mubr.bf16.gmra.mrb[0].mxu0 %v1101
      %v2145 = vpop.f32.mrb[0].mxu0
      %v2146 = vadd.f32 0.0, %v2145
      %v2147 = vpop.f32.mrb[0].mxu0
      %v2148 = vadd.f32 0.0, %v2147
      %v2149 = vpop.f32.mrb[0].mxu0
      %v2150 = vadd.f32 0.0, %v2149
      %v2151 = vpop.f32.mrb[0].mxu0
      %v2152 = vadd.f32 0.0, %v2151
      %2153 = vmatprep.mubr.bf16.mxu0 %v1104
      %2154 = vmatmul.mubr.bf16.gmra.mrb[0].mxu0 %v1103
      %v2155 = vpop.f32.mrb[0].mxu0
      %v2156 = vadd.f32 0.0, %v2155
      %v2157 = vpop.f32.mrb[0].mxu0
      %v2158 = vadd.f32 0.0, %v2157
      %v2159 = vpop.f32.mrb[0].mxu0
      %v2160 = vadd.f32 0.0, %v2159
      %v2161 = vpop.f32.mrb[0].mxu0
      %v2162 = vadd.f32 0.0, %v2161
      %2163 = vmatprep.mubr.bf16.mxu0 %v1106
      %2164 = vmatmul.mubr.bf16.gmra.mrb[0].mxu0 %v1105
      %v2165 = vpop.f32.mrb[0].mxu0
      %v2166 = vadd.f32 0.0, %v2165
      %v2167 = vpop.f32.mrb[0].mxu0
      %v2168 = vadd.f32 0.0, %v2167
      %v2169 = vpop.f32.mrb[0].mxu0
      %v2170 = vadd.f32 0.0, %v2169
      %v2171 = vpop.f32.mrb[0].mxu0
      %v2172 = vadd.f32 0.0, %v2171
      %2173 = vmatprep.mubr.bf16.mxu0 %v1108
      %2174 = vmatmul.mubr.bf16.gmra.mrb[0].mxu0 %v1107
      %v2175 = vpop.f32.mrb[0].mxu0
      %v2176 = vadd.f32 0.0, %v2175
      %v2177 = vpop.f32.mrb[0].mxu0
      %v2178 = vadd.f32 0.0, %v2177
      %v2179 = vpop.f32.mrb[0].mxu0
      %v2180 = vadd.f32 0.0, %v2179
      %v2181 = vpop.f32.mrb[0].mxu0
      %v2182 = vadd.f32 0.0, %v2181
      %2183 = vmatprep.mubr.bf16.mxu0 %v1110
      %2184 = vmatmul.mubr.bf16.gmra.mrb[0].mxu0 %v1109
      %v2185 = vpop.f32.mrb[0].mxu0
      %v2186 = vadd.f32 0.0, %v2185
      %v2187 = vpop.f32.mrb[0].mxu0
      %v2188 = vadd.f32 0.0, %v2187
      %v2189 = vpop.f32.mrb[0].mxu0
      %v2190 = vadd.f32 0.0, %v2189
      %v2191 = vpop.f32.mrb[0].mxu0
      %v2192 = vadd.f32 0.0, %v2191
      %2193 = vmatprep.mubr.bf16.mxu0 %v1112
      %2194 = vmatmul.mubr.bf16.gmra.mrb[0].mxu0 %v1111
      %v2195 = vpop.f32.mrb[0].mxu0
      %v2196 = vadd.f32 0.0, %v2195
      %v2197 = vpop.f32.mrb[0].mxu0
      %v2198 = vadd.f32 0.0, %v2197
      %v2199 = vpop.f32.mrb[0].mxu0
      %v2200 = vadd.f32 0.0, %v2199
      %v2201 = vpop.f32.mrb[0].mxu0
      %v2202 = vadd.f32 0.0, %v2201
      %2203 = vmatprep.mubr.bf16.mxu0 %v1114
      %2204 = vmatmul.mubr.bf16.gmra.mrb[0].mxu0 %v1113
      %v2205 = vpop.f32.mrb[0].mxu0
      %v2206 = vadd.f32 0.0, %v2205
      %v2207 = vpop.f32.mrb[0].mxu0
      %v2208 = vadd.f32 0.0, %v2207
      %v2209 = vpop.f32.mrb[0].mxu0
      %v2210 = vadd.f32 0.0, %v2209
      %v2211 = vpop.f32.mrb[0].mxu0
      %v2212 = vadd.f32 0.0, %v2211
      %2213 = vmatprep.mubr.bf16.mxu0 %v1116
      %2214 = vmatmul.mubr.bf16.gmra.mrb[0].mxu0 %v1115
      %v2215 = vpop.f32.mrb[0].mxu0
      %v2216 = vadd.f32 0.0, %v2215
      %v2217 = vpop.f32.mrb[0].mxu0
      %v2218 = vadd.f32 0.0, %v2217
      %v2219 = vpop.f32.mrb[0].mxu0
      %v2220 = vadd.f32 0.0, %v2219
      %v2221 = vpop.f32.mrb[0].mxu0
      %v2222 = vadd.f32 0.0, %v2221
      %2223 = vmatprep.mubr.bf16.mxu0 %v1118
      %2224 = vmatmul.mubr.bf16.gmra.mrb[0].mxu0 %v1117
      %v2225 = vpop.f32.mrb[0].mxu0
      %v2226 = vadd.f32 0.0, %v2225
      %v2227 = vpop.f32.mrb[0].mxu0
      %v2228 = vadd.f32 0.0, %v2227
      %v2229 = vpop.f32.mrb[0].mxu0
      %v2230 = vadd.f32 0.0, %v2229
      %v2231 = vpop.f32.mrb[0].mxu0
      %v2232 = vadd.f32 0.0, %v2231
      %2233 = vmatprep.mubr.bf16.mxu0 %v1120
      %2234 = vmatmul.mubr.bf16.gmra.mrb[0].mxu0 %v1119
      %v2235 = vpop.f32.mrb[0].mxu0
      %v2236 = vadd.f32 0.0, %v2235
      %v2237 = vpop.f32.mrb[0].mxu0
      %v2238 = vadd.f32 0.0, %v2237
      %v2239 = vpop.f32.mrb[0].mxu0
      %v2240 = vadd.f32 0.0, %v2239
      %v2241 = vpop.f32.mrb[0].mxu0
      %v2242 = vadd.f32 0.0, %v2241
      %2243 = vmatprep.mubr.bf16.mxu0 %v1122
      %2244 = vmatmul.mubr.bf16.gmra.mrb[0].mxu0 %v1121
      %v2245 = vpop.f32.mrb[0].mxu0
      %v2246 = vadd.f32 0.0, %v2245
      %v2247 = vpop.f32.mrb[0].mxu0
      %v2248 = vadd.f32 0.0, %v2247
      %v2249 = vpop.f32.mrb[0].mxu0
      %v2250 = vadd.f32 0.0, %v2249
      %v2251 = vpop.f32.mrb[0].mxu0
      %v2252 = vadd.f32 0.0, %v2251
      %2253 = vmatprep.mubr.bf16.mxu0 %v1124
      %2254 = vmatmul.mubr.bf16.gmra.mrb[0].mxu0 %v1123
      %v2255 = vpop.f32.mrb[0].mxu0
      %v2256 = vadd.f32 0.0, %v2255
      %v2257 = vpop.f32.mrb[0].mxu0
      %v2258 = vadd.f32 0.0, %v2257
      %v2259 = vpop.f32.mrb[0].mxu0
      %v2260 = vadd.f32 0.0, %v2259
      %v2261 = vpop.f32.mrb[0].mxu0
      %v2262 = vadd.f32 0.0, %v2261
      %2263 = vmatprep.mubr.bf16.mxu0 %v1126
      %2264 = vmatmul.mubr.bf16.gmra.mrb[0].mxu0 %v1125
      %v2265 = vpop.f32.mrb[0].mxu0
      %v2266 = vadd.f32 0.0, %v2265
      %v2267 = vpop.f32.mrb[0].mxu0
      %v2268 = vadd.f32 0.0, %v2267
      %v2269 = vpop.f32.mrb[0].mxu0
      %v2270 = vadd.f32 0.0, %v2269
      %v2271 = vpop.f32.mrb[0].mxu0
      %v2272 = vadd.f32 0.0, %v2271
      %2273 = vmatprep.mubr.bf16.mxu0 %v1128
      %2274 = vmatmul.mubr.bf16.gmra.mrb[0].mxu0 %v1127
      %v2275 = vpop.f32.mrb[0].mxu0
      %v2276 = vadd.f32 0.0, %v2275
      %v2277 = vpop.f32.mrb[0].mxu0
      %v2278 = vadd.f32 0.0, %v2277
      %v2279 = vpop.f32.mrb[0].mxu0
      %v2280 = vadd.f32 0.0, %v2279
      %v2281 = vpop.f32.mrb[0].mxu0
      %v2282 = vadd.f32 0.0, %v2281
      %2283 = vdwg.mxu0
      %v2284 = vmul.f32 %v1740, %v636
      %v2285 = vmul.f32 %v1744, %v637
      %v2286 = vmul.f32 %v1750, %v638
      %v2287 = vmul.f32 %v1754, %v639
      %v2288 = vmul.f32 %v1760, %v640
      %v2289 = vmul.f32 %v1764, %v641
      %v2290 = vmul.f32 %v1770, %v642
      %v2291 = vmul.f32 %v1774, %v643
      %v2292 = vmul.f32 %v1780, %v644
      %v2293 = vmul.f32 %v1784, %v645
      %v2294 = vmul.f32 %v1790, %v646
      %v2295 = vmul.f32 %v1794, %v647
      %v2296 = vmul.f32 %v1800, %v648
      %v2297 = vmul.f32 %v1804, %v649
      %v2298 = vmul.f32 %v1810, %v650
      %v2299 = vmul.f32 %v1814, %v651
      %v2300 = vmul.f32 %v1820, %v652
      %v2301 = vmul.f32 %v1824, %v653
      %v2302 = vmul.f32 %v1830, %v654
      %v2303 = vmul.f32 %v1834, %v655
      %v2304 = vmul.f32 %v1840, %v656
      %v2305 = vmul.f32 %v1844, %v657
      %v2306 = vmul.f32 %v1850, %v658
      %v2307 = vmul.f32 %v1854, %v659
      %v2308 = vmul.f32 %v1860, %v660
      %v2309 = vmul.f32 %v1864, %v661
      %v2310 = vmul.f32 %v1870, %v662
      %v2311 = vmul.f32 %v1874, %v663
      %v2312 = vmul.f32 %v1880, %v664
      %v2313 = vmul.f32 %v1884, %v665
      %v2314 = vmul.f32 %v1890, %v666
      %v2315 = vmul.f32 %v1894, %v667
      %2316 = vrot.lane.b32.xlu0 %v1740, 64
      %v2317 = vpop.permute.xlu0 %2316
      %2318 = vrot.lane.b32.xlu0 %v1744, 64
      %v2319 = vpop.permute.xlu0 %2318
      %2320 = vrot.lane.b32.xlu0 %v1750, 64
      %v2321 = vpop.permute.xlu0 %2320
      %2322 = vrot.lane.b32.xlu0 %v1754, 64
      %v2323 = vpop.permute.xlu0 %2322
      %2324 = vrot.lane.b32.xlu0 %v1760, 64
      %v2325 = vpop.permute.xlu0 %2324
      %2326 = vrot.lane.b32.xlu0 %v1764, 64
      %v2327 = vpop.permute.xlu0 %2326
      %2328 = vrot.lane.b32.xlu0 %v1770, 64
      %v2329 = vpop.permute.xlu0 %2328
      %2330 = vrot.lane.b32.xlu0 %v1774, 64
      %v2331 = vpop.permute.xlu0 %2330
      %2332 = vrot.lane.b32.xlu0 %v1780, 64
      %v2333 = vpop.permute.xlu0 %2332
      %2334 = vrot.lane.b32.xlu0 %v1784, 64
      %v2335 = vpop.permute.xlu0 %2334
      %2336 = vrot.lane.b32.xlu0 %v1790, 64
      %v2337 = vpop.permute.xlu0 %2336
      %2338 = vrot.lane.b32.xlu0 %v1794, 64
      %v2339 = vpop.permute.xlu0 %2338
      %2340 = vrot.lane.b32.xlu0 %v1800, 64
      %v2341 = vpop.permute.xlu0 %2340
      %2342 = vrot.lane.b32.xlu0 %v1804, 64
      %v2343 = vpop.permute.xlu0 %2342
      %2344 = vrot.lane.b32.xlu0 %v1810, 64
      %v2345 = vpop.permute.xlu0 %2344
      %2346 = vrot.lane.b32.xlu0 %v1814, 64
      %v2347 = vpop.permute.xlu0 %2346
      %2348 = vrot.lane.b32.xlu0 %v1820, 64
      %v2349 = vpop.permute.xlu0 %2348
      %2350 = vrot.lane.b32.xlu0 %v1824, 64
      %v2351 = vpop.permute.xlu0 %2350
      %2352 = vrot.lane.b32.xlu0 %v1830, 64
      %v2353 = vpop.permute.xlu0 %2352
      %2354 = vrot.lane.b32.xlu0 %v1834, 64
      %v2355 = vpop.permute.xlu0 %2354
      %2356 = vrot.lane.b32.xlu0 %v1840, 64
      %v2357 = vpop.permute.xlu0 %2356
      %2358 = vrot.lane.b32.xlu0 %v1844, 64
      %v2359 = vpop.permute.xlu0 %2358
      %2360 = vrot.lane.b32.xlu0 %v1850, 64
      %v2361 = vpop.permute.xlu0 %2360
      %2362 = vrot.lane.b32.xlu0 %v1854, 64
      %v2363 = vpop.permute.xlu0 %2362
      %2364 = vrot.lane.b32.xlu0 %v1860, 64
      %v2365 = vpop.permute.xlu0 %2364
      %2366 = vrot.lane.b32.xlu0 %v1864, 64
      %v2367 = vpop.permute.xlu0 %2366
      %2368 = vrot.lane.b32.xlu0 %v1870, 64
      %v2369 = vpop.permute.xlu0 %2368
      %2370 = vrot.lane.b32.xlu0 %v1874, 64
      %v2371 = vpop.permute.xlu0 %2370
      %2372 = vrot.lane.b32.xlu0 %v1880, 64
      %v2373 = vpop.permute.xlu0 %2372
      %2374 = vrot.lane.b32.xlu0 %v1884, 64
      %v2375 = vpop.permute.xlu0 %2374
      %2376 = vrot.lane.b32.xlu0 %v1890, 64
      %v2377 = vpop.permute.xlu0 %2376
      %2378 = vrot.lane.b32.xlu0 %v1894, 64
      %v2379 = vpop.permute.xlu0 %2378
      %v2380 = vmul.f32 %v2317, %v668
      %v2381 = vmul.f32 %v2319, %v669
      %v2382 = vmul.f32 %v2321, %v670
      %v2383 = vmul.f32 %v2323, %v671
      %v2384 = vmul.f32 %v2325, %v672
      %v2385 = vmul.f32 %v2327, %v673
      %v2386 = vmul.f32 %v2329, %v674
      %v2387 = vmul.f32 %v2331, %v675
      %v2388 = vmul.f32 %v2333, %v676
      %v2389 = vmul.f32 %v2335, %v677
      %v2390 = vmul.f32 %v2337, %v678
      %v2391 = vmul.f32 %v2339, %v679
      %v2392 = vmul.f32 %v2341, %v680
      %v2393 = vmul.f32 %v2343, %v681
      %v2394 = vmul.f32 %v2345, %v682
      %v2395 = vmul.f32 %v2347, %v683
      %v2396 = vmul.f32 %v2349, %v684
      %v2397 = vmul.f32 %v2351, %v685
      %v2398 = vmul.f32 %v2353, %v686
      %v2399 = vmul.f32 %v2355, %v687
      %v2400 = vmul.f32 %v2357, %v688
      %v2401 = vmul.f32 %v2359, %v689
      %v2402 = vmul.f32 %v2361, %v690
      %v2403 = vmul.f32 %v2363, %v691
      %v2404 = vmul.f32 %v2365, %v692
      %v2405 = vmul.f32 %v2367, %v693
      %v2406 = vmul.f32 %v2369, %v694
      %v2407 = vmul.f32 %v2371, %v695
      %v2408 = vmul.f32 %v2373, %v696
      %v2409 = vmul.f32 %v2375, %v697
      %v2410 = vmul.f32 %v2377, %v698
      %v2411 = vmul.f32 %v2379, %v699
      %v2412 = vadd.f32 %v2284, %v2380
      %v2413 = vadd.f32 %v2285, %v2381
      %v2414 = vadd.f32 %v2286, %v2382
      %v2415 = vadd.f32 %v2287, %v2383
      %v2416 = vadd.f32 %v2288, %v2384
      %v2417 = vadd.f32 %v2289, %v2385
      %v2418 = vadd.f32 %v2290, %v2386
      %v2419 = vadd.f32 %v2291, %v2387
      %v2420 = vadd.f32 %v2292, %v2388
      %v2421 = vadd.f32 %v2293, %v2389
      %v2422 = vadd.f32 %v2294, %v2390
      %v2423 = vadd.f32 %v2295, %v2391
      %v2424 = vadd.f32 %v2296, %v2392
      %v2425 = vadd.f32 %v2297, %v2393
      %v2426 = vadd.f32 %v2298, %v2394
      %v2427 = vadd.f32 %v2299, %v2395
      %v2428 = vadd.f32 %v2300, %v2396
      %v2429 = vadd.f32 %v2301, %v2397
      %v2430 = vadd.f32 %v2302, %v2398
      %v2431 = vadd.f32 %v2303, %v2399
      %v2432 = vadd.f32 %v2304, %v2400
      %v2433 = vadd.f32 %v2305, %v2401
      %v2434 = vadd.f32 %v2306, %v2402
      %v2435 = vadd.f32 %v2307, %v2403
      %v2436 = vadd.f32 %v2308, %v2404
      %v2437 = vadd.f32 %v2309, %v2405
      %v2438 = vadd.f32 %v2310, %v2406
      %v2439 = vadd.f32 %v2311, %v2407
      %v2440 = vadd.f32 %v2312, %v2408
      %v2441 = vadd.f32 %v2313, %v2409
      %v2442 = vadd.f32 %v2314, %v2410
      %v2443 = vadd.f32 %v2315, %v2411
      %v2444 = vmul.f32 %v1933, %v636
      %v2445 = vmul.f32 %v1937, %v637
      %v2446 = vmul.f32 %v1943, %v638
      %v2447 = vmul.f32 %v1947, %v639
      %v2448 = vmul.f32 %v1953, %v640
      %v2449 = vmul.f32 %v1957, %v641
      %v2450 = vmul.f32 %v1963, %v642
      %v2451 = vmul.f32 %v1967, %v643
      %v2452 = vmul.f32 %v1973, %v644
      %v2453 = vmul.f32 %v1977, %v645
      %v2454 = vmul.f32 %v1983, %v646
      %v2455 = vmul.f32 %v1987, %v647
      %v2456 = vmul.f32 %v1993, %v648
      %v2457 = vmul.f32 %v1997, %v649
      %v2458 = vmul.f32 %v2003, %v650
      %v2459 = vmul.f32 %v2007, %v651
      %v2460 = vmul.f32 %v2013, %v652
      %v2461 = vmul.f32 %v2017, %v653
      %v2462 = vmul.f32 %v2023, %v654
      %v2463 = vmul.f32 %v2027, %v655
      %v2464 = vmul.f32 %v2033, %v656
      %v2465 = vmul.f32 %v2037, %v657
      %v2466 = vmul.f32 %v2043, %v658
      %v2467 = vmul.f32 %v2047, %v659
      %v2468 = vmul.f32 %v2053, %v660
      %v2469 = vmul.f32 %v2057, %v661
      %v2470 = vmul.f32 %v2063, %v662
      %v2471 = vmul.f32 %v2067, %v663
      %v2472 = vmul.f32 %v2073, %v664
      %v2473 = vmul.f32 %v2077, %v665
      %v2474 = vmul.f32 %v2083, %v666
      %v2475 = vmul.f32 %v2087, %v667
      %2476 = vrot.lane.b32.xlu0 %v1933, 64
      %v2477 = vpop.permute.xlu0 %2476
      %2478 = vrot.lane.b32.xlu0 %v1937, 64
      %v2479 = vpop.permute.xlu0 %2478
      %2480 = vrot.lane.b32.xlu0 %v1943, 64
      %v2481 = vpop.permute.xlu0 %2480
      %2482 = vrot.lane.b32.xlu0 %v1947, 64
      %v2483 = vpop.permute.xlu0 %2482
      %2484 = vrot.lane.b32.xlu0 %v1953, 64
      %v2485 = vpop.permute.xlu0 %2484
      %2486 = vrot.lane.b32.xlu0 %v1957, 64
      %v2487 = vpop.permute.xlu0 %2486
      %2488 = vrot.lane.b32.xlu0 %v1963, 64
      %v2489 = vpop.permute.xlu0 %2488
      %2490 = vrot.lane.b32.xlu0 %v1967, 64
      %v2491 = vpop.permute.xlu0 %2490
      %2492 = vrot.lane.b32.xlu0 %v1973, 64
      %v2493 = vpop.permute.xlu0 %2492
      %2494 = vrot.lane.b32.xlu0 %v1977, 64
      %v2495 = vpop.permute.xlu0 %2494
      %2496 = vrot.lane.b32.xlu0 %v1983, 64
      %v2497 = vpop.permute.xlu0 %2496
      %2498 = vrot.lane.b32.xlu0 %v1987, 64
      %v2499 = vpop.permute.xlu0 %2498
      %2500 = vrot.lane.b32.xlu0 %v1993, 64
      %v2501 = vpop.permute.xlu0 %2500
      %2502 = vrot.lane.b32.xlu0 %v1997, 64
      %v2503 = vpop.permute.xlu0 %2502
      %2504 = vrot.lane.b32.xlu0 %v2003, 64
      %v2505 = vpop.permute.xlu0 %2504
      %2506 = vrot.lane.b32.xlu0 %v2007, 64
      %v2507 = vpop.permute.xlu0 %2506
      %2508 = vrot.lane.b32.xlu0 %v2013, 64
      %v2509 = vpop.permute.xlu0 %2508
      %2510 = vrot.lane.b32.xlu0 %v2017, 64
      %v2511 = vpop.permute.xlu0 %2510
      %2512 = vrot.lane.b32.xlu0 %v2023, 64
      %v2513 = vpop.permute.xlu0 %2512
      %2514 = vrot.lane.b32.xlu0 %v2027, 64
      %v2515 = vpop.permute.xlu0 %2514
      %2516 = vrot.lane.b32.xlu0 %v2033, 64
      %v2517 = vpop.permute.xlu0 %2516
      %2518 = vrot.lane.b32.xlu0 %v2037, 64
      %v2519 = vpop.permute.xlu0 %2518
      %2520 = vrot.lane.b32.xlu0 %v2043, 64
      %v2521 = vpop.permute.xlu0 %2520
      %2522 = vrot.lane.b32.xlu0 %v2047, 64
      %v2523 = vpop.permute.xlu0 %2522
      %2524 = vrot.lane.b32.xlu0 %v2053, 64
      %v2525 = vpop.permute.xlu0 %2524
      %2526 = vrot.lane.b32.xlu0 %v2057, 64
      %v2527 = vpop.permute.xlu0 %2526
      %2528 = vrot.lane.b32.xlu0 %v2063, 64
      %v2529 = vpop.permute.xlu0 %2528
      %2530 = vrot.lane.b32.xlu0 %v2067, 64
      %v2531 = vpop.permute.xlu0 %2530
      %2532 = vrot.lane.b32.xlu0 %v2073, 64
      %v2533 = vpop.permute.xlu0 %2532
      %2534 = vrot.lane.b32.xlu0 %v2077, 64
      %v2535 = vpop.permute.xlu0 %2534
      %2536 = vrot.lane.b32.xlu0 %v2083, 64
      %v2537 = vpop.permute.xlu0 %2536
      %2538 = vrot.lane.b32.xlu0 %v2087, 64
      %v2539 = vpop.permute.xlu0 %2538
      %v2540 = vmul.f32 %v2477, %v668
      %v2541 = vmul.f32 %v2479, %v669
      %v2542 = vmul.f32 %v2481, %v670
      %v2543 = vmul.f32 %v2483, %v671
      %v2544 = vmul.f32 %v2485, %v672
      %v2545 = vmul.f32 %v2487, %v673
      %v2546 = vmul.f32 %v2489, %v674
      %v2547 = vmul.f32 %v2491, %v675
      %v2548 = vmul.f32 %v2493, %v676
      %v2549 = vmul.f32 %v2495, %v677
      %v2550 = vmul.f32 %v2497, %v678
      %v2551 = vmul.f32 %v2499, %v679
      %v2552 = vmul.f32 %v2501, %v680
      %v2553 = vmul.f32 %v2503, %v681
      %v2554 = vmul.f32 %v2505, %v682
      %v2555 = vmul.f32 %v2507, %v683
      %v2556 = vmul.f32 %v2509, %v684
      %v2557 = vmul.f32 %v2511, %v685
      %v2558 = vmul.f32 %v2513, %v686
      %v2559 = vmul.f32 %v2515, %v687
      %v2560 = vmul.f32 %v2517, %v688
      %v2561 = vmul.f32 %v2519, %v689
      %v2562 = vmul.f32 %v2521, %v690
      %v2563 = vmul.f32 %v2523, %v691
      %v2564 = vmul.f32 %v2525, %v692
      %v2565 = vmul.f32 %v2527, %v693
      %v2566 = vmul.f32 %v2529, %v694
      %v2567 = vmul.f32 %v2531, %v695
      %v2568 = vmul.f32 %v2533, %v696
      %v2569 = vmul.f32 %v2535, %v697
      %v2570 = vmul.f32 %v2537, %v698
      %v2571 = vmul.f32 %v2539, %v699
      %v2572 = vadd.f32 %v2444, %v2540
      %v2573 = vadd.f32 %v2445, %v2541
      %v2574 = vadd.f32 %v2446, %v2542
      %v2575 = vadd.f32 %v2447, %v2543
      %v2576 = vadd.f32 %v2448, %v2544
      %v2577 = vadd.f32 %v2449, %v2545
      %v2578 = vadd.f32 %v2450, %v2546
      %v2579 = vadd.f32 %v2451, %v2547
      %v2580 = vadd.f32 %v2452, %v2548
      %v2581 = vadd.f32 %v2453, %v2549
      %v2582 = vadd.f32 %v2454, %v2550
      %v2583 = vadd.f32 %v2455, %v2551
      %v2584 = vadd.f32 %v2456, %v2552
      %v2585 = vadd.f32 %v2457, %v2553
      %v2586 = vadd.f32 %v2458, %v2554
      %v2587 = vadd.f32 %v2459, %v2555
      %v2588 = vadd.f32 %v2460, %v2556
      %v2589 = vadd.f32 %v2461, %v2557
      %v2590 = vadd.f32 %v2462, %v2558
      %v2591 = vadd.f32 %v2463, %v2559
      %v2592 = vadd.f32 %v2464, %v2560
      %v2593 = vadd.f32 %v2465, %v2561
      %v2594 = vadd.f32 %v2466, %v2562
      %v2595 = vadd.f32 %v2467, %v2563
      %v2596 = vadd.f32 %v2468, %v2564
      %v2597 = vadd.f32 %v2469, %v2565
      %v2598 = vadd.f32 %v2470, %v2566
      %v2599 = vadd.f32 %v2471, %v2567
      %v2600 = vadd.f32 %v2472, %v2568
      %v2601 = vadd.f32 %v2473, %v2569
      %v2602 = vadd.f32 %v2474, %v2570
      %v2603 = vadd.f32 %v2475, %v2571
      %v2604 = vpack.c.bf16 %v2413, %v2412
      %v2605 = vpack.c.bf16 %v2415, %v2414
      %v2606 = vpack.c.bf16 %v2417, %v2416
      %v2607 = vpack.c.bf16 %v2419, %v2418
      %v2608 = vpack.c.bf16 %v2421, %v2420
      %v2609 = vpack.c.bf16 %v2423, %v2422
      %v2610 = vpack.c.bf16 %v2425, %v2424
      %v2611 = vpack.c.bf16 %v2427, %v2426
      %v2612 = vpack.c.bf16 %v2429, %v2428
      %v2613 = vpack.c.bf16 %v2431, %v2430
      %v2614 = vpack.c.bf16 %v2433, %v2432
      %v2615 = vpack.c.bf16 %v2435, %v2434
      %v2616 = vpack.c.bf16 %v2437, %v2436
      %v2617 = vpack.c.bf16 %v2439, %v2438
      %v2618 = vpack.c.bf16 %v2441, %v2440
      %v2619 = vpack.c.bf16 %v2443, %v2442
      %v2620 = vpack.c.bf16 %v2573, %v2572
      %v2621 = vpack.c.bf16 %v2575, %v2574
      %v2622 = vpack.c.bf16 %v2577, %v2576
      %v2623 = vpack.c.bf16 %v2579, %v2578
      %v2624 = vpack.c.bf16 %v2581, %v2580
      %v2625 = vpack.c.bf16 %v2583, %v2582
      %v2626 = vpack.c.bf16 %v2585, %v2584
      %v2627 = vpack.c.bf16 %v2587, %v2586
      %v2628 = vpack.c.bf16 %v2589, %v2588
      %v2629 = vpack.c.bf16 %v2591, %v2590
      %v2630 = vpack.c.bf16 %v2593, %v2592
      %v2631 = vpack.c.bf16 %v2595, %v2594
      %v2632 = vpack.c.bf16 %v2597, %v2596
      %v2633 = vpack.c.bf16 %v2599, %v2598
      %v2634 = vpack.c.bf16 %v2601, %v2600
      %v2635 = vpack.c.bf16 %v2603, %v2602
      %v2636 = vpack.c.bf16 %v2130, %v2126
      %v2637 = vpack.c.bf16 %v2140, %v2136
      %v2638 = vpack.c.bf16 %v2150, %v2146
      %v2639 = vpack.c.bf16 %v2160, %v2156
      %v2640 = vpack.c.bf16 %v2170, %v2166
      %v2641 = vpack.c.bf16 %v2180, %v2176
      %v2642 = vpack.c.bf16 %v2190, %v2186
      %v2643 = vpack.c.bf16 %v2200, %v2196
      %v2644 = vpack.c.bf16 %v2210, %v2206
      %v2645 = vpack.c.bf16 %v2220, %v2216
      %v2646 = vpack.c.bf16 %v2230, %v2226
      %v2647 = vpack.c.bf16 %v2240, %v2236
      %v2648 = vpack.c.bf16 %v2250, %v2246
      %v2649 = vpack.c.bf16 %v2260, %v2256
      %v2650 = vpack.c.bf16 %v2270, %v2266
      %v2651 = vpack.c.bf16 %v2280, %v2276
      %v2652 = vmul.f32 %v1742, %v636
      %v2653 = vmul.f32 %v1746, %v637
      %v2654 = vmul.f32 %v1752, %v638
      %v2655 = vmul.f32 %v1756, %v639
      %v2656 = vmul.f32 %v1762, %v640
      %v2657 = vmul.f32 %v1766, %v641
      %v2658 = vmul.f32 %v1772, %v642
      %v2659 = vmul.f32 %v1776, %v643
      %v2660 = vmul.f32 %v1782, %v644
      %v2661 = vmul.f32 %v1786, %v645
      %v2662 = vmul.f32 %v1792, %v646
      %v2663 = vmul.f32 %v1796, %v647
      %v2664 = vmul.f32 %v1802, %v648
      %v2665 = vmul.f32 %v1806, %v649
      %v2666 = vmul.f32 %v1812, %v650
      %v2667 = vmul.f32 %v1816, %v651
      %v2668 = vmul.f32 %v1822, %v652
      %v2669 = vmul.f32 %v1826, %v653
      %v2670 = vmul.f32 %v1832, %v654
      %v2671 = vmul.f32 %v1836, %v655
      %v2672 = vmul.f32 %v1842, %v656
      %v2673 = vmul.f32 %v1846, %v657
      %v2674 = vmul.f32 %v1852, %v658
      %v2675 = vmul.f32 %v1856, %v659
      %v2676 = vmul.f32 %v1862, %v660
      %v2677 = vmul.f32 %v1866, %v661
      %v2678 = vmul.f32 %v1872, %v662
      %v2679 = vmul.f32 %v1876, %v663
      %v2680 = vmul.f32 %v1882, %v664
      %v2681 = vmul.f32 %v1886, %v665
      %v2682 = vmul.f32 %v1892, %v666
      %v2683 = vmul.f32 %v1896, %v667
      %2684 = vrot.lane.b32.xlu0 %v1742, 64
      %v2685 = vpop.permute.xlu0 %2684
      %2686 = vrot.lane.b32.xlu0 %v1746, 64
      %v2687 = vpop.permute.xlu0 %2686
      %2688 = vrot.lane.b32.xlu0 %v1752, 64
      %v2689 = vpop.permute.xlu0 %2688
      %2690 = vrot.lane.b32.xlu0 %v1756, 64
      %v2691 = vpop.permute.xlu0 %2690
      %2692 = vrot.lane.b32.xlu0 %v1762, 64
      %v2693 = vpop.permute.xlu0 %2692
      %2694 = vrot.lane.b32.xlu0 %v1766, 64
      %v2695 = vpop.permute.xlu0 %2694
      %2696 = vrot.lane.b32.xlu0 %v1772, 64
      %v2697 = vpop.permute.xlu0 %2696
      %2698 = vrot.lane.b32.xlu0 %v1776, 64
      %v2699 = vpop.permute.xlu0 %2698
      %2700 = vrot.lane.b32.xlu0 %v1782, 64
      %v2701 = vpop.permute.xlu0 %2700
      %2702 = vrot.lane.b32.xlu0 %v1786, 64
      %v2703 = vpop.permute.xlu0 %2702
      %2704 = vrot.lane.b32.xlu0 %v1792, 64
      %v2705 = vpop.permute.xlu0 %2704
      %2706 = vrot.lane.b32.xlu0 %v1796, 64
      %v2707 = vpop.permute.xlu0 %2706
      %2708 = vrot.lane.b32.xlu0 %v1802, 64
      %v2709 = vpop.permute.xlu0 %2708
      %2710 = vrot.lane.b32.xlu0 %v1806, 64
      %v2711 = vpop.permute.xlu0 %2710
      %2712 = vrot.lane.b32.xlu0 %v1812, 64
      %v2713 = vpop.permute.xlu0 %2712
      %2714 = vrot.lane.b32.xlu0 %v1816, 64
      %v2715 = vpop.permute.xlu0 %2714
      %2716 = vrot.lane.b32.xlu0 %v1822, 64
      %v2717 = vpop.permute.xlu0 %2716
      %2718 = vrot.lane.b32.xlu0 %v1826, 64
      %v2719 = vpop.permute.xlu0 %2718
      %2720 = vrot.lane.b32.xlu0 %v1832, 64
      %v2721 = vpop.permute.xlu0 %2720
      %2722 = vrot.lane.b32.xlu0 %v1836, 64
      %v2723 = vpop.permute.xlu0 %2722
      %2724 = vrot.lane.b32.xlu0 %v1842, 64
      %v2725 = vpop.permute.xlu0 %2724
      %2726 = vrot.lane.b32.xlu0 %v1846, 64
      %v2727 = vpop.permute.xlu0 %2726
      %2728 = vrot.lane.b32.xlu0 %v1852, 64
      %v2729 = vpop.permute.xlu0 %2728
      %2730 = vrot.lane.b32.xlu0 %v1856, 64
      %v2731 = vpop.permute.xlu0 %2730
      %2732 = vrot.lane.b32.xlu0 %v1862, 64
      %v2733 = vpop.permute.xlu0 %2732
      %2734 = vrot.lane.b32.xlu0 %v1866, 64
      %v2735 = vpop.permute.xlu0 %2734
      %2736 = vrot.lane.b32.xlu0 %v1872, 64
      %v2737 = vpop.permute.xlu0 %2736
      %2738 = vrot.lane.b32.xlu0 %v1876, 64
      %v2739 = vpop.permute.xlu0 %2738
      %2740 = vrot.lane.b32.xlu0 %v1882, 64
      %v2741 = vpop.permute.xlu0 %2740
      %2742 = vrot.lane.b32.xlu0 %v1886, 64
      %v2743 = vpop.permute.xlu0 %2742
      %2744 = vrot.lane.b32.xlu0 %v1892, 64
      %v2745 = vpop.permute.xlu0 %2744
      %2746 = vrot.lane.b32.xlu0 %v1896, 64
      %v2747 = vpop.permute.xlu0 %2746
      %v2748 = vmul.f32 %v2685, %v668
      %v2749 = vmul.f32 %v2687, %v669
      %v2750 = vmul.f32 %v2689, %v670
      %v2751 = vmul.f32 %v2691, %v671
      %v2752 = vmul.f32 %v2693, %v672
      %v2753 = vmul.f32 %v2695, %v673
      %v2754 = vmul.f32 %v2697, %v674
      %v2755 = vmul.f32 %v2699, %v675
      %v2756 = vmul.f32 %v2701, %v676
      %v2757 = vmul.f32 %v2703, %v677
      %v2758 = vmul.f32 %v2705, %v678
      %v2759 = vmul.f32 %v2707, %v679
      %v2760 = vmul.f32 %v2709, %v680
      %v2761 = vmul.f32 %v2711, %v681
      %v2762 = vmul.f32 %v2713, %v682
      %v2763 = vmul.f32 %v2715, %v683
      %v2764 = vmul.f32 %v2717, %v684
      %v2765 = vmul.f32 %v2719, %v685
      %v2766 = vmul.f32 %v2721, %v686
      %v2767 = vmul.f32 %v2723, %v687
      %v2768 = vmul.f32 %v2725, %v688
      %v2769 = vmul.f32 %v2727, %v689
      %v2770 = vmul.f32 %v2729, %v690
      %v2771 = vmul.f32 %v2731, %v691
      %v2772 = vmul.f32 %v2733, %v692
      %v2773 = vmul.f32 %v2735, %v693
      %v2774 = vmul.f32 %v2737, %v694
      %v2775 = vmul.f32 %v2739, %v695
      %v2776 = vmul.f32 %v2741, %v696
      %v2777 = vmul.f32 %v2743, %v697
      %v2778 = vmul.f32 %v2745, %v698
      %v2779 = vmul.f32 %v2747, %v699
      %v2780 = vadd.f32 %v2652, %v2748
      %v2781 = vadd.f32 %v2653, %v2749
      %v2782 = vadd.f32 %v2654, %v2750
      %v2783 = vadd.f32 %v2655, %v2751
      %v2784 = vadd.f32 %v2656, %v2752
      %v2785 = vadd.f32 %v2657, %v2753
      %v2786 = vadd.f32 %v2658, %v2754
      %v2787 = vadd.f32 %v2659, %v2755
      %v2788 = vadd.f32 %v2660, %v2756
      %v2789 = vadd.f32 %v2661, %v2757
      %v2790 = vadd.f32 %v2662, %v2758
      %v2791 = vadd.f32 %v2663, %v2759
      %v2792 = vadd.f32 %v2664, %v2760
      %v2793 = vadd.f32 %v2665, %v2761
      %v2794 = vadd.f32 %v2666, %v2762
      %v2795 = vadd.f32 %v2667, %v2763
      %v2796 = vadd.f32 %v2668, %v2764
      %v2797 = vadd.f32 %v2669, %v2765
      %v2798 = vadd.f32 %v2670, %v2766
      %v2799 = vadd.f32 %v2671, %v2767
      %v2800 = vadd.f32 %v2672, %v2768
      %v2801 = vadd.f32 %v2673, %v2769
      %v2802 = vadd.f32 %v2674, %v2770
      %v2803 = vadd.f32 %v2675, %v2771
      %v2804 = vadd.f32 %v2676, %v2772
      %v2805 = vadd.f32 %v2677, %v2773
      %v2806 = vadd.f32 %v2678, %v2774
      %v2807 = vadd.f32 %v2679, %v2775
      %v2808 = vadd.f32 %v2680, %v2776
      %v2809 = vadd.f32 %v2681, %v2777
      %v2810 = vadd.f32 %v2682, %v2778
      %v2811 = vadd.f32 %v2683, %v2779
      %v2812 = vmul.f32 %v1935, %v636
      %v2813 = vmul.f32 %v1939, %v637
      %v2814 = vmul.f32 %v1945, %v638
      %v2815 = vmul.f32 %v1949, %v639
      %v2816 = vmul.f32 %v1955, %v640
      %v2817 = vmul.f32 %v1959, %v641
      %v2818 = vmul.f32 %v1965, %v642
      %v2819 = vmul.f32 %v1969, %v643
      %v2820 = vmul.f32 %v1975, %v644
      %v2821 = vmul.f32 %v1979, %v645
      %v2822 = vmul.f32 %v1985, %v646
      %v2823 = vmul.f32 %v1989, %v647
      %v2824 = vmul.f32 %v1995, %v648
      %v2825 = vmul.f32 %v1999, %v649
      %v2826 = vmul.f32 %v2005, %v650
      %v2827 = vmul.f32 %v2009, %v651
      %v2828 = vmul.f32 %v2015, %v652
      %v2829 = vmul.f32 %v2019, %v653
      %v2830 = vmul.f32 %v2025, %v654
      %v2831 = vmul.f32 %v2029, %v655
      %v2832 = vmul.f32 %v2035, %v656
      %v2833 = vmul.f32 %v2039, %v657
      %v2834 = vmul.f32 %v2045, %v658
      %v2835 = vmul.f32 %v2049, %v659
      %v2836 = vmul.f32 %v2055, %v660
      %v2837 = vmul.f32 %v2059, %v661
      %v2838 = vmul.f32 %v2065, %v662
      %v2839 = vmul.f32 %v2069, %v663
      %v2840 = vmul.f32 %v2075, %v664
      %v2841 = vmul.f32 %v2079, %v665
      %v2842 = vmul.f32 %v2085, %v666
      %v2843 = vmul.f32 %v2089, %v667
      %2844 = vrot.lane.b32.xlu0 %v1935, 64
      %v2845 = vpop.permute.xlu0 %2844
      %2846 = vrot.lane.b32.xlu0 %v1939, 64
      %v2847 = vpop.permute.xlu0 %2846
      %2848 = vrot.lane.b32.xlu0 %v1945, 64
      %v2849 = vpop.permute.xlu0 %2848
      %2850 = vrot.lane.b32.xlu0 %v1949, 64
      %v2851 = vpop.permute.xlu0 %2850
      %2852 = vrot.lane.b32.xlu0 %v1955, 64
      %v2853 = vpop.permute.xlu0 %2852
      %2854 = vrot.lane.b32.xlu0 %v1959, 64
      %v2855 = vpop.permute.xlu0 %2854
      %2856 = vrot.lane.b32.xlu0 %v1965, 64
      %v2857 = vpop.permute.xlu0 %2856
      %2858 = vrot.lane.b32.xlu0 %v1969, 64
      %v2859 = vpop.permute.xlu0 %2858
      %2860 = vrot.lane.b32.xlu0 %v1975, 64
      %v2861 = vpop.permute.xlu0 %2860
      %2862 = vrot.lane.b32.xlu0 %v1979, 64
      %v2863 = vpop.permute.xlu0 %2862
      %2864 = vrot.lane.b32.xlu0 %v1985, 64
      %v2865 = vpop.permute.xlu0 %2864
      %2866 = vrot.lane.b32.xlu0 %v1989, 64
      %v2867 = vpop.permute.xlu0 %2866
      %2868 = vrot.lane.b32.xlu0 %v1995, 64
      %v2869 = vpop.permute.xlu0 %2868
      %2870 = vrot.lane.b32.xlu0 %v1999, 64
      %v2871 = vpop.permute.xlu0 %2870
      %2872 = vrot.lane.b32.xlu0 %v2005, 64
      %v2873 = vpop.permute.xlu0 %2872
      %2874 = vrot.lane.b32.xlu0 %v2009, 64
      %v2875 = vpop.permute.xlu0 %2874
      %2876 = vrot.lane.b32.xlu0 %v2015, 64
      %v2877 = vpop.permute.xlu0 %2876
      %2878 = vrot.lane.b32.xlu0 %v2019, 64
      %v2879 = vpop.permute.xlu0 %2878
      %2880 = vrot.lane.b32.xlu0 %v2025, 64
      %v2881 = vpop.permute.xlu0 %2880
      %2882 = vrot.lane.b32.xlu0 %v2029, 64
      %v2883 = vpop.permute.xlu0 %2882
      %2884 = vrot.lane.b32.xlu0 %v2035, 64
      %v2885 = vpop.permute.xlu0 %2884
      %2886 = vrot.lane.b32.xlu0 %v2039, 64
      %v2887 = vpop.permute.xlu0 %2886
      %2888 = vrot.lane.b32.xlu0 %v2045, 64
      %v2889 = vpop.permute.xlu0 %2888
      %2890 = vrot.lane.b32.xlu0 %v2049, 64
      %v2891 = vpop.permute.xlu0 %2890
      %2892 = vrot.lane.b32.xlu0 %v2055, 64
      %v2893 = vpop.permute.xlu0 %2892
      %2894 = vrot.lane.b32.xlu0 %v2059, 64
      %v2895 = vpop.permute.xlu0 %2894
      %2896 = vrot.lane.b32.xlu0 %v2065, 64
      %v2897 = vpop.permute.xlu0 %2896
      %2898 = vrot.lane.b32.xlu0 %v2069, 64
      %v2899 = vpop.permute.xlu0 %2898
      %2900 = vrot.lane.b32.xlu0 %v2075, 64
      %v2901 = vpop.permute.xlu0 %2900
      %2902 = vrot.lane.b32.xlu0 %v2079, 64
      %v2903 = vpop.permute.xlu0 %2902
      %2904 = vrot.lane.b32.xlu0 %v2085, 64
      %v2905 = vpop.permute.xlu0 %2904
      %2906 = vrot.lane.b32.xlu0 %v2089, 64
      %v2907 = vpop.permute.xlu0 %2906
      %v2908 = vmul.f32 %v2845, %v668
      %v2909 = vmul.f32 %v2847, %v669
      %v2910 = vmul.f32 %v2849, %v670
      %v2911 = vmul.f32 %v2851, %v671
      %v2912 = vmul.f32 %v2853, %v672
      %v2913 = vmul.f32 %v2855, %v673
      %v2914 = vmul.f32 %v2857, %v674
      %v2915 = vmul.f32 %v2859, %v675
      %v2916 = vmul.f32 %v2861, %v676
      %v2917 = vmul.f32 %v2863, %v677
      %v2918 = vmul.f32 %v2865, %v678
      %v2919 = vmul.f32 %v2867, %v679
      %v2920 = vmul.f32 %v2869, %v680
      %v2921 = vmul.f32 %v2871, %v681
      %v2922 = vmul.f32 %v2873, %v682
      %v2923 = vmul.f32 %v2875, %v683
      %v2924 = vmul.f32 %v2877, %v684
      %v2925 = vmul.f32 %v2879, %v685
      %v2926 = vmul.f32 %v2881, %v686
      %v2927 = vmul.f32 %v2883, %v687
      %v2928 = vmul.f32 %v2885, %v688
      %v2929 = vmul.f32 %v2887, %v689
      %v2930 = vmul.f32 %v2889, %v690
      %v2931 = vmul.f32 %v2891, %v691
      %v2932 = vmul.f32 %v2893, %v692
      %v2933 = vmul.f32 %v2895, %v693
      %v2934 = vmul.f32 %v2897, %v694
      %v2935 = vmul.f32 %v2899, %v695
      %v2936 = vmul.f32 %v2901, %v696
      %v2937 = vmul.f32 %v2903, %v697
      %v2938 = vmul.f32 %v2905, %v698
      %v2939 = vmul.f32 %v2907, %v699
      %v2940 = vadd.f32 %v2812, %v2908
      %v2941 = vadd.f32 %v2813, %v2909
      %v2942 = vadd.f32 %v2814, %v2910
      %v2943 = vadd.f32 %v2815, %v2911
      %v2944 = vadd.f32 %v2816, %v2912
      %v2945 = vadd.f32 %v2817, %v2913
      %v2946 = vadd.f32 %v2818, %v2914
      %v2947 = vadd.f32 %v2819, %v2915
      %v2948 = vadd.f32 %v2820, %v2916
      %v2949 = vadd.f32 %v2821, %v2917
      %v2950 = vadd.f32 %v2822, %v2918
      %v2951 = vadd.f32 %v2823, %v2919
      %v2952 = vadd.f32 %v2824, %v2920
      %v2953 = vadd.f32 %v2825, %v2921
      %v2954 = vadd.f32 %v2826, %v2922
      %v2955 = vadd.f32 %v2827, %v2923
      %v2956 = vadd.f32 %v2828, %v2924
      %v2957 = vadd.f32 %v2829, %v2925
      %v2958 = vadd.f32 %v2830, %v2926
      %v2959 = vadd.f32 %v2831, %v2927
      %v2960 = vadd.f32 %v2832, %v2928
      %v2961 = vadd.f32 %v2833, %v2929
      %v2962 = vadd.f32 %v2834, %v2930
      %v2963 = vadd.f32 %v2835, %v2931
      %v2964 = vadd.f32 %v2836, %v2932
      %v2965 = vadd.f32 %v2837, %v2933
      %v2966 = vadd.f32 %v2838, %v2934
      %v2967 = vadd.f32 %v2839, %v2935
      %v2968 = vadd.f32 %v2840, %v2936
      %v2969 = vadd.f32 %v2841, %v2937
      %v2970 = vadd.f32 %v2842, %v2938
      %v2971 = vadd.f32 %v2843, %v2939
      %v2972 = vpack.c.bf16 %v2781, %v2780
      %v2973 = vpack.c.bf16 %v2783, %v2782
      %v2974 = vpack.c.bf16 %v2785, %v2784
      %v2975 = vpack.c.bf16 %v2787, %v2786
      %v2976 = vpack.c.bf16 %v2789, %v2788
      %v2977 = vpack.c.bf16 %v2791, %v2790
      %v2978 = vpack.c.bf16 %v2793, %v2792
      %v2979 = vpack.c.bf16 %v2795, %v2794
      %v2980 = vpack.c.bf16 %v2797, %v2796
      %v2981 = vpack.c.bf16 %v2799, %v2798
      %v2982 = vpack.c.bf16 %v2801, %v2800
      %v2983 = vpack.c.bf16 %v2803, %v2802
      %v2984 = vpack.c.bf16 %v2805, %v2804
      %v2985 = vpack.c.bf16 %v2807, %v2806
      %v2986 = vpack.c.bf16 %v2809, %v2808
      %v2987 = vpack.c.bf16 %v2811, %v2810
      %v2988 = vpack.c.bf16 %v2941, %v2940
      %v2989 = vpack.c.bf16 %v2943, %v2942
      %v2990 = vpack.c.bf16 %v2945, %v2944
      %v2991 = vpack.c.bf16 %v2947, %v2946
      %v2992 = vpack.c.bf16 %v2949, %v2948
      %v2993 = vpack.c.bf16 %v2951, %v2950
      %v2994 = vpack.c.bf16 %v2953, %v2952
      %v2995 = vpack.c.bf16 %v2955, %v2954
      %v2996 = vpack.c.bf16 %v2957, %v2956
      %v2997 = vpack.c.bf16 %v2959, %v2958
      %v2998 = vpack.c.bf16 %v2961, %v2960
      %v2999 = vpack.c.bf16 %v2963, %v2962
      %v3000 = vpack.c.bf16 %v2965, %v2964
      %v3001 = vpack.c.bf16 %v2967, %v2966
      %v3002 = vpack.c.bf16 %v2969, %v2968
      %v3003 = vpack.c.bf16 %v2971, %v2970
      %v3004 = vpack.c.bf16 %v2132, %v2128
      %v3005 = vpack.c.bf16 %v2142, %v2138
      %v3006 = vpack.c.bf16 %v2152, %v2148
      %v3007 = vpack.c.bf16 %v2162, %v2158
      %v3008 = vpack.c.bf16 %v2172, %v2168
      %v3009 = vpack.c.bf16 %v2182, %v2178
      %v3010 = vpack.c.bf16 %v2192, %v2188
      %v3011 = vpack.c.bf16 %v2202, %v2198
      %v3012 = vpack.c.bf16 %v2212, %v2208
      %v3013 = vpack.c.bf16 %v2222, %v2218
      %v3014 = vpack.c.bf16 %v2232, %v2228
      %v3015 = vpack.c.bf16 %v2242, %v2238
      %v3016 = vpack.c.bf16 %v2252, %v2248
      %v3017 = vpack.c.bf16 %v2262, %v2258
      %v3018 = vpack.c.bf16 %v2272, %v2268
      %v3019 = vpack.c.bf16 %v2282, %v2278
      %3020 = vmatprep.subr.bf16.mxu0 0
      %3021 = vmatpush1.bf16.xpose.msra.mxu0 %v2620
      %3022 = vmatprep.subr.bf16.mxu0 0
      %3023 = vmatpush1.bf16.xpose.msra.mxu0 %v2621
      %3024 = vmatprep.subr.bf16.mxu0 0
      %3025 = vmatpush1.bf16.xpose.msra.mxu0 %v2622
      %3026 = vmatprep.subr.bf16.mxu0 0
      %3027 = vmatpush1.bf16.xpose.msra.mxu0 %v2623
      %3028 = vmatprep.subr.bf16.mxu0 0
      %3029 = vmatpush1.bf16.xpose.msra.mxu0 %v2624
      %3030 = vmatprep.subr.bf16.mxu0 0
      %3031 = vmatpush1.bf16.xpose.msra.mxu0 %v2625
      %3032 = vmatprep.subr.bf16.mxu0 0
      %3033 = vmatpush1.bf16.xpose.msra.mxu0 %v2626
      %3034 = vmatprep.subr.bf16.mxu0 0
      %3035 = vmatpush1.bf16.xpose.msra.mxu0 %v2627
      %3036 = vmatprep.subr.bf16.mxu0 0
      %3037 = vmatpush1.bf16.xpose.msra.mxu0 0
      %3038 = vmatprep.subr.bf16.mxu0 0
      %3039 = vmatpush1.bf16.xpose.msra.mxu0 0
      %3040 = vmatprep.subr.bf16.mxu0 0
      %3041 = vmatpush1.bf16.xpose.msra.mxu0 0
      %3042 = vmatprep.subr.bf16.mxu0 0
      %3043 = vmatpush1.bf16.xpose.msra.mxu0 0
      %3044 = vmatprep.subr.bf16.mxu0 0
      %3045 = vmatpush1.bf16.xpose.msra.mxu0 0
      %3046 = vmatprep.subr.bf16.mxu0 0
      %3047 = vmatpush1.bf16.xpose.msra.mxu0 0
      %3048 = vmatprep.subr.bf16.mxu0 0
      %3049 = vmatpush1.bf16.xpose.msra.mxu0 0
      %3050 = vmatprep.subr.bf16.mxu0 0
      %3051 = vmatpush1.bf16.xpose.msra.mxu0 0
      %3052 = vmatprep.mubr.bf16.mxu0 0
      %3053 = vmatmul.mubr.bf16.gmra.mrb[0].mxu0 %v2604
      %v3054 = vpop.f32.mrb[0].mxu0
      %v3055 = vadd.f32 0.0, %v3054
      %v3056 = vpop.f32.mrb[0].mxu0
      %v3057 = vpop.f32.mrb[0].mxu0
      %v3058 = vadd.f32 0.0, %v3057
      %v3059 = vpop.f32.mrb[0].mxu0
      %3060 = vmatprep.mubr.bf16.mxu0 0
      %3061 = vmatmul.mubr.bf16.gmra.mrb[0].mxu0 %v2605
      %v3062 = vpop.f32.mrb[0].mxu0
      %v3063 = vadd.f32 0.0, %v3062
      %v3064 = vpop.f32.mrb[0].mxu0
      %v3065 = vpop.f32.mrb[0].mxu0
      %v3066 = vadd.f32 0.0, %v3065
      %v3067 = vpop.f32.mrb[0].mxu0
      %3068 = vmatprep.mubr.bf16.mxu0 0
      %3069 = vmatmul.mubr.bf16.gmra.mrb[0].mxu0 %v2606
      %v3070 = vpop.f32.mrb[0].mxu0
      %v3071 = vadd.f32 0.0, %v3070
      %v3072 = vpop.f32.mrb[0].mxu0
      %v3073 = vpop.f32.mrb[0].mxu0
      %v3074 = vadd.f32 0.0, %v3073
      %v3075 = vpop.f32.mrb[0].mxu0
      %3076 = vmatprep.mubr.bf16.mxu0 0
      %3077 = vmatmul.mubr.bf16.gmra.mrb[0].mxu0 %v2607
      %v3078 = vpop.f32.mrb[0].mxu0
      %v3079 = vadd.f32 0.0, %v3078
      %v3080 = vpop.f32.mrb[0].mxu0
      %v3081 = vpop.f32.mrb[0].mxu0
      %v3082 = vadd.f32 0.0, %v3081
      %v3083 = vpop.f32.mrb[0].mxu0
      %3084 = vmatprep.mubr.bf16.mxu0 0
      %3085 = vmatmul.mubr.bf16.gmra.mrb[0].mxu0 %v2608
      %v3086 = vpop.f32.mrb[0].mxu0
      %v3087 = vadd.f32 0.0, %v3086
      %v3088 = vpop.f32.mrb[0].mxu0
      %v3089 = vpop.f32.mrb[0].mxu0
      %v3090 = vadd.f32 0.0, %v3089
      %v3091 = vpop.f32.mrb[0].mxu0
      %3092 = vmatprep.mubr.bf16.mxu0 0
      %3093 = vmatmul.mubr.bf16.gmra.mrb[0].mxu0 %v2609
      %v3094 = vpop.f32.mrb[0].mxu0
      %v3095 = vadd.f32 0.0, %v3094
      %v3096 = vpop.f32.mrb[0].mxu0
      %v3097 = vpop.f32.mrb[0].mxu0
      %v3098 = vadd.f32 0.0, %v3097
      %v3099 = vpop.f32.mrb[0].mxu0
      %3100 = vmatprep.mubr.bf16.mxu0 0
      %3101 = vmatmul.mubr.bf16.gmra.mrb[0].mxu0 %v2610
      %v3102 = vpop.f32.mrb[0].mxu0
      %v3103 = vadd.f32 0.0, %v3102
      %v3104 = vpop.f32.mrb[0].mxu0
      %v3105 = vpop.f32.mrb[0].mxu0
      %v3106 = vadd.f32 0.0, %v3105
      %v3107 = vpop.f32.mrb[0].mxu0
      %3108 = vmatprep.mubr.bf16.mxu0 0
      %3109 = vmatmul.mubr.bf16.gmra.mrb[0].mxu0 %v2611
      %v3110 = vpop.f32.mrb[0].mxu0
      %v3111 = vadd.f32 0.0, %v3110
      %v3112 = vpop.f32.mrb[0].mxu0
      %v3113 = vpop.f32.mrb[0].mxu0
      %v3114 = vadd.f32 0.0, %v3113
      %v3115 = vpop.f32.mrb[0].mxu0
      %3116 = vdwg.mxu0
      %3117 = vmatprep.subr.bf16.mxu0 0
      %3118 = vmatpush1.bf16.xpose.msra.mxu0 %v2628
      %3119 = vmatprep.subr.bf16.mxu0 0
      %3120 = vmatpush1.bf16.xpose.msra.mxu0 %v2629
      %3121 = vmatprep.subr.bf16.mxu0 0
      %3122 = vmatpush1.bf16.xpose.msra.mxu0 %v2630
      %3123 = vmatprep.subr.bf16.mxu0 0
      %3124 = vmatpush1.bf16.xpose.msra.mxu0 %v2631
      %3125 = vmatprep.subr.bf16.mxu0 0
      %3126 = vmatpush1.bf16.xpose.msra.mxu0 %v2632
      %3127 = vmatprep.subr.bf16.mxu0 0
      %3128 = vmatpush1.bf16.xpose.msra.mxu0 %v2633
      %3129 = vmatprep.subr.bf16.mxu0 0
      %3130 = vmatpush1.bf16.xpose.msra.mxu0 %v2634
      %3131 = vmatprep.subr.bf16.mxu0 0
      %3132 = vmatpush1.bf16.xpose.msra.mxu0 %v2635
      %3133 = vmatprep.subr.bf16.mxu0 0
      %3134 = vmatpush1.bf16.xpose.msra.mxu0 0
      %3135 = vmatprep.subr.bf16.mxu0 0
      %3136 = vmatpush1.bf16.xpose.msra.mxu0 0
      %3137 = vmatprep.subr.bf16.mxu0 0
      %3138 = vmatpush1.bf16.xpose.msra.mxu0 0
      %3139 = vmatprep.subr.bf16.mxu0 0
      %3140 = vmatpush1.bf16.xpose.msra.mxu0 0
      %3141 = vmatprep.subr.bf16.mxu0 0
      %3142 = vmatpush1.bf16.xpose.msra.mxu0 0
      %3143 = vmatprep.subr.bf16.mxu0 0
      %3144 = vmatpush1.bf16.xpose.msra.mxu0 0
      %3145 = vmatprep.subr.bf16.mxu0 0
      %3146 = vmatpush1.bf16.xpose.msra.mxu0 0
      %3147 = vmatprep.subr.bf16.mxu0 0
      %3148 = vmatpush1.bf16.xpose.msra.mxu0 0
      %3149 = vmatprep.mubr.bf16.mxu0 0
      %3150 = vmatmul.mubr.bf16.gmra.mrb[0].mxu0 %v2612
      %v3151 = vpop.f32.mrb[0].mxu0
      %v3152 = vadd.f32 0.0, %v3151
      %v3153 = vpop.f32.mrb[0].mxu0
      %v3154 = vpop.f32.mrb[0].mxu0
      %v3155 = vadd.f32 0.0, %v3154
      %v3156 = vpop.f32.mrb[0].mxu0
      %3157 = vmatprep.mubr.bf16.mxu0 0
      %3158 = vmatmul.mubr.bf16.gmra.mrb[0].mxu0 %v2613
      %v3159 = vpop.f32.mrb[0].mxu0
      %v3160 = vadd.f32 0.0, %v3159
      %v3161 = vpop.f32.mrb[0].mxu0
      %v3162 = vpop.f32.mrb[0].mxu0
      %v3163 = vadd.f32 0.0, %v3162
      %v3164 = vpop.f32.mrb[0].mxu0
      %3165 = vmatprep.mubr.bf16.mxu0 0
      %3166 = vmatmul.mubr.bf16.gmra.mrb[0].mxu0 %v2614
      %v3167 = vpop.f32.mrb[0].mxu0
      %v3168 = vadd.f32 0.0, %v3167
      %v3169 = vpop.f32.mrb[0].mxu0
      %v3170 = vpop.f32.mrb[0].mxu0
      %v3171 = vadd.f32 0.0, %v3170
      %v3172 = vpop.f32.mrb[0].mxu0
      %3173 = vmatprep.mubr.bf16.mxu0 0
      %3174 = vmatmul.mubr.bf16.gmra.mrb[0].mxu0 %v2615
      %v3175 = vpop.f32.mrb[0].mxu0
      %v3176 = vadd.f32 0.0, %v3175
      %v3177 = vpop.f32.mrb[0].mxu0
      %v3178 = vpop.f32.mrb[0].mxu0
      %v3179 = vadd.f32 0.0, %v3178
      %v3180 = vpop.f32.mrb[0].mxu0
      %3181 = vmatprep.mubr.bf16.mxu0 0
      %3182 = vmatmul.mubr.bf16.gmra.mrb[0].mxu0 %v2616
      %v3183 = vpop.f32.mrb[0].mxu0
      %v3184 = vadd.f32 0.0, %v3183
      %v3185 = vpop.f32.mrb[0].mxu0
      %v3186 = vpop.f32.mrb[0].mxu0
      %v3187 = vadd.f32 0.0, %v3186
      %v3188 = vpop.f32.mrb[0].mxu0
      %3189 = vmatprep.mubr.bf16.mxu0 0
      %3190 = vmatmul.mubr.bf16.gmra.mrb[0].mxu0 %v2617
      %v3191 = vpop.f32.mrb[0].mxu0
      %v3192 = vadd.f32 0.0, %v3191
      %v3193 = vpop.f32.mrb[0].mxu0
      %v3194 = vpop.f32.mrb[0].mxu0
      %v3195 = vadd.f32 0.0, %v3194
      %v3196 = vpop.f32.mrb[0].mxu0
      %3197 = vmatprep.mubr.bf16.mxu0 0
      %3198 = vmatmul.mubr.bf16.gmra.mrb[0].mxu0 %v2618
      %v3199 = vpop.f32.mrb[0].mxu0
      %v3200 = vadd.f32 0.0, %v3199
      %v3201 = vpop.f32.mrb[0].mxu0
      %v3202 = vpop.f32.mrb[0].mxu0
      %v3203 = vadd.f32 0.0, %v3202
      %v3204 = vpop.f32.mrb[0].mxu0
      %3205 = vmatprep.mubr.bf16.mxu0 0
      %3206 = vmatmul.mubr.bf16.gmra.mrb[0].mxu0 %v2619
      %v3207 = vpop.f32.mrb[0].mxu0
      %v3208 = vadd.f32 0.0, %v3207
      %v3209 = vpop.f32.mrb[0].mxu0
      %v3210 = vpop.f32.mrb[0].mxu0
      %v3211 = vadd.f32 0.0, %v3210
      %v3212 = vpop.f32.mrb[0].mxu0
      %3213 = vdwg.mxu0
      %3214 = vmatprep.subr.bf16.mxu0 0
      %3215 = vmatpush1.bf16.xpose.msra.mxu0 %v2988
      %3216 = vmatprep.subr.bf16.mxu0 0
      %3217 = vmatpush1.bf16.xpose.msra.mxu0 %v2989
      %3218 = vmatprep.subr.bf16.mxu0 0
      %3219 = vmatpush1.bf16.xpose.msra.mxu0 %v2990
      %3220 = vmatprep.subr.bf16.mxu0 0
      %3221 = vmatpush1.bf16.xpose.msra.mxu0 %v2991
      %3222 = vmatprep.subr.bf16.mxu0 0
      %3223 = vmatpush1.bf16.xpose.msra.mxu0 %v2992
      %3224 = vmatprep.subr.bf16.mxu0 0
      %3225 = vmatpush1.bf16.xpose.msra.mxu0 %v2993
      %3226 = vmatprep.subr.bf16.mxu0 0
      %3227 = vmatpush1.bf16.xpose.msra.mxu0 %v2994
      %3228 = vmatprep.subr.bf16.mxu0 0
      %3229 = vmatpush1.bf16.xpose.msra.mxu0 %v2995
      %3230 = vmatprep.subr.bf16.mxu0 0
      %3231 = vmatpush1.bf16.xpose.msra.mxu0 0
      %3232 = vmatprep.subr.bf16.mxu0 0
      %3233 = vmatpush1.bf16.xpose.msra.mxu0 0
      %3234 = vmatprep.subr.bf16.mxu0 0
      %3235 = vmatpush1.bf16.xpose.msra.mxu0 0
      %3236 = vmatprep.subr.bf16.mxu0 0
      %3237 = vmatpush1.bf16.xpose.msra.mxu0 0
      %3238 = vmatprep.subr.bf16.mxu0 0
      %3239 = vmatpush1.bf16.xpose.msra.mxu0 0
      %3240 = vmatprep.subr.bf16.mxu0 0
      %3241 = vmatpush1.bf16.xpose.msra.mxu0 0
      %3242 = vmatprep.subr.bf16.mxu0 0
      %3243 = vmatpush1.bf16.xpose.msra.mxu0 0
      %3244 = vmatprep.subr.bf16.mxu0 0
      %3245 = vmatpush1.bf16.xpose.msra.mxu0 0
      %3246 = vmatprep.mubr.bf16.mxu0 0
      %3247 = vmatmul.mubr.bf16.gmra.mrb[0].mxu0 %v2972
      %v3248 = vpop.f32.mrb[0].mxu0
      %v3249 = vadd.f32 0.0, %v3248
      %v3250 = vpop.f32.mrb[0].mxu0
      %v3251 = vpop.f32.mrb[0].mxu0
      %v3252 = vadd.f32 0.0, %v3251
      %v3253 = vpop.f32.mrb[0].mxu0
      %3254 = vmatprep.mubr.bf16.mxu0 0
      %3255 = vmatmul.mubr.bf16.gmra.mrb[0].mxu0 %v2973
      %v3256 = vpop.f32.mrb[0].mxu0
      %v3257 = vadd.f32 0.0, %v3256
      %v3258 = vpop.f32.mrb[0].mxu0
      %v3259 = vpop.f32.mrb[0].mxu0
      %v3260 = vadd.f32 0.0, %v3259
      %v3261 = vpop.f32.mrb[0].mxu0
      %3262 = vmatprep.mubr.bf16.mxu0 0
      %3263 = vmatmul.mubr.bf16.gmra.mrb[0].mxu0 %v2974
      %v3264 = vpop.f32.mrb[0].mxu0
      %v3265 = vadd.f32 0.0, %v3264
      %v3266 = vpop.f32.mrb[0].mxu0
      %v3267 = vpop.f32.mrb[0].mxu0
      %v3268 = vadd.f32 0.0, %v3267
      %v3269 = vpop.f32.mrb[0].mxu0
      %3270 = vmatprep.mubr.bf16.mxu0 0
      %3271 = vmatmul.mubr.bf16.gmra.mrb[0].mxu0 %v2975
      %v3272 = vpop.f32.mrb[0].mxu0
      %v3273 = vadd.f32 0.0, %v3272
      %v3274 = vpop.f32.mrb[0].mxu0
      %v3275 = vpop.f32.mrb[0].mxu0
      %v3276 = vadd.f32 0.0, %v3275
      %v3277 = vpop.f32.mrb[0].mxu0
      %3278 = vmatprep.mubr.bf16.mxu0 0
      %3279 = vmatmul.mubr.bf16.gmra.mrb[0].mxu0 %v2976
      %v3280 = vpop.f32.mrb[0].mxu0
      %v3281 = vadd.f32 0.0, %v3280
      %v3282 = vpop.f32.mrb[0].mxu0
      %v3283 = vpop.f32.mrb[0].mxu0
      %v3284 = vadd.f32 0.0, %v3283
      %v3285 = vpop.f32.mrb[0].mxu0
      %3286 = vmatprep.mubr.bf16.mxu0 0
      %3287 = vmatmul.mubr.bf16.gmra.mrb[0].mxu0 %v2977
      %v3288 = vpop.f32.mrb[0].mxu0
      %v3289 = vadd.f32 0.0, %v3288
      %v3290 = vpop.f32.mrb[0].mxu0
      %v3291 = vpop.f32.mrb[0].mxu0
      %v3292 = vadd.f32 0.0, %v3291
      %v3293 = vpop.f32.mrb[0].mxu0
      %3294 = vmatprep.mubr.bf16.mxu0 0
      %3295 = vmatmul.mubr.bf16.gmra.mrb[0].mxu0 %v2978
      %v3296 = vpop.f32.mrb[0].mxu0
      %v3297 = vadd.f32 0.0, %v3296
      %v3298 = vpop.f32.mrb[0].mxu0
      %v3299 = vpop.f32.mrb[0].mxu0
      %v3300 = vadd.f32 0.0, %v3299
      %v3301 = vpop.f32.mrb[0].mxu0
      %3302 = vmatprep.mubr.bf16.mxu0 0
      %3303 = vmatmul.mubr.bf16.gmra.mrb[0].mxu0 %v2979
      %v3304 = vpop.f32.mrb[0].mxu0
      %v3305 = vadd.f32 0.0, %v3304
      %v3306 = vpop.f32.mrb[0].mxu0
      %v3307 = vpop.f32.mrb[0].mxu0
      %v3308 = vadd.f32 0.0, %v3307
      %v3309 = vpop.f32.mrb[0].mxu0
      %3310 = vdwg.mxu0
      %3311 = vmatprep.subr.bf16.mxu0 0
      %3312 = vmatpush1.bf16.xpose.msra.mxu0 %v2996
      %3313 = vmatprep.subr.bf16.mxu0 0
      %3314 = vmatpush1.bf16.xpose.msra.mxu0 %v2997
      %3315 = vmatprep.subr.bf16.mxu0 0
      %3316 = vmatpush1.bf16.xpose.msra.mxu0 %v2998
      %3317 = vmatprep.subr.bf16.mxu0 0
      %3318 = vmatpush1.bf16.xpose.msra.mxu0 %v2999
      %3319 = vmatprep.subr.bf16.mxu0 0
      %3320 = vmatpush1.bf16.xpose.msra.mxu0 %v3000
      %3321 = vmatprep.subr.bf16.mxu0 0
      %3322 = vmatpush1.bf16.xpose.msra.mxu0 %v3001
      %3323 = vmatprep.subr.bf16.mxu0 0
      %3324 = vmatpush1.bf16.xpose.msra.mxu0 %v3002
      %3325 = vmatprep.subr.bf16.mxu0 0
      %3326 = vmatpush1.bf16.xpose.msra.mxu0 %v3003
      %3327 = vmatprep.subr.bf16.mxu0 0
      %3328 = vmatpush1.bf16.xpose.msra.mxu0 0
      %3329 = vmatprep.subr.bf16.mxu0 0
      %3330 = vmatpush1.bf16.xpose.msra.mxu0 0
      %3331 = vmatprep.subr.bf16.mxu0 0
      %3332 = vmatpush1.bf16.xpose.msra.mxu0 0
      %3333 = vmatprep.subr.bf16.mxu0 0
      %3334 = vmatpush1.bf16.xpose.msra.mxu0 0
      %3335 = vmatprep.subr.bf16.mxu0 0
      %3336 = vmatpush1.bf16.xpose.msra.mxu0 0
      %3337 = vmatprep.subr.bf16.mxu0 0
      %3338 = vmatpush1.bf16.xpose.msra.mxu0 0
      %3339 = vmatprep.subr.bf16.mxu0 0
      %3340 = vmatpush1.bf16.xpose.msra.mxu0 0
      %3341 = vmatprep.subr.bf16.mxu0 0
      %3342 = vmatpush1.bf16.xpose.msra.mxu0 0
      %3343 = vmatprep.mubr.bf16.mxu0 0
      %3344 = vmatmul.mubr.bf16.gmra.mrb[0].mxu0 %v2980
      %v3345 = vpop.f32.mrb[0].mxu0
      %v3346 = vadd.f32 0.0, %v3345
      %v3347 = vpop.f32.mrb[0].mxu0
      %v3348 = vpop.f32.mrb[0].mxu0
      %v3349 = vadd.f32 0.0, %v3348
      %v3350 = vpop.f32.mrb[0].mxu0
      %3351 = vmatprep.mubr.bf16.mxu0 0
      %3352 = vmatmul.mubr.bf16.gmra.mrb[0].mxu0 %v2981
      %v3353 = vpop.f32.mrb[0].mxu0
      %v3354 = vadd.f32 0.0, %v3353
      %v3355 = vpop.f32.mrb[0].mxu0
      %v3356 = vpop.f32.mrb[0].mxu0
      %v3357 = vadd.f32 0.0, %v3356
      %v3358 = vpop.f32.mrb[0].mxu0
      %3359 = vmatprep.mubr.bf16.mxu0 0
      %3360 = vmatmul.mubr.bf16.gmra.mrb[0].mxu0 %v2982
      %v3361 = vpop.f32.mrb[0].mxu0
      %v3362 = vadd.f32 0.0, %v3361
      %v3363 = vpop.f32.mrb[0].mxu0
      %v3364 = vpop.f32.mrb[0].mxu0
      %v3365 = vadd.f32 0.0, %v3364
      %v3366 = vpop.f32.mrb[0].mxu0
      %3367 = vmatprep.mubr.bf16.mxu0 0
      %3368 = vmatmul.mubr.bf16.gmra.mrb[0].mxu0 %v2983
      %v3369 = vpop.f32.mrb[0].mxu0
      %v3370 = vadd.f32 0.0, %v3369
      %v3371 = vpop.f32.mrb[0].mxu0
      %v3372 = vpop.f32.mrb[0].mxu0
      %v3373 = vadd.f32 0.0, %v3372
      %v3374 = vpop.f32.mrb[0].mxu0
      %3375 = vmatprep.mubr.bf16.mxu0 0
      %3376 = vmatmul.mubr.bf16.gmra.mrb[0].mxu0 %v2984
      %v3377 = vpop.f32.mrb[0].mxu0
      %v3378 = vadd.f32 0.0, %v3377
      %v3379 = vpop.f32.mrb[0].mxu0
      %v3380 = vpop.f32.mrb[0].mxu0
      %v3381 = vadd.f32 0.0, %v3380
      %v3382 = vpop.f32.mrb[0].mxu0
      %3383 = vmatprep.mubr.bf16.mxu0 0
      %3384 = vmatmul.mubr.bf16.gmra.mrb[0].mxu0 %v2985
      %v3385 = vpop.f32.mrb[0].mxu0
      %v3386 = vadd.f32 0.0, %v3385
      %v3387 = vpop.f32.mrb[0].mxu0
      %v3388 = vpop.f32.mrb[0].mxu0
      %v3389 = vadd.f32 0.0, %v3388
      %v3390 = vpop.f32.mrb[0].mxu0
      %3391 = vmatprep.mubr.bf16.mxu0 0
      %3392 = vmatmul.mubr.bf16.gmra.mrb[0].mxu0 %v2986
      %v3393 = vpop.f32.mrb[0].mxu0
      %v3394 = vadd.f32 0.0, %v3393
      %v3395 = vpop.f32.mrb[0].mxu0
      %v3396 = vpop.f32.mrb[0].mxu0
      %v3397 = vadd.f32 0.0, %v3396
      %v3398 = vpop.f32.mrb[0].mxu0
      %3399 = vmatprep.mubr.bf16.mxu0 0
      %3400 = vmatmul.mubr.bf16.gmra.mrb[0].mxu0 %v2987
      %v3401 = vpop.f32.mrb[0].mxu0
      %v3402 = vadd.f32 0.0, %v3401
      %v3403 = vpop.f32.mrb[0].mxu0
      %v3404 = vpop.f32.mrb[0].mxu0
      %v3405 = vadd.f32 0.0, %v3404
      %v3406 = vpop.f32.mrb[0].mxu0
      %3407 = vdwg.mxu0
      %v3408 = vlaneseq
      %v3409 = vshrl.u32 %v3408, 7
      %v3410 = vadd.s32 %v3409, 8
      %v3411 = vadd.s32 %v3409, 16
      %v3412 = vadd.s32 %v3409, 24
      %v3413 = vadd.s32 %v3409, 32
      %v3414 = vadd.s32 %v3409, 40
      %v3415 = vadd.s32 %v3409, 48
      %v3416 = vadd.s32 %v3409, 56
      %v3417 = vadd.s32 %v3409, 64
      %v3418 = vadd.s32 %v3409, 72
      %v3419 = vadd.s32 %v3409, 80
      %v3420 = vadd.s32 %v3409, 88
      %v3421 = vadd.s32 %v3409, 96
      %v3422 = vadd.s32 %v3409, 104
      %v3423 = vadd.s32 %v3409, 112
      %v3424 = vadd.s32 %v3409, 120
      %v3425 = vlaneseq
      %v3426 = vand.u32 %v3425, 127
      %vm3427 = vcmp.gt.s32.totalorder %v3426, %v3409
      %vm3428 = vcmp.gt.s32.totalorder %v3426, %v3410
      %vm3429 = vcmp.gt.s32.totalorder %v3426, %v3411
      %vm3430 = vcmp.gt.s32.totalorder %v3426, %v3412
      %vm3431 = vcmp.gt.s32.totalorder %v3426, %v3413
      %vm3432 = vcmp.gt.s32.totalorder %v3426, %v3414
      %vm3433 = vcmp.gt.s32.totalorder %v3426, %v3415
      %vm3434 = vcmp.gt.s32.totalorder %v3426, %v3416
      %vm3435 = vcmp.gt.s32.totalorder %v3426, %v3417
      %vm3436 = vcmp.gt.s32.totalorder %v3426, %v3418
      %vm3437 = vcmp.gt.s32.totalorder %v3426, %v3419
      %vm3438 = vcmp.gt.s32.totalorder %v3426, %v3420
      %vm3439 = vcmp.gt.s32.totalorder %v3426, %v3421
      %vm3440 = vcmp.gt.s32.totalorder %v3426, %v3422
      %vm3441 = vcmp.gt.s32.totalorder %v3426, %v3423
      %vm3442 = vcmp.gt.s32.totalorder %v3426, %v3424
      %v3443 = vsel %vm3427, 1, 0
      %v3444 = vsel %vm3428, 1, 0
      %v3445 = vsel %vm3429, 1, 0
      %v3446 = vsel %vm3430, 1, 0
      %v3447 = vsel %vm3431, 1, 0
      %v3448 = vsel %vm3432, 1, 0
      %v3449 = vsel %vm3433, 1, 0
      %v3450 = vsel %vm3434, 1, 0
      %v3451 = vsel %vm3435, 1, 0
      %v3452 = vsel %vm3436, 1, 0
      %v3453 = vsel %vm3437, 1, 0
      %v3454 = vsel %vm3438, 1, 0
      %v3455 = vsel %vm3439, 1, 0
      %v3456 = vsel %vm3440, 1, 0
      %v3457 = vsel %vm3441, 1, 0
      %v3458 = vsel %vm3442, 1, 0
      %vm3459 = vcmp.eq.s32.totalorder %v3443, 1
      %vm3460 = vcmp.eq.s32.totalorder %v3444, 1
      %vm3461 = vcmp.eq.s32.totalorder %v3445, 1
      %vm3462 = vcmp.eq.s32.totalorder %v3446, 1
      %vm3463 = vcmp.eq.s32.totalorder %v3447, 1
      %vm3464 = vcmp.eq.s32.totalorder %v3448, 1
      %vm3465 = vcmp.eq.s32.totalorder %v3449, 1
      %vm3466 = vcmp.eq.s32.totalorder %v3450, 1
      %vm3467 = vcmp.eq.s32.totalorder %v3451, 1
      %vm3468 = vcmp.eq.s32.totalorder %v3452, 1
      %vm3469 = vcmp.eq.s32.totalorder %v3453, 1
      %vm3470 = vcmp.eq.s32.totalorder %v3454, 1
      %vm3471 = vcmp.eq.s32.totalorder %v3455, 1
      %vm3472 = vcmp.eq.s32.totalorder %v3456, 1
      %vm3473 = vcmp.eq.s32.totalorder %v3457, 1
      %vm3474 = vcmp.eq.s32.totalorder %v3458, 1
      %v3475 = vsel %vm3459, -10000.0, %v3055
      %v3476 = vsel %vm3460, -10000.0, %v3058
      %v3477 = vsel %vm3461, -10000.0, %v3063
      %v3478 = vsel %vm3462, -10000.0, %v3066
      %v3479 = vsel %vm3463, -10000.0, %v3071
      %v3480 = vsel %vm3464, -10000.0, %v3074
      %v3481 = vsel %vm3465, -10000.0, %v3079
      %v3482 = vsel %vm3466, -10000.0, %v3082
      %v3483 = vsel %vm3467, -10000.0, %v3087
      %v3484 = vsel %vm3468, -10000.0, %v3090
      %v3485 = vsel %vm3469, -10000.0, %v3095
      %v3486 = vsel %vm3470, -10000.0, %v3098
      %v3487 = vsel %vm3471, -10000.0, %v3103
      %v3488 = vsel %vm3472, -10000.0, %v3106
      %v3489 = vsel %vm3473, -10000.0, %v3111
      %v3490 = vsel %vm3474, -10000.0, %v3114
      %v3491 = vsel %vm3459, -10000.0, %v3152
      %v3492 = vsel %vm3460, -10000.0, %v3155
      %v3493 = vsel %vm3461, -10000.0, %v3160
      %v3494 = vsel %vm3462, -10000.0, %v3163
      %v3495 = vsel %vm3463, -10000.0, %v3168
      %v3496 = vsel %vm3464, -10000.0, %v3171
      %v3497 = vsel %vm3465, -10000.0, %v3176
      %v3498 = vsel %vm3466, -10000.0, %v3179
      %v3499 = vsel %vm3467, -10000.0, %v3184
      %v3500 = vsel %vm3468, -10000.0, %v3187
      %v3501 = vsel %vm3469, -10000.0, %v3192
      %v3502 = vsel %vm3470, -10000.0, %v3195
      %v3503 = vsel %vm3471, -10000.0, %v3200
      %v3504 = vsel %vm3472, -10000.0, %v3203
      %v3505 = vsel %vm3473, -10000.0, %v3208
      %v3506 = vsel %vm3474, -10000.0, %v3211
      %v3507 = vsel %vm3459, -10000.0, %v3249
      %v3508 = vsel %vm3460, -10000.0, %v3252
      %v3509 = vsel %vm3461, -10000.0, %v3257
      %v3510 = vsel %vm3462, -10000.0, %v3260
      %v3511 = vsel %vm3463, -10000.0, %v3265
      %v3512 = vsel %vm3464, -10000.0, %v3268
      %v3513 = vsel %vm3465, -10000.0, %v3273
      %v3514 = vsel %vm3466, -10000.0, %v3276
      %v3515 = vsel %vm3467, -10000.0, %v3281
      %v3516 = vsel %vm3468, -10000.0, %v3284
      %v3517 = vsel %vm3469, -10000.0, %v3289
      %v3518 = vsel %vm3470, -10000.0, %v3292
      %v3519 = vsel %vm3471, -10000.0, %v3297
      %v3520 = vsel %vm3472, -10000.0, %v3300
      %v3521 = vsel %vm3473, -10000.0, %v3305
      %v3522 = vsel %vm3474, -10000.0, %v3308
      %v3523 = vsel %vm3459, -10000.0, %v3346
      %v3524 = vsel %vm3460, -10000.0, %v3349
      %v3525 = vsel %vm3461, -10000.0, %v3354
      %v3526 = vsel %vm3462, -10000.0, %v3357
      %v3527 = vsel %vm3463, -10000.0, %v3362
      %v3528 = vsel %vm3464, -10000.0, %v3365
      %v3529 = vsel %vm3465, -10000.0, %v3370
      %v3530 = vsel %vm3466, -10000.0, %v3373
      %v3531 = vsel %vm3467, -10000.0, %v3378
      %v3532 = vsel %vm3468, -10000.0, %v3381
      %v3533 = vsel %vm3469, -10000.0, %v3386
      %v3534 = vsel %vm3470, -10000.0, %v3389
      %v3535 = vsel %vm3471, -10000.0, %v3394
      %v3536 = vsel %vm3472, -10000.0, %v3397
      %v3537 = vsel %vm3473, -10000.0, %v3402
      %v3538 = vsel %vm3474, -10000.0, %v3405
      %3539 = vmax.xlane.f32.xlu0 %v3475
      %v3540 = vpop.xlane.xlu0 %3539
      %3541 = vmax.xlane.f32.xlu0 %v3476
      %v3542 = vpop.xlane.xlu0 %3541
      %3543 = vmax.xlane.f32.xlu0 %v3477
      %v3544 = vpop.xlane.xlu0 %3543
      %3545 = vmax.xlane.f32.xlu0 %v3478
      %v3546 = vpop.xlane.xlu0 %3545
      %3547 = vmax.xlane.f32.xlu0 %v3479
      %v3548 = vpop.xlane.xlu0 %3547
      %3549 = vmax.xlane.f32.xlu0 %v3480
      %v3550 = vpop.xlane.xlu0 %3549
      %3551 = vmax.xlane.f32.xlu0 %v3481
      %v3552 = vpop.xlane.xlu0 %3551
      %3553 = vmax.xlane.f32.xlu0 %v3482
      %v3554 = vpop.xlane.xlu0 %3553
      %3555 = vmax.xlane.f32.xlu0 %v3483
      %v3556 = vpop.xlane.xlu0 %3555
      %3557 = vmax.xlane.f32.xlu0 %v3484
      %v3558 = vpop.xlane.xlu0 %3557
      %3559 = vmax.xlane.f32.xlu0 %v3485
      %v3560 = vpop.xlane.xlu0 %3559
      %3561 = vmax.xlane.f32.xlu0 %v3486
      %v3562 = vpop.xlane.xlu0 %3561
      %3563 = vmax.xlane.f32.xlu0 %v3487
      %v3564 = vpop.xlane.xlu0 %3563
      %3565 = vmax.xlane.f32.xlu0 %v3488
      %v3566 = vpop.xlane.xlu0 %3565
      %3567 = vmax.xlane.f32.xlu0 %v3489
      %v3568 = vpop.xlane.xlu0 %3567
      %3569 = vmax.xlane.f32.xlu0 %v3490
      %v3570 = vpop.xlane.xlu0 %3569
      %3571 = vmax.xlane.f32.xlu0 %v3491
      %v3572 = vpop.xlane.xlu0 %3571
      %3573 = vmax.xlane.f32.xlu0 %v3492
      %v3574 = vpop.xlane.xlu0 %3573
      %3575 = vmax.xlane.f32.xlu0 %v3493
      %v3576 = vpop.xlane.xlu0 %3575
      %3577 = vmax.xlane.f32.xlu0 %v3494
      %v3578 = vpop.xlane.xlu0 %3577
      %3579 = vmax.xlane.f32.xlu0 %v3495
      %v3580 = vpop.xlane.xlu0 %3579
      %3581 = vmax.xlane.f32.xlu0 %v3496
      %v3582 = vpop.xlane.xlu0 %3581
      %3583 = vmax.xlane.f32.xlu0 %v3497
      %v3584 = vpop.xlane.xlu0 %3583
      %3585 = vmax.xlane.f32.xlu0 %v3498
      %v3586 = vpop.xlane.xlu0 %3585
      %3587 = vmax.xlane.f32.xlu0 %v3499
      %v3588 = vpop.xlane.xlu0 %3587
      %3589 = vmax.xlane.f32.xlu0 %v3500
      %v3590 = vpop.xlane.xlu0 %3589
      %3591 = vmax.xlane.f32.xlu0 %v3501
      %v3592 = vpop.xlane.xlu0 %3591
      %3593 = vmax.xlane.f32.xlu0 %v3502
      %v3594 = vpop.xlane.xlu0 %3593
      %3595 = vmax.xlane.f32.xlu0 %v3503
      %v3596 = vpop.xlane.xlu0 %3595
      %3597 = vmax.xlane.f32.xlu0 %v3504
      %v3598 = vpop.xlane.xlu0 %3597
      %3599 = vmax.xlane.f32.xlu0 %v3505
      %v3600 = vpop.xlane.xlu0 %3599
      %3601 = vmax.xlane.f32.xlu0 %v3506
      %v3602 = vpop.xlane.xlu0 %3601
      %3603 = vmax.xlane.f32.xlu0 %v3507
      %v3604 = vpop.xlane.xlu0 %3603
      %3605 = vmax.xlane.f32.xlu0 %v3508
      %v3606 = vpop.xlane.xlu0 %3605
      %3607 = vmax.xlane.f32.xlu0 %v3509
      %v3608 = vpop.xlane.xlu0 %3607
      %3609 = vmax.xlane.f32.xlu0 %v3510
      %v3610 = vpop.xlane.xlu0 %3609
      %3611 = vmax.xlane.f32.xlu0 %v3511
      %v3612 = vpop.xlane.xlu0 %3611
      %3613 = vmax.xlane.f32.xlu0 %v3512
      %v3614 = vpop.xlane.xlu0 %3613
      %3615 = vmax.xlane.f32.xlu0 %v3513
      %v3616 = vpop.xlane.xlu0 %3615
      %3617 = vmax.xlane.f32.xlu0 %v3514
      %v3618 = vpop.xlane.xlu0 %3617
      %3619 = vmax.xlane.f32.xlu0 %v3515
      %v3620 = vpop.xlane.xlu0 %3619
      %3621 = vmax.xlane.f32.xlu0 %v3516
      %v3622 = vpop.xlane.xlu0 %3621
      %3623 = vmax.xlane.f32.xlu0 %v3517
      %v3624 = vpop.xlane.xlu0 %3623
      %3625 = vmax.xlane.f32.xlu0 %v3518
      %v3626 = vpop.xlane.xlu0 %3625
      %3627 = vmax.xlane.f32.xlu0 %v3519
      %v3628 = vpop.xlane.xlu0 %3627
      %3629 = vmax.xlane.f32.xlu0 %v3520
      %v3630 = vpop.xlane.xlu0 %3629
      %3631 = vmax.xlane.f32.xlu0 %v3521
      %v3632 = vpop.xlane.xlu0 %3631
      %3633 = vmax.xlane.f32.xlu0 %v3522
      %v3634 = vpop.xlane.xlu0 %3633
      %3635 = vmax.xlane.f32.xlu0 %v3523
      %v3636 = vpop.xlane.xlu0 %3635
      %3637 = vmax.xlane.f32.xlu0 %v3524
      %v3638 = vpop.xlane.xlu0 %3637
      %3639 = vmax.xlane.f32.xlu0 %v3525
      %v3640 = vpop.xlane.xlu0 %3639
      %3641 = vmax.xlane.f32.xlu0 %v3526
      %v3642 = vpop.xlane.xlu0 %3641
      %3643 = vmax.xlane.f32.xlu0 %v3527
      %v3644 = vpop.xlane.xlu0 %3643
      %3645 = vmax.xlane.f32.xlu0 %v3528
      %v3646 = vpop.xlane.xlu0 %3645
      %3647 = vmax.xlane.f32.xlu0 %v3529
      %v3648 = vpop.xlane.xlu0 %3647
      %3649 = vmax.xlane.f32.xlu0 %v3530
      %v3650 = vpop.xlane.xlu0 %3649
      %3651 = vmax.xlane.f32.xlu0 %v3531
      %v3652 = vpop.xlane.xlu0 %3651
      %3653 = vmax.xlane.f32.xlu0 %v3532
      %v3654 = vpop.xlane.xlu0 %3653
      %3655 = vmax.xlane.f32.xlu0 %v3533
      %v3656 = vpop.xlane.xlu0 %3655
      %3657 = vmax.xlane.f32.xlu0 %v3534
      %v3658 = vpop.xlane.xlu0 %3657
      %3659 = vmax.xlane.f32.xlu0 %v3535
      %v3660 = vpop.xlane.xlu0 %3659
      %3661 = vmax.xlane.f32.xlu0 %v3536
      %v3662 = vpop.xlane.xlu0 %3661
      %3663 = vmax.xlane.f32.xlu0 %v3537
      %v3664 = vpop.xlane.xlu0 %3663
      %3665 = vmax.xlane.f32.xlu0 %v3538
      %v3666 = vpop.xlane.xlu0 %3665
      %v3667 = vsub.f32 %v3475, %v3540
      %v3668 = vsub.f32 %v3476, %v3542
      %v3669 = vsub.f32 %v3477, %v3544
      %v3670 = vsub.f32 %v3478, %v3546
      %v3671 = vsub.f32 %v3479, %v3548
      %v3672 = vsub.f32 %v3480, %v3550
      %v3673 = vsub.f32 %v3481, %v3552
      %v3674 = vsub.f32 %v3482, %v3554
      %v3675 = vsub.f32 %v3483, %v3556
      %v3676 = vsub.f32 %v3484, %v3558
      %v3677 = vsub.f32 %v3485, %v3560
      %v3678 = vsub.f32 %v3486, %v3562
      %v3679 = vsub.f32 %v3487, %v3564
      %v3680 = vsub.f32 %v3488, %v3566
      %v3681 = vsub.f32 %v3489, %v3568
      %v3682 = vsub.f32 %v3490, %v3570
      %v3683 = vsub.f32 %v3491, %v3572
      %v3684 = vsub.f32 %v3492, %v3574
      %v3685 = vsub.f32 %v3493, %v3576
      %v3686 = vsub.f32 %v3494, %v3578
      %v3687 = vsub.f32 %v3495, %v3580
      %v3688 = vsub.f32 %v3496, %v3582
      %v3689 = vsub.f32 %v3497, %v3584
      %v3690 = vsub.f32 %v3498, %v3586
      %v3691 = vsub.f32 %v3499, %v3588
      %v3692 = vsub.f32 %v3500, %v3590
      %v3693 = vsub.f32 %v3501, %v3592
      %v3694 = vsub.f32 %v3502, %v3594
      %v3695 = vsub.f32 %v3503, %v3596
      %v3696 = vsub.f32 %v3504, %v3598
      %v3697 = vsub.f32 %v3505, %v3600
      %v3698 = vsub.f32 %v3506, %v3602
      %v3699 = vsub.f32 %v3507, %v3604
      %v3700 = vsub.f32 %v3508, %v3606
      %v3701 = vsub.f32 %v3509, %v3608
      %v3702 = vsub.f32 %v3510, %v3610
      %v3703 = vsub.f32 %v3511, %v3612
      %v3704 = vsub.f32 %v3512, %v3614
      %v3705 = vsub.f32 %v3513, %v3616
      %v3706 = vsub.f32 %v3514, %v3618
      %v3707 = vsub.f32 %v3515, %v3620
      %v3708 = vsub.f32 %v3516, %v3622
      %v3709 = vsub.f32 %v3517, %v3624
      %v3710 = vsub.f32 %v3518, %v3626
      %v3711 = vsub.f32 %v3519, %v3628
      %v3712 = vsub.f32 %v3520, %v3630
      %v3713 = vsub.f32 %v3521, %v3632
      %v3714 = vsub.f32 %v3522, %v3634
      %v3715 = vsub.f32 %v3523, %v3636
      %v3716 = vsub.f32 %v3524, %v3638
      %v3717 = vsub.f32 %v3525, %v3640
      %v3718 = vsub.f32 %v3526, %v3642
      %v3719 = vsub.f32 %v3527, %v3644
      %v3720 = vsub.f32 %v3528, %v3646
      %v3721 = vsub.f32 %v3529, %v3648
      %v3722 = vsub.f32 %v3530, %v3650
      %v3723 = vsub.f32 %v3531, %v3652
      %v3724 = vsub.f32 %v3532, %v3654
      %v3725 = vsub.f32 %v3533, %v3656
      %v3726 = vsub.f32 %v3534, %v3658
      %v3727 = vsub.f32 %v3535, %v3660
      %v3728 = vsub.f32 %v3536, %v3662
      %v3729 = vsub.f32 %v3537, %v3664
      %v3730 = vsub.f32 %v3538, %v3666
      %v3731 = vmul.f32 %v3667, 1.442695
      %v3732 = vpow.pop %v3731
      %v3733 = vmul.f32 %v3668, 1.442695
      %v3734 = vpow.pop %v3733
      %v3735 = vmul.f32 %v3669, 1.442695
      %v3736 = vpow.pop %v3735
      %v3737 = vmul.f32 %v3670, 1.442695
      %v3738 = vpow.pop %v3737
      %v3739 = vmul.f32 %v3671, 1.442695
      %v3740 = vpow.pop %v3739
      %v3741 = vmul.f32 %v3672, 1.442695
      %v3742 = vpow.pop %v3741
      %v3743 = vmul.f32 %v3673, 1.442695
      %v3744 = vpow.pop %v3743
      %v3745 = vmul.f32 %v3674, 1.442695
      %v3746 = vpow.pop %v3745
      %v3747 = vmul.f32 %v3675, 1.442695
      %v3748 = vpow.pop %v3747
      %v3749 = vmul.f32 %v3676, 1.442695
      %v3750 = vpow.pop %v3749
      %v3751 = vmul.f32 %v3677, 1.442695
      %v3752 = vpow.pop %v3751
      %v3753 = vmul.f32 %v3678, 1.442695
      %v3754 = vpow.pop %v3753
      %v3755 = vmul.f32 %v3679, 1.442695
      %v3756 = vpow.pop %v3755
      %v3757 = vmul.f32 %v3680, 1.442695
      %v3758 = vpow.pop %v3757
      %v3759 = vmul.f32 %v3681, 1.442695
      %v3760 = vpow.pop %v3759
      %v3761 = vmul.f32 %v3682, 1.442695
      %v3762 = vpow.pop %v3761
      %v3763 = vmul.f32 %v3683, 1.442695
      %v3764 = vpow.pop %v3763
      %v3765 = vmul.f32 %v3684, 1.442695
      %v3766 = vpow.pop %v3765
      %v3767 = vmul.f32 %v3685, 1.442695
      %v3768 = vpow.pop %v3767
      %v3769 = vmul.f32 %v3686, 1.442695
      %v3770 = vpow.pop %v3769
      %v3771 = vmul.f32 %v3687, 1.442695
      %v3772 = vpow.pop %v3771
      %v3773 = vmul.f32 %v3688, 1.442695
      %v3774 = vpow.pop %v3773
      %v3775 = vmul.f32 %v3689, 1.442695
      %v3776 = vpow.pop %v3775
      %v3777 = vmul.f32 %v3690, 1.442695
      %v3778 = vpow.pop %v3777
      %v3779 = vmul.f32 %v3691, 1.442695
      %v3780 = vpow.pop %v3779
      %v3781 = vmul.f32 %v3692, 1.442695
      %v3782 = vpow.pop %v3781
      %v3783 = vmul.f32 %v3693, 1.442695
      %v3784 = vpow.pop %v3783
      %v3785 = vmul.f32 %v3694, 1.442695
      %v3786 = vpow.pop %v3785
      %v3787 = vmul.f32 %v3695, 1.442695
      %v3788 = vpow.pop %v3787
      %v3789 = vmul.f32 %v3696, 1.442695
      %v3790 = vpow.pop %v3789
      %v3791 = vmul.f32 %v3697, 1.442695
      %v3792 = vpow.pop %v3791
      %v3793 = vmul.f32 %v3698, 1.442695
      %v3794 = vpow.pop %v3793
      %v3795 = vmul.f32 %v3699, 1.442695
      %v3796 = vpow.pop %v3795
      %v3797 = vmul.f32 %v3700, 1.442695
      %v3798 = vpow.pop %v3797
      %v3799 = vmul.f32 %v3701, 1.442695
      %v3800 = vpow.pop %v3799
      %v3801 = vmul.f32 %v3702, 1.442695
      %v3802 = vpow.pop %v3801
      %v3803 = vmul.f32 %v3703, 1.442695
      %v3804 = vpow.pop %v3803
      %v3805 = vmul.f32 %v3704, 1.442695
      %v3806 = vpow.pop %v3805
      %v3807 = vmul.f32 %v3705, 1.442695
      %v3808 = vpow.pop %v3807
      %v3809 = vmul.f32 %v3706, 1.442695
      %v3810 = vpow.pop %v3809
      %v3811 = vmul.f32 %v3707, 1.442695
      %v3812 = vpow.pop %v3811
      %v3813 = vmul.f32 %v3708, 1.442695
      %v3814 = vpow.pop %v3813
      %v3815 = vmul.f32 %v3709, 1.442695
      %v3816 = vpow.pop %v3815
      %v3817 = vmul.f32 %v3710, 1.442695
      %v3818 = vpow.pop %v3817
      %v3819 = vmul.f32 %v3711, 1.442695
      %v3820 = vpow.pop %v3819
      %v3821 = vmul.f32 %v3712, 1.442695
      %v3822 = vpow.pop %v3821
      %v3823 = vmul.f32 %v3713, 1.442695
      %v3824 = vpow.pop %v3823
      %v3825 = vmul.f32 %v3714, 1.442695
      %v3826 = vpow.pop %v3825
      %v3827 = vmul.f32 %v3715, 1.442695
      %v3828 = vpow.pop %v3827
      %v3829 = vmul.f32 %v3716, 1.442695
      %v3830 = vpow.pop %v3829
      %v3831 = vmul.f32 %v3717, 1.442695
      %v3832 = vpow.pop %v3831
      %v3833 = vmul.f32 %v3718, 1.442695
      %v3834 = vpow.pop %v3833
      %v3835 = vmul.f32 %v3719, 1.442695
      %v3836 = vpow.pop %v3835
      %v3837 = vmul.f32 %v3720, 1.442695
      %v3838 = vpow.pop %v3837
      %v3839 = vmul.f32 %v3721, 1.442695
      %v3840 = vpow.pop %v3839
      %v3841 = vmul.f32 %v3722, 1.442695
      %v3842 = vpow.pop %v3841
      %v3843 = vmul.f32 %v3723, 1.442695
      %v3844 = vpow.pop %v3843
      %v3845 = vmul.f32 %v3724, 1.442695
      %v3846 = vpow.pop %v3845
      %v3847 = vmul.f32 %v3725, 1.442695
      %v3848 = vpow.pop %v3847
      %v3849 = vmul.f32 %v3726, 1.442695
      %v3850 = vpow.pop %v3849
      %v3851 = vmul.f32 %v3727, 1.442695
      %v3852 = vpow.pop %v3851
      %v3853 = vmul.f32 %v3728, 1.442695
      %v3854 = vpow.pop %v3853
      %v3855 = vmul.f32 %v3729, 1.442695
      %v3856 = vpow.pop %v3855
      %v3857 = vmul.f32 %v3730, 1.442695
      %v3858 = vpow.pop %v3857
      %3859 = vadd.xlane.f32.xlu0 %v3732
      %v3860 = vpop.xlane.xlu0 %3859
      %3861 = vadd.xlane.f32.xlu0 %v3734
      %v3862 = vpop.xlane.xlu0 %3861
      %3863 = vadd.xlane.f32.xlu0 %v3736
      %v3864 = vpop.xlane.xlu0 %3863
      %3865 = vadd.xlane.f32.xlu0 %v3738
      %v3866 = vpop.xlane.xlu0 %3865
      %3867 = vadd.xlane.f32.xlu0 %v3740
      %v3868 = vpop.xlane.xlu0 %3867
      %3869 = vadd.xlane.f32.xlu0 %v3742
      %v3870 = vpop.xlane.xlu0 %3869
      %3871 = vadd.xlane.f32.xlu0 %v3744
      %v3872 = vpop.xlane.xlu0 %3871
      %3873 = vadd.xlane.f32.xlu0 %v3746
      %v3874 = vpop.xlane.xlu0 %3873
      %3875 = vadd.xlane.f32.xlu0 %v3748
      %v3876 = vpop.xlane.xlu0 %3875
      %3877 = vadd.xlane.f32.xlu0 %v3750
      %v3878 = vpop.xlane.xlu0 %3877
      %3879 = vadd.xlane.f32.xlu0 %v3752
      %v3880 = vpop.xlane.xlu0 %3879
      %3881 = vadd.xlane.f32.xlu0 %v3754
      %v3882 = vpop.xlane.xlu0 %3881
      %3883 = vadd.xlane.f32.xlu0 %v3756
      %v3884 = vpop.xlane.xlu0 %3883
      %3885 = vadd.xlane.f32.xlu0 %v3758
      %v3886 = vpop.xlane.xlu0 %3885
      %3887 = vadd.xlane.f32.xlu0 %v3760
      %v3888 = vpop.xlane.xlu0 %3887
      %3889 = vadd.xlane.f32.xlu0 %v3762
      %v3890 = vpop.xlane.xlu0 %3889
      %3891 = vadd.xlane.f32.xlu0 %v3764
      %v3892 = vpop.xlane.xlu0 %3891
      %3893 = vadd.xlane.f32.xlu0 %v3766
      %v3894 = vpop.xlane.xlu0 %3893
      %3895 = vadd.xlane.f32.xlu0 %v3768
      %v3896 = vpop.xlane.xlu0 %3895
      %3897 = vadd.xlane.f32.xlu0 %v3770
      %v3898 = vpop.xlane.xlu0 %3897
      %3899 = vadd.xlane.f32.xlu0 %v3772
      %v3900 = vpop.xlane.xlu0 %3899
      %3901 = vadd.xlane.f32.xlu0 %v3774
      %v3902 = vpop.xlane.xlu0 %3901
      %3903 = vadd.xlane.f32.xlu0 %v3776
      %v3904 = vpop.xlane.xlu0 %3903
      %3905 = vadd.xlane.f32.xlu0 %v3778
      %v3906 = vpop.xlane.xlu0 %3905
      %3907 = vadd.xlane.f32.xlu0 %v3780
      %v3908 = vpop.xlane.xlu0 %3907
      %3909 = vadd.xlane.f32.xlu0 %v3782
      %v3910 = vpop.xlane.xlu0 %3909
      %3911 = vadd.xlane.f32.xlu0 %v3784
      %v3912 = vpop.xlane.xlu0 %3911
      %3913 = vadd.xlane.f32.xlu0 %v3786
      %v3914 = vpop.xlane.xlu0 %3913
      %3915 = vadd.xlane.f32.xlu0 %v3788
      %v3916 = vpop.xlane.xlu0 %3915
      %3917 = vadd.xlane.f32.xlu0 %v3790
      %v3918 = vpop.xlane.xlu0 %3917
      %3919 = vadd.xlane.f32.xlu0 %v3792
      %v3920 = vpop.xlane.xlu0 %3919
      %3921 = vadd.xlane.f32.xlu0 %v3794
      %v3922 = vpop.xlane.xlu0 %3921
      %3923 = vadd.xlane.f32.xlu0 %v3796
      %v3924 = vpop.xlane.xlu0 %3923
      %3925 = vadd.xlane.f32.xlu0 %v3798
      %v3926 = vpop.xlane.xlu0 %3925
      %3927 = vadd.xlane.f32.xlu0 %v3800
      %v3928 = vpop.xlane.xlu0 %3927
      %3929 = vadd.xlane.f32.xlu0 %v3802
      %v3930 = vpop.xlane.xlu0 %3929
      %3931 = vadd.xlane.f32.xlu0 %v3804
      %v3932 = vpop.xlane.xlu0 %3931
      %3933 = vadd.xlane.f32.xlu0 %v3806
      %v3934 = vpop.xlane.xlu0 %3933
      %3935 = vadd.xlane.f32.xlu0 %v3808
      %v3936 = vpop.xlane.xlu0 %3935
      %3937 = vadd.xlane.f32.xlu0 %v3810
      %v3938 = vpop.xlane.xlu0 %3937
      %3939 = vadd.xlane.f32.xlu0 %v3812
      %v3940 = vpop.xlane.xlu0 %3939
      %3941 = vadd.xlane.f32.xlu0 %v3814
      %v3942 = vpop.xlane.xlu0 %3941
      %3943 = vadd.xlane.f32.xlu0 %v3816
      %v3944 = vpop.xlane.xlu0 %3943
      %3945 = vadd.xlane.f32.xlu0 %v3818
      %v3946 = vpop.xlane.xlu0 %3945
      %3947 = vadd.xlane.f32.xlu0 %v3820
      %v3948 = vpop.xlane.xlu0 %3947
      %3949 = vadd.xlane.f32.xlu0 %v3822
      %v3950 = vpop.xlane.xlu0 %3949
      %3951 = vadd.xlane.f32.xlu0 %v3824
      %v3952 = vpop.xlane.xlu0 %3951
      %3953 = vadd.xlane.f32.xlu0 %v3826
      %v3954 = vpop.xlane.xlu0 %3953
      %3955 = vadd.xlane.f32.xlu0 %v3828
      %v3956 = vpop.xlane.xlu0 %3955
      %3957 = vadd.xlane.f32.xlu0 %v3830
      %v3958 = vpop.xlane.xlu0 %3957
      %3959 = vadd.xlane.f32.xlu0 %v3832
      %v3960 = vpop.xlane.xlu0 %3959
      %3961 = vadd.xlane.f32.xlu0 %v3834
      %v3962 = vpop.xlane.xlu0 %3961
      %3963 = vadd.xlane.f32.xlu0 %v3836
      %v3964 = vpop.xlane.xlu0 %3963
      %3965 = vadd.xlane.f32.xlu0 %v3838
      %v3966 = vpop.xlane.xlu0 %3965
      %3967 = vadd.xlane.f32.xlu0 %v3840
      %v3968 = vpop.xlane.xlu0 %3967
      %3969 = vadd.xlane.f32.xlu0 %v3842
      %v3970 = vpop.xlane.xlu0 %3969
      %3971 = vadd.xlane.f32.xlu0 %v3844
      %v3972 = vpop.xlane.xlu0 %3971
      %3973 = vadd.xlane.f32.xlu0 %v3846
      %v3974 = vpop.xlane.xlu0 %3973
      %3975 = vadd.xlane.f32.xlu0 %v3848
      %v3976 = vpop.xlane.xlu0 %3975
      %3977 = vadd.xlane.f32.xlu0 %v3850
      %v3978 = vpop.xlane.xlu0 %3977
      %3979 = vadd.xlane.f32.xlu0 %v3852
      %v3980 = vpop.xlane.xlu0 %3979
      %3981 = vadd.xlane.f32.xlu0 %v3854
      %v3982 = vpop.xlane.xlu0 %3981
      %3983 = vadd.xlane.f32.xlu0 %v3856
      %v3984 = vpop.xlane.xlu0 %3983
      %3985 = vadd.xlane.f32.xlu0 %v3858
      %v3986 = vpop.xlane.xlu0 %3985
      %v3987 = vrcp.pop %v3860
      %v3988 = vrcp.pop %v3862
      %v3989 = vrcp.pop %v3864
      %v3990 = vrcp.pop %v3866
      %v3991 = vrcp.pop %v3868
      %v3992 = vrcp.pop %v3870
      %v3993 = vrcp.pop %v3872
      %v3994 = vrcp.pop %v3874
      %v3995 = vrcp.pop %v3876
      %v3996 = vrcp.pop %v3878
      %v3997 = vrcp.pop %v3880
      %v3998 = vrcp.pop %v3882
      %v3999 = vrcp.pop %v3884
      %v4000 = vrcp.pop %v3886
      %v4001 = vrcp.pop %v3888
      %v4002 = vrcp.pop %v3890
      %v4003 = vrcp.pop %v3892
      %v4004 = vrcp.pop %v3894
      %v4005 = vrcp.pop %v3896
      %v4006 = vrcp.pop %v3898
      %v4007 = vrcp.pop %v3900
      %v4008 = vrcp.pop %v3902
      %v4009 = vrcp.pop %v3904
      %v4010 = vrcp.pop %v3906
      %v4011 = vrcp.pop %v3908
      %v4012 = vrcp.pop %v3910
      %v4013 = vrcp.pop %v3912
      %v4014 = vrcp.pop %v3914
      %v4015 = vrcp.pop %v3916
      %v4016 = vrcp.pop %v3918
      %v4017 = vrcp.pop %v3920
      %v4018 = vrcp.pop %v3922
      %v4019 = vrcp.pop %v3924
      %v4020 = vrcp.pop %v3926
      %v4021 = vrcp.pop %v3928
      %v4022 = vrcp.pop %v3930
      %v4023 = vrcp.pop %v3932
      %v4024 = vrcp.pop %v3934
      %v4025 = vrcp.pop %v3936
      %v4026 = vrcp.pop %v3938
      %v4027 = vrcp.pop %v3940
      %v4028 = vrcp.pop %v3942
      %v4029 = vrcp.pop %v3944
      %v4030 = vrcp.pop %v3946
      %v4031 = vrcp.pop %v3948
      %v4032 = vrcp.pop %v3950
      %v4033 = vrcp.pop %v3952
      %v4034 = vrcp.pop %v3954
      %v4035 = vrcp.pop %v3956
      %v4036 = vrcp.pop %v3958
      %v4037 = vrcp.pop %v3960
      %v4038 = vrcp.pop %v3962
      %v4039 = vrcp.pop %v3964
      %v4040 = vrcp.pop %v3966
      %v4041 = vrcp.pop %v3968
      %v4042 = vrcp.pop %v3970
      %v4043 = vrcp.pop %v3972
      %v4044 = vrcp.pop %v3974
      %v4045 = vrcp.pop %v3976
      %v4046 = vrcp.pop %v3978
      %v4047 = vrcp.pop %v3980
      %v4048 = vrcp.pop %v3982
      %v4049 = vrcp.pop %v3984
      %v4050 = vrcp.pop %v3986
      %v4051 = vmul.f32 %v3732, %v3987
      %v4052 = vmul.f32 %v3734, %v3988
      %v4053 = vmul.f32 %v3736, %v3989
      %v4054 = vmul.f32 %v3738, %v3990
      %v4055 = vmul.f32 %v3740, %v3991
      %v4056 = vmul.f32 %v3742, %v3992
      %v4057 = vmul.f32 %v3744, %v3993
      %v4058 = vmul.f32 %v3746, %v3994
      %v4059 = vmul.f32 %v3748, %v3995
      %v4060 = vmul.f32 %v3750, %v3996
      %v4061 = vmul.f32 %v3752, %v3997
      %v4062 = vmul.f32 %v3754, %v3998
      %v4063 = vmul.f32 %v3756, %v3999
      %v4064 = vmul.f32 %v3758, %v4000
      %v4065 = vmul.f32 %v3760, %v4001
      %v4066 = vmul.f32 %v3762, %v4002
      %v4067 = vmul.f32 %v3764, %v4003
      %v4068 = vmul.f32 %v3766, %v4004
      %v4069 = vmul.f32 %v3768, %v4005
      %v4070 = vmul.f32 %v3770, %v4006
      %v4071 = vmul.f32 %v3772, %v4007
      %v4072 = vmul.f32 %v3774, %v4008
      %v4073 = vmul.f32 %v3776, %v4009
      %v4074 = vmul.f32 %v3778, %v4010
      %v4075 = vmul.f32 %v3780, %v4011
      %v4076 = vmul.f32 %v3782, %v4012
      %v4077 = vmul.f32 %v3784, %v4013
      %v4078 = vmul.f32 %v3786, %v4014
      %v4079 = vmul.f32 %v3788, %v4015
      %v4080 = vmul.f32 %v3790, %v4016
      %v4081 = vmul.f32 %v3792, %v4017
      %v4082 = vmul.f32 %v3794, %v4018
      %v4083 = vmul.f32 %v3796, %v4019
      %v4084 = vmul.f32 %v3798, %v4020
      %v4085 = vmul.f32 %v3800, %v4021
      %v4086 = vmul.f32 %v3802, %v4022
      %v4087 = vmul.f32 %v3804, %v4023
      %v4088 = vmul.f32 %v3806, %v4024
      %v4089 = vmul.f32 %v3808, %v4025
      %v4090 = vmul.f32 %v3810, %v4026
      %v4091 = vmul.f32 %v3812, %v4027
      %v4092 = vmul.f32 %v3814, %v4028
      %v4093 = vmul.f32 %v3816, %v4029
      %v4094 = vmul.f32 %v3818, %v4030
      %v4095 = vmul.f32 %v3820, %v4031
      %v4096 = vmul.f32 %v3822, %v4032
      %v4097 = vmul.f32 %v3824, %v4033
      %v4098 = vmul.f32 %v3826, %v4034
      %v4099 = vmul.f32 %v3828, %v4035
      %v4100 = vmul.f32 %v3830, %v4036
      %v4101 = vmul.f32 %v3832, %v4037
      %v4102 = vmul.f32 %v3834, %v4038
      %v4103 = vmul.f32 %v3836, %v4039
      %v4104 = vmul.f32 %v3838, %v4040
      %v4105 = vmul.f32 %v3840, %v4041
      %v4106 = vmul.f32 %v3842, %v4042
      %v4107 = vmul.f32 %v3844, %v4043
      %v4108 = vmul.f32 %v3846, %v4044
      %v4109 = vmul.f32 %v3848, %v4045
      %v4110 = vmul.f32 %v3850, %v4046
      %v4111 = vmul.f32 %v3852, %v4047
      %v4112 = vmul.f32 %v3854, %v4048
      %v4113 = vmul.f32 %v3856, %v4049
      %v4114 = vmul.f32 %v3858, %v4050
      %v4115 = vpack.c.bf16 %v4052, %v4051
      %v4116 = vpack.c.bf16 %v4054, %v4053
      %v4117 = vpack.c.bf16 %v4056, %v4055
      %v4118 = vpack.c.bf16 %v4058, %v4057
      %v4119 = vpack.c.bf16 %v4060, %v4059
      %v4120 = vpack.c.bf16 %v4062, %v4061
      %v4121 = vpack.c.bf16 %v4064, %v4063
      %v4122 = vpack.c.bf16 %v4066, %v4065
      %v4123 = vpack.c.bf16 %v4068, %v4067
      %v4124 = vpack.c.bf16 %v4070, %v4069
      %v4125 = vpack.c.bf16 %v4072, %v4071
      %v4126 = vpack.c.bf16 %v4074, %v4073
      %v4127 = vpack.c.bf16 %v4076, %v4075
      %v4128 = vpack.c.bf16 %v4078, %v4077
      %v4129 = vpack.c.bf16 %v4080, %v4079
      %v4130 = vpack.c.bf16 %v4082, %v4081
      %v4131 = vpack.c.bf16 %v4084, %v4083
      %v4132 = vpack.c.bf16 %v4086, %v4085
      %v4133 = vpack.c.bf16 %v4088, %v4087
      %v4134 = vpack.c.bf16 %v4090, %v4089
      %v4135 = vpack.c.bf16 %v4092, %v4091
      %v4136 = vpack.c.bf16 %v4094, %v4093
      %v4137 = vpack.c.bf16 %v4096, %v4095
      %v4138 = vpack.c.bf16 %v4098, %v4097
      %v4139 = vpack.c.bf16 %v4100, %v4099
      %v4140 = vpack.c.bf16 %v4102, %v4101
      %v4141 = vpack.c.bf16 %v4104, %v4103
      %v4142 = vpack.c.bf16 %v4106, %v4105
      %v4143 = vpack.c.bf16 %v4108, %v4107
      %v4144 = vpack.c.bf16 %v4110, %v4109
      %v4145 = vpack.c.bf16 %v4112, %v4111
      %v4146 = vpack.c.bf16 %v4114, %v4113
      %4147 = vmatprep.subr.bf16.mxu0 0
      %4148 = vmatpush1.bf16.msra.mxu0 %v2636
      %4149 = vmatprep.subr.bf16.mxu0 0
      %4150 = vmatpush1.bf16.msra.mxu0 %v2637
      %4151 = vmatprep.subr.bf16.mxu0 0
      %4152 = vmatpush1.bf16.msra.mxu0 %v2638
      %4153 = vmatprep.subr.bf16.mxu0 0
      %4154 = vmatpush1.bf16.msra.mxu0 %v2639
      %4155 = vmatprep.subr.bf16.mxu0 0
      %4156 = vmatpush1.bf16.msra.mxu0 %v2640
      %4157 = vmatprep.subr.bf16.mxu0 0
      %4158 = vmatpush1.bf16.msra.mxu0 %v2641
      %4159 = vmatprep.subr.bf16.mxu0 0
      %4160 = vmatpush1.bf16.msra.mxu0 %v2642
      %4161 = vmatprep.subr.bf16.mxu0 0
      %4162 = vmatpush1.bf16.msra.mxu0 %v2643
      %4163 = vmatprep.subr.bf16.mxu0 0
      %4164 = vmatpush1.bf16.msra.mxu0 0
      %4165 = vmatprep.subr.bf16.mxu0 0
      %4166 = vmatpush1.bf16.msra.mxu0 0
      %4167 = vmatprep.subr.bf16.mxu0 0
      %4168 = vmatpush1.bf16.msra.mxu0 0
      %4169 = vmatprep.subr.bf16.mxu0 0
      %4170 = vmatpush1.bf16.msra.mxu0 0
      %4171 = vmatprep.subr.bf16.mxu0 0
      %4172 = vmatpush1.bf16.msra.mxu0 0
      %4173 = vmatprep.subr.bf16.mxu0 0
      %4174 = vmatpush1.bf16.msra.mxu0 0
      %4175 = vmatprep.subr.bf16.mxu0 0
      %4176 = vmatpush1.bf16.msra.mxu0 0
      %4177 = vmatprep.subr.bf16.mxu0 0
      %4178 = vmatpush1.bf16.msra.mxu0 0
      %4179 = vmatprep.mubr.bf16.mxu0 0
      %4180 = vmatmul.mubr.bf16.gmra.mrb[0].mxu0 %v4115
      %v4181 = vpop.f32.mrb[0].mxu0
      %v4182 = vadd.f32 0.0, %v4181
      %v4183 = vpop.f32.mrb[0].mxu0
      %v4184 = vpop.f32.mrb[0].mxu0
      %v4185 = vadd.f32 0.0, %v4184
      %v4186 = vpop.f32.mrb[0].mxu0
      %4187 = vmatprep.mubr.bf16.mxu0 0
      %4188 = vmatmul.mubr.bf16.gmra.mrb[0].mxu0 %v4116
      %v4189 = vpop.f32.mrb[0].mxu0
      %v4190 = vadd.f32 0.0, %v4189
      %v4191 = vpop.f32.mrb[0].mxu0
      %v4192 = vpop.f32.mrb[0].mxu0
      %v4193 = vadd.f32 0.0, %v4192
      %v4194 = vpop.f32.mrb[0].mxu0
      %4195 = vmatprep.mubr.bf16.mxu0 0
      %4196 = vmatmul.mubr.bf16.gmra.mrb[0].mxu0 %v4117
      %v4197 = vpop.f32.mrb[0].mxu0
      %v4198 = vadd.f32 0.0, %v4197
      %v4199 = vpop.f32.mrb[0].mxu0
      %v4200 = vpop.f32.mrb[0].mxu0
      %v4201 = vadd.f32 0.0, %v4200
      %v4202 = vpop.f32.mrb[0].mxu0
      %4203 = vmatprep.mubr.bf16.mxu0 0
      %4204 = vmatmul.mubr.bf16.gmra.mrb[0].mxu0 %v4118
      %v4205 = vpop.f32.mrb[0].mxu0
      %v4206 = vadd.f32 0.0, %v4205
      %v4207 = vpop.f32.mrb[0].mxu0
      %v4208 = vpop.f32.mrb[0].mxu0
      %v4209 = vadd.f32 0.0, %v4208
      %v4210 = vpop.f32.mrb[0].mxu0
      %4211 = vmatprep.mubr.bf16.mxu0 0
      %4212 = vmatmul.mubr.bf16.gmra.mrb[0].mxu0 %v4119
      %v4213 = vpop.f32.mrb[0].mxu0
      %v4214 = vadd.f32 0.0, %v4213
      %v4215 = vpop.f32.mrb[0].mxu0
      %v4216 = vpop.f32.mrb[0].mxu0
      %v4217 = vadd.f32 0.0, %v4216
      %v4218 = vpop.f32.mrb[0].mxu0
      %4219 = vmatprep.mubr.bf16.mxu0 0
      %4220 = vmatmul.mubr.bf16.gmra.mrb[0].mxu0 %v4120
      %v4221 = vpop.f32.mrb[0].mxu0
      %v4222 = vadd.f32 0.0, %v4221
      %v4223 = vpop.f32.mrb[0].mxu0
      %v4224 = vpop.f32.mrb[0].mxu0
      %v4225 = vadd.f32 0.0, %v4224
      %v4226 = vpop.f32.mrb[0].mxu0
      %4227 = vmatprep.mubr.bf16.mxu0 0
      %4228 = vmatmul.mubr.bf16.gmra.mrb[0].mxu0 %v4121
      %v4229 = vpop.f32.mrb[0].mxu0
      %v4230 = vadd.f32 0.0, %v4229
      %v4231 = vpop.f32.mrb[0].mxu0
      %v4232 = vpop.f32.mrb[0].mxu0
      %v4233 = vadd.f32 0.0, %v4232
      %v4234 = vpop.f32.mrb[0].mxu0
      %4235 = vmatprep.mubr.bf16.mxu0 0
      %4236 = vmatmul.mubr.bf16.gmra.mrb[0].mxu0 %v4122
      %v4237 = vpop.f32.mrb[0].mxu0
      %v4238 = vadd.f32 0.0, %v4237
      %v4239 = vpop.f32.mrb[0].mxu0
      %v4240 = vpop.f32.mrb[0].mxu0
      %v4241 = vadd.f32 0.0, %v4240
      %v4242 = vpop.f32.mrb[0].mxu0
      %4243 = vdwg.mxu0
      %4244 = vmatprep.subr.bf16.mxu0 0
      %4245 = vmatpush1.bf16.msra.mxu0 %v2644
      %4246 = vmatprep.subr.bf16.mxu0 0
      %4247 = vmatpush1.bf16.msra.mxu0 %v2645
      %4248 = vmatprep.subr.bf16.mxu0 0
      %4249 = vmatpush1.bf16.msra.mxu0 %v2646
      %4250 = vmatprep.subr.bf16.mxu0 0
      %4251 = vmatpush1.bf16.msra.mxu0 %v2647
      %4252 = vmatprep.subr.bf16.mxu0 0
      %4253 = vmatpush1.bf16.msra.mxu0 %v2648
      %4254 = vmatprep.subr.bf16.mxu0 0
      %4255 = vmatpush1.bf16.msra.mxu0 %v2649
      %4256 = vmatprep.subr.bf16.mxu0 0
      %4257 = vmatpush1.bf16.msra.mxu0 %v2650
      %4258 = vmatprep.subr.bf16.mxu0 0
      %4259 = vmatpush1.bf16.msra.mxu0 %v2651
      %4260 = vmatprep.subr.bf16.mxu0 0
      %4261 = vmatpush1.bf16.msra.mxu0 0
      %4262 = vmatprep.subr.bf16.mxu0 0
      %4263 = vmatpush1.bf16.msra.mxu0 0
      %4264 = vmatprep.subr.bf16.mxu0 0
      %4265 = vmatpush1.bf16.msra.mxu0 0
      %4266 = vmatprep.subr.bf16.mxu0 0
      %4267 = vmatpush1.bf16.msra.mxu0 0
      %4268 = vmatprep.subr.bf16.mxu0 0
      %4269 = vmatpush1.bf16.msra.mxu0 0
      %4270 = vmatprep.subr.bf16.mxu0 0
      %4271 = vmatpush1.bf16.msra.mxu0 0
      %4272 = vmatprep.subr.bf16.mxu0 0
      %4273 = vmatpush1.bf16.msra.mxu0 0
      %4274 = vmatprep.subr.bf16.mxu0 0
      %4275 = vmatpush1.bf16.msra.mxu0 0
      %4276 = vmatprep.mubr.bf16.mxu0 0
      %4277 = vmatmul.mubr.bf16.gmra.mrb[0].mxu0 %v4123
      %v4278 = vpop.f32.mrb[0].mxu0
      %v4279 = vadd.f32 0.0, %v4278
      %v4280 = vpop.f32.mrb[0].mxu0
      %v4281 = vpop.f32.mrb[0].mxu0
      %v4282 = vadd.f32 0.0, %v4281
      %v4283 = vpop.f32.mrb[0].mxu0
      %4284 = vmatprep.mubr.bf16.mxu0 0
      %4285 = vmatmul.mubr.bf16.gmra.mrb[0].mxu0 %v4124
      %v4286 = vpop.f32.mrb[0].mxu0
      %v4287 = vadd.f32 0.0, %v4286
      %v4288 = vpop.f32.mrb[0].mxu0
      %v4289 = vpop.f32.mrb[0].mxu0
      %v4290 = vadd.f32 0.0, %v4289
      %v4291 = vpop.f32.mrb[0].mxu0
      %4292 = vmatprep.mubr.bf16.mxu0 0
      %4293 = vmatmul.mubr.bf16.gmra.mrb[0].mxu0 %v4125
      %v4294 = vpop.f32.mrb[0].mxu0
      %v4295 = vadd.f32 0.0, %v4294
      %v4296 = vpop.f32.mrb[0].mxu0
      %v4297 = vpop.f32.mrb[0].mxu0
      %v4298 = vadd.f32 0.0, %v4297
      %v4299 = vpop.f32.mrb[0].mxu0
      %4300 = vmatprep.mubr.bf16.mxu0 0
      %4301 = vmatmul.mubr.bf16.gmra.mrb[0].mxu0 %v4126
      %v4302 = vpop.f32.mrb[0].mxu0
      %v4303 = vadd.f32 0.0, %v4302
      %v4304 = vpop.f32.mrb[0].mxu0
      %v4305 = vpop.f32.mrb[0].mxu0
      %v4306 = vadd.f32 0.0, %v4305
      %v4307 = vpop.f32.mrb[0].mxu0
      %4308 = vmatprep.mubr.bf16.mxu0 0
      %4309 = vmatmul.mubr.bf16.gmra.mrb[0].mxu0 %v4127
      %v4310 = vpop.f32.mrb[0].mxu0
      %v4311 = vadd.f32 0.0, %v4310
      %v4312 = vpop.f32.mrb[0].mxu0
      %v4313 = vpop.f32.mrb[0].mxu0
      %v4314 = vadd.f32 0.0, %v4313
      %v4315 = vpop.f32.mrb[0].mxu0
      %4316 = vmatprep.mubr.bf16.mxu0 0
      %4317 = vmatmul.mubr.bf16.gmra.mrb[0].mxu0 %v4128
      %v4318 = vpop.f32.mrb[0].mxu0
      %v4319 = vadd.f32 0.0, %v4318
      %v4320 = vpop.f32.mrb[0].mxu0
      %v4321 = vpop.f32.mrb[0].mxu0
      %v4322 = vadd.f32 0.0, %v4321
      %v4323 = vpop.f32.mrb[0].mxu0
      %4324 = vmatprep.mubr.bf16.mxu0 0
      %4325 = vmatmul.mubr.bf16.gmra.mrb[0].mxu0 %v4129
      %v4326 = vpop.f32.mrb[0].mxu0
      %v4327 = vadd.f32 0.0, %v4326
      %v4328 = vpop.f32.mrb[0].mxu0
      %v4329 = vpop.f32.mrb[0].mxu0
      %v4330 = vadd.f32 0.0, %v4329
      %v4331 = vpop.f32.mrb[0].mxu0
      %4332 = vmatprep.mubr.bf16.mxu0 0
      %4333 = vmatmul.mubr.bf16.gmra.mrb[0].mxu0 %v4130
      %v4334 = vpop.f32.mrb[0].mxu0
      %v4335 = vadd.f32 0.0, %v4334
      %v4336 = vpop.f32.mrb[0].mxu0
      %v4337 = vpop.f32.mrb[0].mxu0
      %v4338 = vadd.f32 0.0, %v4337
      %v4339 = vpop.f32.mrb[0].mxu0
      %4340 = vdwg.mxu0
      %4341 = vmatprep.subr.bf16.mxu0 0
      %4342 = vmatpush1.bf16.msra.mxu0 %v3004
      %4343 = vmatprep.subr.bf16.mxu0 0
      %4344 = vmatpush1.bf16.msra.mxu0 %v3005
      %4345 = vmatprep.subr.bf16.mxu0 0
      %4346 = vmatpush1.bf16.msra.mxu0 %v3006
      %4347 = vmatprep.subr.bf16.mxu0 0
      %4348 = vmatpush1.bf16.msra.mxu0 %v3007
      %4349 = vmatprep.subr.bf16.mxu0 0
      %4350 = vmatpush1.bf16.msra.mxu0 %v3008
      %4351 = vmatprep.subr.bf16.mxu0 0
      %4352 = vmatpush1.bf16.msra.mxu0 %v3009
      %4353 = vmatprep.subr.bf16.mxu0 0
      %4354 = vmatpush1.bf16.msra.mxu0 %v3010
      %4355 = vmatprep.subr.bf16.mxu0 0
      %4356 = vmatpush1.bf16.msra.mxu0 %v3011
      %4357 = vmatprep.subr.bf16.mxu0 0
      %4358 = vmatpush1.bf16.msra.mxu0 0
      %4359 = vmatprep.subr.bf16.mxu0 0
      %4360 = vmatpush1.bf16.msra.mxu0 0
      %4361 = vmatprep.subr.bf16.mxu0 0
      %4362 = vmatpush1.bf16.msra.mxu0 0
      %4363 = vmatprep.subr.bf16.mxu0 0
      %4364 = vmatpush1.bf16.msra.mxu0 0
      %4365 = vmatprep.subr.bf16.mxu0 0
      %4366 = vmatpush1.bf16.msra.mxu0 0
      %4367 = vmatprep.subr.bf16.mxu0 0
      %4368 = vmatpush1.bf16.msra.mxu0 0
      %4369 = vmatprep.subr.bf16.mxu0 0
      %4370 = vmatpush1.bf16.msra.mxu0 0
      %4371 = vmatprep.subr.bf16.mxu0 0
      %4372 = vmatpush1.bf16.msra.mxu0 0
      %4373 = vmatprep.mubr.bf16.mxu0 0
      %4374 = vmatmul.mubr.bf16.gmra.mrb[0].mxu0 %v4131
      %v4375 = vpop.f32.mrb[0].mxu0
      %v4376 = vadd.f32 0.0, %v4375
      %v4377 = vpop.f32.mrb[0].mxu0
      %v4378 = vpop.f32.mrb[0].mxu0
      %v4379 = vadd.f32 0.0, %v4378
      %v4380 = vpop.f32.mrb[0].mxu0
      %4381 = vmatprep.mubr.bf16.mxu0 0
      %4382 = vmatmul.mubr.bf16.gmra.mrb[0].mxu0 %v4132
      %v4383 = vpop.f32.mrb[0].mxu0
      %v4384 = vadd.f32 0.0, %v4383
      %v4385 = vpop.f32.mrb[0].mxu0
      %v4386 = vpop.f32.mrb[0].mxu0
      %v4387 = vadd.f32 0.0, %v4386
      %v4388 = vpop.f32.mrb[0].mxu0
      %4389 = vmatprep.mubr.bf16.mxu0 0
      %4390 = vmatmul.mubr.bf16.gmra.mrb[0].mxu0 %v4133
      %v4391 = vpop.f32.mrb[0].mxu0
      %v4392 = vadd.f32 0.0, %v4391
      %v4393 = vpop.f32.mrb[0].mxu0
      %v4394 = vpop.f32.mrb[0].mxu0
      %v4395 = vadd.f32 0.0, %v4394
      %v4396 = vpop.f32.mrb[0].mxu0
      %4397 = vmatprep.mubr.bf16.mxu0 0
      %4398 = vmatmul.mubr.bf16.gmra.mrb[0].mxu0 %v4134
      %v4399 = vpop.f32.mrb[0].mxu0
      %v4400 = vadd.f32 0.0, %v4399
      %v4401 = vpop.f32.mrb[0].mxu0
      %v4402 = vpop.f32.mrb[0].mxu0
      %v4403 = vadd.f32 0.0, %v4402
      %v4404 = vpop.f32.mrb[0].mxu0
      %4405 = vmatprep.mubr.bf16.mxu0 0
      %4406 = vmatmul.mubr.bf16.gmra.mrb[0].mxu0 %v4135
      %v4407 = vpop.f32.mrb[0].mxu0
      %v4408 = vadd.f32 0.0, %v4407
      %v4409 = vpop.f32.mrb[0].mxu0
      %v4410 = vpop.f32.mrb[0].mxu0
      %v4411 = vadd.f32 0.0, %v4410
      %v4412 = vpop.f32.mrb[0].mxu0
      %4413 = vmatprep.mubr.bf16.mxu0 0
      %4414 = vmatmul.mubr.bf16.gmra.mrb[0].mxu0 %v4136
      %v4415 = vpop.f32.mrb[0].mxu0
      %v4416 = vadd.f32 0.0, %v4415
      %v4417 = vpop.f32.mrb[0].mxu0
      %v4418 = vpop.f32.mrb[0].mxu0
      %v4419 = vadd.f32 0.0, %v4418
      %v4420 = vpop.f32.mrb[0].mxu0
      %4421 = vmatprep.mubr.bf16.mxu0 0
      %4422 = vmatmul.mubr.bf16.gmra.mrb[0].mxu0 %v4137
      %v4423 = vpop.f32.mrb[0].mxu0
      %v4424 = vadd.f32 0.0, %v4423
      %v4425 = vpop.f32.mrb[0].mxu0
      %v4426 = vpop.f32.mrb[0].mxu0
      %v4427 = vadd.f32 0.0, %v4426
      %v4428 = vpop.f32.mrb[0].mxu0
      %4429 = vmatprep.mubr.bf16.mxu0 0
      %4430 = vmatmul.mubr.bf16.gmra.mrb[0].mxu0 %v4138
      %v4431 = vpop.f32.mrb[0].mxu0
      %v4432 = vadd.f32 0.0, %v4431
      %v4433 = vpop.f32.mrb[0].mxu0
      %v4434 = vpop.f32.mrb[0].mxu0
      %v4435 = vadd.f32 0.0, %v4434
      %v4436 = vpop.f32.mrb[0].mxu0
      %4437 = vdwg.mxu0
      %4438 = vmatprep.subr.bf16.mxu0 0
      %4439 = vmatpush1.bf16.msra.mxu0 %v3012
      %4440 = vmatprep.subr.bf16.mxu0 0
      %4441 = vmatpush1.bf16.msra.mxu0 %v3013
      %4442 = vmatprep.subr.bf16.mxu0 0
      %4443 = vmatpush1.bf16.msra.mxu0 %v3014
      %4444 = vmatprep.subr.bf16.mxu0 0
      %4445 = vmatpush1.bf16.msra.mxu0 %v3015
      %4446 = vmatprep.subr.bf16.mxu0 0
      %4447 = vmatpush1.bf16.msra.mxu0 %v3016
      %4448 = vmatprep.subr.bf16.mxu0 0
      %4449 = vmatpush1.bf16.msra.mxu0 %v3017
      %4450 = vmatprep.subr.bf16.mxu0 0
      %4451 = vmatpush1.bf16.msra.mxu0 %v3018
      %4452 = vmatprep.subr.bf16.mxu0 0
      %4453 = vmatpush1.bf16.msra.mxu0 %v3019
      %4454 = vmatprep.subr.bf16.mxu0 0
      %4455 = vmatpush1.bf16.msra.mxu0 0
      %4456 = vmatprep.subr.bf16.mxu0 0
      %4457 = vmatpush1.bf16.msra.mxu0 0
      %4458 = vmatprep.subr.bf16.mxu0 0
      %4459 = vmatpush1.bf16.msra.mxu0 0
      %4460 = vmatprep.subr.bf16.mxu0 0
      %4461 = vmatpush1.bf16.msra.mxu0 0
      %4462 = vmatprep.subr.bf16.mxu0 0
      %4463 = vmatpush1.bf16.msra.mxu0 0
      %4464 = vmatprep.subr.bf16.mxu0 0
      %4465 = vmatpush1.bf16.msra.mxu0 0
      %4466 = vmatprep.subr.bf16.mxu0 0
      %4467 = vmatpush1.bf16.msra.mxu0 0
      %4468 = vmatprep.subr.bf16.mxu0 0
      %4469 = vmatpush1.bf16.msra.mxu0 0
      %4470 = vmatprep.mubr.bf16.mxu0 0
      %4471 = vmatmul.mubr.bf16.gmra.mrb[0].mxu0 %v4139
      %v4472 = vpop.f32.mrb[0].mxu0
      %v4473 = vadd.f32 0.0, %v4472
      %v4474 = vpop.f32.mrb[0].mxu0
      %v4475 = vpop.f32.mrb[0].mxu0
      %v4476 = vadd.f32 0.0, %v4475
      %v4477 = vpop.f32.mrb[0].mxu0
      %4478 = vmatprep.mubr.bf16.mxu0 0
      %4479 = vmatmul.mubr.bf16.gmra.mrb[0].mxu0 %v4140
      %v4480 = vpop.f32.mrb[0].mxu0
      %v4481 = vadd.f32 0.0, %v4480
      %v4482 = vpop.f32.mrb[0].mxu0
      %v4483 = vpop.f32.mrb[0].mxu0
      %v4484 = vadd.f32 0.0, %v4483
      %v4485 = vpop.f32.mrb[0].mxu0
      %4486 = vmatprep.mubr.bf16.mxu0 0
      %4487 = vmatmul.mubr.bf16.gmra.mrb[0].mxu0 %v4141
      %v4488 = vpop.f32.mrb[0].mxu0
      %v4489 = vadd.f32 0.0, %v4488
      %v4490 = vpop.f32.mrb[0].mxu0
      %v4491 = vpop.f32.mrb[0].mxu0
      %v4492 = vadd.f32 0.0, %v4491
      %v4493 = vpop.f32.mrb[0].mxu0
      %4494 = vmatprep.mubr.bf16.mxu0 0
      %4495 = vmatmul.mubr.bf16.gmra.mrb[0].mxu0 %v4142
      %v4496 = vpop.f32.mrb[0].mxu0
      %v4497 = vadd.f32 0.0, %v4496
      %v4498 = vpop.f32.mrb[0].mxu0
      %v4499 = vpop.f32.mrb[0].mxu0
      %v4500 = vadd.f32 0.0, %v4499
      %v4501 = vpop.f32.mrb[0].mxu0
      %4502 = vmatprep.mubr.bf16.mxu0 0
      %4503 = vmatmul.mubr.bf16.gmra.mrb[0].mxu0 %v4143
      %v4504 = vpop.f32.mrb[0].mxu0
      %v4505 = vadd.f32 0.0, %v4504
      %v4506 = vpop.f32.mrb[0].mxu0
      %v4507 = vpop.f32.mrb[0].mxu0
      %v4508 = vadd.f32 0.0, %v4507
      %v4509 = vpop.f32.mrb[0].mxu0
      %4510 = vmatprep.mubr.bf16.mxu0 0
      %4511 = vmatmul.mubr.bf16.gmra.mrb[0].mxu0 %v4144
      %v4512 = vpop.f32.mrb[0].mxu0
      %v4513 = vadd.f32 0.0, %v4512
      %v4514 = vpop.f32.mrb[0].mxu0
      %v4515 = vpop.f32.mrb[0].mxu0
      %v4516 = vadd.f32 0.0, %v4515
      %v4517 = vpop.f32.mrb[0].mxu0
      %4518 = vmatprep.mubr.bf16.mxu0 0
      %4519 = vmatmul.mubr.bf16.gmra.mrb[0].mxu0 %v4145
      %v4520 = vpop.f32.mrb[0].mxu0
      %v4521 = vadd.f32 0.0, %v4520
      %v4522 = vpop.f32.mrb[0].mxu0
      %v4523 = vpop.f32.mrb[0].mxu0
      %v4524 = vadd.f32 0.0, %v4523
      %v4525 = vpop.f32.mrb[0].mxu0
      %4526 = vmatprep.mubr.bf16.mxu0 0
      %4527 = vmatmul.mubr.bf16.gmra.mrb[0].mxu0 %v4146
      %v4528 = vpop.f32.mrb[0].mxu0
      %v4529 = vadd.f32 0.0, %v4528
      %v4530 = vpop.f32.mrb[0].mxu0
      %v4531 = vpop.f32.mrb[0].mxu0
      %v4532 = vadd.f32 0.0, %v4531
      %v4533 = vpop.f32.mrb[0].mxu0
      %4534 = vdwg.mxu0
      %v4535 = vpack.c.bf16 %v4185, %v4182
      %v4536 = vpack.c.bf16 %v4379, %v4376
      %v4537 = vpack.c.bf16 %v4193, %v4190
      %v4538 = vpack.c.bf16 %v4387, %v4384
      %v4539 = vpack.c.bf16 %v4201, %v4198
      %v4540 = vpack.c.bf16 %v4395, %v4392
      %v4541 = vpack.c.bf16 %v4209, %v4206
      %v4542 = vpack.c.bf16 %v4403, %v4400
      %v4543 = vpack.c.bf16 %v4217, %v4214
      %v4544 = vpack.c.bf16 %v4411, %v4408
      %v4545 = vpack.c.bf16 %v4225, %v4222
      %v4546 = vpack.c.bf16 %v4419, %v4416
      %v4547 = vpack.c.bf16 %v4233, %v4230
      %v4548 = vpack.c.bf16 %v4427, %v4424
      %v4549 = vpack.c.bf16 %v4241, %v4238
      %v4550 = vpack.c.bf16 %v4435, %v4432
      %v4551 = vpack.c.bf16 %v4282, %v4279
      %v4552 = vpack.c.bf16 %v4476, %v4473
      %v4553 = vpack.c.bf16 %v4290, %v4287
      %v4554 = vpack.c.bf16 %v4484, %v4481
      %v4555 = vpack.c.bf16 %v4298, %v4295
      %v4556 = vpack.c.bf16 %v4492, %v4489
      %v4557 = vpack.c.bf16 %v4306, %v4303
      %v4558 = vpack.c.bf16 %v4500, %v4497
      %v4559 = vpack.c.bf16 %v4314, %v4311
      %v4560 = vpack.c.bf16 %v4508, %v4505
      %v4561 = vpack.c.bf16 %v4322, %v4319
      %v4562 = vpack.c.bf16 %v4516, %v4513
      %v4563 = vpack.c.bf16 %v4330, %v4327
      %v4564 = vpack.c.bf16 %v4524, %v4521
      %v4565 = vpack.c.bf16 %v4338, %v4335
      %v4566 = vpack.c.bf16 %v4532, %v4529
      %v4567 = vld [vmem:[%s428] sm:$0xff]
      %v4568 = vld [vmem:[%s428 + $0x8] sm:$0xff]
      %v4569 = vld [vmem:[%s428 + $0x10] sm:$0xff]
      %v4570 = vld [vmem:[%s428 + $0x18] sm:$0xff]
      %v4571 = vld [vmem:[%s428 + $0x20] sm:$0xff]
      %v4572 = vld [vmem:[%s428 + $0x28] sm:$0xff]
      %v4573 = vld [vmem:[%s428 + $0x30] sm:$0xff]
      %v4574 = vld [vmem:[%s428 + $0x38] sm:$0xff]
      %v4575 = vld [vmem:[%s428 + $0x40] sm:$0xff]
      %v4576 = vld [vmem:[%s428 + $0x48] sm:$0xff]
      %v4577 = vld [vmem:[%s428 + $0x50] sm:$0xff]
      %v4578 = vld [vmem:[%s428 + $0x58] sm:$0xff]
      %v4579 = vld [vmem:[%s428 + $0x60] sm:$0xff]
      %v4580 = vld [vmem:[%s428 + $0x68] sm:$0xff]
      %v4581 = vld [vmem:[%s428 + $0x70] sm:$0xff]
      %v4582 = vld [vmem:[%s428 + $0x78] sm:$0xff]
      %v4583 = vld [vmem:[%s428 + $0x80] sm:$0xff]
      %v4584 = vld [vmem:[%s428 + $0x88] sm:$0xff]
      %v4585 = vld [vmem:[%s428 + $0x90] sm:$0xff]
      %v4586 = vld [vmem:[%s428 + $0x98] sm:$0xff]
      %v4587 = vld [vmem:[%s428 + $0xa0] sm:$0xff]
      %v4588 = vld [vmem:[%s428 + $0xa8] sm:$0xff]
      %v4589 = vld [vmem:[%s428 + $0xb0] sm:$0xff]
      %v4590 = vld [vmem:[%s428 + $0xb8] sm:$0xff]
      %v4591 = vld [vmem:[%s428 + $0xc0] sm:$0xff]
      %v4592 = vld [vmem:[%s428 + $0xc8] sm:$0xff]
      %v4593 = vld [vmem:[%s428 + $0xd0] sm:$0xff]
      %v4594 = vld [vmem:[%s428 + $0xd8] sm:$0xff]
      %v4595 = vld [vmem:[%s428 + $0xe0] sm:$0xff]
      %v4596 = vld [vmem:[%s428 + $0xe8] sm:$0xff]
      %v4597 = vld [vmem:[%s428 + $0xf0] sm:$0xff]
      %v4598 = vld [vmem:[%s428 + $0xf8] sm:$0xff]
      %v4631 = vunpack.c.l.b16 %v4567
      %v4632 = vunpack.c.h.b16 %v4567
      %v4633 = vunpack.c.l.b16 %v4568
      %v4634 = vunpack.c.h.b16 %v4568
      %v4635 = vunpack.c.l.b16 %v4569
      %v4636 = vunpack.c.h.b16 %v4569
      %v4637 = vunpack.c.l.b16 %v4570
      %v4638 = vunpack.c.h.b16 %v4570
      %v4639 = vunpack.c.l.b16 %v4571
      %v4640 = vunpack.c.h.b16 %v4571
      %v4641 = vunpack.c.l.b16 %v4572
      %v4642 = vunpack.c.h.b16 %v4572
      %v4643 = vunpack.c.l.b16 %v4573
      %v4644 = vunpack.c.h.b16 %v4573
      %v4645 = vunpack.c.l.b16 %v4574
      %v4646 = vunpack.c.h.b16 %v4574
      %v4647 = vunpack.c.l.b16 %v4575
      %v4648 = vunpack.c.h.b16 %v4575
      %v4649 = vunpack.c.l.b16 %v4576
      %v4650 = vunpack.c.h.b16 %v4576
      %v4651 = vunpack.c.l.b16 %v4577
      %v4652 = vunpack.c.h.b16 %v4577
      %v4653 = vunpack.c.l.b16 %v4578
      %v4654 = vunpack.c.h.b16 %v4578
      %v4655 = vunpack.c.l.b16 %v4579
      %v4656 = vunpack.c.h.b16 %v4579
      %v4657 = vunpack.c.l.b16 %v4580
      %v4658 = vunpack.c.h.b16 %v4580
      %v4659 = vunpack.c.l.b16 %v4581
      %v4660 = vunpack.c.h.b16 %v4581
      %v4661 = vunpack.c.l.b16 %v4582
      %v4662 = vunpack.c.h.b16 %v4582
      %v4663 = vunpack.c.l.b16 %v4583
      %v4664 = vunpack.c.h.b16 %v4583
      %v4665 = vunpack.c.l.b16 %v4584
      %v4666 = vunpack.c.h.b16 %v4584
      %v4667 = vunpack.c.l.b16 %v4585
      %v4668 = vunpack.c.h.b16 %v4585
      %v4669 = vunpack.c.l.b16 %v4586
      %v4670 = vunpack.c.h.b16 %v4586
      %v4671 = vunpack.c.l.b16 %v4587
      %v4672 = vunpack.c.h.b16 %v4587
      %v4673 = vunpack.c.l.b16 %v4588
      %v4674 = vunpack.c.h.b16 %v4588
      %v4675 = vunpack.c.l.b16 %v4589
      %v4676 = vunpack.c.h.b16 %v4589
      %v4677 = vunpack.c.l.b16 %v4590
      %v4678 = vunpack.c.h.b16 %v4590
      %v4679 = vunpack.c.l.b16 %v4591
      %v4680 = vunpack.c.h.b16 %v4591
      %v4681 = vunpack.c.l.b16 %v4592
      %v4682 = vunpack.c.h.b16 %v4592
      %v4683 = vunpack.c.l.b16 %v4593
      %v4684 = vunpack.c.h.b16 %v4593
      %v4685 = vunpack.c.l.b16 %v4594
      %v4686 = vunpack.c.h.b16 %v4594
      %v4687 = vunpack.c.l.b16 %v4595
      %v4688 = vunpack.c.h.b16 %v4595
      %v4689 = vunpack.c.l.b16 %v4596
      %v4690 = vunpack.c.h.b16 %v4596
      %v4691 = vunpack.c.l.b16 %v4597
      %v4692 = vunpack.c.h.b16 %v4597
      %v4693 = vunpack.c.l.b16 %v4598
      %v4694 = vunpack.c.h.b16 %v4598
      %v4695 = vpack.c.b16 %v4633, %v4631
      %v4696 = vpack.c.b16 %v4634, %v4632
      %v4697 = vpack.c.b16 %v4637, %v4635
      %v4698 = vpack.c.b16 %v4638, %v4636
      %v4699 = vpack.c.b16 %v4641, %v4639
      %v4700 = vpack.c.b16 %v4642, %v4640
      %v4701 = vpack.c.b16 %v4645, %v4643
      %v4702 = vpack.c.b16 %v4646, %v4644
      %v4703 = vpack.c.b16 %v4649, %v4647
      %v4704 = vpack.c.b16 %v4650, %v4648
      %v4705 = vpack.c.b16 %v4653, %v4651
      %v4706 = vpack.c.b16 %v4654, %v4652
      %v4707 = vpack.c.b16 %v4657, %v4655
      %v4708 = vpack.c.b16 %v4658, %v4656
      %v4709 = vpack.c.b16 %v4661, %v4659
      %v4710 = vpack.c.b16 %v4662, %v4660
      %v4711 = vpack.c.b16 %v4665, %v4663
      %v4712 = vpack.c.b16 %v4666, %v4664
      %v4713 = vpack.c.b16 %v4669, %v4667
      %v4714 = vpack.c.b16 %v4670, %v4668
      %v4715 = vpack.c.b16 %v4673, %v4671
      %v4716 = vpack.c.b16 %v4674, %v4672
      %v4717 = vpack.c.b16 %v4677, %v4675
      %v4718 = vpack.c.b16 %v4678, %v4676
      %v4719 = vpack.c.b16 %v4681, %v4679
      %v4720 = vpack.c.b16 %v4682, %v4680
      %v4721 = vpack.c.b16 %v4685, %v4683
      %v4722 = vpack.c.b16 %v4686, %v4684
      %v4723 = vpack.c.b16 %v4689, %v4687
      %v4724 = vpack.c.b16 %v4690, %v4688
      %v4725 = vpack.c.b16 %v4693, %v4691
      %v4726 = vpack.c.b16 %v4694, %v4692
      %4759 = vmatprep.subr.bf16.mxu0 %v4696
      %4760 = vmatpush1.bf16.msra.mxu0 %v4695
      %4761 = vmatprep.subr.bf16.mxu0 %v4698
      %4762 = vmatpush1.bf16.msra.mxu0 %v4697
      %4763 = vmatprep.subr.bf16.mxu0 %v4700
      %4764 = vmatpush1.bf16.msra.mxu0 %v4699
      %4765 = vmatprep.subr.bf16.mxu0 %v4702
      %4766 = vmatpush1.bf16.msra.mxu0 %v4701
      %4767 = vmatprep.subr.bf16.mxu0 %v4704
      %4768 = vmatpush1.bf16.msra.mxu0 %v4703
      %4769 = vmatprep.subr.bf16.mxu0 %v4706
      %4770 = vmatpush1.bf16.msra.mxu0 %v4705
      %4771 = vmatprep.subr.bf16.mxu0 %v4708
      %4772 = vmatpush1.bf16.msra.mxu0 %v4707
      %4773 = vmatprep.subr.bf16.mxu0 %v4710
      %4774 = vmatpush1.bf16.msra.mxu0 %v4709
      %4775 = vmatprep.subr.bf16.mxu0 %v4712
      %4776 = vmatpush1.bf16.msra.mxu0 %v4711
      %4777 = vmatprep.subr.bf16.mxu0 %v4714
      %4778 = vmatpush1.bf16.msra.mxu0 %v4713
      %4779 = vmatprep.subr.bf16.mxu0 %v4716
      %4780 = vmatpush1.bf16.msra.mxu0 %v4715
      %4781 = vmatprep.subr.bf16.mxu0 %v4718
      %4782 = vmatpush1.bf16.msra.mxu0 %v4717
      %4783 = vmatprep.subr.bf16.mxu0 %v4720
      %4784 = vmatpush1.bf16.msra.mxu0 %v4719
      %4785 = vmatprep.subr.bf16.mxu0 %v4722
      %4786 = vmatpush1.bf16.msra.mxu0 %v4721
      %4787 = vmatprep.subr.bf16.mxu0 %v4724
      %4788 = vmatpush1.bf16.msra.mxu0 %v4723
      %4789 = vmatprep.subr.bf16.mxu0 %v4726
      %4790 = vmatpush1.bf16.msra.mxu0 %v4725
      %4791 = vmatprep.mubr.bf16.mxu0 %v4536
      %4792 = vmatmul.mubr.bf16.gmra.mrb[0].mxu0 %v4535
      %v4793 = vpop.f32.mrb[0].mxu0
      %v4794 = vadd.f32 0.0, %v4793
      %v4795 = vpop.f32.mrb[0].mxu0
      %v4796 = vadd.f32 0.0, %v4795
      %v4797 = vpop.f32.mrb[0].mxu0
      %v4798 = vadd.f32 0.0, %v4797
      %v4799 = vpop.f32.mrb[0].mxu0
      %v4800 = vadd.f32 0.0, %v4799
      %4801 = vmatprep.mubr.bf16.mxu0 %v4538
      %4802 = vmatmul.mubr.bf16.gmra.mrb[0].mxu0 %v4537
      %v4803 = vpop.f32.mrb[0].mxu0
      %v4804 = vadd.f32 0.0, %v4803
      %v4805 = vpop.f32.mrb[0].mxu0
      %v4806 = vadd.f32 0.0, %v4805
      %v4807 = vpop.f32.mrb[0].mxu0
      %v4808 = vadd.f32 0.0, %v4807
      %v4809 = vpop.f32.mrb[0].mxu0
      %v4810 = vadd.f32 0.0, %v4809
      %4811 = vmatprep.mubr.bf16.mxu0 %v4540
      %4812 = vmatmul.mubr.bf16.gmra.mrb[0].mxu0 %v4539
      %v4813 = vpop.f32.mrb[0].mxu0
      %v4814 = vadd.f32 0.0, %v4813
      %v4815 = vpop.f32.mrb[0].mxu0
      %v4816 = vadd.f32 0.0, %v4815
      %v4817 = vpop.f32.mrb[0].mxu0
      %v4818 = vadd.f32 0.0, %v4817
      %v4819 = vpop.f32.mrb[0].mxu0
      %v4820 = vadd.f32 0.0, %v4819
      %4821 = vmatprep.mubr.bf16.mxu0 %v4542
      %4822 = vmatmul.mubr.bf16.gmra.mrb[0].mxu0 %v4541
      %v4823 = vpop.f32.mrb[0].mxu0
      %v4824 = vadd.f32 0.0, %v4823
      %v4825 = vpop.f32.mrb[0].mxu0
      %v4826 = vadd.f32 0.0, %v4825
      %v4827 = vpop.f32.mrb[0].mxu0
      %v4828 = vadd.f32 0.0, %v4827
      %v4829 = vpop.f32.mrb[0].mxu0
      %v4830 = vadd.f32 0.0, %v4829
      %4831 = vmatprep.mubr.bf16.mxu0 %v4544
      %4832 = vmatmul.mubr.bf16.gmra.mrb[0].mxu0 %v4543
      %v4833 = vpop.f32.mrb[0].mxu0
      %v4834 = vadd.f32 0.0, %v4833
      %v4835 = vpop.f32.mrb[0].mxu0
      %v4836 = vadd.f32 0.0, %v4835
      %v4837 = vpop.f32.mrb[0].mxu0
      %v4838 = vadd.f32 0.0, %v4837
      %v4839 = vpop.f32.mrb[0].mxu0
      %v4840 = vadd.f32 0.0, %v4839
      %4841 = vmatprep.mubr.bf16.mxu0 %v4546
      %4842 = vmatmul.mubr.bf16.gmra.mrb[0].mxu0 %v4545
      %v4843 = vpop.f32.mrb[0].mxu0
      %v4844 = vadd.f32 0.0, %v4843
      %v4845 = vpop.f32.mrb[0].mxu0
      %v4846 = vadd.f32 0.0, %v4845
      %v4847 = vpop.f32.mrb[0].mxu0
      %v4848 = vadd.f32 0.0, %v4847
      %v4849 = vpop.f32.mrb[0].mxu0
      %v4850 = vadd.f32 0.0, %v4849
      %4851 = vmatprep.mubr.bf16.mxu0 %v4548
      %4852 = vmatmul.mubr.bf16.gmra.mrb[0].mxu0 %v4547
      %v4853 = vpop.f32.mrb[0].mxu0
      %v4854 = vadd.f32 0.0, %v4853
      %v4855 = vpop.f32.mrb[0].mxu0
      %v4856 = vadd.f32 0.0, %v4855
      %v4857 = vpop.f32.mrb[0].mxu0
      %v4858 = vadd.f32 0.0, %v4857
      %v4859 = vpop.f32.mrb[0].mxu0
      %v4860 = vadd.f32 0.0, %v4859
      %4861 = vmatprep.mubr.bf16.mxu0 %v4550
      %4862 = vmatmul.mubr.bf16.gmra.mrb[0].mxu0 %v4549
      %v4863 = vpop.f32.mrb[0].mxu0
      %v4864 = vadd.f32 0.0, %v4863
      %v4865 = vpop.f32.mrb[0].mxu0
      %v4866 = vadd.f32 0.0, %v4865
      %v4867 = vpop.f32.mrb[0].mxu0
      %v4868 = vadd.f32 0.0, %v4867
      %v4869 = vpop.f32.mrb[0].mxu0
      %v4870 = vadd.f32 0.0, %v4869
      %4871 = vmatprep.mubr.bf16.mxu0 %v4552
      %4872 = vmatmul.mubr.bf16.gmra.mrb[0].mxu0 %v4551
      %v4873 = vpop.f32.mrb[0].mxu0
      %v4874 = vadd.f32 0.0, %v4873
      %v4875 = vpop.f32.mrb[0].mxu0
      %v4876 = vadd.f32 0.0, %v4875
      %v4877 = vpop.f32.mrb[0].mxu0
      %v4878 = vadd.f32 0.0, %v4877
      %v4879 = vpop.f32.mrb[0].mxu0
      %v4880 = vadd.f32 0.0, %v4879
      %4881 = vmatprep.mubr.bf16.mxu0 %v4554
      %4882 = vmatmul.mubr.bf16.gmra.mrb[0].mxu0 %v4553
      %v4883 = vpop.f32.mrb[0].mxu0
      %v4884 = vadd.f32 0.0, %v4883
      %v4885 = vpop.f32.mrb[0].mxu0
      %v4886 = vadd.f32 0.0, %v4885
      %v4887 = vpop.f32.mrb[0].mxu0
      %v4888 = vadd.f32 0.0, %v4887
      %v4889 = vpop.f32.mrb[0].mxu0
      %v4890 = vadd.f32 0.0, %v4889
      %4891 = vmatprep.mubr.bf16.mxu0 %v4556
      %4892 = vmatmul.mubr.bf16.gmra.mrb[0].mxu0 %v4555
      %v4893 = vpop.f32.mrb[0].mxu0
      %v4894 = vadd.f32 0.0, %v4893
      %v4895 = vpop.f32.mrb[0].mxu0
      %v4896 = vadd.f32 0.0, %v4895
      %v4897 = vpop.f32.mrb[0].mxu0
      %v4898 = vadd.f32 0.0, %v4897
      %v4899 = vpop.f32.mrb[0].mxu0
      %v4900 = vadd.f32 0.0, %v4899
      %4901 = vmatprep.mubr.bf16.mxu0 %v4558
      %4902 = vmatmul.mubr.bf16.gmra.mrb[0].mxu0 %v4557
      %v4903 = vpop.f32.mrb[0].mxu0
      %v4904 = vadd.f32 0.0, %v4903
      %v4905 = vpop.f32.mrb[0].mxu0
      %v4906 = vadd.f32 0.0, %v4905
      %v4907 = vpop.f32.mrb[0].mxu0
      %v4908 = vadd.f32 0.0, %v4907
      %v4909 = vpop.f32.mrb[0].mxu0
      %v4910 = vadd.f32 0.0, %v4909
      %4911 = vmatprep.mubr.bf16.mxu0 %v4560
      %4912 = vmatmul.mubr.bf16.gmra.mrb[0].mxu0 %v4559
      %v4913 = vpop.f32.mrb[0].mxu0
      %v4914 = vadd.f32 0.0, %v4913
      %v4915 = vpop.f32.mrb[0].mxu0
      %v4916 = vadd.f32 0.0, %v4915
      %v4917 = vpop.f32.mrb[0].mxu0
      %v4918 = vadd.f32 0.0, %v4917
      %v4919 = vpop.f32.mrb[0].mxu0
      %v4920 = vadd.f32 0.0, %v4919
      %4921 = vmatprep.mubr.bf16.mxu0 %v4562
      %4922 = vmatmul.mubr.bf16.gmra.mrb[0].mxu0 %v4561
      %v4923 = vpop.f32.mrb[0].mxu0
      %v4924 = vadd.f32 0.0, %v4923
      %v4925 = vpop.f32.mrb[0].mxu0
      %v4926 = vadd.f32 0.0, %v4925
      %v4927 = vpop.f32.mrb[0].mxu0
      %v4928 = vadd.f32 0.0, %v4927
      %v4929 = vpop.f32.mrb[0].mxu0
      %v4930 = vadd.f32 0.0, %v4929
      %4931 = vmatprep.mubr.bf16.mxu0 %v4564
      %4932 = vmatmul.mubr.bf16.gmra.mrb[0].mxu0 %v4563
      %v4933 = vpop.f32.mrb[0].mxu0
      %v4934 = vadd.f32 0.0, %v4933
      %v4935 = vpop.f32.mrb[0].mxu0
      %v4936 = vadd.f32 0.0, %v4935
      %v4937 = vpop.f32.mrb[0].mxu0
      %v4938 = vadd.f32 0.0, %v4937
      %v4939 = vpop.f32.mrb[0].mxu0
      %v4940 = vadd.f32 0.0, %v4939
      %4941 = vmatprep.mubr.bf16.mxu0 %v4566
      %4942 = vmatmul.mubr.bf16.gmra.mrb[0].mxu0 %v4565
      %v4943 = vpop.f32.mrb[0].mxu0
      %v4944 = vadd.f32 0.0, %v4943
      %v4945 = vpop.f32.mrb[0].mxu0
      %v4946 = vadd.f32 0.0, %v4945
      %v4947 = vpop.f32.mrb[0].mxu0
      %v4948 = vadd.f32 0.0, %v4947
      %v4949 = vpop.f32.mrb[0].mxu0
      %v4950 = vadd.f32 0.0, %v4949
      %4951 = vdwg.mxu0
      %v4952 = vadd.f32 %v572, %v4794
      %v4953 = vadd.f32 %v573, %v4796
      %v4954 = vadd.f32 %v574, %v4798
      %v4955 = vadd.f32 %v575, %v4800
      %v4956 = vadd.f32 %v576, %v4804
      %v4957 = vadd.f32 %v577, %v4806
      %v4958 = vadd.f32 %v578, %v4808
      %v4959 = vadd.f32 %v579, %v4810
      %v4960 = vadd.f32 %v580, %v4814
      %v4961 = vadd.f32 %v581, %v4816
      %v4962 = vadd.f32 %v582, %v4818
      %v4963 = vadd.f32 %v583, %v4820
      %v4964 = vadd.f32 %v584, %v4824
      %v4965 = vadd.f32 %v585, %v4826
      %v4966 = vadd.f32 %v586, %v4828
      %v4967 = vadd.f32 %v587, %v4830
      %v4968 = vadd.f32 %v588, %v4834
      %v4969 = vadd.f32 %v589, %v4836
      %v4970 = vadd.f32 %v590, %v4838
      %v4971 = vadd.f32 %v591, %v4840
      %v4972 = vadd.f32 %v592, %v4844
      %v4973 = vadd.f32 %v593, %v4846
      %v4974 = vadd.f32 %v594, %v4848
      %v4975 = vadd.f32 %v595, %v4850
      %v4976 = vadd.f32 %v596, %v4854
      %v4977 = vadd.f32 %v597, %v4856
      %v4978 = vadd.f32 %v598, %v4858
      %v4979 = vadd.f32 %v599, %v4860
      %v4980 = vadd.f32 %v600, %v4864
      %v4981 = vadd.f32 %v601, %v4866
      %v4982 = vadd.f32 %v602, %v4868
      %v4983 = vadd.f32 %v603, %v4870
      %v4984 = vadd.f32 %v604, %v4874
      %v4985 = vadd.f32 %v605, %v4876
      %v4986 = vadd.f32 %v606, %v4878
      %v4987 = vadd.f32 %v607, %v4880
      %v4988 = vadd.f32 %v608, %v4884
      %v4989 = vadd.f32 %v609, %v4886
      %v4990 = vadd.f32 %v610, %v4888
      %v4991 = vadd.f32 %v611, %v4890
      %v4992 = vadd.f32 %v612, %v4894
      %v4993 = vadd.f32 %v613, %v4896
      %v4994 = vadd.f32 %v614, %v4898
      %v4995 = vadd.f32 %v615, %v4900
      %v4996 = vadd.f32 %v616, %v4904
      %v4997 = vadd.f32 %v617, %v4906
      %v4998 = vadd.f32 %v618, %v4908
      %v4999 = vadd.f32 %v619, %v4910
      %v5000 = vadd.f32 %v620, %v4914
      %v5001 = vadd.f32 %v621, %v4916
      %v5002 = vadd.f32 %v622, %v4918
      %v5003 = vadd.f32 %v623, %v4920
      %v5004 = vadd.f32 %v624, %v4924
      %v5005 = vadd.f32 %v625, %v4926
      %v5006 = vadd.f32 %v626, %v4928
      %v5007 = vadd.f32 %v627, %v4930
      %v5008 = vadd.f32 %v628, %v4934
      %v5009 = vadd.f32 %v629, %v4936
      %v5010 = vadd.f32 %v630, %v4938
      %v5011 = vadd.f32 %v631, %v4940
      %v5012 = vadd.f32 %v632, %v4944
      %v5013 = vadd.f32 %v633, %v4946
      %v5014 = vadd.f32 %v634, %v4948
      %v5015 = vadd.f32 %v635, %v4950
      %v5016 = vld [vmem:[%s418] sm:$0x3]
      %v5017 = vmul.f32 %v4952, %v4952
      %v5018 = vmul.f32 %v4953, %v4953
      %v5019 = vmul.f32 %v4954, %v4954
      %v5020 = vmul.f32 %v4955, %v4955
      %v5021 = vmul.f32 %v4956, %v4956
      %v5022 = vmul.f32 %v4957, %v4957
      %v5023 = vmul.f32 %v4958, %v4958
      %v5024 = vmul.f32 %v4959, %v4959
      %v5025 = vmul.f32 %v4960, %v4960
      %v5026 = vmul.f32 %v4961, %v4961
      %v5027 = vmul.f32 %v4962, %v4962
      %v5028 = vmul.f32 %v4963, %v4963
      %v5029 = vmul.f32 %v4964, %v4964
      %v5030 = vmul.f32 %v4965, %v4965
      %v5031 = vmul.f32 %v4966, %v4966
      %v5032 = vmul.f32 %v4967, %v4967
      %v5033 = vmul.f32 %v4968, %v4968
      %v5034 = vmul.f32 %v4969, %v4969
      %v5035 = vmul.f32 %v4970, %v4970
      %v5036 = vmul.f32 %v4971, %v4971
      %v5037 = vmul.f32 %v4972, %v4972
      %v5038 = vmul.f32 %v4973, %v4973
      %v5039 = vmul.f32 %v4974, %v4974
      %v5040 = vmul.f32 %v4975, %v4975
      %v5041 = vmul.f32 %v4976, %v4976
      %v5042 = vmul.f32 %v4977, %v4977
      %v5043 = vmul.f32 %v4978, %v4978
      %v5044 = vmul.f32 %v4979, %v4979
      %v5045 = vmul.f32 %v4980, %v4980
      %v5046 = vmul.f32 %v4981, %v4981
      %v5047 = vmul.f32 %v4982, %v4982
      %v5048 = vmul.f32 %v4983, %v4983
      %v5049 = vmul.f32 %v4984, %v4984
      %v5050 = vmul.f32 %v4985, %v4985
      %v5051 = vmul.f32 %v4986, %v4986
      %v5052 = vmul.f32 %v4987, %v4987
      %v5053 = vmul.f32 %v4988, %v4988
      %v5054 = vmul.f32 %v4989, %v4989
      %v5055 = vmul.f32 %v4990, %v4990
      %v5056 = vmul.f32 %v4991, %v4991
      %v5057 = vmul.f32 %v4992, %v4992
      %v5058 = vmul.f32 %v4993, %v4993
      %v5059 = vmul.f32 %v4994, %v4994
      %v5060 = vmul.f32 %v4995, %v4995
      %v5061 = vmul.f32 %v4996, %v4996
      %v5062 = vmul.f32 %v4997, %v4997
      %v5063 = vmul.f32 %v4998, %v4998
      %v5064 = vmul.f32 %v4999, %v4999
      %v5065 = vmul.f32 %v5000, %v5000
      %v5066 = vmul.f32 %v5001, %v5001
      %v5067 = vmul.f32 %v5002, %v5002
      %v5068 = vmul.f32 %v5003, %v5003
      %v5069 = vmul.f32 %v5004, %v5004
      %v5070 = vmul.f32 %v5005, %v5005
      %v5071 = vmul.f32 %v5006, %v5006
      %v5072 = vmul.f32 %v5007, %v5007
      %v5073 = vmul.f32 %v5008, %v5008
      %v5074 = vmul.f32 %v5009, %v5009
      %v5075 = vmul.f32 %v5010, %v5010
      %v5076 = vmul.f32 %v5011, %v5011
      %v5077 = vmul.f32 %v5012, %v5012
      %v5078 = vmul.f32 %v5013, %v5013
      %v5079 = vmul.f32 %v5014, %v5014
      %v5080 = vmul.f32 %v5015, %v5015
      %v5081 = vadd.f32 %v5017, %v5018
      %5082 = vadd.xlane.f32.xlu0 %v5081
      %v5083 = vpop.xlane.xlu0 %5082
      %v5084 = vadd.f32 %v5019, %v5020
      %5085 = vadd.xlane.f32.xlu0 %v5084
      %v5086 = vpop.xlane.xlu0 %5085
      %v5087 = vadd.f32 %v5021, %v5022
      %5088 = vadd.xlane.f32.xlu0 %v5087
      %v5089 = vpop.xlane.xlu0 %5088
      %v5090 = vadd.f32 %v5023, %v5024
      %5091 = vadd.xlane.f32.xlu0 %v5090
      %v5092 = vpop.xlane.xlu0 %5091
      %v5093 = vadd.f32 %v5025, %v5026
      %5094 = vadd.xlane.f32.xlu0 %v5093
      %v5095 = vpop.xlane.xlu0 %5094
      %v5096 = vadd.f32 %v5027, %v5028
      %5097 = vadd.xlane.f32.xlu0 %v5096
      %v5098 = vpop.xlane.xlu0 %5097
      %v5099 = vadd.f32 %v5029, %v5030
      %5100 = vadd.xlane.f32.xlu0 %v5099
      %v5101 = vpop.xlane.xlu0 %5100
      %v5102 = vadd.f32 %v5031, %v5032
      %5103 = vadd.xlane.f32.xlu0 %v5102
      %v5104 = vpop.xlane.xlu0 %5103
      %v5105 = vadd.f32 %v5033, %v5034
      %5106 = vadd.xlane.f32.xlu0 %v5105
      %v5107 = vpop.xlane.xlu0 %5106
      %v5108 = vadd.f32 %v5035, %v5036
      %5109 = vadd.xlane.f32.xlu0 %v5108
      %v5110 = vpop.xlane.xlu0 %5109
      %v5111 = vadd.f32 %v5037, %v5038
      %5112 = vadd.xlane.f32.xlu0 %v5111
      %v5113 = vpop.xlane.xlu0 %5112
      %v5114 = vadd.f32 %v5039, %v5040
      %5115 = vadd.xlane.f32.xlu0 %v5114
      %v5116 = vpop.xlane.xlu0 %5115
      %v5117 = vadd.f32 %v5041, %v5042
      %5118 = vadd.xlane.f32.xlu0 %v5117
      %v5119 = vpop.xlane.xlu0 %5118
      %v5120 = vadd.f32 %v5043, %v5044
      %5121 = vadd.xlane.f32.xlu0 %v5120
      %v5122 = vpop.xlane.xlu0 %5121
      %v5123 = vadd.f32 %v5045, %v5046
      %5124 = vadd.xlane.f32.xlu0 %v5123
      %v5125 = vpop.xlane.xlu0 %5124
      %v5126 = vadd.f32 %v5047, %v5048
      %5127 = vadd.xlane.f32.xlu0 %v5126
      %v5128 = vpop.xlane.xlu0 %5127
      %v5129 = vadd.f32 %v5049, %v5050
      %5130 = vadd.xlane.f32.xlu0 %v5129
      %v5131 = vpop.xlane.xlu0 %5130
      %v5132 = vadd.f32 %v5051, %v5052
      %5133 = vadd.xlane.f32.xlu0 %v5132
      %v5134 = vpop.xlane.xlu0 %5133
      %v5135 = vadd.f32 %v5053, %v5054
      %5136 = vadd.xlane.f32.xlu0 %v5135
      %v5137 = vpop.xlane.xlu0 %5136
      %v5138 = vadd.f32 %v5055, %v5056
      %5139 = vadd.xlane.f32.xlu0 %v5138
      %v5140 = vpop.xlane.xlu0 %5139
      %v5141 = vadd.f32 %v5057, %v5058
      %5142 = vadd.xlane.f32.xlu0 %v5141
      %v5143 = vpop.xlane.xlu0 %5142
      %v5144 = vadd.f32 %v5059, %v5060
      %5145 = vadd.xlane.f32.xlu0 %v5144
      %v5146 = vpop.xlane.xlu0 %5145
      %v5147 = vadd.f32 %v5061, %v5062
      %5148 = vadd.xlane.f32.xlu0 %v5147
      %v5149 = vpop.xlane.xlu0 %5148
      %v5150 = vadd.f32 %v5063, %v5064
      %5151 = vadd.xlane.f32.xlu0 %v5150
      %v5152 = vpop.xlane.xlu0 %5151
      %v5153 = vadd.f32 %v5065, %v5066
      %5154 = vadd.xlane.f32.xlu0 %v5153
      %v5155 = vpop.xlane.xlu0 %5154
      %v5156 = vadd.f32 %v5067, %v5068
      %5157 = vadd.xlane.f32.xlu0 %v5156
      %v5158 = vpop.xlane.xlu0 %5157
      %v5159 = vadd.f32 %v5069, %v5070
      %5160 = vadd.xlane.f32.xlu0 %v5159
      %v5161 = vpop.xlane.xlu0 %5160
      %v5162 = vadd.f32 %v5071, %v5072
      %5163 = vadd.xlane.f32.xlu0 %v5162
      %v5164 = vpop.xlane.xlu0 %5163
      %v5165 = vadd.f32 %v5073, %v5074
      %5166 = vadd.xlane.f32.xlu0 %v5165
      %v5167 = vpop.xlane.xlu0 %5166
      %v5168 = vadd.f32 %v5075, %v5076
      %5169 = vadd.xlane.f32.xlu0 %v5168
      %v5170 = vpop.xlane.xlu0 %5169
      %v5171 = vadd.f32 %v5077, %v5078
      %5172 = vadd.xlane.f32.xlu0 %v5171
      %v5173 = vpop.xlane.xlu0 %5172
      %v5174 = vadd.f32 %v5079, %v5080
      %5175 = vadd.xlane.f32.xlu0 %v5174
      %v5176 = vpop.xlane.xlu0 %5175
      %v5177 = vmul.f32 %v5083, %v861
      %v5178 = vmul.f32 %v5086, %v861
      %v5179 = vmul.f32 %v5089, %v861
      %v5180 = vmul.f32 %v5092, %v861
      %v5181 = vmul.f32 %v5095, %v861
      %v5182 = vmul.f32 %v5098, %v861
      %v5183 = vmul.f32 %v5101, %v861
      %v5184 = vmul.f32 %v5104, %v861
      %v5185 = vmul.f32 %v5107, %v861
      %v5186 = vmul.f32 %v5110, %v861
      %v5187 = vmul.f32 %v5113, %v861
      %v5188 = vmul.f32 %v5116, %v861
      %v5189 = vmul.f32 %v5119, %v861
      %v5190 = vmul.f32 %v5122, %v861
      %v5191 = vmul.f32 %v5125, %v861
      %v5192 = vmul.f32 %v5128, %v861
      %v5193 = vmul.f32 %v5131, %v861
      %v5194 = vmul.f32 %v5134, %v861
      %v5195 = vmul.f32 %v5137, %v861
      %v5196 = vmul.f32 %v5140, %v861
      %v5197 = vmul.f32 %v5143, %v861
      %v5198 = vmul.f32 %v5146, %v861
      %v5199 = vmul.f32 %v5149, %v861
      %v5200 = vmul.f32 %v5152, %v861
      %v5201 = vmul.f32 %v5155, %v861
      %v5202 = vmul.f32 %v5158, %v861
      %v5203 = vmul.f32 %v5161, %v861
      %v5204 = vmul.f32 %v5164, %v861
      %v5205 = vmul.f32 %v5167, %v861
      %v5206 = vmul.f32 %v5170, %v861
      %v5207 = vmul.f32 %v5173, %v861
      %v5208 = vmul.f32 %v5176, %v861
      %v5209 = vadd.f32 %v5177, 1e-06
      %v5210 = vadd.f32 %v5178, 1e-06
      %v5211 = vadd.f32 %v5179, 1e-06
      %v5212 = vadd.f32 %v5180, 1e-06
      %v5213 = vadd.f32 %v5181, 1e-06
      %v5214 = vadd.f32 %v5182, 1e-06
      %v5215 = vadd.f32 %v5183, 1e-06
      %v5216 = vadd.f32 %v5184, 1e-06
      %v5217 = vadd.f32 %v5185, 1e-06
      %v5218 = vadd.f32 %v5186, 1e-06
      %v5219 = vadd.f32 %v5187, 1e-06
      %v5220 = vadd.f32 %v5188, 1e-06
      %v5221 = vadd.f32 %v5189, 1e-06
      %v5222 = vadd.f32 %v5190, 1e-06
      %v5223 = vadd.f32 %v5191, 1e-06
      %v5224 = vadd.f32 %v5192, 1e-06
      %v5225 = vadd.f32 %v5193, 1e-06
      %v5226 = vadd.f32 %v5194, 1e-06
      %v5227 = vadd.f32 %v5195, 1e-06
      %v5228 = vadd.f32 %v5196, 1e-06
      %v5229 = vadd.f32 %v5197, 1e-06
      %v5230 = vadd.f32 %v5198, 1e-06
      %v5231 = vadd.f32 %v5199, 1e-06
      %v5232 = vadd.f32 %v5200, 1e-06
      %v5233 = vadd.f32 %v5201, 1e-06
      %v5234 = vadd.f32 %v5202, 1e-06
      %v5235 = vadd.f32 %v5203, 1e-06
      %v5236 = vadd.f32 %v5204, 1e-06
      %v5237 = vadd.f32 %v5205, 1e-06
      %v5238 = vadd.f32 %v5206, 1e-06
      %v5239 = vadd.f32 %v5207, 1e-06
      %v5240 = vadd.f32 %v5208, 1e-06
      %v5241 = vrsqrt.pop %v5209
      %v5242 = vrsqrt.pop %v5210
      %v5243 = vrsqrt.pop %v5211
      %v5244 = vrsqrt.pop %v5212
      %v5245 = vrsqrt.pop %v5213
      %v5246 = vrsqrt.pop %v5214
      %v5247 = vrsqrt.pop %v5215
      %v5248 = vrsqrt.pop %v5216
      %v5249 = vrsqrt.pop %v5217
      %v5250 = vrsqrt.pop %v5218
      %v5251 = vrsqrt.pop %v5219
      %v5252 = vrsqrt.pop %v5220
      %v5253 = vrsqrt.pop %v5221
      %v5254 = vrsqrt.pop %v5222
      %v5255 = vrsqrt.pop %v5223
      %v5256 = vrsqrt.pop %v5224
      %v5257 = vrsqrt.pop %v5225
      %v5258 = vrsqrt.pop %v5226
      %v5259 = vrsqrt.pop %v5227
      %v5260 = vrsqrt.pop %v5228
      %v5261 = vrsqrt.pop %v5229
      %v5262 = vrsqrt.pop %v5230
      %v5263 = vrsqrt.pop %v5231
      %v5264 = vrsqrt.pop %v5232
      %v5265 = vrsqrt.pop %v5233
      %v5266 = vrsqrt.pop %v5234
      %v5267 = vrsqrt.pop %v5235
      %v5268 = vrsqrt.pop %v5236
      %v5269 = vrsqrt.pop %v5237
      %v5270 = vrsqrt.pop %v5238
      %v5271 = vrsqrt.pop %v5239
      %v5272 = vrsqrt.pop %v5240
      %v5273 = vmul.f32 %v4952, %v5241
      %v5274 = vmul.f32 %v4953, %v5241
      %v5275 = vmul.f32 %v4954, %v5242
      %v5276 = vmul.f32 %v4955, %v5242
      %v5277 = vmul.f32 %v4956, %v5243
      %v5278 = vmul.f32 %v4957, %v5243
      %v5279 = vmul.f32 %v4958, %v5244
      %v5280 = vmul.f32 %v4959, %v5244
      %v5281 = vmul.f32 %v4960, %v5245
      %v5282 = vmul.f32 %v4961, %v5245
      %v5283 = vmul.f32 %v4962, %v5246
      %v5284 = vmul.f32 %v4963, %v5246
      %v5285 = vmul.f32 %v4964, %v5247
      %v5286 = vmul.f32 %v4965, %v5247
      %v5287 = vmul.f32 %v4966, %v5248
      %v5288 = vmul.f32 %v4967, %v5248
      %v5289 = vmul.f32 %v4968, %v5249
      %v5290 = vmul.f32 %v4969, %v5249
      %v5291 = vmul.f32 %v4970, %v5250
      %v5292 = vmul.f32 %v4971, %v5250
      %v5293 = vmul.f32 %v4972, %v5251
      %v5294 = vmul.f32 %v4973, %v5251
      %v5295 = vmul.f32 %v4974, %v5252
      %v5296 = vmul.f32 %v4975, %v5252
      %v5297 = vmul.f32 %v4976, %v5253
      %v5298 = vmul.f32 %v4977, %v5253
      %v5299 = vmul.f32 %v4978, %v5254
      %v5300 = vmul.f32 %v4979, %v5254
      %v5301 = vmul.f32 %v4980, %v5255
      %v5302 = vmul.f32 %v4981, %v5255
      %v5303 = vmul.f32 %v4982, %v5256
      %v5304 = vmul.f32 %v4983, %v5256
      %v5305 = vmul.f32 %v4984, %v5257
      %v5306 = vmul.f32 %v4985, %v5257
      %v5307 = vmul.f32 %v4986, %v5258
      %v5308 = vmul.f32 %v4987, %v5258
      %v5309 = vmul.f32 %v4988, %v5259
      %v5310 = vmul.f32 %v4989, %v5259
      %v5311 = vmul.f32 %v4990, %v5260
      %v5312 = vmul.f32 %v4991, %v5260
      %v5313 = vmul.f32 %v4992, %v5261
      %v5314 = vmul.f32 %v4993, %v5261
      %v5315 = vmul.f32 %v4994, %v5262
      %v5316 = vmul.f32 %v4995, %v5262
      %v5317 = vmul.f32 %v4996, %v5263
      %v5318 = vmul.f32 %v4997, %v5263
      %v5319 = vmul.f32 %v4998, %v5264
      %v5320 = vmul.f32 %v4999, %v5264
      %v5321 = vmul.f32 %v5000, %v5265
      %v5322 = vmul.f32 %v5001, %v5265
      %v5323 = vmul.f32 %v5002, %v5266
      %v5324 = vmul.f32 %v5003, %v5266
      %v5325 = vmul.f32 %v5004, %v5267
      %v5326 = vmul.f32 %v5005, %v5267
      %v5327 = vmul.f32 %v5006, %v5268
      %v5328 = vmul.f32 %v5007, %v5268
      %v5329 = vmul.f32 %v5008, %v5269
      %v5330 = vmul.f32 %v5009, %v5269
      %v5331 = vmul.f32 %v5010, %v5270
      %v5332 = vmul.f32 %v5011, %v5270
      %v5333 = vmul.f32 %v5012, %v5271
      %v5334 = vmul.f32 %v5013, %v5271
      %v5335 = vmul.f32 %v5014, %v5272
      %v5336 = vmul.f32 %v5015, %v5272
      %v5338 = vlaneseq
      %v5339 = vshrl.u32 %v5338, 7
      %v5340 = vsub.s32 0, %v5339
      %v5341 = vrot.slane %v5016, %v5340
      %v5342 = vlaneseq
      %v5343 = vshrl.u32 %v5342, 7
      %v5344 = vsub.s32 1, %v5343
      %v5345 = vrot.slane %v5016, %v5344
      %v5348 = vmul.f32 %v5273, %v5341
      %v5349 = vmul.f32 %v5274, %v5345
      %v5350 = vmul.f32 %v5275, %v5341
      %v5351 = vmul.f32 %v5276, %v5345
      %v5352 = vmul.f32 %v5277, %v5341
      %v5353 = vmul.f32 %v5278, %v5345
      %v5354 = vmul.f32 %v5279, %v5341
      %v5355 = vmul.f32 %v5280, %v5345
      %v5356 = vmul.f32 %v5281, %v5341
      %v5357 = vmul.f32 %v5282, %v5345
      %v5358 = vmul.f32 %v5283, %v5341
      %v5359 = vmul.f32 %v5284, %v5345
      %v5360 = vmul.f32 %v5285, %v5341
      %v5361 = vmul.f32 %v5286, %v5345
      %v5362 = vmul.f32 %v5287, %v5341
      %v5363 = vmul.f32 %v5288, %v5345
      %v5364 = vmul.f32 %v5289, %v5341
      %v5365 = vmul.f32 %v5290, %v5345
      %v5366 = vmul.f32 %v5291, %v5341
      %v5367 = vmul.f32 %v5292, %v5345
      %v5368 = vmul.f32 %v5293, %v5341
      %v5369 = vmul.f32 %v5294, %v5345
      %v5370 = vmul.f32 %v5295, %v5341
      %v5371 = vmul.f32 %v5296, %v5345
      %v5372 = vmul.f32 %v5297, %v5341
      %v5373 = vmul.f32 %v5298, %v5345
      %v5374 = vmul.f32 %v5299, %v5341
      %v5375 = vmul.f32 %v5300, %v5345
      %v5376 = vmul.f32 %v5301, %v5341
      %v5377 = vmul.f32 %v5302, %v5345
      %v5378 = vmul.f32 %v5303, %v5341
      %v5379 = vmul.f32 %v5304, %v5345
      %v5380 = vmul.f32 %v5305, %v5341
      %v5381 = vmul.f32 %v5306, %v5345
      %v5382 = vmul.f32 %v5307, %v5341
      %v5383 = vmul.f32 %v5308, %v5345
      %v5384 = vmul.f32 %v5309, %v5341
      %v5385 = vmul.f32 %v5310, %v5345
      %v5386 = vmul.f32 %v5311, %v5341
      %v5387 = vmul.f32 %v5312, %v5345
      %v5388 = vmul.f32 %v5313, %v5341
      %v5389 = vmul.f32 %v5314, %v5345
      %v5390 = vmul.f32 %v5315, %v5341
      %v5391 = vmul.f32 %v5316, %v5345
      %v5392 = vmul.f32 %v5317, %v5341
      %v5393 = vmul.f32 %v5318, %v5345
      %v5394 = vmul.f32 %v5319, %v5341
      %v5395 = vmul.f32 %v5320, %v5345
      %v5396 = vmul.f32 %v5321, %v5341
      %v5397 = vmul.f32 %v5322, %v5345
      %v5398 = vmul.f32 %v5323, %v5341
      %v5399 = vmul.f32 %v5324, %v5345
      %v5400 = vmul.f32 %v5325, %v5341
      %v5401 = vmul.f32 %v5326, %v5345
      %v5402 = vmul.f32 %v5327, %v5341
      %v5403 = vmul.f32 %v5328, %v5345
      %v5404 = vmul.f32 %v5329, %v5341
      %v5405 = vmul.f32 %v5330, %v5345
      %v5406 = vmul.f32 %v5331, %v5341
      %v5407 = vmul.f32 %v5332, %v5345
      %v5408 = vmul.f32 %v5333, %v5341
      %v5409 = vmul.f32 %v5334, %v5345
      %v5410 = vmul.f32 %v5335, %v5341
      %v5411 = vmul.f32 %v5336, %v5345
      %v5412 = vpack.c.bf16 %v5350, %v5348
      %v5413 = vpack.c.bf16 %v5351, %v5349
      %v5414 = vpack.c.bf16 %v5354, %v5352
      %v5415 = vpack.c.bf16 %v5355, %v5353
      %v5416 = vpack.c.bf16 %v5358, %v5356
      %v5417 = vpack.c.bf16 %v5359, %v5357
      %v5418 = vpack.c.bf16 %v5362, %v5360
      %v5419 = vpack.c.bf16 %v5363, %v5361
      %v5420 = vpack.c.bf16 %v5366, %v5364
      %v5421 = vpack.c.bf16 %v5367, %v5365
      %v5422 = vpack.c.bf16 %v5370, %v5368
      %v5423 = vpack.c.bf16 %v5371, %v5369
      %v5424 = vpack.c.bf16 %v5374, %v5372
      %v5425 = vpack.c.bf16 %v5375, %v5373
      %v5426 = vpack.c.bf16 %v5378, %v5376
      %v5427 = vpack.c.bf16 %v5379, %v5377
      %v5428 = vpack.c.bf16 %v5382, %v5380
      %v5429 = vpack.c.bf16 %v5383, %v5381
      %v5430 = vpack.c.bf16 %v5386, %v5384
      %v5431 = vpack.c.bf16 %v5387, %v5385
      %v5432 = vpack.c.bf16 %v5390, %v5388
      %v5433 = vpack.c.bf16 %v5391, %v5389
      %v5434 = vpack.c.bf16 %v5394, %v5392
      %v5435 = vpack.c.bf16 %v5395, %v5393
      %v5436 = vpack.c.bf16 %v5398, %v5396
      %v5437 = vpack.c.bf16 %v5399, %v5397
      %v5438 = vpack.c.bf16 %v5402, %v5400
      %v5439 = vpack.c.bf16 %v5403, %v5401
      %v5440 = vpack.c.bf16 %v5406, %v5404
      %v5441 = vpack.c.bf16 %v5407, %v5405
      %v5442 = vpack.c.bf16 %v5410, %v5408
      %v5443 = vpack.c.bf16 %v5411, %v5409
      %v5444 = vld [vmem:[%s433] sm:$0xff]
      %v5445 = vld [vmem:[%s433 + $0x8] sm:$0xff]
      %v5446 = vld [vmem:[%s433 + $0x10] sm:$0xff]
      %v5447 = vld [vmem:[%s433 + $0x18] sm:$0xff]
      %v5448 = vld [vmem:[%s433 + $0x20] sm:$0xff]
      %v5449 = vld [vmem:[%s433 + $0x28] sm:$0xff]
      %v5450 = vld [vmem:[%s433 + $0x30] sm:$0xff]
      %v5451 = vld [vmem:[%s433 + $0x38] sm:$0xff]
      %v5452 = vld [vmem:[%s433 + $0x40] sm:$0xff]
      %v5453 = vld [vmem:[%s433 + $0x48] sm:$0xff]
      %v5454 = vld [vmem:[%s433 + $0x50] sm:$0xff]
      %v5455 = vld [vmem:[%s433 + $0x58] sm:$0xff]
      %v5456 = vld [vmem:[%s433 + $0x60] sm:$0xff]
      %v5457 = vld [vmem:[%s433 + $0x68] sm:$0xff]
      %v5458 = vld [vmem:[%s433 + $0x70] sm:$0xff]
      %v5459 = vld [vmem:[%s433 + $0x78] sm:$0xff]
      %v5460 = vld [vmem:[%s433 + $0x80] sm:$0xff]
      %v5461 = vld [vmem:[%s433 + $0x88] sm:$0xff]
      %v5462 = vld [vmem:[%s433 + $0x90] sm:$0xff]
      %v5463 = vld [vmem:[%s433 + $0x98] sm:$0xff]
      %v5464 = vld [vmem:[%s433 + $0xa0] sm:$0xff]
      %v5465 = vld [vmem:[%s433 + $0xa8] sm:$0xff]
      %v5466 = vld [vmem:[%s433 + $0xb0] sm:$0xff]
      %v5467 = vld [vmem:[%s433 + $0xb8] sm:$0xff]
      %v5468 = vld [vmem:[%s433 + $0xc0] sm:$0xff]
      %v5469 = vld [vmem:[%s433 + $0xc8] sm:$0xff]
      %v5470 = vld [vmem:[%s433 + $0xd0] sm:$0xff]
      %v5471 = vld [vmem:[%s433 + $0xd8] sm:$0xff]
      %v5472 = vld [vmem:[%s433 + $0xe0] sm:$0xff]
      %v5473 = vld [vmem:[%s433 + $0xe8] sm:$0xff]
      %v5474 = vld [vmem:[%s433 + $0xf0] sm:$0xff]
      %v5475 = vld [vmem:[%s433 + $0xf8] sm:$0xff]
      %v5476 = vld [vmem:[%s433 + $0x100] sm:$0xff]
      %v5477 = vld [vmem:[%s433 + $0x108] sm:$0xff]
      %v5478 = vld [vmem:[%s433 + $0x110] sm:$0xff]
      %v5479 = vld [vmem:[%s433 + $0x118] sm:$0xff]
      %v5480 = vld [vmem:[%s433 + $0x120] sm:$0xff]
      %v5481 = vld [vmem:[%s433 + $0x128] sm:$0xff]
      %v5482 = vld [vmem:[%s433 + $0x130] sm:$0xff]
      %v5483 = vld [vmem:[%s433 + $0x138] sm:$0xff]
      %v5484 = vld [vmem:[%s433 + $0x140] sm:$0xff]
      %v5485 = vld [vmem:[%s433 + $0x148] sm:$0xff]
      %v5486 = vld [vmem:[%s433 + $0x150] sm:$0xff]
      %v5487 = vld [vmem:[%s433 + $0x158] sm:$0xff]
      %v5488 = vld [vmem:[%s433 + $0x160] sm:$0xff]
      %v5489 = vld [vmem:[%s433 + $0x168] sm:$0xff]
      %v5490 = vld [vmem:[%s433 + $0x170] sm:$0xff]
      %v5491 = vld [vmem:[%s433 + $0x178] sm:$0xff]
      %v5492 = vld [vmem:[%s433 + $0x180] sm:$0xff]
      %v5493 = vld [vmem:[%s433 + $0x188] sm:$0xff]
      %v5494 = vld [vmem:[%s433 + $0x190] sm:$0xff]
      %v5495 = vld [vmem:[%s433 + $0x198] sm:$0xff]
      %v5496 = vld [vmem:[%s433 + $0x1a0] sm:$0xff]
      %v5497 = vld [vmem:[%s433 + $0x1a8] sm:$0xff]
      %v5498 = vld [vmem:[%s433 + $0x1b0] sm:$0xff]
      %v5499 = vld [vmem:[%s433 + $0x1b8] sm:$0xff]
      %v5500 = vld [vmem:[%s433 + $0x1c0] sm:$0xff]
      %v5501 = vld [vmem:[%s433 + $0x1c8] sm:$0xff]
      %v5502 = vld [vmem:[%s433 + $0x1d0] sm:$0xff]
      %v5503 = vld [vmem:[%s433 + $0x1d8] sm:$0xff]
      %v5504 = vld [vmem:[%s433 + $0x1e0] sm:$0xff]
      %v5505 = vld [vmem:[%s433 + $0x1e8] sm:$0xff]
      %v5506 = vld [vmem:[%s433 + $0x1f0] sm:$0xff]
      %v5507 = vld [vmem:[%s433 + $0x1f8] sm:$0xff]
      %v5508 = vld [vmem:[%s433 + $0x200] sm:$0xff]
      %v5509 = vld [vmem:[%s433 + $0x208] sm:$0xff]
      %v5510 = vld [vmem:[%s433 + $0x210] sm:$0xff]
      %v5511 = vld [vmem:[%s433 + $0x218] sm:$0xff]
      %v5512 = vld [vmem:[%s433 + $0x220] sm:$0xff]
      %v5513 = vld [vmem:[%s433 + $0x228] sm:$0xff]
      %v5514 = vld [vmem:[%s433 + $0x230] sm:$0xff]
      %v5515 = vld [vmem:[%s433 + $0x238] sm:$0xff]
      %v5516 = vld [vmem:[%s433 + $0x240] sm:$0xff]
      %v5517 = vld [vmem:[%s433 + $0x248] sm:$0xff]
      %v5518 = vld [vmem:[%s433 + $0x250] sm:$0xff]
      %v5519 = vld [vmem:[%s433 + $0x258] sm:$0xff]
      %v5520 = vld [vmem:[%s433 + $0x260] sm:$0xff]
      %v5521 = vld [vmem:[%s433 + $0x268] sm:$0xff]
      %v5522 = vld [vmem:[%s433 + $0x270] sm:$0xff]
      %v5523 = vld [vmem:[%s433 + $0x278] sm:$0xff]
      %v5524 = vld [vmem:[%s433 + $0x280] sm:$0xff]
      %v5525 = vld [vmem:[%s433 + $0x288] sm:$0xff]
      %v5526 = vld [vmem:[%s433 + $0x290] sm:$0xff]
      %v5527 = vld [vmem:[%s433 + $0x298] sm:$0xff]
      %v5528 = vld [vmem:[%s433 + $0x2a0] sm:$0xff]
      %v5529 = vld [vmem:[%s433 + $0x2a8] sm:$0xff]
      %v5530 = vld [vmem:[%s433 + $0x2b0] sm:$0xff]
      %v5531 = vld [vmem:[%s433 + $0x2b8] sm:$0xff]
      %v5532 = vld [vmem:[%s433 + $0x2c0] sm:$0xff]
      %v5533 = vld [vmem:[%s433 + $0x2c8] sm:$0xff]
      %v5534 = vld [vmem:[%s433 + $0x2d0] sm:$0xff]
      %v5535 = vld [vmem:[%s433 + $0x2d8] sm:$0xff]
      %v5536 = vld [vmem:[%s433 + $0x2e0] sm:$0xff]
      %v5537 = vld [vmem:[%s433 + $0x2e8] sm:$0xff]
      %v5538 = vld [vmem:[%s433 + $0x2f0] sm:$0xff]
      %v5539 = vld [vmem:[%s433 + $0x2f8] sm:$0xff]
      %v5540 = vld [vmem:[%s433 + $0x300] sm:$0xff]
      %v5541 = vld [vmem:[%s433 + $0x308] sm:$0xff]
      %v5542 = vld [vmem:[%s433 + $0x310] sm:$0xff]
      %v5543 = vld [vmem:[%s433 + $0x318] sm:$0xff]
      %v5544 = vld [vmem:[%s433 + $0x320] sm:$0xff]
      %v5545 = vld [vmem:[%s433 + $0x328] sm:$0xff]
      %v5546 = vld [vmem:[%s433 + $0x330] sm:$0xff]
      %v5547 = vld [vmem:[%s433 + $0x338] sm:$0xff]
      %v5548 = vld [vmem:[%s433 + $0x340] sm:$0xff]
      %v5549 = vld [vmem:[%s433 + $0x348] sm:$0xff]
      %v5550 = vld [vmem:[%s433 + $0x350] sm:$0xff]
      %v5551 = vld [vmem:[%s433 + $0x358] sm:$0xff]
      %v5552 = vld [vmem:[%s433 + $0x360] sm:$0xff]
      %v5553 = vld [vmem:[%s433 + $0x368] sm:$0xff]
      %v5554 = vld [vmem:[%s433 + $0x370] sm:$0xff]
      %v5555 = vld [vmem:[%s433 + $0x378] sm:$0xff]
      %v5556 = vld [vmem:[%s433 + $0x380] sm:$0xff]
      %v5557 = vld [vmem:[%s433 + $0x388] sm:$0xff]
      %v5558 = vld [vmem:[%s433 + $0x390] sm:$0xff]
      %v5559 = vld [vmem:[%s433 + $0x398] sm:$0xff]
      %v5560 = vld [vmem:[%s433 + $0x3a0] sm:$0xff]
      %v5561 = vld [vmem:[%s433 + $0x3a8] sm:$0xff]
      %v5562 = vld [vmem:[%s433 + $0x3b0] sm:$0xff]
      %v5563 = vld [vmem:[%s433 + $0x3b8] sm:$0xff]
      %v5564 = vld [vmem:[%s433 + $0x3c0] sm:$0xff]
      %v5565 = vld [vmem:[%s433 + $0x3c8] sm:$0xff]
      %v5566 = vld [vmem:[%s433 + $0x3d0] sm:$0xff]
      %v5567 = vld [vmem:[%s433 + $0x3d8] sm:$0xff]
      %v5568 = vld [vmem:[%s433 + $0x3e0] sm:$0xff]
      %v5569 = vld [vmem:[%s433 + $0x3e8] sm:$0xff]
      %v5570 = vld [vmem:[%s433 + $0x3f0] sm:$0xff]
      %v5571 = vld [vmem:[%s433 + $0x3f8] sm:$0xff]
      %v5700 = vunpack.c.l.b16 %v5444
      %v5701 = vunpack.c.h.b16 %v5444
      %v5702 = vunpack.c.l.b16 %v5445
      %v5703 = vunpack.c.h.b16 %v5445
      %v5704 = vunpack.c.l.b16 %v5446
      %v5705 = vunpack.c.h.b16 %v5446
      %v5706 = vunpack.c.l.b16 %v5447
      %v5707 = vunpack.c.h.b16 %v5447
      %v5708 = vunpack.c.l.b16 %v5448
      %v5709 = vunpack.c.h.b16 %v5448
      %v5710 = vunpack.c.l.b16 %v5449
      %v5711 = vunpack.c.h.b16 %v5449
      %v5712 = vunpack.c.l.b16 %v5450
      %v5713 = vunpack.c.h.b16 %v5450
      %v5714 = vunpack.c.l.b16 %v5451
      %v5715 = vunpack.c.h.b16 %v5451
      %v5716 = vunpack.c.l.b16 %v5452
      %v5717 = vunpack.c.h.b16 %v5452
      %v5718 = vunpack.c.l.b16 %v5453
      %v5719 = vunpack.c.h.b16 %v5453
      %v5720 = vunpack.c.l.b16 %v5454
      %v5721 = vunpack.c.h.b16 %v5454
      %v5722 = vunpack.c.l.b16 %v5455
      %v5723 = vunpack.c.h.b16 %v5455
      %v5724 = vunpack.c.l.b16 %v5456
      %v5725 = vunpack.c.h.b16 %v5456
      %v5726 = vunpack.c.l.b16 %v5457
      %v5727 = vunpack.c.h.b16 %v5457
      %v5728 = vunpack.c.l.b16 %v5458
      %v5729 = vunpack.c.h.b16 %v5458
      %v5730 = vunpack.c.l.b16 %v5459
      %v5731 = vunpack.c.h.b16 %v5459
      %v5732 = vunpack.c.l.b16 %v5460
      %v5733 = vunpack.c.h.b16 %v5460
      %v5734 = vunpack.c.l.b16 %v5461
      %v5735 = vunpack.c.h.b16 %v5461
      %v5736 = vunpack.c.l.b16 %v5462
      %v5737 = vunpack.c.h.b16 %v5462
      %v5738 = vunpack.c.l.b16 %v5463
      %v5739 = vunpack.c.h.b16 %v5463
      %v5740 = vunpack.c.l.b16 %v5464
      %v5741 = vunpack.c.h.b16 %v5464
      %v5742 = vunpack.c.l.b16 %v5465
      %v5743 = vunpack.c.h.b16 %v5465
      %v5744 = vunpack.c.l.b16 %v5466
      %v5745 = vunpack.c.h.b16 %v5466
      %v5746 = vunpack.c.l.b16 %v5467
      %v5747 = vunpack.c.h.b16 %v5467
      %v5748 = vunpack.c.l.b16 %v5468
      %v5749 = vunpack.c.h.b16 %v5468
      %v5750 = vunpack.c.l.b16 %v5469
      %v5751 = vunpack.c.h.b16 %v5469
      %v5752 = vunpack.c.l.b16 %v5470
      %v5753 = vunpack.c.h.b16 %v5470
      %v5754 = vunpack.c.l.b16 %v5471
      %v5755 = vunpack.c.h.b16 %v5471
      %v5756 = vunpack.c.l.b16 %v5472
      %v5757 = vunpack.c.h.b16 %v5472
      %v5758 = vunpack.c.l.b16 %v5473
      %v5759 = vunpack.c.h.b16 %v5473
      %v5760 = vunpack.c.l.b16 %v5474
      %v5761 = vunpack.c.h.b16 %v5474
      %v5762 = vunpack.c.l.b16 %v5475
      %v5763 = vunpack.c.h.b16 %v5475
      %v5764 = vunpack.c.l.b16 %v5476
      %v5765 = vunpack.c.h.b16 %v5476
      %v5766 = vunpack.c.l.b16 %v5477
      %v5767 = vunpack.c.h.b16 %v5477
      %v5768 = vunpack.c.l.b16 %v5478
      %v5769 = vunpack.c.h.b16 %v5478
      %v5770 = vunpack.c.l.b16 %v5479
      %v5771 = vunpack.c.h.b16 %v5479
      %v5772 = vunpack.c.l.b16 %v5480
      %v5773 = vunpack.c.h.b16 %v5480
      %v5774 = vunpack.c.l.b16 %v5481
      %v5775 = vunpack.c.h.b16 %v5481
      %v5776 = vunpack.c.l.b16 %v5482
      %v5777 = vunpack.c.h.b16 %v5482
      %v5778 = vunpack.c.l.b16 %v5483
      %v5779 = vunpack.c.h.b16 %v5483
      %v5780 = vunpack.c.l.b16 %v5484
      %v5781 = vunpack.c.h.b16 %v5484
      %v5782 = vunpack.c.l.b16 %v5485
      %v5783 = vunpack.c.h.b16 %v5485
      %v5784 = vunpack.c.l.b16 %v5486
      %v5785 = vunpack.c.h.b16 %v5486
      %v5786 = vunpack.c.l.b16 %v5487
      %v5787 = vunpack.c.h.b16 %v5487
      %v5788 = vunpack.c.l.b16 %v5488
      %v5789 = vunpack.c.h.b16 %v5488
      %v5790 = vunpack.c.l.b16 %v5489
      %v5791 = vunpack.c.h.b16 %v5489
      %v5792 = vunpack.c.l.b16 %v5490
      %v5793 = vunpack.c.h.b16 %v5490
      %v5794 = vunpack.c.l.b16 %v5491
      %v5795 = vunpack.c.h.b16 %v5491
      %v5796 = vunpack.c.l.b16 %v5492
      %v5797 = vunpack.c.h.b16 %v5492
      %v5798 = vunpack.c.l.b16 %v5493
      %v5799 = vunpack.c.h.b16 %v5493
      %v5800 = vunpack.c.l.b16 %v5494
      %v5801 = vunpack.c.h.b16 %v5494
      %v5802 = vunpack.c.l.b16 %v5495
      %v5803 = vunpack.c.h.b16 %v5495
      %v5804 = vunpack.c.l.b16 %v5496
      %v5805 = vunpack.c.h.b16 %v5496
      %v5806 = vunpack.c.l.b16 %v5497
      %v5807 = vunpack.c.h.b16 %v5497
      %v5808 = vunpack.c.l.b16 %v5498
      %v5809 = vunpack.c.h.b16 %v5498
      %v5810 = vunpack.c.l.b16 %v5499
      %v5811 = vunpack.c.h.b16 %v5499
      %v5812 = vunpack.c.l.b16 %v5500
      %v5813 = vunpack.c.h.b16 %v5500
      %v5814 = vunpack.c.l.b16 %v5501
      %v5815 = vunpack.c.h.b16 %v5501
      %v5816 = vunpack.c.l.b16 %v5502
      %v5817 = vunpack.c.h.b16 %v5502
      %v5818 = vunpack.c.l.b16 %v5503
      %v5819 = vunpack.c.h.b16 %v5503
      %v5820 = vunpack.c.l.b16 %v5504
      %v5821 = vunpack.c.h.b16 %v5504
      %v5822 = vunpack.c.l.b16 %v5505
      %v5823 = vunpack.c.h.b16 %v5505
      %v5824 = vunpack.c.l.b16 %v5506
      %v5825 = vunpack.c.h.b16 %v5506
      %v5826 = vunpack.c.l.b16 %v5507
      %v5827 = vunpack.c.h.b16 %v5507
      %v5828 = vunpack.c.l.b16 %v5508
      %v5829 = vunpack.c.h.b16 %v5508
      %v5830 = vunpack.c.l.b16 %v5509
      %v5831 = vunpack.c.h.b16 %v5509
      %v5832 = vunpack.c.l.b16 %v5510
      %v5833 = vunpack.c.h.b16 %v5510
      %v5834 = vunpack.c.l.b16 %v5511
      %v5835 = vunpack.c.h.b16 %v5511
      %v5836 = vunpack.c.l.b16 %v5512
      %v5837 = vunpack.c.h.b16 %v5512
      %v5838 = vunpack.c.l.b16 %v5513
      %v5839 = vunpack.c.h.b16 %v5513
      %v5840 = vunpack.c.l.b16 %v5514
      %v5841 = vunpack.c.h.b16 %v5514
      %v5842 = vunpack.c.l.b16 %v5515
      %v5843 = vunpack.c.h.b16 %v5515
      %v5844 = vunpack.c.l.b16 %v5516
      %v5845 = vunpack.c.h.b16 %v5516
      %v5846 = vunpack.c.l.b16 %v5517
      %v5847 = vunpack.c.h.b16 %v5517
      %v5848 = vunpack.c.l.b16 %v5518
      %v5849 = vunpack.c.h.b16 %v5518
      %v5850 = vunpack.c.l.b16 %v5519
      %v5851 = vunpack.c.h.b16 %v5519
      %v5852 = vunpack.c.l.b16 %v5520
      %v5853 = vunpack.c.h.b16 %v5520
      %v5854 = vunpack.c.l.b16 %v5521
      %v5855 = vunpack.c.h.b16 %v5521
      %v5856 = vunpack.c.l.b16 %v5522
      %v5857 = vunpack.c.h.b16 %v5522
      %v5858 = vunpack.c.l.b16 %v5523
      %v5859 = vunpack.c.h.b16 %v5523
      %v5860 = vunpack.c.l.b16 %v5524
      %v5861 = vunpack.c.h.b16 %v5524
      %v5862 = vunpack.c.l.b16 %v5525
      %v5863 = vunpack.c.h.b16 %v5525
      %v5864 = vunpack.c.l.b16 %v5526
      %v5865 = vunpack.c.h.b16 %v5526
      %v5866 = vunpack.c.l.b16 %v5527
      %v5867 = vunpack.c.h.b16 %v5527
      %v5868 = vunpack.c.l.b16 %v5528
      %v5869 = vunpack.c.h.b16 %v5528
      %v5870 = vunpack.c.l.b16 %v5529
      %v5871 = vunpack.c.h.b16 %v5529
      %v5872 = vunpack.c.l.b16 %v5530
      %v5873 = vunpack.c.h.b16 %v5530
      %v5874 = vunpack.c.l.b16 %v5531
      %v5875 = vunpack.c.h.b16 %v5531
      %v5876 = vunpack.c.l.b16 %v5532
      %v5877 = vunpack.c.h.b16 %v5532
      %v5878 = vunpack.c.l.b16 %v5533
      %v5879 = vunpack.c.h.b16 %v5533
      %v5880 = vunpack.c.l.b16 %v5534
      %v5881 = vunpack.c.h.b16 %v5534
      %v5882 = vunpack.c.l.b16 %v5535
      %v5883 = vunpack.c.h.b16 %v5535
      %v5884 = vunpack.c.l.b16 %v5536
      %v5885 = vunpack.c.h.b16 %v5536
      %v5886 = vunpack.c.l.b16 %v5537
      %v5887 = vunpack.c.h.b16 %v5537
      %v5888 = vunpack.c.l.b16 %v5538
      %v5889 = vunpack.c.h.b16 %v5538
      %v5890 = vunpack.c.l.b16 %v5539
      %v5891 = vunpack.c.h.b16 %v5539
      %v5892 = vunpack.c.l.b16 %v5540
      %v5893 = vunpack.c.h.b16 %v5540
      %v5894 = vunpack.c.l.b16 %v5541
      %v5895 = vunpack.c.h.b16 %v5541
      %v5896 = vunpack.c.l.b16 %v5542
      %v5897 = vunpack.c.h.b16 %v5542
      %v5898 = vunpack.c.l.b16 %v5543
      %v5899 = vunpack.c.h.b16 %v5543
      %v5900 = vunpack.c.l.b16 %v5544
      %v5901 = vunpack.c.h.b16 %v5544
      %v5902 = vunpack.c.l.b16 %v5545
      %v5903 = vunpack.c.h.b16 %v5545
      %v5904 = vunpack.c.l.b16 %v5546
      %v5905 = vunpack.c.h.b16 %v5546
      %v5906 = vunpack.c.l.b16 %v5547
      %v5907 = vunpack.c.h.b16 %v5547
      %v5908 = vunpack.c.l.b16 %v5548
      %v5909 = vunpack.c.h.b16 %v5548
      %v5910 = vunpack.c.l.b16 %v5549
      %v5911 = vunpack.c.h.b16 %v5549
      %v5912 = vunpack.c.l.b16 %v5550
      %v5913 = vunpack.c.h.b16 %v5550
      %v5914 = vunpack.c.l.b16 %v5551
      %v5915 = vunpack.c.h.b16 %v5551
      %v5916 = vunpack.c.l.b16 %v5552
      %v5917 = vunpack.c.h.b16 %v5552
      %v5918 = vunpack.c.l.b16 %v5553
      %v5919 = vunpack.c.h.b16 %v5553
      %v5920 = vunpack.c.l.b16 %v5554
      %v5921 = vunpack.c.h.b16 %v5554
      %v5922 = vunpack.c.l.b16 %v5555
      %v5923 = vunpack.c.h.b16 %v5555
      %v5924 = vunpack.c.l.b16 %v5556
      %v5925 = vunpack.c.h.b16 %v5556
      %v5926 = vunpack.c.l.b16 %v5557
      %v5927 = vunpack.c.h.b16 %v5557
      %v5928 = vunpack.c.l.b16 %v5558
      %v5929 = vunpack.c.h.b16 %v5558
      %v5930 = vunpack.c.l.b16 %v5559
      %v5931 = vunpack.c.h.b16 %v5559
      %v5932 = vunpack.c.l.b16 %v5560
      %v5933 = vunpack.c.h.b16 %v5560
      %v5934 = vunpack.c.l.b16 %v5561
      %v5935 = vunpack.c.h.b16 %v5561
      %v5936 = vunpack.c.l.b16 %v5562
      %v5937 = vunpack.c.h.b16 %v5562
      %v5938 = vunpack.c.l.b16 %v5563
      %v5939 = vunpack.c.h.b16 %v5563
      %v5940 = vunpack.c.l.b16 %v5564
      %v5941 = vunpack.c.h.b16 %v5564
      %v5942 = vunpack.c.l.b16 %v5565
      %v5943 = vunpack.c.h.b16 %v5565
      %v5944 = vunpack.c.l.b16 %v5566
      %v5945 = vunpack.c.h.b16 %v5566
      %v5946 = vunpack.c.l.b16 %v5567
      %v5947 = vunpack.c.h.b16 %v5567
      %v5948 = vunpack.c.l.b16 %v5568
      %v5949 = vunpack.c.h.b16 %v5568
      %v5950 = vunpack.c.l.b16 %v5569
      %v5951 = vunpack.c.h.b16 %v5569
      %v5952 = vunpack.c.l.b16 %v5570
      %v5953 = vunpack.c.h.b16 %v5570
      %v5954 = vunpack.c.l.b16 %v5571
      %v5955 = vunpack.c.h.b16 %v5571
      %v5956 = vpack.c.b16 %v5708, %v5700
      %v5957 = vpack.c.b16 %v5709, %v5701
      %v5958 = vpack.c.b16 %v5710, %v5702
      %v5959 = vpack.c.b16 %v5711, %v5703
      %v5960 = vpack.c.b16 %v5712, %v5704
      %v5961 = vpack.c.b16 %v5713, %v5705
      %v5962 = vpack.c.b16 %v5714, %v5706
      %v5963 = vpack.c.b16 %v5715, %v5707
      %v5964 = vpack.c.b16 %v5724, %v5716
      %v5965 = vpack.c.b16 %v5725, %v5717
      %v5966 = vpack.c.b16 %v5726, %v5718
      %v5967 = vpack.c.b16 %v5727, %v5719
      %v5968 = vpack.c.b16 %v5728, %v5720
      %v5969 = vpack.c.b16 %v5729, %v5721
      %v5970 = vpack.c.b16 %v5730, %v5722
      %v5971 = vpack.c.b16 %v5731, %v5723
      %v5972 = vpack.c.b16 %v5740, %v5732
      %v5973 = vpack.c.b16 %v5741, %v5733
      %v5974 = vpack.c.b16 %v5742, %v5734
      %v5975 = vpack.c.b16 %v5743, %v5735
      %v5976 = vpack.c.b16 %v5744, %v5736
      %v5977 = vpack.c.b16 %v5745, %v5737
      %v5978 = vpack.c.b16 %v5746, %v5738
      %v5979 = vpack.c.b16 %v5747, %v5739
      %v5980 = vpack.c.b16 %v5756, %v5748
      %v5981 = vpack.c.b16 %v5757, %v5749
      %v5982 = vpack.c.b16 %v5758, %v5750
      %v5983 = vpack.c.b16 %v5759, %v5751
      %v5984 = vpack.c.b16 %v5760, %v5752
      %v5985 = vpack.c.b16 %v5761, %v5753
      %v5986 = vpack.c.b16 %v5762, %v5754
      %v5987 = vpack.c.b16 %v5763, %v5755
      %v5988 = vpack.c.b16 %v5772, %v5764
      %v5989 = vpack.c.b16 %v5773, %v5765
      %v5990 = vpack.c.b16 %v5774, %v5766
      %v5991 = vpack.c.b16 %v5775, %v5767
      %v5992 = vpack.c.b16 %v5776, %v5768
      %v5993 = vpack.c.b16 %v5777, %v5769
      %v5994 = vpack.c.b16 %v5778, %v5770
      %v5995 = vpack.c.b16 %v5779, %v5771
      %v5996 = vpack.c.b16 %v5788, %v5780
      %v5997 = vpack.c.b16 %v5789, %v5781
      %v5998 = vpack.c.b16 %v5790, %v5782
      %v5999 = vpack.c.b16 %v5791, %v5783
      %v6000 = vpack.c.b16 %v5792, %v5784
      %v6001 = vpack.c.b16 %v5793, %v5785
      %v6002 = vpack.c.b16 %v5794, %v5786
      %v6003 = vpack.c.b16 %v5795, %v5787
      %v6004 = vpack.c.b16 %v5804, %v5796
      %v6005 = vpack.c.b16 %v5805, %v5797
      %v6006 = vpack.c.b16 %v5806, %v5798
      %v6007 = vpack.c.b16 %v5807, %v5799
      %v6008 = vpack.c.b16 %v5808, %v5800
      %v6009 = vpack.c.b16 %v5809, %v5801
      %v6010 = vpack.c.b16 %v5810, %v5802
      %v6011 = vpack.c.b16 %v5811, %v5803
      %v6012 = vpack.c.b16 %v5820, %v5812
      %v6013 = vpack.c.b16 %v5821, %v5813
      %v6014 = vpack.c.b16 %v5822, %v5814
      %v6015 = vpack.c.b16 %v5823, %v5815
      %v6016 = vpack.c.b16 %v5824, %v5816
      %v6017 = vpack.c.b16 %v5825, %v5817
      %v6018 = vpack.c.b16 %v5826, %v5818
      %v6019 = vpack.c.b16 %v5827, %v5819
      %v6020 = vpack.c.b16 %v5836, %v5828
      %v6021 = vpack.c.b16 %v5837, %v5829
      %v6022 = vpack.c.b16 %v5838, %v5830
      %v6023 = vpack.c.b16 %v5839, %v5831
      %v6024 = vpack.c.b16 %v5840, %v5832
      %v6025 = vpack.c.b16 %v5841, %v5833
      %v6026 = vpack.c.b16 %v5842, %v5834
      %v6027 = vpack.c.b16 %v5843, %v5835
      %v6028 = vpack.c.b16 %v5852, %v5844
      %v6029 = vpack.c.b16 %v5853, %v5845
      %v6030 = vpack.c.b16 %v5854, %v5846
      %v6031 = vpack.c.b16 %v5855, %v5847
      %v6032 = vpack.c.b16 %v5856, %v5848
      %v6033 = vpack.c.b16 %v5857, %v5849
      %v6034 = vpack.c.b16 %v5858, %v5850
      %v6035 = vpack.c.b16 %v5859, %v5851
      %v6036 = vpack.c.b16 %v5868, %v5860
      %v6037 = vpack.c.b16 %v5869, %v5861
      %v6038 = vpack.c.b16 %v5870, %v5862
      %v6039 = vpack.c.b16 %v5871, %v5863
      %v6040 = vpack.c.b16 %v5872, %v5864
      %v6041 = vpack.c.b16 %v5873, %v5865
      %v6042 = vpack.c.b16 %v5874, %v5866
      %v6043 = vpack.c.b16 %v5875, %v5867
      %v6044 = vpack.c.b16 %v5884, %v5876
      %v6045 = vpack.c.b16 %v5885, %v5877
      %v6046 = vpack.c.b16 %v5886, %v5878
      %v6047 = vpack.c.b16 %v5887, %v5879
      %v6048 = vpack.c.b16 %v5888, %v5880
      %v6049 = vpack.c.b16 %v5889, %v5881
      %v6050 = vpack.c.b16 %v5890, %v5882
      %v6051 = vpack.c.b16 %v5891, %v5883
      %v6052 = vpack.c.b16 %v5900, %v5892
      %v6053 = vpack.c.b16 %v5901, %v5893
      %v6054 = vpack.c.b16 %v5902, %v5894
      %v6055 = vpack.c.b16 %v5903, %v5895
      %v6056 = vpack.c.b16 %v5904, %v5896
      %v6057 = vpack.c.b16 %v5905, %v5897
      %v6058 = vpack.c.b16 %v5906, %v5898
      %v6059 = vpack.c.b16 %v5907, %v5899
      %v6060 = vpack.c.b16 %v5916, %v5908
      %v6061 = vpack.c.b16 %v5917, %v5909
      %v6062 = vpack.c.b16 %v5918, %v5910
      %v6063 = vpack.c.b16 %v5919, %v5911
      %v6064 = vpack.c.b16 %v5920, %v5912
      %v6065 = vpack.c.b16 %v5921, %v5913
      %v6066 = vpack.c.b16 %v5922, %v5914
      %v6067 = vpack.c.b16 %v5923, %v5915
      %v6068 = vpack.c.b16 %v5932, %v5924
      %v6069 = vpack.c.b16 %v5933, %v5925
      %v6070 = vpack.c.b16 %v5934, %v5926
      %v6071 = vpack.c.b16 %v5935, %v5927
      %v6072 = vpack.c.b16 %v5936, %v5928
      %v6073 = vpack.c.b16 %v5937, %v5929
      %v6074 = vpack.c.b16 %v5938, %v5930
      %v6075 = vpack.c.b16 %v5939, %v5931
      %v6076 = vpack.c.b16 %v5948, %v5940
      %v6077 = vpack.c.b16 %v5949, %v5941
      %v6078 = vpack.c.b16 %v5950, %v5942
      %v6079 = vpack.c.b16 %v5951, %v5943
      %v6080 = vpack.c.b16 %v5952, %v5944
      %v6081 = vpack.c.b16 %v5953, %v5945
      %v6082 = vpack.c.b16 %v5954, %v5946
      %v6083 = vpack.c.b16 %v5955, %v5947
      %6212 = vmatprep.subr.bf16.mxu0 %v5957
      %6213 = vmatpush1.bf16.msra.mxu0 %v5956
      %6214 = vmatprep.subr.bf16.mxu0 %v5965
      %6215 = vmatpush1.bf16.msra.mxu0 %v5964
      %6216 = vmatprep.subr.bf16.mxu0 %v5973
      %6217 = vmatpush1.bf16.msra.mxu0 %v5972
      %6218 = vmatprep.subr.bf16.mxu0 %v5981
      %6219 = vmatpush1.bf16.msra.mxu0 %v5980
      %6220 = vmatprep.subr.bf16.mxu0 %v5989
      %6221 = vmatpush1.bf16.msra.mxu0 %v5988
      %6222 = vmatprep.subr.bf16.mxu0 %v5997
      %6223 = vmatpush1.bf16.msra.mxu0 %v5996
      %6224 = vmatprep.subr.bf16.mxu0 %v6005
      %6225 = vmatpush1.bf16.msra.mxu0 %v6004
      %6226 = vmatprep.subr.bf16.mxu0 %v6013
      %6227 = vmatpush1.bf16.msra.mxu0 %v6012
      %6228 = vmatprep.subr.bf16.mxu0 %v6021
      %6229 = vmatpush1.bf16.msra.mxu0 %v6020
      %6230 = vmatprep.subr.bf16.mxu0 %v6029
      %6231 = vmatpush1.bf16.msra.mxu0 %v6028
      %6232 = vmatprep.subr.bf16.mxu0 %v6037
      %6233 = vmatpush1.bf16.msra.mxu0 %v6036
      %6234 = vmatprep.subr.bf16.mxu0 %v6045
      %6235 = vmatpush1.bf16.msra.mxu0 %v6044
      %6236 = vmatprep.subr.bf16.mxu0 %v6053
      %6237 = vmatpush1.bf16.msra.mxu0 %v6052
      %6238 = vmatprep.subr.bf16.mxu0 %v6061
      %6239 = vmatpush1.bf16.msra.mxu0 %v6060
      %6240 = vmatprep.subr.bf16.mxu0 %v6069
      %6241 = vmatpush1.bf16.msra.mxu0 %v6068
      %6242 = vmatprep.subr.bf16.mxu0 %v6077
      %6243 = vmatpush1.bf16.msra.mxu0 %v6076
      %6244 = vmatprep.mubr.bf16.mxu0 %v5413
      %6245 = vmatmul.mubr.bf16.gmra.mrb[0].mxu0 %v5412
      %v6246 = vpop.f32.mrb[0].mxu0
      %v6247 = vadd.f32 0.0, %v6246
      %v6248 = vpop.f32.mrb[0].mxu0
      %v6249 = vadd.f32 0.0, %v6248
      %v6250 = vpop.f32.mrb[0].mxu0
      %v6251 = vadd.f32 0.0, %v6250
      %v6252 = vpop.f32.mrb[0].mxu0
      %v6253 = vadd.f32 0.0, %v6252
      %6254 = vmatprep.mubr.bf16.mxu0 %v5415
      %6255 = vmatmul.mubr.bf16.gmra.mrb[0].mxu0 %v5414
      %v6256 = vpop.f32.mrb[0].mxu0
      %v6257 = vadd.f32 0.0, %v6256
      %v6258 = vpop.f32.mrb[0].mxu0
      %v6259 = vadd.f32 0.0, %v6258
      %v6260 = vpop.f32.mrb[0].mxu0
      %v6261 = vadd.f32 0.0, %v6260
      %v6262 = vpop.f32.mrb[0].mxu0
      %v6263 = vadd.f32 0.0, %v6262
      %6264 = vmatprep.mubr.bf16.mxu0 %v5417
      %6265 = vmatmul.mubr.bf16.gmra.mrb[0].mxu0 %v5416
      %v6266 = vpop.f32.mrb[0].mxu0
      %v6267 = vadd.f32 0.0, %v6266
      %v6268 = vpop.f32.mrb[0].mxu0
      %v6269 = vadd.f32 0.0, %v6268
      %v6270 = vpop.f32.mrb[0].mxu0
      %v6271 = vadd.f32 0.0, %v6270
      %v6272 = vpop.f32.mrb[0].mxu0
      %v6273 = vadd.f32 0.0, %v6272
      %6274 = vmatprep.mubr.bf16.mxu0 %v5419
      %6275 = vmatmul.mubr.bf16.gmra.mrb[0].mxu0 %v5418
      %v6276 = vpop.f32.mrb[0].mxu0
      %v6277 = vadd.f32 0.0, %v6276
      %v6278 = vpop.f32.mrb[0].mxu0
      %v6279 = vadd.f32 0.0, %v6278
      %v6280 = vpop.f32.mrb[0].mxu0
      %v6281 = vadd.f32 0.0, %v6280
      %v6282 = vpop.f32.mrb[0].mxu0
      %v6283 = vadd.f32 0.0, %v6282
      %6284 = vmatprep.mubr.bf16.mxu0 %v5421
      %6285 = vmatmul.mubr.bf16.gmra.mrb[0].mxu0 %v5420
      %v6286 = vpop.f32.mrb[0].mxu0
      %v6287 = vadd.f32 0.0, %v6286
      %v6288 = vpop.f32.mrb[0].mxu0
      %v6289 = vadd.f32 0.0, %v6288
      %v6290 = vpop.f32.mrb[0].mxu0
      %v6291 = vadd.f32 0.0, %v6290
      %v6292 = vpop.f32.mrb[0].mxu0
      %v6293 = vadd.f32 0.0, %v6292
      %6294 = vmatprep.mubr.bf16.mxu0 %v5423
      %6295 = vmatmul.mubr.bf16.gmra.mrb[0].mxu0 %v5422
      %v6296 = vpop.f32.mrb[0].mxu0
      %v6297 = vadd.f32 0.0, %v6296
      %v6298 = vpop.f32.mrb[0].mxu0
      %v6299 = vadd.f32 0.0, %v6298
      %v6300 = vpop.f32.mrb[0].mxu0
      %v6301 = vadd.f32 0.0, %v6300
      %v6302 = vpop.f32.mrb[0].mxu0
      %v6303 = vadd.f32 0.0, %v6302
      %6304 = vmatprep.mubr.bf16.mxu0 %v5425
      %6305 = vmatmul.mubr.bf16.gmra.mrb[0].mxu0 %v5424
      %v6306 = vpop.f32.mrb[0].mxu0
      %v6307 = vadd.f32 0.0, %v6306
      %v6308 = vpop.f32.mrb[0].mxu0
      %v6309 = vadd.f32 0.0, %v6308
      %v6310 = vpop.f32.mrb[0].mxu0
      %v6311 = vadd.f32 0.0, %v6310
      %v6312 = vpop.f32.mrb[0].mxu0
      %v6313 = vadd.f32 0.0, %v6312
      %6314 = vmatprep.mubr.bf16.mxu0 %v5427
      %6315 = vmatmul.mubr.bf16.gmra.mrb[0].mxu0 %v5426
      %v6316 = vpop.f32.mrb[0].mxu0
      %v6317 = vadd.f32 0.0, %v6316
      %v6318 = vpop.f32.mrb[0].mxu0
      %v6319 = vadd.f32 0.0, %v6318
      %v6320 = vpop.f32.mrb[0].mxu0
      %v6321 = vadd.f32 0.0, %v6320
      %v6322 = vpop.f32.mrb[0].mxu0
      %v6323 = vadd.f32 0.0, %v6322
      %6324 = vmatprep.mubr.bf16.mxu0 %v5429
      %6325 = vmatmul.mubr.bf16.gmra.mrb[0].mxu0 %v5428
      %v6326 = vpop.f32.mrb[0].mxu0
      %v6327 = vadd.f32 0.0, %v6326
      %v6328 = vpop.f32.mrb[0].mxu0
      %v6329 = vadd.f32 0.0, %v6328
      %v6330 = vpop.f32.mrb[0].mxu0
      %v6331 = vadd.f32 0.0, %v6330
      %v6332 = vpop.f32.mrb[0].mxu0
      %v6333 = vadd.f32 0.0, %v6332
      %6334 = vmatprep.mubr.bf16.mxu0 %v5431
      %6335 = vmatmul.mubr.bf16.gmra.mrb[0].mxu0 %v5430
      %v6336 = vpop.f32.mrb[0].mxu0
      %v6337 = vadd.f32 0.0, %v6336
      %v6338 = vpop.f32.mrb[0].mxu0
      %v6339 = vadd.f32 0.0, %v6338
      %v6340 = vpop.f32.mrb[0].mxu0
      %v6341 = vadd.f32 0.0, %v6340
      %v6342 = vpop.f32.mrb[0].mxu0
      %v6343 = vadd.f32 0.0, %v6342
      %6344 = vmatprep.mubr.bf16.mxu0 %v5433
      %6345 = vmatmul.mubr.bf16.gmra.mrb[0].mxu0 %v5432
      %v6346 = vpop.f32.mrb[0].mxu0
      %v6347 = vadd.f32 0.0, %v6346
      %v6348 = vpop.f32.mrb[0].mxu0
      %v6349 = vadd.f32 0.0, %v6348
      %v6350 = vpop.f32.mrb[0].mxu0
      %v6351 = vadd.f32 0.0, %v6350
      %v6352 = vpop.f32.mrb[0].mxu0
      %v6353 = vadd.f32 0.0, %v6352
      %6354 = vmatprep.mubr.bf16.mxu0 %v5435
      %6355 = vmatmul.mubr.bf16.gmra.mrb[0].mxu0 %v5434
      %v6356 = vpop.f32.mrb[0].mxu0
      %v6357 = vadd.f32 0.0, %v6356
      %v6358 = vpop.f32.mrb[0].mxu0
      %v6359 = vadd.f32 0.0, %v6358
      %v6360 = vpop.f32.mrb[0].mxu0
      %v6361 = vadd.f32 0.0, %v6360
      %v6362 = vpop.f32.mrb[0].mxu0
      %v6363 = vadd.f32 0.0, %v6362
      %6364 = vmatprep.mubr.bf16.mxu0 %v5437
      %6365 = vmatmul.mubr.bf16.gmra.mrb[0].mxu0 %v5436
      %v6366 = vpop.f32.mrb[0].mxu0
      %v6367 = vadd.f32 0.0, %v6366
      %v6368 = vpop.f32.mrb[0].mxu0
      %v6369 = vadd.f32 0.0, %v6368
      %v6370 = vpop.f32.mrb[0].mxu0
      %v6371 = vadd.f32 0.0, %v6370
      %v6372 = vpop.f32.mrb[0].mxu0
      %v6373 = vadd.f32 0.0, %v6372
      %6374 = vmatprep.mubr.bf16.mxu0 %v5439
      %6375 = vmatmul.mubr.bf16.gmra.mrb[0].mxu0 %v5438
      %v6376 = vpop.f32.mrb[0].mxu0
      %v6377 = vadd.f32 0.0, %v6376
      %v6378 = vpop.f32.mrb[0].mxu0
      %v6379 = vadd.f32 0.0, %v6378
      %v6380 = vpop.f32.mrb[0].mxu0
      %v6381 = vadd.f32 0.0, %v6380
      %v6382 = vpop.f32.mrb[0].mxu0
      %v6383 = vadd.f32 0.0, %v6382
      %6384 = vmatprep.mubr.bf16.mxu0 %v5441
      %6385 = vmatmul.mubr.bf16.gmra.mrb[0].mxu0 %v5440
      %v6386 = vpop.f32.mrb[0].mxu0
      %v6387 = vadd.f32 0.0, %v6386
      %v6388 = vpop.f32.mrb[0].mxu0
      %v6389 = vadd.f32 0.0, %v6388
      %v6390 = vpop.f32.mrb[0].mxu0
      %v6391 = vadd.f32 0.0, %v6390
      %v6392 = vpop.f32.mrb[0].mxu0
      %v6393 = vadd.f32 0.0, %v6392
      %6394 = vmatprep.mubr.bf16.mxu0 %v5443
      %6395 = vmatmul.mubr.bf16.gmra.mrb[0].mxu0 %v5442
      %v6396 = vpop.f32.mrb[0].mxu0
      %v6397 = vadd.f32 0.0, %v6396
      %v6398 = vpop.f32.mrb[0].mxu0
      %v6399 = vadd.f32 0.0, %v6398
      %v6400 = vpop.f32.mrb[0].mxu0
      %v6401 = vadd.f32 0.0, %v6400
      %v6402 = vpop.f32.mrb[0].mxu0
      %v6403 = vadd.f32 0.0, %v6402
      %6404 = vdwg.mxu0
      %6405 = vmatprep.subr.bf16.mxu0 %v5959
      %6406 = vmatpush1.bf16.msra.mxu0 %v5958
      %6407 = vmatprep.subr.bf16.mxu0 %v5967
      %6408 = vmatpush1.bf16.msra.mxu0 %v5966
      %6409 = vmatprep.subr.bf16.mxu0 %v5975
      %6410 = vmatpush1.bf16.msra.mxu0 %v5974
      %6411 = vmatprep.subr.bf16.mxu0 %v5983
      %6412 = vmatpush1.bf16.msra.mxu0 %v5982
      %6413 = vmatprep.subr.bf16.mxu0 %v5991
      %6414 = vmatpush1.bf16.msra.mxu0 %v5990
      %6415 = vmatprep.subr.bf16.mxu0 %v5999
      %6416 = vmatpush1.bf16.msra.mxu0 %v5998
      %6417 = vmatprep.subr.bf16.mxu0 %v6007
      %6418 = vmatpush1.bf16.msra.mxu0 %v6006
      %6419 = vmatprep.subr.bf16.mxu0 %v6015
      %6420 = vmatpush1.bf16.msra.mxu0 %v6014
      %6421 = vmatprep.subr.bf16.mxu0 %v6023
      %6422 = vmatpush1.bf16.msra.mxu0 %v6022
      %6423 = vmatprep.subr.bf16.mxu0 %v6031
      %6424 = vmatpush1.bf16.msra.mxu0 %v6030
      %6425 = vmatprep.subr.bf16.mxu0 %v6039
      %6426 = vmatpush1.bf16.msra.mxu0 %v6038
      %6427 = vmatprep.subr.bf16.mxu0 %v6047
      %6428 = vmatpush1.bf16.msra.mxu0 %v6046
      %6429 = vmatprep.subr.bf16.mxu0 %v6055
      %6430 = vmatpush1.bf16.msra.mxu0 %v6054
      %6431 = vmatprep.subr.bf16.mxu0 %v6063
      %6432 = vmatpush1.bf16.msra.mxu0 %v6062
      %6433 = vmatprep.subr.bf16.mxu0 %v6071
      %6434 = vmatpush1.bf16.msra.mxu0 %v6070
      %6435 = vmatprep.subr.bf16.mxu0 %v6079
      %6436 = vmatpush1.bf16.msra.mxu0 %v6078
      %6437 = vmatprep.mubr.bf16.mxu0 %v5413
      %6438 = vmatmul.mubr.bf16.gmra.mrb[0].mxu0 %v5412
      %v6439 = vpop.f32.mrb[0].mxu0
      %v6440 = vadd.f32 0.0, %v6439
      %v6441 = vpop.f32.mrb[0].mxu0
      %v6442 = vadd.f32 0.0, %v6441
      %v6443 = vpop.f32.mrb[0].mxu0
      %v6444 = vadd.f32 0.0, %v6443
      %v6445 = vpop.f32.mrb[0].mxu0
      %v6446 = vadd.f32 0.0, %v6445
      %6447 = vmatprep.mubr.bf16.mxu0 %v5415
      %6448 = vmatmul.mubr.bf16.gmra.mrb[0].mxu0 %v5414
      %v6449 = vpop.f32.mrb[0].mxu0
      %v6450 = vadd.f32 0.0, %v6449
      %v6451 = vpop.f32.mrb[0].mxu0
      %v6452 = vadd.f32 0.0, %v6451
      %v6453 = vpop.f32.mrb[0].mxu0
      %v6454 = vadd.f32 0.0, %v6453
      %v6455 = vpop.f32.mrb[0].mxu0
      %v6456 = vadd.f32 0.0, %v6455
      %6457 = vmatprep.mubr.bf16.mxu0 %v5417
      %6458 = vmatmul.mubr.bf16.gmra.mrb[0].mxu0 %v5416
      %v6459 = vpop.f32.mrb[0].mxu0
      %v6460 = vadd.f32 0.0, %v6459
      %v6461 = vpop.f32.mrb[0].mxu0
      %v6462 = vadd.f32 0.0, %v6461
      %v6463 = vpop.f32.mrb[0].mxu0
      %v6464 = vadd.f32 0.0, %v6463
      %v6465 = vpop.f32.mrb[0].mxu0
      %v6466 = vadd.f32 0.0, %v6465
      %6467 = vmatprep.mubr.bf16.mxu0 %v5419
      %6468 = vmatmul.mubr.bf16.gmra.mrb[0].mxu0 %v5418
      %v6469 = vpop.f32.mrb[0].mxu0
      %v6470 = vadd.f32 0.0, %v6469
      %v6471 = vpop.f32.mrb[0].mxu0
      %v6472 = vadd.f32 0.0, %v6471
      %v6473 = vpop.f32.mrb[0].mxu0
      %v6474 = vadd.f32 0.0, %v6473
      %v6475 = vpop.f32.mrb[0].mxu0
      %v6476 = vadd.f32 0.0, %v6475
      %6477 = vmatprep.mubr.bf16.mxu0 %v5421
      %6478 = vmatmul.mubr.bf16.gmra.mrb[0].mxu0 %v5420
      %v6479 = vpop.f32.mrb[0].mxu0
      %v6480 = vadd.f32 0.0, %v6479
      %v6481 = vpop.f32.mrb[0].mxu0
      %v6482 = vadd.f32 0.0, %v6481
      %v6483 = vpop.f32.mrb[0].mxu0
      %v6484 = vadd.f32 0.0, %v6483
      %v6485 = vpop.f32.mrb[0].mxu0
      %v6486 = vadd.f32 0.0, %v6485
      %6487 = vmatprep.mubr.bf16.mxu0 %v5423
      %6488 = vmatmul.mubr.bf16.gmra.mrb[0].mxu0 %v5422
      %v6489 = vpop.f32.mrb[0].mxu0
      %v6490 = vadd.f32 0.0, %v6489
      %v6491 = vpop.f32.mrb[0].mxu0
      %v6492 = vadd.f32 0.0, %v6491
      %v6493 = vpop.f32.mrb[0].mxu0
      %v6494 = vadd.f32 0.0, %v6493
      %v6495 = vpop.f32.mrb[0].mxu0
      %v6496 = vadd.f32 0.0, %v6495
      %6497 = vmatprep.mubr.bf16.mxu0 %v5425
      %6498 = vmatmul.mubr.bf16.gmra.mrb[0].mxu0 %v5424
      %v6499 = vpop.f32.mrb[0].mxu0
      %v6500 = vadd.f32 0.0, %v6499
      %v6501 = vpop.f32.mrb[0].mxu0
      %v6502 = vadd.f32 0.0, %v6501
      %v6503 = vpop.f32.mrb[0].mxu0
      %v6504 = vadd.f32 0.0, %v6503
      %v6505 = vpop.f32.mrb[0].mxu0
      %v6506 = vadd.f32 0.0, %v6505
      %6507 = vmatprep.mubr.bf16.mxu0 %v5427
      %6508 = vmatmul.mubr.bf16.gmra.mrb[0].mxu0 %v5426
      %v6509 = vpop.f32.mrb[0].mxu0
      %v6510 = vadd.f32 0.0, %v6509
      %v6511 = vpop.f32.mrb[0].mxu0
      %v6512 = vadd.f32 0.0, %v6511
      %v6513 = vpop.f32.mrb[0].mxu0
      %v6514 = vadd.f32 0.0, %v6513
      %v6515 = vpop.f32.mrb[0].mxu0
      %v6516 = vadd.f32 0.0, %v6515
      %6517 = vmatprep.mubr.bf16.mxu0 %v5429
      %6518 = vmatmul.mubr.bf16.gmra.mrb[0].mxu0 %v5428
      %v6519 = vpop.f32.mrb[0].mxu0
      %v6520 = vadd.f32 0.0, %v6519
      %v6521 = vpop.f32.mrb[0].mxu0
      %v6522 = vadd.f32 0.0, %v6521
      %v6523 = vpop.f32.mrb[0].mxu0
      %v6524 = vadd.f32 0.0, %v6523
      %v6525 = vpop.f32.mrb[0].mxu0
      %v6526 = vadd.f32 0.0, %v6525
      %6527 = vmatprep.mubr.bf16.mxu0 %v5431
      %6528 = vmatmul.mubr.bf16.gmra.mrb[0].mxu0 %v5430
      %v6529 = vpop.f32.mrb[0].mxu0
      %v6530 = vadd.f32 0.0, %v6529
      %v6531 = vpop.f32.mrb[0].mxu0
      %v6532 = vadd.f32 0.0, %v6531
      %v6533 = vpop.f32.mrb[0].mxu0
      %v6534 = vadd.f32 0.0, %v6533
      %v6535 = vpop.f32.mrb[0].mxu0
      %v6536 = vadd.f32 0.0, %v6535
      %6537 = vmatprep.mubr.bf16.mxu0 %v5433
      %6538 = vmatmul.mubr.bf16.gmra.mrb[0].mxu0 %v5432
      %v6539 = vpop.f32.mrb[0].mxu0
      %v6540 = vadd.f32 0.0, %v6539
      %v6541 = vpop.f32.mrb[0].mxu0
      %v6542 = vadd.f32 0.0, %v6541
      %v6543 = vpop.f32.mrb[0].mxu0
      %v6544 = vadd.f32 0.0, %v6543
      %v6545 = vpop.f32.mrb[0].mxu0
      %v6546 = vadd.f32 0.0, %v6545
      %6547 = vmatprep.mubr.bf16.mxu0 %v5435
      %6548 = vmatmul.mubr.bf16.gmra.mrb[0].mxu0 %v5434
      %v6549 = vpop.f32.mrb[0].mxu0
      %v6550 = vadd.f32 0.0, %v6549
      %v6551 = vpop.f32.mrb[0].mxu0
      %v6552 = vadd.f32 0.0, %v6551
      %v6553 = vpop.f32.mrb[0].mxu0
      %v6554 = vadd.f32 0.0, %v6553
      %v6555 = vpop.f32.mrb[0].mxu0
      %v6556 = vadd.f32 0.0, %v6555
      %6557 = vmatprep.mubr.bf16.mxu0 %v5437
      %6558 = vmatmul.mubr.bf16.gmra.mrb[0].mxu0 %v5436
      %v6559 = vpop.f32.mrb[0].mxu0
      %v6560 = vadd.f32 0.0, %v6559
      %v6561 = vpop.f32.mrb[0].mxu0
      %v6562 = vadd.f32 0.0, %v6561
      %v6563 = vpop.f32.mrb[0].mxu0
      %v6564 = vadd.f32 0.0, %v6563
      %v6565 = vpop.f32.mrb[0].mxu0
      %v6566 = vadd.f32 0.0, %v6565
      %6567 = vmatprep.mubr.bf16.mxu0 %v5439
      %6568 = vmatmul.mubr.bf16.gmra.mrb[0].mxu0 %v5438
      %v6569 = vpop.f32.mrb[0].mxu0
      %v6570 = vadd.f32 0.0, %v6569
      %v6571 = vpop.f32.mrb[0].mxu0
      %v6572 = vadd.f32 0.0, %v6571
      %v6573 = vpop.f32.mrb[0].mxu0
      %v6574 = vadd.f32 0.0, %v6573
      %v6575 = vpop.f32.mrb[0].mxu0
      %v6576 = vadd.f32 0.0, %v6575
      %6577 = vmatprep.mubr.bf16.mxu0 %v5441
      %6578 = vmatmul.mubr.bf16.gmra.mrb[0].mxu0 %v5440
      %v6579 = vpop.f32.mrb[0].mxu0
      %v6580 = vadd.f32 0.0, %v6579
      %v6581 = vpop.f32.mrb[0].mxu0
      %v6582 = vadd.f32 0.0, %v6581
      %v6583 = vpop.f32.mrb[0].mxu0
      %v6584 = vadd.f32 0.0, %v6583
      %v6585 = vpop.f32.mrb[0].mxu0
      %v6586 = vadd.f32 0.0, %v6585
      %6587 = vmatprep.mubr.bf16.mxu0 %v5443
      %6588 = vmatmul.mubr.bf16.gmra.mrb[0].mxu0 %v5442
      %v6589 = vpop.f32.mrb[0].mxu0
      %v6590 = vadd.f32 0.0, %v6589
      %v6591 = vpop.f32.mrb[0].mxu0
      %v6592 = vadd.f32 0.0, %v6591
      %v6593 = vpop.f32.mrb[0].mxu0
      %v6594 = vadd.f32 0.0, %v6593
      %v6595 = vpop.f32.mrb[0].mxu0
      %v6596 = vadd.f32 0.0, %v6595
      %6597 = vdwg.mxu0
      %6598 = vmatprep.subr.bf16.mxu0 %v5961
      %6599 = vmatpush1.bf16.msra.mxu0 %v5960
      %6600 = vmatprep.subr.bf16.mxu0 %v5969
      %6601 = vmatpush1.bf16.msra.mxu0 %v5968
      %6602 = vmatprep.subr.bf16.mxu0 %v5977
      %6603 = vmatpush1.bf16.msra.mxu0 %v5976
      %6604 = vmatprep.subr.bf16.mxu0 %v5985
      %6605 = vmatpush1.bf16.msra.mxu0 %v5984
      %6606 = vmatprep.subr.bf16.mxu0 %v5993
      %6607 = vmatpush1.bf16.msra.mxu0 %v5992
      %6608 = vmatprep.subr.bf16.mxu0 %v6001
      %6609 = vmatpush1.bf16.msra.mxu0 %v6000
      %6610 = vmatprep.subr.bf16.mxu0 %v6009
      %6611 = vmatpush1.bf16.msra.mxu0 %v6008
      %6612 = vmatprep.subr.bf16.mxu0 %v6017
      %6613 = vmatpush1.bf16.msra.mxu0 %v6016
      %6614 = vmatprep.subr.bf16.mxu0 %v6025
      %6615 = vmatpush1.bf16.msra.mxu0 %v6024
      %6616 = vmatprep.subr.bf16.mxu0 %v6033
      %6617 = vmatpush1.bf16.msra.mxu0 %v6032
      %6618 = vmatprep.subr.bf16.mxu0 %v6041
      %6619 = vmatpush1.bf16.msra.mxu0 %v6040
      %6620 = vmatprep.subr.bf16.mxu0 %v6049
      %6621 = vmatpush1.bf16.msra.mxu0 %v6048
      %6622 = vmatprep.subr.bf16.mxu0 %v6057
      %6623 = vmatpush1.bf16.msra.mxu0 %v6056
      %6624 = vmatprep.subr.bf16.mxu0 %v6065
      %6625 = vmatpush1.bf16.msra.mxu0 %v6064
      %6626 = vmatprep.subr.bf16.mxu0 %v6073
      %6627 = vmatpush1.bf16.msra.mxu0 %v6072
      %6628 = vmatprep.subr.bf16.mxu0 %v6081
      %6629 = vmatpush1.bf16.msra.mxu0 %v6080
      %6630 = vmatprep.mubr.bf16.mxu0 %v5413
      %6631 = vmatmul.mubr.bf16.gmra.mrb[0].mxu0 %v5412
      %v6632 = vpop.f32.mrb[0].mxu0
      %v6633 = vadd.f32 0.0, %v6632
      %v6634 = vpop.f32.mrb[0].mxu0
      %v6635 = vadd.f32 0.0, %v6634
      %v6636 = vpop.f32.mrb[0].mxu0
      %v6637 = vadd.f32 0.0, %v6636
      %v6638 = vpop.f32.mrb[0].mxu0
      %v6639 = vadd.f32 0.0, %v6638
      %6640 = vmatprep.mubr.bf16.mxu0 %v5415
      %6641 = vmatmul.mubr.bf16.gmra.mrb[0].mxu0 %v5414
      %v6642 = vpop.f32.mrb[0].mxu0
      %v6643 = vadd.f32 0.0, %v6642
      %v6644 = vpop.f32.mrb[0].mxu0
      %v6645 = vadd.f32 0.0, %v6644
      %v6646 = vpop.f32.mrb[0].mxu0
      %v6647 = vadd.f32 0.0, %v6646
      %v6648 = vpop.f32.mrb[0].mxu0
      %v6649 = vadd.f32 0.0, %v6648
      %6650 = vmatprep.mubr.bf16.mxu0 %v5417
      %6651 = vmatmul.mubr.bf16.gmra.mrb[0].mxu0 %v5416
      %v6652 = vpop.f32.mrb[0].mxu0
      %v6653 = vadd.f32 0.0, %v6652
      %v6654 = vpop.f32.mrb[0].mxu0
      %v6655 = vadd.f32 0.0, %v6654
      %v6656 = vpop.f32.mrb[0].mxu0
      %v6657 = vadd.f32 0.0, %v6656
      %v6658 = vpop.f32.mrb[0].mxu0
      %v6659 = vadd.f32 0.0, %v6658
      %6660 = vmatprep.mubr.bf16.mxu0 %v5419
      %6661 = vmatmul.mubr.bf16.gmra.mrb[0].mxu0 %v5418
      %v6662 = vpop.f32.mrb[0].mxu0
      %v6663 = vadd.f32 0.0, %v6662
      %v6664 = vpop.f32.mrb[0].mxu0
      %v6665 = vadd.f32 0.0, %v6664
      %v6666 = vpop.f32.mrb[0].mxu0
      %v6667 = vadd.f32 0.0, %v6666
      %v6668 = vpop.f32.mrb[0].mxu0
      %v6669 = vadd.f32 0.0, %v6668
      %6670 = vmatprep.mubr.bf16.mxu0 %v5421
      %6671 = vmatmul.mubr.bf16.gmra.mrb[0].mxu0 %v5420
      %v6672 = vpop.f32.mrb[0].mxu0
      %v6673 = vadd.f32 0.0, %v6672
      %v6674 = vpop.f32.mrb[0].mxu0
      %v6675 = vadd.f32 0.0, %v6674
      %v6676 = vpop.f32.mrb[0].mxu0
      %v6677 = vadd.f32 0.0, %v6676
      %v6678 = vpop.f32.mrb[0].mxu0
      %v6679 = vadd.f32 0.0, %v6678
      %6680 = vmatprep.mubr.bf16.mxu0 %v5423
      %6681 = vmatmul.mubr.bf16.gmra.mrb[0].mxu0 %v5422
      %v6682 = vpop.f32.mrb[0].mxu0
      %v6683 = vadd.f32 0.0, %v6682
      %v6684 = vpop.f32.mrb[0].mxu0
      %v6685 = vadd.f32 0.0, %v6684
      %v6686 = vpop.f32.mrb[0].mxu0
      %v6687 = vadd.f32 0.0, %v6686
      %v6688 = vpop.f32.mrb[0].mxu0
      %v6689 = vadd.f32 0.0, %v6688
      %6690 = vmatprep.mubr.bf16.mxu0 %v5425
      %6691 = vmatmul.mubr.bf16.gmra.mrb[0].mxu0 %v5424
      %v6692 = vpop.f32.mrb[0].mxu0
      %v6693 = vadd.f32 0.0, %v6692
      %v6694 = vpop.f32.mrb[0].mxu0
      %v6695 = vadd.f32 0.0, %v6694
      %v6696 = vpop.f32.mrb[0].mxu0
      %v6697 = vadd.f32 0.0, %v6696
      %v6698 = vpop.f32.mrb[0].mxu0
      %v6699 = vadd.f32 0.0, %v6698
      %6700 = vmatprep.mubr.bf16.mxu0 %v5427
      %6701 = vmatmul.mubr.bf16.gmra.mrb[0].mxu0 %v5426
      %v6702 = vpop.f32.mrb[0].mxu0
      %v6703 = vadd.f32 0.0, %v6702
      %v6704 = vpop.f32.mrb[0].mxu0
      %v6705 = vadd.f32 0.0, %v6704
      %v6706 = vpop.f32.mrb[0].mxu0
      %v6707 = vadd.f32 0.0, %v6706
      %v6708 = vpop.f32.mrb[0].mxu0
      %v6709 = vadd.f32 0.0, %v6708
      %6710 = vmatprep.mubr.bf16.mxu0 %v5429
      %6711 = vmatmul.mubr.bf16.gmra.mrb[0].mxu0 %v5428
      %v6712 = vpop.f32.mrb[0].mxu0
      %v6713 = vadd.f32 0.0, %v6712
      %v6714 = vpop.f32.mrb[0].mxu0
      %v6715 = vadd.f32 0.0, %v6714
      %v6716 = vpop.f32.mrb[0].mxu0
      %v6717 = vadd.f32 0.0, %v6716
      %v6718 = vpop.f32.mrb[0].mxu0
      %v6719 = vadd.f32 0.0, %v6718
      %6720 = vmatprep.mubr.bf16.mxu0 %v5431
      %6721 = vmatmul.mubr.bf16.gmra.mrb[0].mxu0 %v5430
      %v6722 = vpop.f32.mrb[0].mxu0
      %v6723 = vadd.f32 0.0, %v6722
      %v6724 = vpop.f32.mrb[0].mxu0
      %v6725 = vadd.f32 0.0, %v6724
      %v6726 = vpop.f32.mrb[0].mxu0
      %v6727 = vadd.f32 0.0, %v6726
      %v6728 = vpop.f32.mrb[0].mxu0
      %v6729 = vadd.f32 0.0, %v6728
      %6730 = vmatprep.mubr.bf16.mxu0 %v5433
      %6731 = vmatmul.mubr.bf16.gmra.mrb[0].mxu0 %v5432
      %v6732 = vpop.f32.mrb[0].mxu0
      %v6733 = vadd.f32 0.0, %v6732
      %v6734 = vpop.f32.mrb[0].mxu0
      %v6735 = vadd.f32 0.0, %v6734
      %v6736 = vpop.f32.mrb[0].mxu0
      %v6737 = vadd.f32 0.0, %v6736
      %v6738 = vpop.f32.mrb[0].mxu0
      %v6739 = vadd.f32 0.0, %v6738
      %6740 = vmatprep.mubr.bf16.mxu0 %v5435
      %6741 = vmatmul.mubr.bf16.gmra.mrb[0].mxu0 %v5434
      %v6742 = vpop.f32.mrb[0].mxu0
      %v6743 = vadd.f32 0.0, %v6742
      %v6744 = vpop.f32.mrb[0].mxu0
      %v6745 = vadd.f32 0.0, %v6744
      %v6746 = vpop.f32.mrb[0].mxu0
      %v6747 = vadd.f32 0.0, %v6746
      %v6748 = vpop.f32.mrb[0].mxu0
      %v6749 = vadd.f32 0.0, %v6748
      %6750 = vmatprep.mubr.bf16.mxu0 %v5437
      %6751 = vmatmul.mubr.bf16.gmra.mrb[0].mxu0 %v5436
      %v6752 = vpop.f32.mrb[0].mxu0
      %v6753 = vadd.f32 0.0, %v6752
      %v6754 = vpop.f32.mrb[0].mxu0
      %v6755 = vadd.f32 0.0, %v6754
      %v6756 = vpop.f32.mrb[0].mxu0
      %v6757 = vadd.f32 0.0, %v6756
      %v6758 = vpop.f32.mrb[0].mxu0
      %v6759 = vadd.f32 0.0, %v6758
      %6760 = vmatprep.mubr.bf16.mxu0 %v5439
      %6761 = vmatmul.mubr.bf16.gmra.mrb[0].mxu0 %v5438
      %v6762 = vpop.f32.mrb[0].mxu0
      %v6763 = vadd.f32 0.0, %v6762
      %v6764 = vpop.f32.mrb[0].mxu0
      %v6765 = vadd.f32 0.0, %v6764
      %v6766 = vpop.f32.mrb[0].mxu0
      %v6767 = vadd.f32 0.0, %v6766
      %v6768 = vpop.f32.mrb[0].mxu0
      %v6769 = vadd.f32 0.0, %v6768
      %6770 = vmatprep.mubr.bf16.mxu0 %v5441
      %6771 = vmatmul.mubr.bf16.gmra.mrb[0].mxu0 %v5440
      %v6772 = vpop.f32.mrb[0].mxu0
      %v6773 = vadd.f32 0.0, %v6772
      %v6774 = vpop.f32.mrb[0].mxu0
      %v6775 = vadd.f32 0.0, %v6774
      %v6776 = vpop.f32.mrb[0].mxu0
      %v6777 = vadd.f32 0.0, %v6776
      %v6778 = vpop.f32.mrb[0].mxu0
      %v6779 = vadd.f32 0.0, %v6778
      %6780 = vmatprep.mubr.bf16.mxu0 %v5443
      %6781 = vmatmul.mubr.bf16.gmra.mrb[0].mxu0 %v5442
      %v6782 = vpop.f32.mrb[0].mxu0
      %v6783 = vadd.f32 0.0, %v6782
      %v6784 = vpop.f32.mrb[0].mxu0
      %v6785 = vadd.f32 0.0, %v6784
      %v6786 = vpop.f32.mrb[0].mxu0
      %v6787 = vadd.f32 0.0, %v6786
      %v6788 = vpop.f32.mrb[0].mxu0
      %v6789 = vadd.f32 0.0, %v6788
      %6790 = vdwg.mxu0
      %6791 = vmatprep.subr.bf16.mxu0 %v5963
      %6792 = vmatpush1.bf16.msra.mxu0 %v5962
      %6793 = vmatprep.subr.bf16.mxu0 %v5971
      %6794 = vmatpush1.bf16.msra.mxu0 %v5970
      %6795 = vmatprep.subr.bf16.mxu0 %v5979
      %6796 = vmatpush1.bf16.msra.mxu0 %v5978
      %6797 = vmatprep.subr.bf16.mxu0 %v5987
      %6798 = vmatpush1.bf16.msra.mxu0 %v5986
      %6799 = vmatprep.subr.bf16.mxu0 %v5995
      %6800 = vmatpush1.bf16.msra.mxu0 %v5994
      %6801 = vmatprep.subr.bf16.mxu0 %v6003
      %6802 = vmatpush1.bf16.msra.mxu0 %v6002
      %6803 = vmatprep.subr.bf16.mxu0 %v6011
      %6804 = vmatpush1.bf16.msra.mxu0 %v6010
      %6805 = vmatprep.subr.bf16.mxu0 %v6019
      %6806 = vmatpush1.bf16.msra.mxu0 %v6018
      %6807 = vmatprep.subr.bf16.mxu0 %v6027
      %6808 = vmatpush1.bf16.msra.mxu0 %v6026
      %6809 = vmatprep.subr.bf16.mxu0 %v6035
      %6810 = vmatpush1.bf16.msra.mxu0 %v6034
      %6811 = vmatprep.subr.bf16.mxu0 %v6043
      %6812 = vmatpush1.bf16.msra.mxu0 %v6042
      %6813 = vmatprep.subr.bf16.mxu0 %v6051
      %6814 = vmatpush1.bf16.msra.mxu0 %v6050
      %6815 = vmatprep.subr.bf16.mxu0 %v6059
      %6816 = vmatpush1.bf16.msra.mxu0 %v6058
      %6817 = vmatprep.subr.bf16.mxu0 %v6067
      %6818 = vmatpush1.bf16.msra.mxu0 %v6066
      %6819 = vmatprep.subr.bf16.mxu0 %v6075
      %6820 = vmatpush1.bf16.msra.mxu0 %v6074
      %6821 = vmatprep.subr.bf16.mxu0 %v6083
      %6822 = vmatpush1.bf16.msra.mxu0 %v6082
      %6823 = vmatprep.mubr.bf16.mxu0 %v5413
      %6824 = vmatmul.mubr.bf16.gmra.mrb[0].mxu0 %v5412
      %v6825 = vpop.f32.mrb[0].mxu0
      %v6826 = vadd.f32 0.0, %v6825
      %v6827 = vpop.f32.mrb[0].mxu0
      %v6828 = vadd.f32 0.0, %v6827
      %v6829 = vpop.f32.mrb[0].mxu0
      %v6830 = vadd.f32 0.0, %v6829
      %v6831 = vpop.f32.mrb[0].mxu0
      %v6832 = vadd.f32 0.0, %v6831
      %6833 = vmatprep.mubr.bf16.mxu0 %v5415
      %6834 = vmatmul.mubr.bf16.gmra.mrb[0].mxu0 %v5414
      %v6835 = vpop.f32.mrb[0].mxu0
      %v6836 = vadd.f32 0.0, %v6835
      %v6837 = vpop.f32.mrb[0].mxu0
      %v6838 = vadd.f32 0.0, %v6837
      %v6839 = vpop.f32.mrb[0].mxu0
      %v6840 = vadd.f32 0.0, %v6839
      %v6841 = vpop.f32.mrb[0].mxu0
      %v6842 = vadd.f32 0.0, %v6841
      %6843 = vmatprep.mubr.bf16.mxu0 %v5417
      %6844 = vmatmul.mubr.bf16.gmra.mrb[0].mxu0 %v5416
      %v6845 = vpop.f32.mrb[0].mxu0
      %v6846 = vadd.f32 0.0, %v6845
      %v6847 = vpop.f32.mrb[0].mxu0
      %v6848 = vadd.f32 0.0, %v6847
      %v6849 = vpop.f32.mrb[0].mxu0
      %v6850 = vadd.f32 0.0, %v6849
      %v6851 = vpop.f32.mrb[0].mxu0
      %v6852 = vadd.f32 0.0, %v6851
      %6853 = vmatprep.mubr.bf16.mxu0 %v5419
      %6854 = vmatmul.mubr.bf16.gmra.mrb[0].mxu0 %v5418
      %v6855 = vpop.f32.mrb[0].mxu0
      %v6856 = vadd.f32 0.0, %v6855
      %v6857 = vpop.f32.mrb[0].mxu0
      %v6858 = vadd.f32 0.0, %v6857
      %v6859 = vpop.f32.mrb[0].mxu0
      %v6860 = vadd.f32 0.0, %v6859
      %v6861 = vpop.f32.mrb[0].mxu0
      %v6862 = vadd.f32 0.0, %v6861
      %6863 = vmatprep.mubr.bf16.mxu0 %v5421
      %6864 = vmatmul.mubr.bf16.gmra.mrb[0].mxu0 %v5420
      %v6865 = vpop.f32.mrb[0].mxu0
      %v6866 = vadd.f32 0.0, %v6865
      %v6867 = vpop.f32.mrb[0].mxu0
      %v6868 = vadd.f32 0.0, %v6867
      %v6869 = vpop.f32.mrb[0].mxu0
      %v6870 = vadd.f32 0.0, %v6869
      %v6871 = vpop.f32.mrb[0].mxu0
      %v6872 = vadd.f32 0.0, %v6871
      %6873 = vmatprep.mubr.bf16.mxu0 %v5423
      %6874 = vmatmul.mubr.bf16.gmra.mrb[0].mxu0 %v5422
      %v6875 = vpop.f32.mrb[0].mxu0
      %v6876 = vadd.f32 0.0, %v6875
      %v6877 = vpop.f32.mrb[0].mxu0
      %v6878 = vadd.f32 0.0, %v6877
      %v6879 = vpop.f32.mrb[0].mxu0
      %v6880 = vadd.f32 0.0, %v6879
      %v6881 = vpop.f32.mrb[0].mxu0
      %v6882 = vadd.f32 0.0, %v6881
      %6883 = vmatprep.mubr.bf16.mxu0 %v5425
      %6884 = vmatmul.mubr.bf16.gmra.mrb[0].mxu0 %v5424
      %v6885 = vpop.f32.mrb[0].mxu0
      %v6886 = vadd.f32 0.0, %v6885
      %v6887 = vpop.f32.mrb[0].mxu0
      %v6888 = vadd.f32 0.0, %v6887
      %v6889 = vpop.f32.mrb[0].mxu0
      %v6890 = vadd.f32 0.0, %v6889
      %v6891 = vpop.f32.mrb[0].mxu0
      %v6892 = vadd.f32 0.0, %v6891
      %6893 = vmatprep.mubr.bf16.mxu0 %v5427
      %6894 = vmatmul.mubr.bf16.gmra.mrb[0].mxu0 %v5426
      %v6895 = vpop.f32.mrb[0].mxu0
      %v6896 = vadd.f32 0.0, %v6895
      %v6897 = vpop.f32.mrb[0].mxu0
      %v6898 = vadd.f32 0.0, %v6897
      %v6899 = vpop.f32.mrb[0].mxu0
      %v6900 = vadd.f32 0.0, %v6899
      %v6901 = vpop.f32.mrb[0].mxu0
      %v6902 = vadd.f32 0.0, %v6901
      %6903 = vmatprep.mubr.bf16.mxu0 %v5429
      %6904 = vmatmul.mubr.bf16.gmra.mrb[0].mxu0 %v5428
      %v6905 = vpop.f32.mrb[0].mxu0
      %v6906 = vadd.f32 0.0, %v6905
      %v6907 = vpop.f32.mrb[0].mxu0
      %v6908 = vadd.f32 0.0, %v6907
      %v6909 = vpop.f32.mrb[0].mxu0
      %v6910 = vadd.f32 0.0, %v6909
      %v6911 = vpop.f32.mrb[0].mxu0
      %v6912 = vadd.f32 0.0, %v6911
      %6913 = vmatprep.mubr.bf16.mxu0 %v5431
      %6914 = vmatmul.mubr.bf16.gmra.mrb[0].mxu0 %v5430
      %v6915 = vpop.f32.mrb[0].mxu0
      %v6916 = vadd.f32 0.0, %v6915
      %v6917 = vpop.f32.mrb[0].mxu0
      %v6918 = vadd.f32 0.0, %v6917
      %v6919 = vpop.f32.mrb[0].mxu0
      %v6920 = vadd.f32 0.0, %v6919
      %v6921 = vpop.f32.mrb[0].mxu0
      %v6922 = vadd.f32 0.0, %v6921
      %6923 = vmatprep.mubr.bf16.mxu0 %v5433
      %6924 = vmatmul.mubr.bf16.gmra.mrb[0].mxu0 %v5432
      %v6925 = vpop.f32.mrb[0].mxu0
      %v6926 = vadd.f32 0.0, %v6925
      %v6927 = vpop.f32.mrb[0].mxu0
      %v6928 = vadd.f32 0.0, %v6927
      %v6929 = vpop.f32.mrb[0].mxu0
      %v6930 = vadd.f32 0.0, %v6929
      %v6931 = vpop.f32.mrb[0].mxu0
      %v6932 = vadd.f32 0.0, %v6931
      %6933 = vmatprep.mubr.bf16.mxu0 %v5435
      %6934 = vmatmul.mubr.bf16.gmra.mrb[0].mxu0 %v5434
      %v6935 = vpop.f32.mrb[0].mxu0
      %v6936 = vadd.f32 0.0, %v6935
      %v6937 = vpop.f32.mrb[0].mxu0
      %v6938 = vadd.f32 0.0, %v6937
      %v6939 = vpop.f32.mrb[0].mxu0
      %v6940 = vadd.f32 0.0, %v6939
      %v6941 = vpop.f32.mrb[0].mxu0
      %v6942 = vadd.f32 0.0, %v6941
      %6943 = vmatprep.mubr.bf16.mxu0 %v5437
      %6944 = vmatmul.mubr.bf16.gmra.mrb[0].mxu0 %v5436
      %v6945 = vpop.f32.mrb[0].mxu0
      %v6946 = vadd.f32 0.0, %v6945
      %v6947 = vpop.f32.mrb[0].mxu0
      %v6948 = vadd.f32 0.0, %v6947
      %v6949 = vpop.f32.mrb[0].mxu0
      %v6950 = vadd.f32 0.0, %v6949
      %v6951 = vpop.f32.mrb[0].mxu0
      %v6952 = vadd.f32 0.0, %v6951
      %6953 = vmatprep.mubr.bf16.mxu0 %v5439
      %6954 = vmatmul.mubr.bf16.gmra.mrb[0].mxu0 %v5438
      %v6955 = vpop.f32.mrb[0].mxu0
      %v6956 = vadd.f32 0.0, %v6955
      %v6957 = vpop.f32.mrb[0].mxu0
      %v6958 = vadd.f32 0.0, %v6957
      %v6959 = vpop.f32.mrb[0].mxu0
      %v6960 = vadd.f32 0.0, %v6959
      %v6961 = vpop.f32.mrb[0].mxu0
      %v6962 = vadd.f32 0.0, %v6961
      %6963 = vmatprep.mubr.bf16.mxu0 %v5441
      %6964 = vmatmul.mubr.bf16.gmra.mrb[0].mxu0 %v5440
      %v6965 = vpop.f32.mrb[0].mxu0
      %v6966 = vadd.f32 0.0, %v6965
      %v6967 = vpop.f32.mrb[0].mxu0
      %v6968 = vadd.f32 0.0, %v6967
      %v6969 = vpop.f32.mrb[0].mxu0
      %v6970 = vadd.f32 0.0, %v6969
      %v6971 = vpop.f32.mrb[0].mxu0
      %v6972 = vadd.f32 0.0, %v6971
      %6973 = vmatprep.mubr.bf16.mxu0 %v5443
      %6974 = vmatmul.mubr.bf16.gmra.mrb[0].mxu0 %v5442
      %v6975 = vpop.f32.mrb[0].mxu0
      %v6976 = vadd.f32 0.0, %v6975
      %v6977 = vpop.f32.mrb[0].mxu0
      %v6978 = vadd.f32 0.0, %v6977
      %v6979 = vpop.f32.mrb[0].mxu0
      %v6980 = vadd.f32 0.0, %v6979
      %v6981 = vpop.f32.mrb[0].mxu0
      %v6982 = vadd.f32 0.0, %v6981
      %6983 = vdwg.mxu0
      %v6984 = vmul.f32 %v6247, %v6633
      %v6985 = vmul.f32 %v6249, %v6635
      %v6986 = vmul.f32 %v6440, %v6826
      %v6987 = vmul.f32 %v6442, %v6828
      %v6988 = vmul.f32 %v6251, %v6637
      %v6989 = vmul.f32 %v6253, %v6639
      %v6990 = vmul.f32 %v6444, %v6830
      %v6991 = vmul.f32 %v6446, %v6832
      %v6992 = vmul.f32 %v6257, %v6643
      %v6993 = vmul.f32 %v6259, %v6645
      %v6994 = vmul.f32 %v6450, %v6836
      %v6995 = vmul.f32 %v6452, %v6838
      %v6996 = vmul.f32 %v6261, %v6647
      %v6997 = vmul.f32 %v6263, %v6649
      %v6998 = vmul.f32 %v6454, %v6840
      %v6999 = vmul.f32 %v6456, %v6842
      %v7000 = vmul.f32 %v6267, %v6653
      %v7001 = vmul.f32 %v6269, %v6655
      %v7002 = vmul.f32 %v6460, %v6846
      %v7003 = vmul.f32 %v6462, %v6848
      %v7004 = vmul.f32 %v6271, %v6657
      %v7005 = vmul.f32 %v6273, %v6659
      %v7006 = vmul.f32 %v6464, %v6850
      %v7007 = vmul.f32 %v6466, %v6852
      %v7008 = vmul.f32 %v6277, %v6663
      %v7009 = vmul.f32 %v6279, %v6665
      %v7010 = vmul.f32 %v6470, %v6856
      %v7011 = vmul.f32 %v6472, %v6858
      %v7012 = vmul.f32 %v6281, %v6667
      %v7013 = vmul.f32 %v6283, %v6669
      %v7014 = vmul.f32 %v6474, %v6860
      %v7015 = vmul.f32 %v6476, %v6862
      %v7016 = vmul.f32 %v6287, %v6673
      %v7017 = vmul.f32 %v6289, %v6675
      %v7018 = vmul.f32 %v6480, %v6866
      %v7019 = vmul.f32 %v6482, %v6868
      %v7020 = vmul.f32 %v6291, %v6677
      %v7021 = vmul.f32 %v6293, %v6679
      %v7022 = vmul.f32 %v6484, %v6870
      %v7023 = vmul.f32 %v6486, %v6872
      %v7024 = vmul.f32 %v6297, %v6683
      %v7025 = vmul.f32 %v6299, %v6685
      %v7026 = vmul.f32 %v6490, %v6876
      %v7027 = vmul.f32 %v6492, %v6878
      %v7028 = vmul.f32 %v6301, %v6687
      %v7029 = vmul.f32 %v6303, %v6689
      %v7030 = vmul.f32 %v6494, %v6880
      %v7031 = vmul.f32 %v6496, %v6882
      %v7032 = vmul.f32 %v6307, %v6693
      %v7033 = vmul.f32 %v6309, %v6695
      %v7034 = vmul.f32 %v6500, %v6886
      %v7035 = vmul.f32 %v6502, %v6888
      %v7036 = vmul.f32 %v6311, %v6697
      %v7037 = vmul.f32 %v6313, %v6699
      %v7038 = vmul.f32 %v6504, %v6890
      %v7039 = vmul.f32 %v6506, %v6892
      %v7040 = vmul.f32 %v6317, %v6703
      %v7041 = vmul.f32 %v6319, %v6705
      %v7042 = vmul.f32 %v6510, %v6896
      %v7043 = vmul.f32 %v6512, %v6898
      %v7044 = vmul.f32 %v6321, %v6707
      %v7045 = vmul.f32 %v6323, %v6709
      %v7046 = vmul.f32 %v6514, %v6900
      %v7047 = vmul.f32 %v6516, %v6902
      %v7048 = vmul.f32 %v6327, %v6713
      %v7049 = vmul.f32 %v6329, %v6715
      %v7050 = vmul.f32 %v6520, %v6906
      %v7051 = vmul.f32 %v6522, %v6908
      %v7052 = vmul.f32 %v6331, %v6717
      %v7053 = vmul.f32 %v6333, %v6719
      %v7054 = vmul.f32 %v6524, %v6910
      %v7055 = vmul.f32 %v6526, %v6912
      %v7056 = vmul.f32 %v6337, %v6723
      %v7057 = vmul.f32 %v6339, %v6725
      %v7058 = vmul.f32 %v6530, %v6916
      %v7059 = vmul.f32 %v6532, %v6918
      %v7060 = vmul.f32 %v6341, %v6727
      %v7061 = vmul.f32 %v6343, %v6729
      %v7062 = vmul.f32 %v6534, %v6920
      %v7063 = vmul.f32 %v6536, %v6922
      %v7064 = vmul.f32 %v6347, %v6733
      %v7065 = vmul.f32 %v6349, %v6735
      %v7066 = vmul.f32 %v6540, %v6926
      %v7067 = vmul.f32 %v6542, %v6928
      %v7068 = vmul.f32 %v6351, %v6737
      %v7069 = vmul.f32 %v6353, %v6739
      %v7070 = vmul.f32 %v6544, %v6930
      %v7071 = vmul.f32 %v6546, %v6932
      %v7072 = vmul.f32 %v6357, %v6743
      %v7073 = vmul.f32 %v6359, %v6745
      %v7074 = vmul.f32 %v6550, %v6936
      %v7075 = vmul.f32 %v6552, %v6938
      %v7076 = vmul.f32 %v6361, %v6747
      %v7077 = vmul.f32 %v6363, %v6749
      %v7078 = vmul.f32 %v6554, %v6940
      %v7079 = vmul.f32 %v6556, %v6942
      %v7080 = vmul.f32 %v6367, %v6753
      %v7081 = vmul.f32 %v6369, %v6755
      %v7082 = vmul.f32 %v6560, %v6946
      %v7083 = vmul.f32 %v6562, %v6948
      %v7084 = vmul.f32 %v6371, %v6757
      %v7085 = vmul.f32 %v6373, %v6759
      %v7086 = vmul.f32 %v6564, %v6950
      %v7087 = vmul.f32 %v6566, %v6952
      %v7088 = vmul.f32 %v6377, %v6763
      %v7089 = vmul.f32 %v6379, %v6765
      %v7090 = vmul.f32 %v6570, %v6956
      %v7091 = vmul.f32 %v6572, %v6958
      %v7092 = vmul.f32 %v6381, %v6767
      %v7093 = vmul.f32 %v6383, %v6769
      %v7094 = vmul.f32 %v6574, %v6960
      %v7095 = vmul.f32 %v6576, %v6962
      %v7096 = vmul.f32 %v6387, %v6773
      %v7097 = vmul.f32 %v6389, %v6775
      %v7098 = vmul.f32 %v6580, %v6966
      %v7099 = vmul.f32 %v6582, %v6968
      %v7100 = vmul.f32 %v6391, %v6777
      %v7101 = vmul.f32 %v6393, %v6779
      %v7102 = vmul.f32 %v6584, %v6970
      %v7103 = vmul.f32 %v6586, %v6972
      %v7104 = vmul.f32 %v6397, %v6783
      %v7105 = vmul.f32 %v6399, %v6785
      %v7106 = vmul.f32 %v6590, %v6976
      %v7107 = vmul.f32 %v6592, %v6978
      %v7108 = vmul.f32 %v6401, %v6787
      %v7109 = vmul.f32 %v6403, %v6789
      %v7110 = vmul.f32 %v6594, %v6980
      %v7111 = vmul.f32 %v6596, %v6982
      %v7112 = vsub.f32 0.0, %v6247
      %v7113 = vsub.f32 0.0, %v6249
      %v7114 = vsub.f32 0.0, %v6440
      %v7115 = vsub.f32 0.0, %v6442
      %v7116 = vsub.f32 0.0, %v6251
      %v7117 = vsub.f32 0.0, %v6253
      %v7118 = vsub.f32 0.0, %v6444
      %v7119 = vsub.f32 0.0, %v6446
      %v7120 = vsub.f32 0.0, %v6257
      %v7121 = vsub.f32 0.0, %v6259
      %v7122 = vsub.f32 0.0, %v6450
      %v7123 = vsub.f32 0.0, %v6452
      %v7124 = vsub.f32 0.0, %v6261
      %v7125 = vsub.f32 0.0, %v6263
      %v7126 = vsub.f32 0.0, %v6454
      %v7127 = vsub.f32 0.0, %v6456
      %v7128 = vsub.f32 0.0, %v6267
      %v7129 = vsub.f32 0.0, %v6269
      %v7130 = vsub.f32 0.0, %v6460
      %v7131 = vsub.f32 0.0, %v6462
      %v7132 = vsub.f32 0.0, %v6271
      %v7133 = vsub.f32 0.0, %v6273
      %v7134 = vsub.f32 0.0, %v6464
      %v7135 = vsub.f32 0.0, %v6466
      %v7136 = vsub.f32 0.0, %v6277
      %v7137 = vsub.f32 0.0, %v6279
      %v7138 = vsub.f32 0.0, %v6470
      %v7139 = vsub.f32 0.0, %v6472
      %v7140 = vsub.f32 0.0, %v6281
      %v7141 = vsub.f32 0.0, %v6283
      %v7142 = vsub.f32 0.0, %v6474
      %v7143 = vsub.f32 0.0, %v6476
      %v7144 = vsub.f32 0.0, %v6287
      %v7145 = vsub.f32 0.0, %v6289
      %v7146 = vsub.f32 0.0, %v6480
      %v7147 = vsub.f32 0.0, %v6482
      %v7148 = vsub.f32 0.0, %v6291
      %v7149 = vsub.f32 0.0, %v6293
      %v7150 = vsub.f32 0.0, %v6484
      %v7151 = vsub.f32 0.0, %v6486
      %v7152 = vsub.f32 0.0, %v6297
      %v7153 = vsub.f32 0.0, %v6299
      %v7154 = vsub.f32 0.0, %v6490
      %v7155 = vsub.f32 0.0, %v6492
      %v7156 = vsub.f32 0.0, %v6301
      %v7157 = vsub.f32 0.0, %v6303
      %v7158 = vsub.f32 0.0, %v6494
      %v7159 = vsub.f32 0.0, %v6496
      %v7160 = vsub.f32 0.0, %v6307
      %v7161 = vsub.f32 0.0, %v6309
      %v7162 = vsub.f32 0.0, %v6500
      %v7163 = vsub.f32 0.0, %v6502
      %v7164 = vsub.f32 0.0, %v6311
      %v7165 = vsub.f32 0.0, %v6313
      %v7166 = vsub.f32 0.0, %v6504
      %v7167 = vsub.f32 0.0, %v6506
      %v7168 = vsub.f32 0.0, %v6317
      %v7169 = vsub.f32 0.0, %v6319
      %v7170 = vsub.f32 0.0, %v6510
      %v7171 = vsub.f32 0.0, %v6512
      %v7172 = vsub.f32 0.0, %v6321
      %v7173 = vsub.f32 0.0, %v6323
      %v7174 = vsub.f32 0.0, %v6514
      %v7175 = vsub.f32 0.0, %v6516
      %v7176 = vsub.f32 0.0, %v6327
      %v7177 = vsub.f32 0.0, %v6329
      %v7178 = vsub.f32 0.0, %v6520
      %v7179 = vsub.f32 0.0, %v6522
      %v7180 = vsub.f32 0.0, %v6331
      %v7181 = vsub.f32 0.0, %v6333
      %v7182 = vsub.f32 0.0, %v6524
      %v7183 = vsub.f32 0.0, %v6526
      %v7184 = vsub.f32 0.0, %v6337
      %v7185 = vsub.f32 0.0, %v6339
      %v7186 = vsub.f32 0.0, %v6530
      %v7187 = vsub.f32 0.0, %v6532
      %v7188 = vsub.f32 0.0, %v6341
      %v7189 = vsub.f32 0.0, %v6343
      %v7190 = vsub.f32 0.0, %v6534
      %v7191 = vsub.f32 0.0, %v6536
      %v7192 = vsub.f32 0.0, %v6347
      %v7193 = vsub.f32 0.0, %v6349
      %v7194 = vsub.f32 0.0, %v6540
      %v7195 = vsub.f32 0.0, %v6542
      %v7196 = vsub.f32 0.0, %v6351
      %v7197 = vsub.f32 0.0, %v6353
      %v7198 = vsub.f32 0.0, %v6544
      %v7199 = vsub.f32 0.0, %v6546
      %v7200 = vsub.f32 0.0, %v6357
      %v7201 = vsub.f32 0.0, %v6359
      %v7202 = vsub.f32 0.0, %v6550
      %v7203 = vsub.f32 0.0, %v6552
      %v7204 = vsub.f32 0.0, %v6361
      %v7205 = vsub.f32 0.0, %v6363
      %v7206 = vsub.f32 0.0, %v6554
      %v7207 = vsub.f32 0.0, %v6556
      %v7208 = vsub.f32 0.0, %v6367
      %v7209 = vsub.f32 0.0, %v6369
      %v7210 = vsub.f32 0.0, %v6560
      %v7211 = vsub.f32 0.0, %v6562
      %v7212 = vsub.f32 0.0, %v6371
      %v7213 = vsub.f32 0.0, %v6373
      %v7214 = vsub.f32 0.0, %v6564
      %v7215 = vsub.f32 0.0, %v6566
      %v7216 = vsub.f32 0.0, %v6377
      %v7217 = vsub.f32 0.0, %v6379
      %v7218 = vsub.f32 0.0, %v6570
      %v7219 = vsub.f32 0.0, %v6572
      %v7220 = vsub.f32 0.0, %v6381
      %v7221 = vsub.f32 0.0, %v6383
      %v7222 = vsub.f32 0.0, %v6574
      %v7223 = vsub.f32 0.0, %v6576
      %v7224 = vsub.f32 0.0, %v6387
      %v7225 = vsub.f32 0.0, %v6389
      %v7226 = vsub.f32 0.0, %v6580
      %v7227 = vsub.f32 0.0, %v6582
      %v7228 = vsub.f32 0.0, %v6391
      %v7229 = vsub.f32 0.0, %v6393
      %v7230 = vsub.f32 0.0, %v6584
      %v7231 = vsub.f32 0.0, %v6586
      %v7232 = vsub.f32 0.0, %v6397
      %v7233 = vsub.f32 0.0, %v6399
      %v7234 = vsub.f32 0.0, %v6590
      %v7235 = vsub.f32 0.0, %v6592
      %v7236 = vsub.f32 0.0, %v6401
      %v7237 = vsub.f32 0.0, %v6403
      %v7238 = vsub.f32 0.0, %v6594
      %v7239 = vsub.f32 0.0, %v6596
      %v7240 = vmul.f32 %v7112, 1.442695
      %v7241 = vpow.pop %v7240
      %v7242 = vmul.f32 %v7113, 1.442695
      %v7243 = vpow.pop %v7242
      %v7244 = vmul.f32 %v7114, 1.442695
      %v7245 = vpow.pop %v7244
      %v7246 = vmul.f32 %v7115, 1.442695
      %v7247 = vpow.pop %v7246
      %v7248 = vmul.f32 %v7116, 1.442695
      %v7249 = vpow.pop %v7248
      %v7250 = vmul.f32 %v7117, 1.442695
      %v7251 = vpow.pop %v7250
      %v7252 = vmul.f32 %v7118, 1.442695
      %v7253 = vpow.pop %v7252
      %v7254 = vmul.f32 %v7119, 1.442695
      %v7255 = vpow.pop %v7254
      %v7256 = vmul.f32 %v7120, 1.442695
      %v7257 = vpow.pop %v7256
      %v7258 = vmul.f32 %v7121, 1.442695
      %v7259 = vpow.pop %v7258
      %v7260 = vmul.f32 %v7122, 1.442695
      %v7261 = vpow.pop %v7260
      %v7262 = vmul.f32 %v7123, 1.442695
      %v7263 = vpow.pop %v7262
      %v7264 = vmul.f32 %v7124, 1.442695
      %v7265 = vpow.pop %v7264
      %v7266 = vmul.f32 %v7125, 1.442695
      %v7267 = vpow.pop %v7266
      %v7268 = vmul.f32 %v7126, 1.442695
      %v7269 = vpow.pop %v7268
      %v7270 = vmul.f32 %v7127, 1.442695
      %v7271 = vpow.pop %v7270
      %v7272 = vmul.f32 %v7128, 1.442695
      %v7273 = vpow.pop %v7272
      %v7274 = vmul.f32 %v7129, 1.442695
      %v7275 = vpow.pop %v7274
      %v7276 = vmul.f32 %v7130, 1.442695
      %v7277 = vpow.pop %v7276
      %v7278 = vmul.f32 %v7131, 1.442695
      %v7279 = vpow.pop %v7278
      %v7280 = vmul.f32 %v7132, 1.442695
      %v7281 = vpow.pop %v7280
      %v7282 = vmul.f32 %v7133, 1.442695
      %v7283 = vpow.pop %v7282
      %v7284 = vmul.f32 %v7134, 1.442695
      %v7285 = vpow.pop %v7284
      %v7286 = vmul.f32 %v7135, 1.442695
      %v7287 = vpow.pop %v7286
      %v7288 = vmul.f32 %v7136, 1.442695
      %v7289 = vpow.pop %v7288
      %v7290 = vmul.f32 %v7137, 1.442695
      %v7291 = vpow.pop %v7290
      %v7292 = vmul.f32 %v7138, 1.442695
      %v7293 = vpow.pop %v7292
      %v7294 = vmul.f32 %v7139, 1.442695
      %v7295 = vpow.pop %v7294
      %v7296 = vmul.f32 %v7140, 1.442695
      %v7297 = vpow.pop %v7296
      %v7298 = vmul.f32 %v7141, 1.442695
      %v7299 = vpow.pop %v7298
      %v7300 = vmul.f32 %v7142, 1.442695
      %v7301 = vpow.pop %v7300
      %v7302 = vmul.f32 %v7143, 1.442695
      %v7303 = vpow.pop %v7302
      %v7304 = vmul.f32 %v7144, 1.442695
      %v7305 = vpow.pop %v7304
      %v7306 = vmul.f32 %v7145, 1.442695
      %v7307 = vpow.pop %v7306
      %v7308 = vmul.f32 %v7146, 1.442695
      %v7309 = vpow.pop %v7308
      %v7310 = vmul.f32 %v7147, 1.442695
      %v7311 = vpow.pop %v7310
      %v7312 = vmul.f32 %v7148, 1.442695
      %v7313 = vpow.pop %v7312
      %v7314 = vmul.f32 %v7149, 1.442695
      %v7315 = vpow.pop %v7314
      %v7316 = vmul.f32 %v7150, 1.442695
      %v7317 = vpow.pop %v7316
      %v7318 = vmul.f32 %v7151, 1.442695
      %v7319 = vpow.pop %v7318
      %v7320 = vmul.f32 %v7152, 1.442695
      %v7321 = vpow.pop %v7320
      %v7322 = vmul.f32 %v7153, 1.442695
      %v7323 = vpow.pop %v7322
      %v7324 = vmul.f32 %v7154, 1.442695
      %v7325 = vpow.pop %v7324
      %v7326 = vmul.f32 %v7155, 1.442695
      %v7327 = vpow.pop %v7326
      %v7328 = vmul.f32 %v7156, 1.442695
      %v7329 = vpow.pop %v7328
      %v7330 = vmul.f32 %v7157, 1.442695
      %v7331 = vpow.pop %v7330
      %v7332 = vmul.f32 %v7158, 1.442695
      %v7333 = vpow.pop %v7332
      %v7334 = vmul.f32 %v7159, 1.442695
      %v7335 = vpow.pop %v7334
      %v7336 = vmul.f32 %v7160, 1.442695
      %v7337 = vpow.pop %v7336
      %v7338 = vmul.f32 %v7161, 1.442695
      %v7339 = vpow.pop %v7338
      %v7340 = vmul.f32 %v7162, 1.442695
      %v7341 = vpow.pop %v7340
      %v7342 = vmul.f32 %v7163, 1.442695
      %v7343 = vpow.pop %v7342
      %v7344 = vmul.f32 %v7164, 1.442695
      %v7345 = vpow.pop %v7344
      %v7346 = vmul.f32 %v7165, 1.442695
      %v7347 = vpow.pop %v7346
      %v7348 = vmul.f32 %v7166, 1.442695
      %v7349 = vpow.pop %v7348
      %v7350 = vmul.f32 %v7167, 1.442695
      %v7351 = vpow.pop %v7350
      %v7352 = vmul.f32 %v7168, 1.442695
      %v7353 = vpow.pop %v7352
      %v7354 = vmul.f32 %v7169, 1.442695
      %v7355 = vpow.pop %v7354
      %v7356 = vmul.f32 %v7170, 1.442695
      %v7357 = vpow.pop %v7356
      %v7358 = vmul.f32 %v7171, 1.442695
      %v7359 = vpow.pop %v7358
      %v7360 = vmul.f32 %v7172, 1.442695
      %v7361 = vpow.pop %v7360
      %v7362 = vmul.f32 %v7173, 1.442695
      %v7363 = vpow.pop %v7362
      %v7364 = vmul.f32 %v7174, 1.442695
      %v7365 = vpow.pop %v7364
      %v7366 = vmul.f32 %v7175, 1.442695
      %v7367 = vpow.pop %v7366
      %v7368 = vmul.f32 %v7176, 1.442695
      %v7369 = vpow.pop %v7368
      %v7370 = vmul.f32 %v7177, 1.442695
      %v7371 = vpow.pop %v7370
      %v7372 = vmul.f32 %v7178, 1.442695
      %v7373 = vpow.pop %v7372
      %v7374 = vmul.f32 %v7179, 1.442695
      %v7375 = vpow.pop %v7374
      %v7376 = vmul.f32 %v7180, 1.442695
      %v7377 = vpow.pop %v7376
      %v7378 = vmul.f32 %v7181, 1.442695
      %v7379 = vpow.pop %v7378
      %v7380 = vmul.f32 %v7182, 1.442695
      %v7381 = vpow.pop %v7380
      %v7382 = vmul.f32 %v7183, 1.442695
      %v7383 = vpow.pop %v7382
      %v7384 = vmul.f32 %v7184, 1.442695
      %v7385 = vpow.pop %v7384
      %v7386 = vmul.f32 %v7185, 1.442695
      %v7387 = vpow.pop %v7386
      %v7388 = vmul.f32 %v7186, 1.442695
      %v7389 = vpow.pop %v7388
      %v7390 = vmul.f32 %v7187, 1.442695
      %v7391 = vpow.pop %v7390
      %v7392 = vmul.f32 %v7188, 1.442695
      %v7393 = vpow.pop %v7392
      %v7394 = vmul.f32 %v7189, 1.442695
      %v7395 = vpow.pop %v7394
      %v7396 = vmul.f32 %v7190, 1.442695
      %v7397 = vpow.pop %v7396
      %v7398 = vmul.f32 %v7191, 1.442695
      %v7399 = vpow.pop %v7398
      %v7400 = vmul.f32 %v7192, 1.442695
      %v7401 = vpow.pop %v7400
      %v7402 = vmul.f32 %v7193, 1.442695
      %v7403 = vpow.pop %v7402
      %v7404 = vmul.f32 %v7194, 1.442695
      %v7405 = vpow.pop %v7404
      %v7406 = vmul.f32 %v7195, 1.442695
      %v7407 = vpow.pop %v7406
      %v7408 = vmul.f32 %v7196, 1.442695
      %v7409 = vpow.pop %v7408
      %v7410 = vmul.f32 %v7197, 1.442695
      %v7411 = vpow.pop %v7410
      %v7412 = vmul.f32 %v7198, 1.442695
      %v7413 = vpow.pop %v7412
      %v7414 = vmul.f32 %v7199, 1.442695
      %v7415 = vpow.pop %v7414
      %v7416 = vmul.f32 %v7200, 1.442695
      %v7417 = vpow.pop %v7416
      %v7418 = vmul.f32 %v7201, 1.442695
      %v7419 = vpow.pop %v7418
      %v7420 = vmul.f32 %v7202, 1.442695
      %v7421 = vpow.pop %v7420
      %v7422 = vmul.f32 %v7203, 1.442695
      %v7423 = vpow.pop %v7422
      %v7424 = vmul.f32 %v7204, 1.442695
      %v7425 = vpow.pop %v7424
      %v7426 = vmul.f32 %v7205, 1.442695
      %v7427 = vpow.pop %v7426
      %v7428 = vmul.f32 %v7206, 1.442695
      %v7429 = vpow.pop %v7428
      %v7430 = vmul.f32 %v7207, 1.442695
      %v7431 = vpow.pop %v7430
      %v7432 = vmul.f32 %v7208, 1.442695
      %v7433 = vpow.pop %v7432
      %v7434 = vmul.f32 %v7209, 1.442695
      %v7435 = vpow.pop %v7434
      %v7436 = vmul.f32 %v7210, 1.442695
      %v7437 = vpow.pop %v7436
      %v7438 = vmul.f32 %v7211, 1.442695
      %v7439 = vpow.pop %v7438
      %v7440 = vmul.f32 %v7212, 1.442695
      %v7441 = vpow.pop %v7440
      %v7442 = vmul.f32 %v7213, 1.442695
      %v7443 = vpow.pop %v7442
      %v7444 = vmul.f32 %v7214, 1.442695
      %v7445 = vpow.pop %v7444
      %v7446 = vmul.f32 %v7215, 1.442695
      %v7447 = vpow.pop %v7446
      %v7448 = vmul.f32 %v7216, 1.442695
      %v7449 = vpow.pop %v7448
      %v7450 = vmul.f32 %v7217, 1.442695
      %v7451 = vpow.pop %v7450
      %v7452 = vmul.f32 %v7218, 1.442695
      %v7453 = vpow.pop %v7452
      %v7454 = vmul.f32 %v7219, 1.442695
      %v7455 = vpow.pop %v7454
      %v7456 = vmul.f32 %v7220, 1.442695
      %v7457 = vpow.pop %v7456
      %v7458 = vmul.f32 %v7221, 1.442695
      %v7459 = vpow.pop %v7458
      %v7460 = vmul.f32 %v7222, 1.442695
      %v7461 = vpow.pop %v7460
      %v7462 = vmul.f32 %v7223, 1.442695
      %v7463 = vpow.pop %v7462
      %v7464 = vmul.f32 %v7224, 1.442695
      %v7465 = vpow.pop %v7464
      %v7466 = vmul.f32 %v7225, 1.442695
      %v7467 = vpow.pop %v7466
      %v7468 = vmul.f32 %v7226, 1.442695
      %v7469 = vpow.pop %v7468
      %v7470 = vmul.f32 %v7227, 1.442695
      %v7471 = vpow.pop %v7470
      %v7472 = vmul.f32 %v7228, 1.442695
      %v7473 = vpow.pop %v7472
      %v7474 = vmul.f32 %v7229, 1.442695
      %v7475 = vpow.pop %v7474
      %v7476 = vmul.f32 %v7230, 1.442695
      %v7477 = vpow.pop %v7476
      %v7478 = vmul.f32 %v7231, 1.442695
      %v7479 = vpow.pop %v7478
      %v7480 = vmul.f32 %v7232, 1.442695
      %v7481 = vpow.pop %v7480
      %v7482 = vmul.f32 %v7233, 1.442695
      %v7483 = vpow.pop %v7482
      %v7484 = vmul.f32 %v7234, 1.442695
      %v7485 = vpow.pop %v7484
      %v7486 = vmul.f32 %v7235, 1.442695
      %v7487 = vpow.pop %v7486
      %v7488 = vmul.f32 %v7236, 1.442695
      %v7489 = vpow.pop %v7488
      %v7490 = vmul.f32 %v7237, 1.442695
      %v7491 = vpow.pop %v7490
      %v7492 = vmul.f32 %v7238, 1.442695
      %v7493 = vpow.pop %v7492
      %v7494 = vmul.f32 %v7239, 1.442695
      %v7495 = vpow.pop %v7494
      %v7496 = vadd.f32 %v7241, 1.0
      %v7497 = vadd.f32 %v7243, 1.0
      %v7498 = vadd.f32 %v7245, 1.0
      %v7499 = vadd.f32 %v7247, 1.0
      %v7500 = vadd.f32 %v7249, 1.0
      %v7501 = vadd.f32 %v7251, 1.0
      %v7502 = vadd.f32 %v7253, 1.0
      %v7503 = vadd.f32 %v7255, 1.0
      %v7504 = vadd.f32 %v7257, 1.0
      %v7505 = vadd.f32 %v7259, 1.0
      %v7506 = vadd.f32 %v7261, 1.0
      %v7507 = vadd.f32 %v7263, 1.0
      %v7508 = vadd.f32 %v7265, 1.0
      %v7509 = vadd.f32 %v7267, 1.0
      %v7510 = vadd.f32 %v7269, 1.0
      %v7511 = vadd.f32 %v7271, 1.0
      %v7512 = vadd.f32 %v7273, 1.0
      %v7513 = vadd.f32 %v7275, 1.0
      %v7514 = vadd.f32 %v7277, 1.0
      %v7515 = vadd.f32 %v7279, 1.0
      %v7516 = vadd.f32 %v7281, 1.0
      %v7517 = vadd.f32 %v7283, 1.0
      %v7518 = vadd.f32 %v7285, 1.0
      %v7519 = vadd.f32 %v7287, 1.0
      %v7520 = vadd.f32 %v7289, 1.0
      %v7521 = vadd.f32 %v7291, 1.0
      %v7522 = vadd.f32 %v7293, 1.0
      %v7523 = vadd.f32 %v7295, 1.0
      %v7524 = vadd.f32 %v7297, 1.0
      %v7525 = vadd.f32 %v7299, 1.0
      %v7526 = vadd.f32 %v7301, 1.0
      %v7527 = vadd.f32 %v7303, 1.0
      %v7528 = vadd.f32 %v7305, 1.0
      %v7529 = vadd.f32 %v7307, 1.0
      %v7530 = vadd.f32 %v7309, 1.0
      %v7531 = vadd.f32 %v7311, 1.0
      %v7532 = vadd.f32 %v7313, 1.0
      %v7533 = vadd.f32 %v7315, 1.0
      %v7534 = vadd.f32 %v7317, 1.0
      %v7535 = vadd.f32 %v7319, 1.0
      %v7536 = vadd.f32 %v7321, 1.0
      %v7537 = vadd.f32 %v7323, 1.0
      %v7538 = vadd.f32 %v7325, 1.0
      %v7539 = vadd.f32 %v7327, 1.0
      %v7540 = vadd.f32 %v7329, 1.0
      %v7541 = vadd.f32 %v7331, 1.0
      %v7542 = vadd.f32 %v7333, 1.0
      %v7543 = vadd.f32 %v7335, 1.0
      %v7544 = vadd.f32 %v7337, 1.0
      %v7545 = vadd.f32 %v7339, 1.0
      %v7546 = vadd.f32 %v7341, 1.0
      %v7547 = vadd.f32 %v7343, 1.0
      %v7548 = vadd.f32 %v7345, 1.0
      %v7549 = vadd.f32 %v7347, 1.0
      %v7550 = vadd.f32 %v7349, 1.0
      %v7551 = vadd.f32 %v7351, 1.0
      %v7552 = vadd.f32 %v7353, 1.0
      %v7553 = vadd.f32 %v7355, 1.0
      %v7554 = vadd.f32 %v7357, 1.0
      %v7555 = vadd.f32 %v7359, 1.0
      %v7556 = vadd.f32 %v7361, 1.0
      %v7557 = vadd.f32 %v7363, 1.0
      %v7558 = vadd.f32 %v7365, 1.0
      %v7559 = vadd.f32 %v7367, 1.0
      %v7560 = vadd.f32 %v7369, 1.0
      %v7561 = vadd.f32 %v7371, 1.0
      %v7562 = vadd.f32 %v7373, 1.0
      %v7563 = vadd.f32 %v7375, 1.0
      %v7564 = vadd.f32 %v7377, 1.0
      %v7565 = vadd.f32 %v7379, 1.0
      %v7566 = vadd.f32 %v7381, 1.0
      %v7567 = vadd.f32 %v7383, 1.0
      %v7568 = vadd.f32 %v7385, 1.0
      %v7569 = vadd.f32 %v7387, 1.0
      %v7570 = vadd.f32 %v7389, 1.0
      %v7571 = vadd.f32 %v7391, 1.0
      %v7572 = vadd.f32 %v7393, 1.0
      %v7573 = vadd.f32 %v7395, 1.0
      %v7574 = vadd.f32 %v7397, 1.0
      %v7575 = vadd.f32 %v7399, 1.0
      %v7576 = vadd.f32 %v7401, 1.0
      %v7577 = vadd.f32 %v7403, 1.0
      %v7578 = vadd.f32 %v7405, 1.0
      %v7579 = vadd.f32 %v7407, 1.0
      %v7580 = vadd.f32 %v7409, 1.0
      %v7581 = vadd.f32 %v7411, 1.0
      %v7582 = vadd.f32 %v7413, 1.0
      %v7583 = vadd.f32 %v7415, 1.0
      %v7584 = vadd.f32 %v7417, 1.0
      %v7585 = vadd.f32 %v7419, 1.0
      %v7586 = vadd.f32 %v7421, 1.0
      %v7587 = vadd.f32 %v7423, 1.0
      %v7588 = vadd.f32 %v7425, 1.0
      %v7589 = vadd.f32 %v7427, 1.0
      %v7590 = vadd.f32 %v7429, 1.0
      %v7591 = vadd.f32 %v7431, 1.0
      %v7592 = vadd.f32 %v7433, 1.0
      %v7593 = vadd.f32 %v7435, 1.0
      %v7594 = vadd.f32 %v7437, 1.0
      %v7595 = vadd.f32 %v7439, 1.0
      %v7596 = vadd.f32 %v7441, 1.0
      %v7597 = vadd.f32 %v7443, 1.0
      %v7598 = vadd.f32 %v7445, 1.0
      %v7599 = vadd.f32 %v7447, 1.0
      %v7600 = vadd.f32 %v7449, 1.0
      %v7601 = vadd.f32 %v7451, 1.0
      %v7602 = vadd.f32 %v7453, 1.0
      %v7603 = vadd.f32 %v7455, 1.0
      %v7604 = vadd.f32 %v7457, 1.0
      %v7605 = vadd.f32 %v7459, 1.0
      %v7606 = vadd.f32 %v7461, 1.0
      %v7607 = vadd.f32 %v7463, 1.0
      %v7608 = vadd.f32 %v7465, 1.0
      %v7609 = vadd.f32 %v7467, 1.0
      %v7610 = vadd.f32 %v7469, 1.0
      %v7611 = vadd.f32 %v7471, 1.0
      %v7612 = vadd.f32 %v7473, 1.0
      %v7613 = vadd.f32 %v7475, 1.0
      %v7614 = vadd.f32 %v7477, 1.0
      %v7615 = vadd.f32 %v7479, 1.0
      %v7616 = vadd.f32 %v7481, 1.0
      %v7617 = vadd.f32 %v7483, 1.0
      %v7618 = vadd.f32 %v7485, 1.0
      %v7619 = vadd.f32 %v7487, 1.0
      %v7620 = vadd.f32 %v7489, 1.0
      %v7621 = vadd.f32 %v7491, 1.0
      %v7622 = vadd.f32 %v7493, 1.0
      %v7623 = vadd.f32 %v7495, 1.0
      %v7624 = vrcp.pop %v7496
      %v7625 = vrcp.pop %v7497
      %v7626 = vrcp.pop %v7498
      %v7627 = vrcp.pop %v7499
      %v7628 = vrcp.pop %v7500
      %v7629 = vrcp.pop %v7501
      %v7630 = vrcp.pop %v7502
      %v7631 = vrcp.pop %v7503
      %v7632 = vrcp.pop %v7504
      %v7633 = vrcp.pop %v7505
      %v7634 = vrcp.pop %v7506
      %v7635 = vrcp.pop %v7507
      %v7636 = vrcp.pop %v7508
      %v7637 = vrcp.pop %v7509
      %v7638 = vrcp.pop %v7510
      %v7639 = vrcp.pop %v7511
      %v7640 = vrcp.pop %v7512
      %v7641 = vrcp.pop %v7513
      %v7642 = vrcp.pop %v7514
      %v7643 = vrcp.pop %v7515
      %v7644 = vrcp.pop %v7516
      %v7645 = vrcp.pop %v7517
      %v7646 = vrcp.pop %v7518
      %v7647 = vrcp.pop %v7519
      %v7648 = vrcp.pop %v7520
      %v7649 = vrcp.pop %v7521
      %v7650 = vrcp.pop %v7522
      %v7651 = vrcp.pop %v7523
      %v7652 = vrcp.pop %v7524
      %v7653 = vrcp.pop %v7525
      %v7654 = vrcp.pop %v7526
      %v7655 = vrcp.pop %v7527
      %v7656 = vrcp.pop %v7528
      %v7657 = vrcp.pop %v7529
      %v7658 = vrcp.pop %v7530
      %v7659 = vrcp.pop %v7531
      %v7660 = vrcp.pop %v7532
      %v7661 = vrcp.pop %v7533
      %v7662 = vrcp.pop %v7534
      %v7663 = vrcp.pop %v7535
      %v7664 = vrcp.pop %v7536
      %v7665 = vrcp.pop %v7537
      %v7666 = vrcp.pop %v7538
      %v7667 = vrcp.pop %v7539
      %v7668 = vrcp.pop %v7540
      %v7669 = vrcp.pop %v7541
      %v7670 = vrcp.pop %v7542
      %v7671 = vrcp.pop %v7543
      %v7672 = vrcp.pop %v7544
      %v7673 = vrcp.pop %v7545
      %v7674 = vrcp.pop %v7546
      %v7675 = vrcp.pop %v7547
      %v7676 = vrcp.pop %v7548
      %v7677 = vrcp.pop %v7549
      %v7678 = vrcp.pop %v7550
      %v7679 = vrcp.pop %v7551
      %v7680 = vrcp.pop %v7552
      %v7681 = vrcp.pop %v7553
      %v7682 = vrcp.pop %v7554
      %v7683 = vrcp.pop %v7555
      %v7684 = vrcp.pop %v7556
      %v7685 = vrcp.pop %v7557
      %v7686 = vrcp.pop %v7558
      %v7687 = vrcp.pop %v7559
      %v7688 = vrcp.pop %v7560
      %v7689 = vrcp.pop %v7561
      %v7690 = vrcp.pop %v7562
      %v7691 = vrcp.pop %v7563
      %v7692 = vrcp.pop %v7564
      %v7693 = vrcp.pop %v7565
      %v7694 = vrcp.pop %v7566
      %v7695 = vrcp.pop %v7567
      %v7696 = vrcp.pop %v7568
      %v7697 = vrcp.pop %v7569
      %v7698 = vrcp.pop %v7570
      %v7699 = vrcp.pop %v7571
      %v7700 = vrcp.pop %v7572
      %v7701 = vrcp.pop %v7573
      %v7702 = vrcp.pop %v7574
      %v7703 = vrcp.pop %v7575
      %v7704 = vrcp.pop %v7576
      %v7705 = vrcp.pop %v7577
      %v7706 = vrcp.pop %v7578
      %v7707 = vrcp.pop %v7579
      %v7708 = vrcp.pop %v7580
      %v7709 = vrcp.pop %v7581
      %v7710 = vrcp.pop %v7582
      %v7711 = vrcp.pop %v7583
      %v7712 = vrcp.pop %v7584
      %v7713 = vrcp.pop %v7585
      %v7714 = vrcp.pop %v7586
      %v7715 = vrcp.pop %v7587
      %v7716 = vrcp.pop %v7588
      %v7717 = vrcp.pop %v7589
      %v7718 = vrcp.pop %v7590
      %v7719 = vrcp.pop %v7591
      %v7720 = vrcp.pop %v7592
      %v7721 = vrcp.pop %v7593
      %v7722 = vrcp.pop %v7594
      %v7723 = vrcp.pop %v7595
      %v7724 = vrcp.pop %v7596
      %v7725 = vrcp.pop %v7597
      %v7726 = vrcp.pop %v7598
      %v7727 = vrcp.pop %v7599
      %v7728 = vrcp.pop %v7600
      %v7729 = vrcp.pop %v7601
      %v7730 = vrcp.pop %v7602
      %v7731 = vrcp.pop %v7603
      %v7732 = vrcp.pop %v7604
      %v7733 = vrcp.pop %v7605
      %v7734 = vrcp.pop %v7606
      %v7735 = vrcp.pop %v7607
      %v7736 = vrcp.pop %v7608
      %v7737 = vrcp.pop %v7609
      %v7738 = vrcp.pop %v7610
      %v7739 = vrcp.pop %v7611
      %v7740 = vrcp.pop %v7612
      %v7741 = vrcp.pop %v7613
      %v7742 = vrcp.pop %v7614
      %v7743 = vrcp.pop %v7615
      %v7744 = vrcp.pop %v7616
      %v7745 = vrcp.pop %v7617
      %v7746 = vrcp.pop %v7618
      %v7747 = vrcp.pop %v7619
      %v7748 = vrcp.pop %v7620
      %v7749 = vrcp.pop %v7621
      %v7750 = vrcp.pop %v7622
      %v7751 = vrcp.pop %v7623
      %v7752 = vmul.f32 %v6984, %v7624
      %v7753 = vmul.f32 %v6985, %v7625
      %v7754 = vmul.f32 %v6986, %v7626
      %v7755 = vmul.f32 %v6987, %v7627
      %v7756 = vmul.f32 %v6988, %v7628
      %v7757 = vmul.f32 %v6989, %v7629
      %v7758 = vmul.f32 %v6990, %v7630
      %v7759 = vmul.f32 %v6991, %v7631
      %v7760 = vmul.f32 %v6992, %v7632
      %v7761 = vmul.f32 %v6993, %v7633
      %v7762 = vmul.f32 %v6994, %v7634
      %v7763 = vmul.f32 %v6995, %v7635
      %v7764 = vmul.f32 %v6996, %v7636
      %v7765 = vmul.f32 %v6997, %v7637
      %v7766 = vmul.f32 %v6998, %v7638
      %v7767 = vmul.f32 %v6999, %v7639
      %v7768 = vmul.f32 %v7000, %v7640
      %v7769 = vmul.f32 %v7001, %v7641
      %v7770 = vmul.f32 %v7002, %v7642
      %v7771 = vmul.f32 %v7003, %v7643
      %v7772 = vmul.f32 %v7004, %v7644
      %v7773 = vmul.f32 %v7005, %v7645
      %v7774 = vmul.f32 %v7006, %v7646
      %v7775 = vmul.f32 %v7007, %v7647
      %v7776 = vmul.f32 %v7008, %v7648
      %v7777 = vmul.f32 %v7009, %v7649
      %v7778 = vmul.f32 %v7010, %v7650
      %v7779 = vmul.f32 %v7011, %v7651
      %v7780 = vmul.f32 %v7012, %v7652
      %v7781 = vmul.f32 %v7013, %v7653
      %v7782 = vmul.f32 %v7014, %v7654
      %v7783 = vmul.f32 %v7015, %v7655
      %v7784 = vmul.f32 %v7016, %v7656
      %v7785 = vmul.f32 %v7017, %v7657
      %v7786 = vmul.f32 %v7018, %v7658
      %v7787 = vmul.f32 %v7019, %v7659
      %v7788 = vmul.f32 %v7020, %v7660
      %v7789 = vmul.f32 %v7021, %v7661
      %v7790 = vmul.f32 %v7022, %v7662
      %v7791 = vmul.f32 %v7023, %v7663
      %v7792 = vmul.f32 %v7024, %v7664
      %v7793 = vmul.f32 %v7025, %v7665
      %v7794 = vmul.f32 %v7026, %v7666
      %v7795 = vmul.f32 %v7027, %v7667
      %v7796 = vmul.f32 %v7028, %v7668
      %v7797 = vmul.f32 %v7029, %v7669
      %v7798 = vmul.f32 %v7030, %v7670
      %v7799 = vmul.f32 %v7031, %v7671
      %v7800 = vmul.f32 %v7032, %v7672
      %v7801 = vmul.f32 %v7033, %v7673
      %v7802 = vmul.f32 %v7034, %v7674
      %v7803 = vmul.f32 %v7035, %v7675
      %v7804 = vmul.f32 %v7036, %v7676
      %v7805 = vmul.f32 %v7037, %v7677
      %v7806 = vmul.f32 %v7038, %v7678
      %v7807 = vmul.f32 %v7039, %v7679
      %v7808 = vmul.f32 %v7040, %v7680
      %v7809 = vmul.f32 %v7041, %v7681
      %v7810 = vmul.f32 %v7042, %v7682
      %v7811 = vmul.f32 %v7043, %v7683
      %v7812 = vmul.f32 %v7044, %v7684
      %v7813 = vmul.f32 %v7045, %v7685
      %v7814 = vmul.f32 %v7046, %v7686
      %v7815 = vmul.f32 %v7047, %v7687
      %v7816 = vmul.f32 %v7048, %v7688
      %v7817 = vmul.f32 %v7049, %v7689
      %v7818 = vmul.f32 %v7050, %v7690
      %v7819 = vmul.f32 %v7051, %v7691
      %v7820 = vmul.f32 %v7052, %v7692
      %v7821 = vmul.f32 %v7053, %v7693
      %v7822 = vmul.f32 %v7054, %v7694
      %v7823 = vmul.f32 %v7055, %v7695
      %v7824 = vmul.f32 %v7056, %v7696
      %v7825 = vmul.f32 %v7057, %v7697
      %v7826 = vmul.f32 %v7058, %v7698
      %v7827 = vmul.f32 %v7059, %v7699
      %v7828 = vmul.f32 %v7060, %v7700
      %v7829 = vmul.f32 %v7061, %v7701
      %v7830 = vmul.f32 %v7062, %v7702
      %v7831 = vmul.f32 %v7063, %v7703
      %v7832 = vmul.f32 %v7064, %v7704
      %v7833 = vmul.f32 %v7065, %v7705
      %v7834 = vmul.f32 %v7066, %v7706
      %v7835 = vmul.f32 %v7067, %v7707
      %v7836 = vmul.f32 %v7068, %v7708
      %v7837 = vmul.f32 %v7069, %v7709
      %v7838 = vmul.f32 %v7070, %v7710
      %v7839 = vmul.f32 %v7071, %v7711
      %v7840 = vmul.f32 %v7072, %v7712
      %v7841 = vmul.f32 %v7073, %v7713
      %v7842 = vmul.f32 %v7074, %v7714
      %v7843 = vmul.f32 %v7075, %v7715
      %v7844 = vmul.f32 %v7076, %v7716
      %v7845 = vmul.f32 %v7077, %v7717
      %v7846 = vmul.f32 %v7078, %v7718
      %v7847 = vmul.f32 %v7079, %v7719
      %v7848 = vmul.f32 %v7080, %v7720
      %v7849 = vmul.f32 %v7081, %v7721
      %v7850 = vmul.f32 %v7082, %v7722
      %v7851 = vmul.f32 %v7083, %v7723
      %v7852 = vmul.f32 %v7084, %v7724
      %v7853 = vmul.f32 %v7085, %v7725
      %v7854 = vmul.f32 %v7086, %v7726
      %v7855 = vmul.f32 %v7087, %v7727
      %v7856 = vmul.f32 %v7088, %v7728
      %v7857 = vmul.f32 %v7089, %v7729
      %v7858 = vmul.f32 %v7090, %v7730
      %v7859 = vmul.f32 %v7091, %v7731
      %v7860 = vmul.f32 %v7092, %v7732
      %v7861 = vmul.f32 %v7093, %v7733
      %v7862 = vmul.f32 %v7094, %v7734
      %v7863 = vmul.f32 %v7095, %v7735
      %v7864 = vmul.f32 %v7096, %v7736
      %v7865 = vmul.f32 %v7097, %v7737
      %v7866 = vmul.f32 %v7098, %v7738
      %v7867 = vmul.f32 %v7099, %v7739
      %v7868 = vmul.f32 %v7100, %v7740
      %v7869 = vmul.f32 %v7101, %v7741
      %v7870 = vmul.f32 %v7102, %v7742
      %v7871 = vmul.f32 %v7103, %v7743
      %v7872 = vmul.f32 %v7104, %v7744
      %v7873 = vmul.f32 %v7105, %v7745
      %v7874 = vmul.f32 %v7106, %v7746
      %v7875 = vmul.f32 %v7107, %v7747
      %v7876 = vmul.f32 %v7108, %v7748
      %v7877 = vmul.f32 %v7109, %v7749
      %v7878 = vmul.f32 %v7110, %v7750
      %v7879 = vmul.f32 %v7111, %v7751
      %v7880 = vpack.c.bf16 %v7756, %v7752
      %v7881 = vpack.c.bf16 %v7757, %v7753
      %v7882 = vpack.c.bf16 %v7758, %v7754
      %v7883 = vpack.c.bf16 %v7759, %v7755
      %v7884 = vpack.c.bf16 %v7764, %v7760
      %v7885 = vpack.c.bf16 %v7765, %v7761
      %v7886 = vpack.c.bf16 %v7766, %v7762
      %v7887 = vpack.c.bf16 %v7767, %v7763
      %v7888 = vpack.c.bf16 %v7772, %v7768
      %v7889 = vpack.c.bf16 %v7773, %v7769
      %v7890 = vpack.c.bf16 %v7774, %v7770
      %v7891 = vpack.c.bf16 %v7775, %v7771
      %v7892 = vpack.c.bf16 %v7780, %v7776
      %v7893 = vpack.c.bf16 %v7781, %v7777
      %v7894 = vpack.c.bf16 %v7782, %v7778
      %v7895 = vpack.c.bf16 %v7783, %v7779
      %v7896 = vpack.c.bf16 %v7788, %v7784
      %v7897 = vpack.c.bf16 %v7789, %v7785
      %v7898 = vpack.c.bf16 %v7790, %v7786
      %v7899 = vpack.c.bf16 %v7791, %v7787
      %v7900 = vpack.c.bf16 %v7796, %v7792
      %v7901 = vpack.c.bf16 %v7797, %v7793
      %v7902 = vpack.c.bf16 %v7798, %v7794
      %v7903 = vpack.c.bf16 %v7799, %v7795
      %v7904 = vpack.c.bf16 %v7804, %v7800
      %v7905 = vpack.c.bf16 %v7805, %v7801
      %v7906 = vpack.c.bf16 %v7806, %v7802
      %v7907 = vpack.c.bf16 %v7807, %v7803
      %v7908 = vpack.c.bf16 %v7812, %v7808
      %v7909 = vpack.c.bf16 %v7813, %v7809
      %v7910 = vpack.c.bf16 %v7814, %v7810
      %v7911 = vpack.c.bf16 %v7815, %v7811
      %v7912 = vpack.c.bf16 %v7820, %v7816
      %v7913 = vpack.c.bf16 %v7821, %v7817
      %v7914 = vpack.c.bf16 %v7822, %v7818
      %v7915 = vpack.c.bf16 %v7823, %v7819
      %v7916 = vpack.c.bf16 %v7828, %v7824
      %v7917 = vpack.c.bf16 %v7829, %v7825
      %v7918 = vpack.c.bf16 %v7830, %v7826
      %v7919 = vpack.c.bf16 %v7831, %v7827
      %v7920 = vpack.c.bf16 %v7836, %v7832
      %v7921 = vpack.c.bf16 %v7837, %v7833
      %v7922 = vpack.c.bf16 %v7838, %v7834
      %v7923 = vpack.c.bf16 %v7839, %v7835
      %v7924 = vpack.c.bf16 %v7844, %v7840
      %v7925 = vpack.c.bf16 %v7845, %v7841
      %v7926 = vpack.c.bf16 %v7846, %v7842
      %v7927 = vpack.c.bf16 %v7847, %v7843
      %v7928 = vpack.c.bf16 %v7852, %v7848
      %v7929 = vpack.c.bf16 %v7853, %v7849
      %v7930 = vpack.c.bf16 %v7854, %v7850
      %v7931 = vpack.c.bf16 %v7855, %v7851
      %v7932 = vpack.c.bf16 %v7860, %v7856
      %v7933 = vpack.c.bf16 %v7861, %v7857
      %v7934 = vpack.c.bf16 %v7862, %v7858
      %v7935 = vpack.c.bf16 %v7863, %v7859
      %v7936 = vpack.c.bf16 %v7868, %v7864
      %v7937 = vpack.c.bf16 %v7869, %v7865
      %v7938 = vpack.c.bf16 %v7870, %v7866
      %v7939 = vpack.c.bf16 %v7871, %v7867
      %v7940 = vpack.c.bf16 %v7876, %v7872
      %v7941 = vpack.c.bf16 %v7877, %v7873
      %v7942 = vpack.c.bf16 %v7878, %v7874
      %v7943 = vpack.c.bf16 %v7879, %v7875
      %v7944 = vld [vmem:[%s438] sm:$0xff]
      %v7945 = vld [vmem:[%s438 + $0x8] sm:$0xff]
      %v7946 = vld [vmem:[%s438 + $0x10] sm:$0xff]
      %v7947 = vld [vmem:[%s438 + $0x18] sm:$0xff]
      %v7948 = vld [vmem:[%s438 + $0x20] sm:$0xff]
      %v7949 = vld [vmem:[%s438 + $0x28] sm:$0xff]
      %v7950 = vld [vmem:[%s438 + $0x30] sm:$0xff]
      %v7951 = vld [vmem:[%s438 + $0x38] sm:$0xff]
      %v7952 = vld [vmem:[%s438 + $0x40] sm:$0xff]
      %v7953 = vld [vmem:[%s438 + $0x48] sm:$0xff]
      %v7954 = vld [vmem:[%s438 + $0x50] sm:$0xff]
      %v7955 = vld [vmem:[%s438 + $0x58] sm:$0xff]
      %v7956 = vld [vmem:[%s438 + $0x60] sm:$0xff]
      %v7957 = vld [vmem:[%s438 + $0x68] sm:$0xff]
      %v7958 = vld [vmem:[%s438 + $0x70] sm:$0xff]
      %v7959 = vld [vmem:[%s438 + $0x78] sm:$0xff]
      %v7960 = vld [vmem:[%s438 + $0x80] sm:$0xff]
      %v7961 = vld [vmem:[%s438 + $0x88] sm:$0xff]
      %v7962 = vld [vmem:[%s438 + $0x90] sm:$0xff]
      %v7963 = vld [vmem:[%s438 + $0x98] sm:$0xff]
      %v7964 = vld [vmem:[%s438 + $0xa0] sm:$0xff]
      %v7965 = vld [vmem:[%s438 + $0xa8] sm:$0xff]
      %v7966 = vld [vmem:[%s438 + $0xb0] sm:$0xff]
      %v7967 = vld [vmem:[%s438 + $0xb8] sm:$0xff]
      %v7968 = vld [vmem:[%s438 + $0xc0] sm:$0xff]
      %v7969 = vld [vmem:[%s438 + $0xc8] sm:$0xff]
      %v7970 = vld [vmem:[%s438 + $0xd0] sm:$0xff]
      %v7971 = vld [vmem:[%s438 + $0xd8] sm:$0xff]
      %v7972 = vld [vmem:[%s438 + $0xe0] sm:$0xff]
      %v7973 = vld [vmem:[%s438 + $0xe8] sm:$0xff]
      %v7974 = vld [vmem:[%s438 + $0xf0] sm:$0xff]
      %v7975 = vld [vmem:[%s438 + $0xf8] sm:$0xff]
      %v7976 = vld [vmem:[%s438 + $0x100] sm:$0xff]
      %v7977 = vld [vmem:[%s438 + $0x108] sm:$0xff]
      %v7978 = vld [vmem:[%s438 + $0x110] sm:$0xff]
      %v7979 = vld [vmem:[%s438 + $0x118] sm:$0xff]
      %v7980 = vld [vmem:[%s438 + $0x120] sm:$0xff]
      %v7981 = vld [vmem:[%s438 + $0x128] sm:$0xff]
      %v7982 = vld [vmem:[%s438 + $0x130] sm:$0xff]
      %v7983 = vld [vmem:[%s438 + $0x138] sm:$0xff]
      %v7984 = vld [vmem:[%s438 + $0x140] sm:$0xff]
      %v7985 = vld [vmem:[%s438 + $0x148] sm:$0xff]
      %v7986 = vld [vmem:[%s438 + $0x150] sm:$0xff]
      %v7987 = vld [vmem:[%s438 + $0x158] sm:$0xff]
      %v7988 = vld [vmem:[%s438 + $0x160] sm:$0xff]
      %v7989 = vld [vmem:[%s438 + $0x168] sm:$0xff]
      %v7990 = vld [vmem:[%s438 + $0x170] sm:$0xff]
      %v7991 = vld [vmem:[%s438 + $0x178] sm:$0xff]
      %v7992 = vld [vmem:[%s438 + $0x180] sm:$0xff]
      %v7993 = vld [vmem:[%s438 + $0x188] sm:$0xff]
      %v7994 = vld [vmem:[%s438 + $0x190] sm:$0xff]
      %v7995 = vld [vmem:[%s438 + $0x198] sm:$0xff]
      %v7996 = vld [vmem:[%s438 + $0x1a0] sm:$0xff]
      %v7997 = vld [vmem:[%s438 + $0x1a8] sm:$0xff]
      %v7998 = vld [vmem:[%s438 + $0x1b0] sm:$0xff]
      %v7999 = vld [vmem:[%s438 + $0x1b8] sm:$0xff]
      %v8000 = vld [vmem:[%s438 + $0x1c0] sm:$0xff]
      %v8001 = vld [vmem:[%s438 + $0x1c8] sm:$0xff]
      %v8002 = vld [vmem:[%s438 + $0x1d0] sm:$0xff]
      %v8003 = vld [vmem:[%s438 + $0x1d8] sm:$0xff]
      %v8004 = vld [vmem:[%s438 + $0x1e0] sm:$0xff]
      %v8005 = vld [vmem:[%s438 + $0x1e8] sm:$0xff]
      %v8006 = vld [vmem:[%s438 + $0x1f0] sm:$0xff]
      %v8007 = vld [vmem:[%s438 + $0x1f8] sm:$0xff]
      %v8072 = vunpack.c.l.b16 %v7944
      %v8073 = vunpack.c.h.b16 %v7944
      %v8074 = vunpack.c.l.b16 %v7945
      %v8075 = vunpack.c.h.b16 %v7945
      %v8076 = vunpack.c.l.b16 %v7946
      %v8077 = vunpack.c.h.b16 %v7946
      %v8078 = vunpack.c.l.b16 %v7947
      %v8079 = vunpack.c.h.b16 %v7947
      %v8080 = vunpack.c.l.b16 %v7948
      %v8081 = vunpack.c.h.b16 %v7948
      %v8082 = vunpack.c.l.b16 %v7949
      %v8083 = vunpack.c.h.b16 %v7949
      %v8084 = vunpack.c.l.b16 %v7950
      %v8085 = vunpack.c.h.b16 %v7950
      %v8086 = vunpack.c.l.b16 %v7951
      %v8087 = vunpack.c.h.b16 %v7951
      %v8088 = vunpack.c.l.b16 %v7952
      %v8089 = vunpack.c.h.b16 %v7952
      %v8090 = vunpack.c.l.b16 %v7953
      %v8091 = vunpack.c.h.b16 %v7953
      %v8092 = vunpack.c.l.b16 %v7954
      %v8093 = vunpack.c.h.b16 %v7954
      %v8094 = vunpack.c.l.b16 %v7955
      %v8095 = vunpack.c.h.b16 %v7955
      %v8096 = vunpack.c.l.b16 %v7956
      %v8097 = vunpack.c.h.b16 %v7956
      %v8098 = vunpack.c.l.b16 %v7957
      %v8099 = vunpack.c.h.b16 %v7957
      %v8100 = vunpack.c.l.b16 %v7958
      %v8101 = vunpack.c.h.b16 %v7958
      %v8102 = vunpack.c.l.b16 %v7959
      %v8103 = vunpack.c.h.b16 %v7959
      %v8104 = vunpack.c.l.b16 %v7960
      %v8105 = vunpack.c.h.b16 %v7960
      %v8106 = vunpack.c.l.b16 %v7961
      %v8107 = vunpack.c.h.b16 %v7961
      %v8108 = vunpack.c.l.b16 %v7962
      %v8109 = vunpack.c.h.b16 %v7962
      %v8110 = vunpack.c.l.b16 %v7963
      %v8111 = vunpack.c.h.b16 %v7963
      %v8112 = vunpack.c.l.b16 %v7964
      %v8113 = vunpack.c.h.b16 %v7964
      %v8114 = vunpack.c.l.b16 %v7965
      %v8115 = vunpack.c.h.b16 %v7965
      %v8116 = vunpack.c.l.b16 %v7966
      %v8117 = vunpack.c.h.b16 %v7966
      %v8118 = vunpack.c.l.b16 %v7967
      %v8119 = vunpack.c.h.b16 %v7967
      %v8120 = vunpack.c.l.b16 %v7968
      %v8121 = vunpack.c.h.b16 %v7968
      %v8122 = vunpack.c.l.b16 %v7969
      %v8123 = vunpack.c.h.b16 %v7969
      %v8124 = vunpack.c.l.b16 %v7970
      %v8125 = vunpack.c.h.b16 %v7970
      %v8126 = vunpack.c.l.b16 %v7971
      %v8127 = vunpack.c.h.b16 %v7971
      %v8128 = vunpack.c.l.b16 %v7972
      %v8129 = vunpack.c.h.b16 %v7972
      %v8130 = vunpack.c.l.b16 %v7973
      %v8131 = vunpack.c.h.b16 %v7973
      %v8132 = vunpack.c.l.b16 %v7974
      %v8133 = vunpack.c.h.b16 %v7974
      %v8134 = vunpack.c.l.b16 %v7975
      %v8135 = vunpack.c.h.b16 %v7975
      %v8136 = vunpack.c.l.b16 %v7976
      %v8137 = vunpack.c.h.b16 %v7976
      %v8138 = vunpack.c.l.b16 %v7977
      %v8139 = vunpack.c.h.b16 %v7977
      %v8140 = vunpack.c.l.b16 %v7978
      %v8141 = vunpack.c.h.b16 %v7978
      %v8142 = vunpack.c.l.b16 %v7979
      %v8143 = vunpack.c.h.b16 %v7979
      %v8144 = vunpack.c.l.b16 %v7980
      %v8145 = vunpack.c.h.b16 %v7980
      %v8146 = vunpack.c.l.b16 %v7981
      %v8147 = vunpack.c.h.b16 %v7981
      %v8148 = vunpack.c.l.b16 %v7982
      %v8149 = vunpack.c.h.b16 %v7982
      %v8150 = vunpack.c.l.b16 %v7983
      %v8151 = vunpack.c.h.b16 %v7983
      %v8152 = vunpack.c.l.b16 %v7984
      %v8153 = vunpack.c.h.b16 %v7984
      %v8154 = vunpack.c.l.b16 %v7985
      %v8155 = vunpack.c.h.b16 %v7985
      %v8156 = vunpack.c.l.b16 %v7986
      %v8157 = vunpack.c.h.b16 %v7986
      %v8158 = vunpack.c.l.b16 %v7987
      %v8159 = vunpack.c.h.b16 %v7987
      %v8160 = vunpack.c.l.b16 %v7988
      %v8161 = vunpack.c.h.b16 %v7988
      %v8162 = vunpack.c.l.b16 %v7989
      %v8163 = vunpack.c.h.b16 %v7989
      %v8164 = vunpack.c.l.b16 %v7990
      %v8165 = vunpack.c.h.b16 %v7990
      %v8166 = vunpack.c.l.b16 %v7991
      %v8167 = vunpack.c.h.b16 %v7991
      %v8168 = vunpack.c.l.b16 %v7992
      %v8169 = vunpack.c.h.b16 %v7992
      %v8170 = vunpack.c.l.b16 %v7993
      %v8171 = vunpack.c.h.b16 %v7993
      %v8172 = vunpack.c.l.b16 %v7994
      %v8173 = vunpack.c.h.b16 %v7994
      %v8174 = vunpack.c.l.b16 %v7995
      %v8175 = vunpack.c.h.b16 %v7995
      %v8176 = vunpack.c.l.b16 %v7996
      %v8177 = vunpack.c.h.b16 %v7996
      %v8178 = vunpack.c.l.b16 %v7997
      %v8179 = vunpack.c.h.b16 %v7997
      %v8180 = vunpack.c.l.b16 %v7998
      %v8181 = vunpack.c.h.b16 %v7998
      %v8182 = vunpack.c.l.b16 %v7999
      %v8183 = vunpack.c.h.b16 %v7999
      %v8184 = vunpack.c.l.b16 %v8000
      %v8185 = vunpack.c.h.b16 %v8000
      %v8186 = vunpack.c.l.b16 %v8001
      %v8187 = vunpack.c.h.b16 %v8001
      %v8188 = vunpack.c.l.b16 %v8002
      %v8189 = vunpack.c.h.b16 %v8002
      %v8190 = vunpack.c.l.b16 %v8003
      %v8191 = vunpack.c.h.b16 %v8003
      %v8192 = vunpack.c.l.b16 %v8004
      %v8193 = vunpack.c.h.b16 %v8004
      %v8194 = vunpack.c.l.b16 %v8005
      %v8195 = vunpack.c.h.b16 %v8005
      %v8196 = vunpack.c.l.b16 %v8006
      %v8197 = vunpack.c.h.b16 %v8006
      %v8198 = vunpack.c.l.b16 %v8007
      %v8199 = vunpack.c.h.b16 %v8007
      %v8200 = vpack.c.b16 %v8074, %v8072
      %v8201 = vpack.c.b16 %v8075, %v8073
      %v8202 = vpack.c.b16 %v8078, %v8076
      %v8203 = vpack.c.b16 %v8079, %v8077
      %v8204 = vpack.c.b16 %v8082, %v8080
      %v8205 = vpack.c.b16 %v8083, %v8081
      %v8206 = vpack.c.b16 %v8086, %v8084
      %v8207 = vpack.c.b16 %v8087, %v8085
      %v8208 = vpack.c.b16 %v8090, %v8088
      %v8209 = vpack.c.b16 %v8091, %v8089
      %v8210 = vpack.c.b16 %v8094, %v8092
      %v8211 = vpack.c.b16 %v8095, %v8093
      %v8212 = vpack.c.b16 %v8098, %v8096
      %v8213 = vpack.c.b16 %v8099, %v8097
      %v8214 = vpack.c.b16 %v8102, %v8100
      %v8215 = vpack.c.b16 %v8103, %v8101
      %v8216 = vpack.c.b16 %v8106, %v8104
      %v8217 = vpack.c.b16 %v8107, %v8105
      %v8218 = vpack.c.b16 %v8110, %v8108
      %v8219 = vpack.c.b16 %v8111, %v8109
      %v8220 = vpack.c.b16 %v8114, %v8112
      %v8221 = vpack.c.b16 %v8115, %v8113
      %v8222 = vpack.c.b16 %v8118, %v8116
      %v8223 = vpack.c.b16 %v8119, %v8117
      %v8224 = vpack.c.b16 %v8122, %v8120
      %v8225 = vpack.c.b16 %v8123, %v8121
      %v8226 = vpack.c.b16 %v8126, %v8124
      %v8227 = vpack.c.b16 %v8127, %v8125
      %v8228 = vpack.c.b16 %v8130, %v8128
      %v8229 = vpack.c.b16 %v8131, %v8129
      %v8230 = vpack.c.b16 %v8134, %v8132
      %v8231 = vpack.c.b16 %v8135, %v8133
      %v8232 = vpack.c.b16 %v8138, %v8136
      %v8233 = vpack.c.b16 %v8139, %v8137
      %v8234 = vpack.c.b16 %v8142, %v8140
      %v8235 = vpack.c.b16 %v8143, %v8141
      %v8236 = vpack.c.b16 %v8146, %v8144
      %v8237 = vpack.c.b16 %v8147, %v8145
      %v8238 = vpack.c.b16 %v8150, %v8148
      %v8239 = vpack.c.b16 %v8151, %v8149
      %v8240 = vpack.c.b16 %v8154, %v8152
      %v8241 = vpack.c.b16 %v8155, %v8153
      %v8242 = vpack.c.b16 %v8158, %v8156
      %v8243 = vpack.c.b16 %v8159, %v8157
      %v8244 = vpack.c.b16 %v8162, %v8160
      %v8245 = vpack.c.b16 %v8163, %v8161
      %v8246 = vpack.c.b16 %v8166, %v8164
      %v8247 = vpack.c.b16 %v8167, %v8165
      %v8248 = vpack.c.b16 %v8170, %v8168
      %v8249 = vpack.c.b16 %v8171, %v8169
      %v8250 = vpack.c.b16 %v8174, %v8172
      %v8251 = vpack.c.b16 %v8175, %v8173
      %v8252 = vpack.c.b16 %v8178, %v8176
      %v8253 = vpack.c.b16 %v8179, %v8177
      %v8254 = vpack.c.b16 %v8182, %v8180
      %v8255 = vpack.c.b16 %v8183, %v8181
      %v8256 = vpack.c.b16 %v8186, %v8184
      %v8257 = vpack.c.b16 %v8187, %v8185
      %v8258 = vpack.c.b16 %v8190, %v8188
      %v8259 = vpack.c.b16 %v8191, %v8189
      %v8260 = vpack.c.b16 %v8194, %v8192
      %v8261 = vpack.c.b16 %v8195, %v8193
      %v8262 = vpack.c.b16 %v8198, %v8196
      %v8263 = vpack.c.b16 %v8199, %v8197
      %8328 = vmatprep.subr.bf16.mxu0 %v8201
      %8329 = vmatpush1.bf16.msra.mxu0 %v8200
      %8330 = vmatprep.subr.bf16.mxu0 %v8203
      %8331 = vmatpush1.bf16.msra.mxu0 %v8202
      %8332 = vmatprep.subr.bf16.mxu0 %v8205
      %8333 = vmatpush1.bf16.msra.mxu0 %v8204
      %8334 = vmatprep.subr.bf16.mxu0 %v8207
      %8335 = vmatpush1.bf16.msra.mxu0 %v8206
      %8336 = vmatprep.subr.bf16.mxu0 %v8209
      %8337 = vmatpush1.bf16.msra.mxu0 %v8208
      %8338 = vmatprep.subr.bf16.mxu0 %v8211
      %8339 = vmatpush1.bf16.msra.mxu0 %v8210
      %8340 = vmatprep.subr.bf16.mxu0 %v8213
      %8341 = vmatpush1.bf16.msra.mxu0 %v8212
      %8342 = vmatprep.subr.bf16.mxu0 %v8215
      %8343 = vmatpush1.bf16.msra.mxu0 %v8214
      %8344 = vmatprep.subr.bf16.mxu0 %v8217
      %8345 = vmatpush1.bf16.msra.mxu0 %v8216
      %8346 = vmatprep.subr.bf16.mxu0 %v8219
      %8347 = vmatpush1.bf16.msra.mxu0 %v8218
      %8348 = vmatprep.subr.bf16.mxu0 %v8221
      %8349 = vmatpush1.bf16.msra.mxu0 %v8220
      %8350 = vmatprep.subr.bf16.mxu0 %v8223
      %8351 = vmatpush1.bf16.msra.mxu0 %v8222
      %8352 = vmatprep.subr.bf16.mxu0 %v8225
      %8353 = vmatpush1.bf16.msra.mxu0 %v8224
      %8354 = vmatprep.subr.bf16.mxu0 %v8227
      %8355 = vmatpush1.bf16.msra.mxu0 %v8226
      %8356 = vmatprep.subr.bf16.mxu0 %v8229
      %8357 = vmatpush1.bf16.msra.mxu0 %v8228
      %8358 = vmatprep.subr.bf16.mxu0 %v8231
      %8359 = vmatpush1.bf16.msra.mxu0 %v8230
      %8360 = vmatprep.mubr.bf16.mxu0 %v7881
      %8361 = vmatmul.mubr.bf16.gmra.mrb[0].mxu0 %v7880
      %v8362 = vpop.f32.mrb[0].mxu0
      %v8363 = vadd.f32 0.0, %v8362
      %v8364 = vpop.f32.mrb[0].mxu0
      %v8365 = vadd.f32 0.0, %v8364
      %v8366 = vpop.f32.mrb[0].mxu0
      %v8367 = vadd.f32 0.0, %v8366
      %v8368 = vpop.f32.mrb[0].mxu0
      %v8369 = vadd.f32 0.0, %v8368
      %8370 = vmatprep.mubr.bf16.mxu0 %v7885
      %8371 = vmatmul.mubr.bf16.gmra.mrb[0].mxu0 %v7884
      %v8372 = vpop.f32.mrb[0].mxu0
      %v8373 = vadd.f32 0.0, %v8372
      %v8374 = vpop.f32.mrb[0].mxu0
      %v8375 = vadd.f32 0.0, %v8374
      %v8376 = vpop.f32.mrb[0].mxu0
      %v8377 = vadd.f32 0.0, %v8376
      %v8378 = vpop.f32.mrb[0].mxu0
      %v8379 = vadd.f32 0.0, %v8378
      %8380 = vmatprep.mubr.bf16.mxu0 %v7889
      %8381 = vmatmul.mubr.bf16.gmra.mrb[0].mxu0 %v7888
      %v8382 = vpop.f32.mrb[0].mxu0
      %v8383 = vadd.f32 0.0, %v8382
      %v8384 = vpop.f32.mrb[0].mxu0
      %v8385 = vadd.f32 0.0, %v8384
      %v8386 = vpop.f32.mrb[0].mxu0
      %v8387 = vadd.f32 0.0, %v8386
      %v8388 = vpop.f32.mrb[0].mxu0
      %v8389 = vadd.f32 0.0, %v8388
      %8390 = vmatprep.mubr.bf16.mxu0 %v7893
      %8391 = vmatmul.mubr.bf16.gmra.mrb[0].mxu0 %v7892
      %v8392 = vpop.f32.mrb[0].mxu0
      %v8393 = vadd.f32 0.0, %v8392
      %v8394 = vpop.f32.mrb[0].mxu0
      %v8395 = vadd.f32 0.0, %v8394
      %v8396 = vpop.f32.mrb[0].mxu0
      %v8397 = vadd.f32 0.0, %v8396
      %v8398 = vpop.f32.mrb[0].mxu0
      %v8399 = vadd.f32 0.0, %v8398
      %8400 = vmatprep.mubr.bf16.mxu0 %v7897
      %8401 = vmatmul.mubr.bf16.gmra.mrb[0].mxu0 %v7896
      %v8402 = vpop.f32.mrb[0].mxu0
      %v8403 = vadd.f32 0.0, %v8402
      %v8404 = vpop.f32.mrb[0].mxu0
      %v8405 = vadd.f32 0.0, %v8404
      %v8406 = vpop.f32.mrb[0].mxu0
      %v8407 = vadd.f32 0.0, %v8406
      %v8408 = vpop.f32.mrb[0].mxu0
      %v8409 = vadd.f32 0.0, %v8408
      %8410 = vmatprep.mubr.bf16.mxu0 %v7901
      %8411 = vmatmul.mubr.bf16.gmra.mrb[0].mxu0 %v7900
      %v8412 = vpop.f32.mrb[0].mxu0
      %v8413 = vadd.f32 0.0, %v8412
      %v8414 = vpop.f32.mrb[0].mxu0
      %v8415 = vadd.f32 0.0, %v8414
      %v8416 = vpop.f32.mrb[0].mxu0
      %v8417 = vadd.f32 0.0, %v8416
      %v8418 = vpop.f32.mrb[0].mxu0
      %v8419 = vadd.f32 0.0, %v8418
      %8420 = vmatprep.mubr.bf16.mxu0 %v7905
      %8421 = vmatmul.mubr.bf16.gmra.mrb[0].mxu0 %v7904
      %v8422 = vpop.f32.mrb[0].mxu0
      %v8423 = vadd.f32 0.0, %v8422
      %v8424 = vpop.f32.mrb[0].mxu0
      %v8425 = vadd.f32 0.0, %v8424
      %v8426 = vpop.f32.mrb[0].mxu0
      %v8427 = vadd.f32 0.0, %v8426
      %v8428 = vpop.f32.mrb[0].mxu0
      %v8429 = vadd.f32 0.0, %v8428
      %8430 = vmatprep.mubr.bf16.mxu0 %v7909
      %8431 = vmatmul.mubr.bf16.gmra.mrb[0].mxu0 %v7908
      %v8432 = vpop.f32.mrb[0].mxu0
      %v8433 = vadd.f32 0.0, %v8432
      %v8434 = vpop.f32.mrb[0].mxu0
      %v8435 = vadd.f32 0.0, %v8434
      %v8436 = vpop.f32.mrb[0].mxu0
      %v8437 = vadd.f32 0.0, %v8436
      %v8438 = vpop.f32.mrb[0].mxu0
      %v8439 = vadd.f32 0.0, %v8438
      %8440 = vmatprep.mubr.bf16.mxu0 %v7913
      %8441 = vmatmul.mubr.bf16.gmra.mrb[0].mxu0 %v7912
      %v8442 = vpop.f32.mrb[0].mxu0
      %v8443 = vadd.f32 0.0, %v8442
      %v8444 = vpop.f32.mrb[0].mxu0
      %v8445 = vadd.f32 0.0, %v8444
      %v8446 = vpop.f32.mrb[0].mxu0
      %v8447 = vadd.f32 0.0, %v8446
      %v8448 = vpop.f32.mrb[0].mxu0
      %v8449 = vadd.f32 0.0, %v8448
      %8450 = vmatprep.mubr.bf16.mxu0 %v7917
      %8451 = vmatmul.mubr.bf16.gmra.mrb[0].mxu0 %v7916
      %v8452 = vpop.f32.mrb[0].mxu0
      %v8453 = vadd.f32 0.0, %v8452
      %v8454 = vpop.f32.mrb[0].mxu0
      %v8455 = vadd.f32 0.0, %v8454
      %v8456 = vpop.f32.mrb[0].mxu0
      %v8457 = vadd.f32 0.0, %v8456
      %v8458 = vpop.f32.mrb[0].mxu0
      %v8459 = vadd.f32 0.0, %v8458
      %8460 = vmatprep.mubr.bf16.mxu0 %v7921
      %8461 = vmatmul.mubr.bf16.gmra.mrb[0].mxu0 %v7920
      %v8462 = vpop.f32.mrb[0].mxu0
      %v8463 = vadd.f32 0.0, %v8462
      %v8464 = vpop.f32.mrb[0].mxu0
      %v8465 = vadd.f32 0.0, %v8464
      %v8466 = vpop.f32.mrb[0].mxu0
      %v8467 = vadd.f32 0.0, %v8466
      %v8468 = vpop.f32.mrb[0].mxu0
      %v8469 = vadd.f32 0.0, %v8468
      %8470 = vmatprep.mubr.bf16.mxu0 %v7925
      %8471 = vmatmul.mubr.bf16.gmra.mrb[0].mxu0 %v7924
      %v8472 = vpop.f32.mrb[0].mxu0
      %v8473 = vadd.f32 0.0, %v8472
      %v8474 = vpop.f32.mrb[0].mxu0
      %v8475 = vadd.f32 0.0, %v8474
      %v8476 = vpop.f32.mrb[0].mxu0
      %v8477 = vadd.f32 0.0, %v8476
      %v8478 = vpop.f32.mrb[0].mxu0
      %v8479 = vadd.f32 0.0, %v8478
      %8480 = vmatprep.mubr.bf16.mxu0 %v7929
      %8481 = vmatmul.mubr.bf16.gmra.mrb[0].mxu0 %v7928
      %v8482 = vpop.f32.mrb[0].mxu0
      %v8483 = vadd.f32 0.0, %v8482
      %v8484 = vpop.f32.mrb[0].mxu0
      %v8485 = vadd.f32 0.0, %v8484
      %v8486 = vpop.f32.mrb[0].mxu0
      %v8487 = vadd.f32 0.0, %v8486
      %v8488 = vpop.f32.mrb[0].mxu0
      %v8489 = vadd.f32 0.0, %v8488
      %8490 = vmatprep.mubr.bf16.mxu0 %v7933
      %8491 = vmatmul.mubr.bf16.gmra.mrb[0].mxu0 %v7932
      %v8492 = vpop.f32.mrb[0].mxu0
      %v8493 = vadd.f32 0.0, %v8492
      %v8494 = vpop.f32.mrb[0].mxu0
      %v8495 = vadd.f32 0.0, %v8494
      %v8496 = vpop.f32.mrb[0].mxu0
      %v8497 = vadd.f32 0.0, %v8496
      %v8498 = vpop.f32.mrb[0].mxu0
      %v8499 = vadd.f32 0.0, %v8498
      %8500 = vmatprep.mubr.bf16.mxu0 %v7937
      %8501 = vmatmul.mubr.bf16.gmra.mrb[0].mxu0 %v7936
      %v8502 = vpop.f32.mrb[0].mxu0
      %v8503 = vadd.f32 0.0, %v8502
      %v8504 = vpop.f32.mrb[0].mxu0
      %v8505 = vadd.f32 0.0, %v8504
      %v8506 = vpop.f32.mrb[0].mxu0
      %v8507 = vadd.f32 0.0, %v8506
      %v8508 = vpop.f32.mrb[0].mxu0
      %v8509 = vadd.f32 0.0, %v8508
      %8510 = vmatprep.mubr.bf16.mxu0 %v7941
      %8511 = vmatmul.mubr.bf16.gmra.mrb[0].mxu0 %v7940
      %v8512 = vpop.f32.mrb[0].mxu0
      %v8513 = vadd.f32 0.0, %v8512
      %v8514 = vpop.f32.mrb[0].mxu0
      %v8515 = vadd.f32 0.0, %v8514
      %v8516 = vpop.f32.mrb[0].mxu0
      %v8517 = vadd.f32 0.0, %v8516
      %v8518 = vpop.f32.mrb[0].mxu0
      %v8519 = vadd.f32 0.0, %v8518
      %8520 = vdwg.mxu0
      %8521 = vmatprep.subr.bf16.mxu0 %v8233
      %8522 = vmatpush1.bf16.msra.mxu0 %v8232
      %8523 = vmatprep.subr.bf16.mxu0 %v8235
      %8524 = vmatpush1.bf16.msra.mxu0 %v8234
      %8525 = vmatprep.subr.bf16.mxu0 %v8237
      %8526 = vmatpush1.bf16.msra.mxu0 %v8236
      %8527 = vmatprep.subr.bf16.mxu0 %v8239
      %8528 = vmatpush1.bf16.msra.mxu0 %v8238
      %8529 = vmatprep.subr.bf16.mxu0 %v8241
      %8530 = vmatpush1.bf16.msra.mxu0 %v8240
      %8531 = vmatprep.subr.bf16.mxu0 %v8243
      %8532 = vmatpush1.bf16.msra.mxu0 %v8242
      %8533 = vmatprep.subr.bf16.mxu0 %v8245
      %8534 = vmatpush1.bf16.msra.mxu0 %v8244
      %8535 = vmatprep.subr.bf16.mxu0 %v8247
      %8536 = vmatpush1.bf16.msra.mxu0 %v8246
      %8537 = vmatprep.subr.bf16.mxu0 %v8249
      %8538 = vmatpush1.bf16.msra.mxu0 %v8248
      %8539 = vmatprep.subr.bf16.mxu0 %v8251
      %8540 = vmatpush1.bf16.msra.mxu0 %v8250
      %8541 = vmatprep.subr.bf16.mxu0 %v8253
      %8542 = vmatpush1.bf16.msra.mxu0 %v8252
      %8543 = vmatprep.subr.bf16.mxu0 %v8255
      %8544 = vmatpush1.bf16.msra.mxu0 %v8254
      %8545 = vmatprep.subr.bf16.mxu0 %v8257
      %8546 = vmatpush1.bf16.msra.mxu0 %v8256
      %8547 = vmatprep.subr.bf16.mxu0 %v8259
      %8548 = vmatpush1.bf16.msra.mxu0 %v8258
      %8549 = vmatprep.subr.bf16.mxu0 %v8261
      %8550 = vmatpush1.bf16.msra.mxu0 %v8260
      %8551 = vmatprep.subr.bf16.mxu0 %v8263
      %8552 = vmatpush1.bf16.msra.mxu0 %v8262
      %8553 = vmatprep.mubr.bf16.mxu0 %v7883
      %8554 = vmatmul.mubr.bf16.gmra.mrb[0].mxu0 %v7882
      %v8555 = vpop.f32.mrb[0].mxu0
      %v8556 = vadd.f32 %v8363, %v8555
      %v8557 = vpop.f32.mrb[0].mxu0
      %v8558 = vadd.f32 %v8365, %v8557
      %v8559 = vpop.f32.mrb[0].mxu0
      %v8560 = vadd.f32 %v8367, %v8559
      %v8561 = vpop.f32.mrb[0].mxu0
      %v8562 = vadd.f32 %v8369, %v8561
      %8563 = vmatprep.mubr.bf16.mxu0 %v7887
      %8564 = vmatmul.mubr.bf16.gmra.mrb[0].mxu0 %v7886
      %v8565 = vpop.f32.mrb[0].mxu0
      %v8566 = vadd.f32 %v8373, %v8565
      %v8567 = vpop.f32.mrb[0].mxu0
      %v8568 = vadd.f32 %v8375, %v8567
      %v8569 = vpop.f32.mrb[0].mxu0
      %v8570 = vadd.f32 %v8377, %v8569
      %v8571 = vpop.f32.mrb[0].mxu0
      %v8572 = vadd.f32 %v8379, %v8571
      %8573 = vmatprep.mubr.bf16.mxu0 %v7891
      %8574 = vmatmul.mubr.bf16.gmra.mrb[0].mxu0 %v7890
      %v8575 = vpop.f32.mrb[0].mxu0
      %v8576 = vadd.f32 %v8383, %v8575
      %v8577 = vpop.f32.mrb[0].mxu0
      %v8578 = vadd.f32 %v8385, %v8577
      %v8579 = vpop.f32.mrb[0].mxu0
      %v8580 = vadd.f32 %v8387, %v8579
      %v8581 = vpop.f32.mrb[0].mxu0
      %v8582 = vadd.f32 %v8389, %v8581
      %8583 = vmatprep.mubr.bf16.mxu0 %v7895
      %8584 = vmatmul.mubr.bf16.gmra.mrb[0].mxu0 %v7894
      %v8585 = vpop.f32.mrb[0].mxu0
      %v8586 = vadd.f32 %v8393, %v8585
      %v8587 = vpop.f32.mrb[0].mxu0
      %v8588 = vadd.f32 %v8395, %v8587
      %v8589 = vpop.f32.mrb[0].mxu0
      %v8590 = vadd.f32 %v8397, %v8589
      %v8591 = vpop.f32.mrb[0].mxu0
      %v8592 = vadd.f32 %v8399, %v8591
      %8593 = vmatprep.mubr.bf16.mxu0 %v7899
      %8594 = vmatmul.mubr.bf16.gmra.mrb[0].mxu0 %v7898
      %v8595 = vpop.f32.mrb[0].mxu0
      %v8596 = vadd.f32 %v8403, %v8595
      %v8597 = vpop.f32.mrb[0].mxu0
      %v8598 = vadd.f32 %v8405, %v8597
      %v8599 = vpop.f32.mrb[0].mxu0
      %v8600 = vadd.f32 %v8407, %v8599
      %v8601 = vpop.f32.mrb[0].mxu0
      %v8602 = vadd.f32 %v8409, %v8601
      %8603 = vmatprep.mubr.bf16.mxu0 %v7903
      %8604 = vmatmul.mubr.bf16.gmra.mrb[0].mxu0 %v7902
      %v8605 = vpop.f32.mrb[0].mxu0
      %v8606 = vadd.f32 %v8413, %v8605
      %v8607 = vpop.f32.mrb[0].mxu0
      %v8608 = vadd.f32 %v8415, %v8607
      %v8609 = vpop.f32.mrb[0].mxu0
      %v8610 = vadd.f32 %v8417, %v8609
      %v8611 = vpop.f32.mrb[0].mxu0
      %v8612 = vadd.f32 %v8419, %v8611
      %8613 = vmatprep.mubr.bf16.mxu0 %v7907
      %8614 = vmatmul.mubr.bf16.gmra.mrb[0].mxu0 %v7906
      %v8615 = vpop.f32.mrb[0].mxu0
      %v8616 = vadd.f32 %v8423, %v8615
      %v8617 = vpop.f32.mrb[0].mxu0
      %v8618 = vadd.f32 %v8425, %v8617
      %v8619 = vpop.f32.mrb[0].mxu0
      %v8620 = vadd.f32 %v8427, %v8619
      %v8621 = vpop.f32.mrb[0].mxu0
      %v8622 = vadd.f32 %v8429, %v8621
      %8623 = vmatprep.mubr.bf16.mxu0 %v7911
      %8624 = vmatmul.mubr.bf16.gmra.mrb[0].mxu0 %v7910
      %v8625 = vpop.f32.mrb[0].mxu0
      %v8626 = vadd.f32 %v8433, %v8625
      %v8627 = vpop.f32.mrb[0].mxu0
      %v8628 = vadd.f32 %v8435, %v8627
      %v8629 = vpop.f32.mrb[0].mxu0
      %v8630 = vadd.f32 %v8437, %v8629
      %v8631 = vpop.f32.mrb[0].mxu0
      %v8632 = vadd.f32 %v8439, %v8631
      %8633 = vmatprep.mubr.bf16.mxu0 %v7915
      %8634 = vmatmul.mubr.bf16.gmra.mrb[0].mxu0 %v7914
      %v8635 = vpop.f32.mrb[0].mxu0
      %v8636 = vadd.f32 %v8443, %v8635
      %v8637 = vpop.f32.mrb[0].mxu0
      %v8638 = vadd.f32 %v8445, %v8637
      %v8639 = vpop.f32.mrb[0].mxu0
      %v8640 = vadd.f32 %v8447, %v8639
      %v8641 = vpop.f32.mrb[0].mxu0
      %v8642 = vadd.f32 %v8449, %v8641
      %8643 = vmatprep.mubr.bf16.mxu0 %v7919
      %8644 = vmatmul.mubr.bf16.gmra.mrb[0].mxu0 %v7918
      %v8645 = vpop.f32.mrb[0].mxu0
      %v8646 = vadd.f32 %v8453, %v8645
      %v8647 = vpop.f32.mrb[0].mxu0
      %v8648 = vadd.f32 %v8455, %v8647
      %v8649 = vpop.f32.mrb[0].mxu0
      %v8650 = vadd.f32 %v8457, %v8649
      %v8651 = vpop.f32.mrb[0].mxu0
      %v8652 = vadd.f32 %v8459, %v8651
      %8653 = vmatprep.mubr.bf16.mxu0 %v7923
      %8654 = vmatmul.mubr.bf16.gmra.mrb[0].mxu0 %v7922
      %v8655 = vpop.f32.mrb[0].mxu0
      %v8656 = vadd.f32 %v8463, %v8655
      %v8657 = vpop.f32.mrb[0].mxu0
      %v8658 = vadd.f32 %v8465, %v8657
      %v8659 = vpop.f32.mrb[0].mxu0
      %v8660 = vadd.f32 %v8467, %v8659
      %v8661 = vpop.f32.mrb[0].mxu0
      %v8662 = vadd.f32 %v8469, %v8661
      %8663 = vmatprep.mubr.bf16.mxu0 %v7927
      %8664 = vmatmul.mubr.bf16.gmra.mrb[0].mxu0 %v7926
      %v8665 = vpop.f32.mrb[0].mxu0
      %v8666 = vadd.f32 %v8473, %v8665
      %v8667 = vpop.f32.mrb[0].mxu0
      %v8668 = vadd.f32 %v8475, %v8667
      %v8669 = vpop.f32.mrb[0].mxu0
      %v8670 = vadd.f32 %v8477, %v8669
      %v8671 = vpop.f32.mrb[0].mxu0
      %v8672 = vadd.f32 %v8479, %v8671
      %8673 = vmatprep.mubr.bf16.mxu0 %v7931
      %8674 = vmatmul.mubr.bf16.gmra.mrb[0].mxu0 %v7930
      %v8675 = vpop.f32.mrb[0].mxu0
      %v8676 = vadd.f32 %v8483, %v8675
      %v8677 = vpop.f32.mrb[0].mxu0
      %v8678 = vadd.f32 %v8485, %v8677
      %v8679 = vpop.f32.mrb[0].mxu0
      %v8680 = vadd.f32 %v8487, %v8679
      %v8681 = vpop.f32.mrb[0].mxu0
      %v8682 = vadd.f32 %v8489, %v8681
      %8683 = vmatprep.mubr.bf16.mxu0 %v7935
      %8684 = vmatmul.mubr.bf16.gmra.mrb[0].mxu0 %v7934
      %v8685 = vpop.f32.mrb[0].mxu0
      %v8686 = vadd.f32 %v8493, %v8685
      %v8687 = vpop.f32.mrb[0].mxu0
      %v8688 = vadd.f32 %v8495, %v8687
      %v8689 = vpop.f32.mrb[0].mxu0
      %v8690 = vadd.f32 %v8497, %v8689
      %v8691 = vpop.f32.mrb[0].mxu0
      %v8692 = vadd.f32 %v8499, %v8691
      %8693 = vmatprep.mubr.bf16.mxu0 %v7939
      %8694 = vmatmul.mubr.bf16.gmra.mrb[0].mxu0 %v7938
      %v8695 = vpop.f32.mrb[0].mxu0
      %v8696 = vadd.f32 %v8503, %v8695
      %v8697 = vpop.f32.mrb[0].mxu0
      %v8698 = vadd.f32 %v8505, %v8697
      %v8699 = vpop.f32.mrb[0].mxu0
      %v8700 = vadd.f32 %v8507, %v8699
      %v8701 = vpop.f32.mrb[0].mxu0
      %v8702 = vadd.f32 %v8509, %v8701
      %8703 = vmatprep.mubr.bf16.mxu0 %v7943
      %8704 = vmatmul.mubr.bf16.gmra.mrb[0].mxu0 %v7942
      %v8705 = vpop.f32.mrb[0].mxu0
      %v8706 = vadd.f32 %v8513, %v8705
      %v8707 = vpop.f32.mrb[0].mxu0
      %v8708 = vadd.f32 %v8515, %v8707
      %v8709 = vpop.f32.mrb[0].mxu0
      %v8710 = vadd.f32 %v8517, %v8709
      %v8711 = vpop.f32.mrb[0].mxu0
      %v8712 = vadd.f32 %v8519, %v8711
      %8713 = vdwg.mxu0
      %v8714 = vadd.f32 %v4952, %v8556
      %v8715 = vadd.f32 %v4953, %v8558
      %v8716 = vadd.f32 %v4954, %v8560
      %v8717 = vadd.f32 %v4955, %v8562
      %v8718 = vadd.f32 %v4956, %v8566
      %v8719 = vadd.f32 %v4957, %v8568
      %v8720 = vadd.f32 %v4958, %v8570
      %v8721 = vadd.f32 %v4959, %v8572
      %v8722 = vadd.f32 %v4960, %v8576
      %v8723 = vadd.f32 %v4961, %v8578
      %v8724 = vadd.f32 %v4962, %v8580
      %v8725 = vadd.f32 %v4963, %v8582
      %v8726 = vadd.f32 %v4964, %v8586
      %v8727 = vadd.f32 %v4965, %v8588
      %v8728 = vadd.f32 %v4966, %v8590
      %v8729 = vadd.f32 %v4967, %v8592
      %v8730 = vadd.f32 %v4968, %v8596
      %v8731 = vadd.f32 %v4969, %v8598
      %v8732 = vadd.f32 %v4970, %v8600
      %v8733 = vadd.f32 %v4971, %v8602
      %v8734 = vadd.f32 %v4972, %v8606
      %v8735 = vadd.f32 %v4973, %v8608
      %v8736 = vadd.f32 %v4974, %v8610
      %v8737 = vadd.f32 %v4975, %v8612
      %v8738 = vadd.f32 %v4976, %v8616
      %v8739 = vadd.f32 %v4977, %v8618
      %v8740 = vadd.f32 %v4978, %v8620
      %v8741 = vadd.f32 %v4979, %v8622
      %v8742 = vadd.f32 %v4980, %v8626
      %v8743 = vadd.f32 %v4981, %v8628
      %v8744 = vadd.f32 %v4982, %v8630
      %v8745 = vadd.f32 %v4983, %v8632
      %v8746 = vadd.f32 %v4984, %v8636
      %v8747 = vadd.f32 %v4985, %v8638
      %v8748 = vadd.f32 %v4986, %v8640
      %v8749 = vadd.f32 %v4987, %v8642
      %v8750 = vadd.f32 %v4988, %v8646
      %v8751 = vadd.f32 %v4989, %v8648
      %v8752 = vadd.f32 %v4990, %v8650
      %v8753 = vadd.f32 %v4991, %v8652
      %v8754 = vadd.f32 %v4992, %v8656
      %v8755 = vadd.f32 %v4993, %v8658
      %v8756 = vadd.f32 %v4994, %v8660
      %v8757 = vadd.f32 %v4995, %v8662
      %v8758 = vadd.f32 %v4996, %v8666
      %v8759 = vadd.f32 %v4997, %v8668
      %v8760 = vadd.f32 %v4998, %v8670
      %v8761 = vadd.f32 %v4999, %v8672
      %v8762 = vadd.f32 %v5000, %v8676
      %v8763 = vadd.f32 %v5001, %v8678
      %v8764 = vadd.f32 %v5002, %v8680
      %v8765 = vadd.f32 %v5003, %v8682
      %v8766 = vadd.f32 %v5004, %v8686
      %v8767 = vadd.f32 %v5005, %v8688
      %v8768 = vadd.f32 %v5006, %v8690
      %v8769 = vadd.f32 %v5007, %v8692
      %v8770 = vadd.f32 %v5008, %v8696
      %v8771 = vadd.f32 %v5009, %v8698
      %v8772 = vadd.f32 %v5010, %v8700
      %v8773 = vadd.f32 %v5011, %v8702
      %v8774 = vadd.f32 %v5012, %v8706
      %v8775 = vadd.f32 %v5013, %v8708
      %v8776 = vadd.f32 %v5014, %v8710
      %v8777 = vadd.f32 %v5015, %v8712
      %8778 = vst [vmem:[#allocation2] sm:$0xff] %v8714
      %8779 = vst [vmem:[#allocation2 + $0x8] sm:$0xff] %v8715
      %8780 = vst [vmem:[#allocation2 + $0x10] sm:$0xff] %v8716
      %8781 = vst [vmem:[#allocation2 + $0x18] sm:$0xff] %v8717
      %8782 = vst [vmem:[#allocation2 + $0x20] sm:$0xff] %v8718
      %8783 = vst [vmem:[#allocation2 + $0x28] sm:$0xff] %v8719
      %8784 = vst [vmem:[#allocation2 + $0x30] sm:$0xff] %v8720
      %8785 = vst [vmem:[#allocation2 + $0x38] sm:$0xff] %v8721
      %8786 = vst [vmem:[#allocation2 + $0x40] sm:$0xff] %v8722
      %8787 = vst [vmem:[#allocation2 + $0x48] sm:$0xff] %v8723
      %8788 = vst [vmem:[#allocation2 + $0x50] sm:$0xff] %v8724
      %8789 = vst [vmem:[#allocation2 + $0x58] sm:$0xff] %v8725
      %8790 = vst [vmem:[#allocation2 + $0x60] sm:$0xff] %v8726
      %8791 = vst [vmem:[#allocation2 + $0x68] sm:$0xff] %v8727
      %8792 = vst [vmem:[#allocation2 + $0x70] sm:$0xff] %v8728
      %8793 = vst [vmem:[#allocation2 + $0x78] sm:$0xff] %v8729
      %8794 = vst [vmem:[#allocation2 + $0x80] sm:$0xff] %v8730
      %8795 = vst [vmem:[#allocation2 + $0x88] sm:$0xff] %v8731
      %8796 = vst [vmem:[#allocation2 + $0x90] sm:$0xff] %v8732
      %8797 = vst [vmem:[#allocation2 + $0x98] sm:$0xff] %v8733
      %8798 = vst [vmem:[#allocation2 + $0xa0] sm:$0xff] %v8734
      %8799 = vst [vmem:[#allocation2 + $0xa8] sm:$0xff] %v8735
      %8800 = vst [vmem:[#allocation2 + $0xb0] sm:$0xff] %v8736
      %8801 = vst [vmem:[#allocation2 + $0xb8] sm:$0xff] %v8737
      %8802 = vst [vmem:[#allocation2 + $0xc0] sm:$0xff] %v8738
      %8803 = vst [vmem:[#allocation2 + $0xc8] sm:$0xff] %v8739
      %8804 = vst [vmem:[#allocation2 + $0xd0] sm:$0xff] %v8740
      %8805 = vst [vmem:[#allocation2 + $0xd8] sm:$0xff] %v8741
      %8806 = vst [vmem:[#allocation2 + $0xe0] sm:$0xff] %v8742
      %8807 = vst [vmem:[#allocation2 + $0xe8] sm:$0xff] %v8743
      %8808 = vst [vmem:[#allocation2 + $0xf0] sm:$0xff] %v8744
      %8809 = vst [vmem:[#allocation2 + $0xf8] sm:$0xff] %v8745
      %8810 = vst [vmem:[#allocation2 + $0x100] sm:$0xff] %v8746
      %8811 = vst [vmem:[#allocation2 + $0x108] sm:$0xff] %v8747
      %8812 = vst [vmem:[#allocation2 + $0x110] sm:$0xff] %v8748
      %8813 = vst [vmem:[#allocation2 + $0x118] sm:$0xff] %v8749
      %8814 = vst [vmem:[#allocation2 + $0x120] sm:$0xff] %v8750
      %8815 = vst [vmem:[#allocation2 + $0x128] sm:$0xff] %v8751
      %8816 = vst [vmem:[#allocation2 + $0x130] sm:$0xff] %v8752
      %8817 = vst [vmem:[#allocation2 + $0x138] sm:$0xff] %v8753
      %8818 = vst [vmem:[#allocation2 + $0x140] sm:$0xff] %v8754
      %8819 = vst [vmem:[#allocation2 + $0x148] sm:$0xff] %v8755
      %8820 = vst [vmem:[#allocation2 + $0x150] sm:$0xff] %v8756
      %8821 = vst [vmem:[#allocation2 + $0x158] sm:$0xff] %v8757
      %8822 = vst [vmem:[#allocation2 + $0x160] sm:$0xff] %v8758
      %8823 = vst [vmem:[#allocation2 + $0x168] sm:$0xff] %v8759
      %8824 = vst [vmem:[#allocation2 + $0x170] sm:$0xff] %v8760
      %8825 = vst [vmem:[#allocation2 + $0x178] sm:$0xff] %v8761
      %8826 = vst [vmem:[#allocation2 + $0x180] sm:$0xff] %v8762
      %8827 = vst [vmem:[#allocation2 + $0x188] sm:$0xff] %v8763
      %8828 = vst [vmem:[#allocation2 + $0x190] sm:$0xff] %v8764
      %8829 = vst [vmem:[#allocation2 + $0x198] sm:$0xff] %v8765
      %8830 = vst [vmem:[#allocation2 + $0x1a0] sm:$0xff] %v8766
      %8831 = vst [vmem:[#allocation2 + $0x1a8] sm:$0xff] %v8767
      %8832 = vst [vmem:[#allocation2 + $0x1b0] sm:$0xff] %v8768
      %8833 = vst [vmem:[#allocation2 + $0x1b8] sm:$0xff] %v8769
      %8834 = vst [vmem:[#allocation2 + $0x1c0] sm:$0xff] %v8770
      %8835 = vst [vmem:[#allocation2 + $0x1c8] sm:$0xff] %v8771
      %8836 = vst [vmem:[#allocation2 + $0x1d0] sm:$0xff] %v8772
      %8837 = vst [vmem:[#allocation2 + $0x1d8] sm:$0xff] %v8773
      %8838 = vst [vmem:[#allocation2 + $0x1e0] sm:$0xff] %v8774
      %8839 = vst [vmem:[#allocation2 + $0x1e8] sm:$0xff] %v8775
      %8840 = vst [vmem:[#allocation2 + $0x1f0] sm:$0xff] %v8776
      %8841 = vst [vmem:[#allocation2 + $0x1f8] sm:$0xff] %v8777
      %p8842 = scmp.eq.s32.totalorder %s21, 1
      // Predicated region
      $region65: #{transformer_forward.2} parent=59 // pred_check
        %p8843 = pneg %p8842
      $region66: #{transformer_forward.2} parent=59 // pred_check_branch
        %8845 = sbr.rel (%p8843) target = $region68
      $region67: #{transformer_forward.2} parent=59 // pred_region
        %v8846 = vld [vmem:[%s5] sm:$0x3]
        %v8847 = vmul.f32 %v8714, %v8714
        %v8848 = vmul.f32 %v8715, %v8715
        %v8849 = vmul.f32 %v8716, %v8716
        %v8850 = vmul.f32 %v8717, %v8717
        %v8851 = vmul.f32 %v8718, %v8718
        %v8852 = vmul.f32 %v8719, %v8719
        %v8853 = vmul.f32 %v8720, %v8720
        %v8854 = vmul.f32 %v8721, %v8721
        %v8855 = vmul.f32 %v8722, %v8722
        %v8856 = vmul.f32 %v8723, %v8723
        %v8857 = vmul.f32 %v8724, %v8724
        %v8858 = vmul.f32 %v8725, %v8725
        %v8859 = vmul.f32 %v8726, %v8726
        %v8860 = vmul.f32 %v8727, %v8727
        %v8861 = vmul.f32 %v8728, %v8728
        %v8862 = vmul.f32 %v8729, %v8729
        %v8863 = vmul.f32 %v8730, %v8730
        %v8864 = vmul.f32 %v8731, %v8731
        %v8865 = vmul.f32 %v8732, %v8732
        %v8866 = vmul.f32 %v8733, %v8733
        %v8867 = vmul.f32 %v8734, %v8734
        %v8868 = vmul.f32 %v8735, %v8735
        %v8869 = vmul.f32 %v8736, %v8736
        %v8870 = vmul.f32 %v8737, %v8737
        %v8871 = vmul.f32 %v8738, %v8738
        %v8872 = vmul.f32 %v8739, %v8739
        %v8873 = vmul.f32 %v8740, %v8740
        %v8874 = vmul.f32 %v8741, %v8741
        %v8875 = vmul.f32 %v8742, %v8742
        %v8876 = vmul.f32 %v8743, %v8743
        %v8877 = vmul.f32 %v8744, %v8744
        %v8878 = vmul.f32 %v8745, %v8745
        %v8879 = vmul.f32 %v8746, %v8746
        %v8880 = vmul.f32 %v8747, %v8747
        %v8881 = vmul.f32 %v8748, %v8748
        %v8882 = vmul.f32 %v8749, %v8749
        %v8883 = vmul.f32 %v8750, %v8750
        %v8884 = vmul.f32 %v8751, %v8751
        %v8885 = vmul.f32 %v8752, %v8752
        %v8886 = vmul.f32 %v8753, %v8753
        %v8887 = vmul.f32 %v8754, %v8754
        %v8888 = vmul.f32 %v8755, %v8755
        %v8889 = vmul.f32 %v8756, %v8756
        %v8890 = vmul.f32 %v8757, %v8757
        %v8891 = vmul.f32 %v8758, %v8758
        %v8892 = vmul.f32 %v8759, %v8759
        %v8893 = vmul.f32 %v8760, %v8760
        %v8894 = vmul.f32 %v8761, %v8761
        %v8895 = vmul.f32 %v8762, %v8762
        %v8896 = vmul.f32 %v8763, %v8763
        %v8897 = vmul.f32 %v8764, %v8764
        %v8898 = vmul.f32 %v8765, %v8765
        %v8899 = vmul.f32 %v8766, %v8766
        %v8900 = vmul.f32 %v8767, %v8767
        %v8901 = vmul.f32 %v8768, %v8768
        %v8902 = vmul.f32 %v8769, %v8769
        %v8903 = vmul.f32 %v8770, %v8770
        %v8904 = vmul.f32 %v8771, %v8771
        %v8905 = vmul.f32 %v8772, %v8772
        %v8906 = vmul.f32 %v8773, %v8773
        %v8907 = vmul.f32 %v8774, %v8774
        %v8908 = vmul.f32 %v8775, %v8775
        %v8909 = vmul.f32 %v8776, %v8776
        %v8910 = vmul.f32 %v8777, %v8777
        %v8911 = vadd.f32 %v8847, %v8848
        %8912 = vadd.xlane.f32.xlu0 %v8911
        %v8913 = vpop.xlane.xlu0 %8912
        %v8914 = vadd.f32 %v8849, %v8850
        %8915 = vadd.xlane.f32.xlu0 %v8914
        %v8916 = vpop.xlane.xlu0 %8915
        %v8917 = vadd.f32 %v8851, %v8852
        %8918 = vadd.xlane.f32.xlu0 %v8917
        %v8919 = vpop.xlane.xlu0 %8918
        %v8920 = vadd.f32 %v8853, %v8854
        %8921 = vadd.xlane.f32.xlu0 %v8920
        %v8922 = vpop.xlane.xlu0 %8921
        %v8923 = vadd.f32 %v8855, %v8856
        %8924 = vadd.xlane.f32.xlu0 %v8923
        %v8925 = vpop.xlane.xlu0 %8924
        %v8926 = vadd.f32 %v8857, %v8858
        %8927 = vadd.xlane.f32.xlu0 %v8926
        %v8928 = vpop.xlane.xlu0 %8927
        %v8929 = vadd.f32 %v8859, %v8860
        %8930 = vadd.xlane.f32.xlu0 %v8929
        %v8931 = vpop.xlane.xlu0 %8930
        %v8932 = vadd.f32 %v8861, %v8862
        %8933 = vadd.xlane.f32.xlu0 %v8932
        %v8934 = vpop.xlane.xlu0 %8933
        %v8935 = vadd.f32 %v8863, %v8864
        %8936 = vadd.xlane.f32.xlu0 %v8935
        %v8937 = vpop.xlane.xlu0 %8936
        %v8938 = vadd.f32 %v8865, %v8866
        %8939 = vadd.xlane.f32.xlu0 %v8938
        %v8940 = vpop.xlane.xlu0 %8939
        %v8941 = vadd.f32 %v8867, %v8868
        %8942 = vadd.xlane.f32.xlu0 %v8941
        %v8943 = vpop.xlane.xlu0 %8942
        %v8944 = vadd.f32 %v8869, %v8870
        %8945 = vadd.xlane.f32.xlu0 %v8944
        %v8946 = vpop.xlane.xlu0 %8945
        %v8947 = vadd.f32 %v8871, %v8872
        %8948 = vadd.xlane.f32.xlu0 %v8947
        %v8949 = vpop.xlane.xlu0 %8948
        %v8950 = vadd.f32 %v8873, %v8874
        %8951 = vadd.xlane.f32.xlu0 %v8950
        %v8952 = vpop.xlane.xlu0 %8951
        %v8953 = vadd.f32 %v8875, %v8876
        %8954 = vadd.xlane.f32.xlu0 %v8953
        %v8955 = vpop.xlane.xlu0 %8954
        %v8956 = vadd.f32 %v8877, %v8878
        %8957 = vadd.xlane.f32.xlu0 %v8956
        %v8958 = vpop.xlane.xlu0 %8957
        %v8959 = vadd.f32 %v8879, %v8880
        %8960 = vadd.xlane.f32.xlu0 %v8959
        %v8961 = vpop.xlane.xlu0 %8960
        %v8962 = vadd.f32 %v8881, %v8882
        %8963 = vadd.xlane.f32.xlu0 %v8962
        %v8964 = vpop.xlane.xlu0 %8963
        %v8965 = vadd.f32 %v8883, %v8884
        %8966 = vadd.xlane.f32.xlu0 %v8965
        %v8967 = vpop.xlane.xlu0 %8966
        %v8968 = vadd.f32 %v8885, %v8886
        %8969 = vadd.xlane.f32.xlu0 %v8968
        %v8970 = vpop.xlane.xlu0 %8969
        %v8971 = vadd.f32 %v8887, %v8888
        %8972 = vadd.xlane.f32.xlu0 %v8971
        %v8973 = vpop.xlane.xlu0 %8972
        %v8974 = vadd.f32 %v8889, %v8890
        %8975 = vadd.xlane.f32.xlu0 %v8974
        %v8976 = vpop.xlane.xlu0 %8975
        %v8977 = vadd.f32 %v8891, %v8892
        %8978 = vadd.xlane.f32.xlu0 %v8977
        %v8979 = vpop.xlane.xlu0 %8978
        %v8980 = vadd.f32 %v8893, %v8894
        %8981 = vadd.xlane.f32.xlu0 %v8980
        %v8982 = vpop.xlane.xlu0 %8981
        %v8983 = vadd.f32 %v8895, %v8896
        %8984 = vadd.xlane.f32.xlu0 %v8983
        %v8985 = vpop.xlane.xlu0 %8984
        %v8986 = vadd.f32 %v8897, %v8898
        %8987 = vadd.xlane.f32.xlu0 %v8986
        %v8988 = vpop.xlane.xlu0 %8987
        %v8989 = vadd.f32 %v8899, %v8900
        %8990 = vadd.xlane.f32.xlu0 %v8989
        %v8991 = vpop.xlane.xlu0 %8990
        %v8992 = vadd.f32 %v8901, %v8902
        %8993 = vadd.xlane.f32.xlu0 %v8992
        %v8994 = vpop.xlane.xlu0 %8993
        %v8995 = vadd.f32 %v8903, %v8904
        %8996 = vadd.xlane.f32.xlu0 %v8995
        %v8997 = vpop.xlane.xlu0 %8996
        %v8998 = vadd.f32 %v8905, %v8906
        %8999 = vadd.xlane.f32.xlu0 %v8998
        %v9000 = vpop.xlane.xlu0 %8999
        %v9001 = vadd.f32 %v8907, %v8908
        %9002 = vadd.xlane.f32.xlu0 %v9001
        %v9003 = vpop.xlane.xlu0 %9002
        %v9004 = vadd.f32 %v8909, %v8910
        %9005 = vadd.xlane.f32.xlu0 %v9004
        %v9006 = vpop.xlane.xlu0 %9005
        %v9007 = vmul.f32 %v8913, %v861
        %v9008 = vmul.f32 %v8916, %v861
        %v9009 = vmul.f32 %v8919, %v861
        %v9010 = vmul.f32 %v8922, %v861
        %v9011 = vmul.f32 %v8925, %v861
        %v9012 = vmul.f32 %v8928, %v861
        %v9013 = vmul.f32 %v8931, %v861
        %v9014 = vmul.f32 %v8934, %v861
        %v9015 = vmul.f32 %v8937, %v861
        %v9016 = vmul.f32 %v8940, %v861
        %v9017 = vmul.f32 %v8943, %v861
        %v9018 = vmul.f32 %v8946, %v861
        %v9019 = vmul.f32 %v8949, %v861
        %v9020 = vmul.f32 %v8952, %v861
        %v9021 = vmul.f32 %v8955, %v861
        %v9022 = vmul.f32 %v8958, %v861
        %v9023 = vmul.f32 %v8961, %v861
        %v9024 = vmul.f32 %v8964, %v861
        %v9025 = vmul.f32 %v8967, %v861
        %v9026 = vmul.f32 %v8970, %v861
        %v9027 = vmul.f32 %v8973, %v861
        %v9028 = vmul.f32 %v8976, %v861
        %v9029 = vmul.f32 %v8979, %v861
        %v9030 = vmul.f32 %v8982, %v861
        %v9031 = vmul.f32 %v8985, %v861
        %v9032 = vmul.f32 %v8988, %v861
        %v9033 = vmul.f32 %v8991, %v861
        %v9034 = vmul.f32 %v8994, %v861
        %v9035 = vmul.f32 %v8997, %v861
        %v9036 = vmul.f32 %v9000, %v861
        %v9037 = vmul.f32 %v9003, %v861
        %v9038 = vmul.f32 %v9006, %v861
        %v9039 = vadd.f32 %v9007, 1e-06
        %v9040 = vadd.f32 %v9008, 1e-06
        %v9041 = vadd.f32 %v9009, 1e-06
        %v9042 = vadd.f32 %v9010, 1e-06
        %v9043 = vadd.f32 %v9011, 1e-06
        %v9044 = vadd.f32 %v9012, 1e-06
        %v9045 = vadd.f32 %v9013, 1e-06
        %v9046 = vadd.f32 %v9014, 1e-06
        %v9047 = vadd.f32 %v9015, 1e-06
        %v9048 = vadd.f32 %v9016, 1e-06
        %v9049 = vadd.f32 %v9017, 1e-06
        %v9050 = vadd.f32 %v9018, 1e-06
        %v9051 = vadd.f32 %v9019, 1e-06
        %v9052 = vadd.f32 %v9020, 1e-06
        %v9053 = vadd.f32 %v9021, 1e-06
        %v9054 = vadd.f32 %v9022, 1e-06
        %v9055 = vadd.f32 %v9023, 1e-06
        %v9056 = vadd.f32 %v9024, 1e-06
        %v9057 = vadd.f32 %v9025, 1e-06
        %v9058 = vadd.f32 %v9026, 1e-06
        %v9059 = vadd.f32 %v9027, 1e-06
        %v9060 = vadd.f32 %v9028, 1e-06
        %v9061 = vadd.f32 %v9029, 1e-06
        %v9062 = vadd.f32 %v9030, 1e-06
        %v9063 = vadd.f32 %v9031, 1e-06
        %v9064 = vadd.f32 %v9032, 1e-06
        %v9065 = vadd.f32 %v9033, 1e-06
        %v9066 = vadd.f32 %v9034, 1e-06
        %v9067 = vadd.f32 %v9035, 1e-06
        %v9068 = vadd.f32 %v9036, 1e-06
        %v9069 = vadd.f32 %v9037, 1e-06
        %v9070 = vadd.f32 %v9038, 1e-06
        %v9071 = vrsqrt.pop %v9039
        %v9072 = vrsqrt.pop %v9040
        %v9073 = vrsqrt.pop %v9041
        %v9074 = vrsqrt.pop %v9042
        %v9075 = vrsqrt.pop %v9043
        %v9076 = vrsqrt.pop %v9044
        %v9077 = vrsqrt.pop %v9045
        %v9078 = vrsqrt.pop %v9046
        %v9079 = vrsqrt.pop %v9047
        %v9080 = vrsqrt.pop %v9048
        %v9081 = vrsqrt.pop %v9049
        %v9082 = vrsqrt.pop %v9050
        %v9083 = vrsqrt.pop %v9051
        %v9084 = vrsqrt.pop %v9052
        %v9085 = vrsqrt.pop %v9053
        %v9086 = vrsqrt.pop %v9054
        %v9087 = vrsqrt.pop %v9055
        %v9088 = vrsqrt.pop %v9056
        %v9089 = vrsqrt.pop %v9057
        %v9090 = vrsqrt.pop %v9058
        %v9091 = vrsqrt.pop %v9059
        %v9092 = vrsqrt.pop %v9060
        %v9093 = vrsqrt.pop %v9061
        %v9094 = vrsqrt.pop %v9062
        %v9095 = vrsqrt.pop %v9063
        %v9096 = vrsqrt.pop %v9064
        %v9097 = vrsqrt.pop %v9065
        %v9098 = vrsqrt.pop %v9066
        %v9099 = vrsqrt.pop %v9067
        %v9100 = vrsqrt.pop %v9068
        %v9101 = vrsqrt.pop %v9069
        %v9102 = vrsqrt.pop %v9070
        %v9103 = vmul.f32 %v8714, %v9071
        %v9104 = vmul.f32 %v8715, %v9071
        %v9105 = vmul.f32 %v8716, %v9072
        %v9106 = vmul.f32 %v8717, %v9072
        %v9107 = vmul.f32 %v8718, %v9073
        %v9108 = vmul.f32 %v8719, %v9073
        %v9109 = vmul.f32 %v8720, %v9074
        %v9110 = vmul.f32 %v8721, %v9074
        %v9111 = vmul.f32 %v8722, %v9075
        %v9112 = vmul.f32 %v8723, %v9075
        %v9113 = vmul.f32 %v8724, %v9076
        %v9114 = vmul.f32 %v8725, %v9076
        %v9115 = vmul.f32 %v8726, %v9077
        %v9116 = vmul.f32 %v8727, %v9077
        %v9117 = vmul.f32 %v8728, %v9078
        %v9118 = vmul.f32 %v8729, %v9078
        %v9119 = vmul.f32 %v8730, %v9079
        %v9120 = vmul.f32 %v8731, %v9079
        %v9121 = vmul.f32 %v8732, %v9080
        %v9122 = vmul.f32 %v8733, %v9080
        %v9123 = vmul.f32 %v8734, %v9081
        %v9124 = vmul.f32 %v8735, %v9081
        %v9125 = vmul.f32 %v8736, %v9082
        %v9126 = vmul.f32 %v8737, %v9082
        %v9127 = vmul.f32 %v8738, %v9083
        %v9128 = vmul.f32 %v8739, %v9083
        %v9129 = vmul.f32 %v8740, %v9084
        %v9130 = vmul.f32 %v8741, %v9084
        %v9131 = vmul.f32 %v8742, %v9085
        %v9132 = vmul.f32 %v8743, %v9085
        %v9133 = vmul.f32 %v8744, %v9086
        %v9134 = vmul.f32 %v8745, %v9086
        %v9135 = vmul.f32 %v8746, %v9087
        %v9136 = vmul.f32 %v8747, %v9087
        %v9137 = vmul.f32 %v8748, %v9088
        %v9138 = vmul.f32 %v8749, %v9088
        %v9139 = vmul.f32 %v8750, %v9089
        %v9140 = vmul.f32 %v8751, %v9089
        %v9141 = vmul.f32 %v8752, %v9090
        %v9142 = vmul.f32 %v8753, %v9090
        %v9143 = vmul.f32 %v8754, %v9091
        %v9144 = vmul.f32 %v8755, %v9091
        %v9145 = vmul.f32 %v8756, %v9092
        %v9146 = vmul.f32 %v8757, %v9092
        %v9147 = vmul.f32 %v8758, %v9093
        %v9148 = vmul.f32 %v8759, %v9093
        %v9149 = vmul.f32 %v8760, %v9094
        %v9150 = vmul.f32 %v8761, %v9094
        %v9151 = vmul.f32 %v8762, %v9095
        %v9152 = vmul.f32 %v8763, %v9095
        %v9153 = vmul.f32 %v8764, %v9096
        %v9154 = vmul.f32 %v8765, %v9096
        %v9155 = vmul.f32 %v8766, %v9097
        %v9156 = vmul.f32 %v8767, %v9097
        %v9157 = vmul.f32 %v8768, %v9098
        %v9158 = vmul.f32 %v8769, %v9098
        %v9159 = vmul.f32 %v8770, %v9099
        %v9160 = vmul.f32 %v8771, %v9099
        %v9161 = vmul.f32 %v8772, %v9100
        %v9162 = vmul.f32 %v8773, %v9100
        %v9163 = vmul.f32 %v8774, %v9101
        %v9164 = vmul.f32 %v8775, %v9101
        %v9165 = vmul.f32 %v8776, %v9102
        %v9166 = vmul.f32 %v8777, %v9102
        %v9168 = vlaneseq
        %v9169 = vshrl.u32 %v9168, 7
        %v9170 = vsub.s32 0, %v9169
        %v9171 = vrot.slane %v8846, %v9170
        %v9172 = vlaneseq
        %v9173 = vshrl.u32 %v9172, 7
        %v9174 = vsub.s32 1, %v9173
        %v9175 = vrot.slane %v8846, %v9174
        %v9178 = vmul.f32 %v9103, %v9171
        %v9179 = vmul.f32 %v9104, %v9175
        %v9180 = vmul.f32 %v9105, %v9171
        %v9181 = vmul.f32 %v9106, %v9175
        %v9182 = vmul.f32 %v9107, %v9171
        %v9183 = vmul.f32 %v9108, %v9175
        %v9184 = vmul.f32 %v9109, %v9171
        %v9185 = vmul.f32 %v9110, %v9175
        %v9186 = vmul.f32 %v9111, %v9171
        %v9187 = vmul.f32 %v9112, %v9175
        %v9188 = vmul.f32 %v9113, %v9171
        %v9189 = vmul.f32 %v9114, %v9175
        %v9190 = vmul.f32 %v9115, %v9171
        %v9191 = vmul.f32 %v9116, %v9175
        %v9192 = vmul.f32 %v9117, %v9171
        %v9193 = vmul.f32 %v9118, %v9175
        %v9194 = vmul.f32 %v9119, %v9171
        %v9195 = vmul.f32 %v9120, %v9175
        %v9196 = vmul.f32 %v9121, %v9171
        %v9197 = vmul.f32 %v9122, %v9175
        %v9198 = vmul.f32 %v9123, %v9171
        %v9199 = vmul.f32 %v9124, %v9175
        %v9200 = vmul.f32 %v9125, %v9171
        %v9201 = vmul.f32 %v9126, %v9175
        %v9202 = vmul.f32 %v9127, %v9171
        %v9203 = vmul.f32 %v9128, %v9175
        %v9204 = vmul.f32 %v9129, %v9171
        %v9205 = vmul.f32 %v9130, %v9175
        %v9206 = vmul.f32 %v9131, %v9171
        %v9207 = vmul.f32 %v9132, %v9175
        %v9208 = vmul.f32 %v9133, %v9171
        %v9209 = vmul.f32 %v9134, %v9175
        %v9210 = vmul.f32 %v9135, %v9171
        %v9211 = vmul.f32 %v9136, %v9175
        %v9212 = vmul.f32 %v9137, %v9171
        %v9213 = vmul.f32 %v9138, %v9175
        %v9214 = vmul.f32 %v9139, %v9171
        %v9215 = vmul.f32 %v9140, %v9175
        %v9216 = vmul.f32 %v9141, %v9171
        %v9217 = vmul.f32 %v9142, %v9175
        %v9218 = vmul.f32 %v9143, %v9171
        %v9219 = vmul.f32 %v9144, %v9175
        %v9220 = vmul.f32 %v9145, %v9171
        %v9221 = vmul.f32 %v9146, %v9175
        %v9222 = vmul.f32 %v9147, %v9171
        %v9223 = vmul.f32 %v9148, %v9175
        %v9224 = vmul.f32 %v9149, %v9171
        %v9225 = vmul.f32 %v9150, %v9175
        %v9226 = vmul.f32 %v9151, %v9171
        %v9227 = vmul.f32 %v9152, %v9175
        %v9228 = vmul.f32 %v9153, %v9171
        %v9229 = vmul.f32 %v9154, %v9175
        %v9230 = vmul.f32 %v9155, %v9171
        %v9231 = vmul.f32 %v9156, %v9175
        %v9232 = vmul.f32 %v9157, %v9171
        %v9233 = vmul.f32 %v9158, %v9175
        %v9234 = vmul.f32 %v9159, %v9171
        %v9235 = vmul.f32 %v9160, %v9175
        %v9236 = vmul.f32 %v9161, %v9171
        %v9237 = vmul.f32 %v9162, %v9175
        %v9238 = vmul.f32 %v9163, %v9171
        %v9239 = vmul.f32 %v9164, %v9175
        %v9240 = vmul.f32 %v9165, %v9171
        %v9241 = vmul.f32 %v9166, %v9175
        %v9242 = vpack.c.bf16 %v9180, %v9178
        %v9243 = vpack.c.bf16 %v9181, %v9179
        %v9244 = vpack.c.bf16 %v9184, %v9182
        %v9245 = vpack.c.bf16 %v9185, %v9183
        %v9246 = vpack.c.bf16 %v9188, %v9186
        %v9247 = vpack.c.bf16 %v9189, %v9187
        %v9248 = vpack.c.bf16 %v9192, %v9190
        %v9249 = vpack.c.bf16 %v9193, %v9191
        %v9250 = vpack.c.bf16 %v9196, %v9194
        %v9251 = vpack.c.bf16 %v9197, %v9195
        %v9252 = vpack.c.bf16 %v9200, %v9198
        %v9253 = vpack.c.bf16 %v9201, %v9199
        %v9254 = vpack.c.bf16 %v9204, %v9202
        %v9255 = vpack.c.bf16 %v9205, %v9203
        %v9256 = vpack.c.bf16 %v9208, %v9206
        %v9257 = vpack.c.bf16 %v9209, %v9207
        %v9258 = vpack.c.bf16 %v9212, %v9210
        %v9259 = vpack.c.bf16 %v9213, %v9211
        %v9260 = vpack.c.bf16 %v9216, %v9214
        %v9261 = vpack.c.bf16 %v9217, %v9215
        %v9262 = vpack.c.bf16 %v9220, %v9218
        %v9263 = vpack.c.bf16 %v9221, %v9219
        %v9264 = vpack.c.bf16 %v9224, %v9222
        %v9265 = vpack.c.bf16 %v9225, %v9223
        %v9266 = vpack.c.bf16 %v9228, %v9226
        %v9267 = vpack.c.bf16 %v9229, %v9227
        %v9268 = vpack.c.bf16 %v9232, %v9230
        %v9269 = vpack.c.bf16 %v9233, %v9231
        %v9270 = vpack.c.bf16 %v9236, %v9234
        %v9271 = vpack.c.bf16 %v9237, %v9235
        %v9272 = vpack.c.bf16 %v9240, %v9238
        %v9273 = vpack.c.bf16 %v9241, %v9239
        %v9306 = vunpack.c.l.b16 %v9242
        %v9307 = vunpack.c.l.b16 %v9243
        %v9308 = vunpack.c.h.b16 %v9242
        %v9309 = vunpack.c.h.b16 %v9243
        %v9310 = vunpack.c.l.b16 %v9244
        %v9311 = vunpack.c.l.b16 %v9245
        %v9312 = vunpack.c.h.b16 %v9244
        %v9313 = vunpack.c.h.b16 %v9245
        %v9314 = vunpack.c.l.b16 %v9246
        %v9315 = vunpack.c.l.b16 %v9247
        %v9316 = vunpack.c.h.b16 %v9246
        %v9317 = vunpack.c.h.b16 %v9247
        %v9318 = vunpack.c.l.b16 %v9248
        %v9319 = vunpack.c.l.b16 %v9249
        %v9320 = vunpack.c.h.b16 %v9248
        %v9321 = vunpack.c.h.b16 %v9249
        %v9322 = vunpack.c.l.b16 %v9250
        %v9323 = vunpack.c.l.b16 %v9251
        %v9324 = vunpack.c.h.b16 %v9250
        %v9325 = vunpack.c.h.b16 %v9251
        %v9326 = vunpack.c.l.b16 %v9252
        %v9327 = vunpack.c.l.b16 %v9253
        %v9328 = vunpack.c.h.b16 %v9252
        %v9329 = vunpack.c.h.b16 %v9253
        %v9330 = vunpack.c.l.b16 %v9254
        %v9331 = vunpack.c.l.b16 %v9255
        %v9332 = vunpack.c.h.b16 %v9254
        %v9333 = vunpack.c.h.b16 %v9255
        %v9334 = vunpack.c.l.b16 %v9256
        %v9335 = vunpack.c.l.b16 %v9257
        %v9336 = vunpack.c.h.b16 %v9256
        %v9337 = vunpack.c.h.b16 %v9257
        %v9338 = vunpack.c.l.b16 %v9258
        %v9339 = vunpack.c.l.b16 %v9259
        %v9340 = vunpack.c.h.b16 %v9258
        %v9341 = vunpack.c.h.b16 %v9259
        %v9342 = vunpack.c.l.b16 %v9260
        %v9343 = vunpack.c.l.b16 %v9261
        %v9344 = vunpack.c.h.b16 %v9260
        %v9345 = vunpack.c.h.b16 %v9261
        %v9346 = vunpack.c.l.b16 %v9262
        %v9347 = vunpack.c.l.b16 %v9263
        %v9348 = vunpack.c.h.b16 %v9262
        %v9349 = vunpack.c.h.b16 %v9263
        %v9350 = vunpack.c.l.b16 %v9264
        %v9351 = vunpack.c.l.b16 %v9265
        %v9352 = vunpack.c.h.b16 %v9264
        %v9353 = vunpack.c.h.b16 %v9265
        %v9354 = vunpack.c.l.b16 %v9266
        %v9355 = vunpack.c.l.b16 %v9267
        %v9356 = vunpack.c.h.b16 %v9266
        %v9357 = vunpack.c.h.b16 %v9267
        %v9358 = vunpack.c.l.b16 %v9268
        %v9359 = vunpack.c.l.b16 %v9269
        %v9360 = vunpack.c.h.b16 %v9268
        %v9361 = vunpack.c.h.b16 %v9269
        %v9362 = vunpack.c.l.b16 %v9270
        %v9363 = vunpack.c.l.b16 %v9271
        %v9364 = vunpack.c.h.b16 %v9270
        %v9365 = vunpack.c.h.b16 %v9271
        %v9366 = vunpack.c.l.b16 %v9272
        %v9367 = vunpack.c.l.b16 %v9273
        %v9368 = vunpack.c.h.b16 %v9272
        %v9369 = vunpack.c.h.b16 %v9273
        %v9370 = vpack.c.b16 %v9307, %v9306
        %v9371 = vpack.c.b16 %v9309, %v9308
        %v9372 = vpack.c.b16 %v9311, %v9310
        %v9373 = vpack.c.b16 %v9313, %v9312
        %v9374 = vpack.c.b16 %v9315, %v9314
        %v9375 = vpack.c.b16 %v9317, %v9316
        %v9376 = vpack.c.b16 %v9319, %v9318
        %v9377 = vpack.c.b16 %v9321, %v9320
        %v9378 = vpack.c.b16 %v9323, %v9322
        %v9379 = vpack.c.b16 %v9325, %v9324
        %v9380 = vpack.c.b16 %v9327, %v9326
        %v9381 = vpack.c.b16 %v9329, %v9328
        %v9382 = vpack.c.b16 %v9331, %v9330
        %v9383 = vpack.c.b16 %v9333, %v9332
        %v9384 = vpack.c.b16 %v9335, %v9334
        %v9385 = vpack.c.b16 %v9337, %v9336
        %v9386 = vpack.c.b16 %v9339, %v9338
        %v9387 = vpack.c.b16 %v9341, %v9340
        %v9388 = vpack.c.b16 %v9343, %v9342
        %v9389 = vpack.c.b16 %v9345, %v9344
        %v9390 = vpack.c.b16 %v9347, %v9346
        %v9391 = vpack.c.b16 %v9349, %v9348
        %v9392 = vpack.c.b16 %v9351, %v9350
        %v9393 = vpack.c.b16 %v9353, %v9352
        %v9394 = vpack.c.b16 %v9355, %v9354
        %v9395 = vpack.c.b16 %v9357, %v9356
        %v9396 = vpack.c.b16 %v9359, %v9358
        %v9397 = vpack.c.b16 %v9361, %v9360
        %v9398 = vpack.c.b16 %v9363, %v9362
        %v9399 = vpack.c.b16 %v9365, %v9364
        %v9400 = vpack.c.b16 %v9367, %v9366
        %v9401 = vpack.c.b16 %v9369, %v9368
        %9434 = vst [vmem:[%s10] sm:$0xff] %v9370
        %9435 = vst [vmem:[%s10 + $0x8] sm:$0xff] %v9371
        %9436 = vst [vmem:[%s10 + $0x10] sm:$0xff] %v9372
        %9437 = vst [vmem:[%s10 + $0x18] sm:$0xff] %v9373
        %9438 = vst [vmem:[%s10 + $0x20] sm:$0xff] %v9374
        %9439 = vst [vmem:[%s10 + $0x28] sm:$0xff] %v9375
        %9440 = vst [vmem:[%s10 + $0x30] sm:$0xff] %v9376
        %9441 = vst [vmem:[%s10 + $0x38] sm:$0xff] %v9377
        %9442 = vst [vmem:[%s10 + $0x40] sm:$0xff] %v9378
        %9443 = vst [vmem:[%s10 + $0x48] sm:$0xff] %v9379
        %9444 = vst [vmem:[%s10 + $0x50] sm:$0xff] %v9380
        %9445 = vst [vmem:[%s10 + $0x58] sm:$0xff] %v9381
        %9446 = vst [vmem:[%s10 + $0x60] sm:$0xff] %v9382
        %9447 = vst [vmem:[%s10 + $0x68] sm:$0xff] %v9383
        %9448 = vst [vmem:[%s10 + $0x70] sm:$0xff] %v9384
        %9449 = vst [vmem:[%s10 + $0x78] sm:$0xff] %v9385
        %9450 = vst [vmem:[%s10 + $0x80] sm:$0xff] %v9386
        %9451 = vst [vmem:[%s10 + $0x88] sm:$0xff] %v9387
        %9452 = vst [vmem:[%s10 + $0x90] sm:$0xff] %v9388
        %9453 = vst [vmem:[%s10 + $0x98] sm:$0xff] %v9389
        %9454 = vst [vmem:[%s10 + $0xa0] sm:$0xff] %v9390
        %9455 = vst [vmem:[%s10 + $0xa8] sm:$0xff] %v9391
        %9456 = vst [vmem:[%s10 + $0xb0] sm:$0xff] %v9392
        %9457 = vst [vmem:[%s10 + $0xb8] sm:$0xff] %v9393
        %9458 = vst [vmem:[%s10 + $0xc0] sm:$0xff] %v9394
        %9459 = vst [vmem:[%s10 + $0xc8] sm:$0xff] %v9395
        %9460 = vst [vmem:[%s10 + $0xd0] sm:$0xff] %v9396
        %9461 = vst [vmem:[%s10 + $0xd8] sm:$0xff] %v9397
        %9462 = vst [vmem:[%s10 + $0xe0] sm:$0xff] %v9398
        %9463 = vst [vmem:[%s10 + $0xe8] sm:$0xff] %v9399
        %9464 = vst [vmem:[%s10 + $0xf0] sm:$0xff] %v9400
        %9465 = vst [vmem:[%s10 + $0xf8] sm:$0xff] %v9401
      $region68: #{transformer_forward.2} parent=59 // pred_fallthru
        _
      // Predicated region
      $region69: #{transformer_forward.2} parent=59 // pred_check
        %p9466 = pneg %p274
      $region70: #{transformer_forward.2} parent=59 // pred_check_branch
        %9468 = sbr.rel (%p9466) target = $region72
      $region71: #{transformer_forward.2} parent=59 // pred_region
        _
      $region72: #{transformer_forward.2} parent=59 // pred_fallthru
        _
      // Predicated region
      $region73: #{transformer_forward.2} parent=59 // pred_check
        %p9469 = pneg %p274
      $region74: #{transformer_forward.2} parent=59 // pred_check_branch
        %9471 = sbr.rel (%p9469) target = $region76
      $region75: #{transformer_forward.2} parent=59 // pred_region
        _
      $region76: #{transformer_forward.2} parent=59 // pred_fallthru
        _
    $region60: #{transformer_forward.2} parent=5 // pred_fallthru
      _
    %p9472 = scmp.le.s32.totalorder 2, %s16
    // Predicated region
    $region77: #{transformer_forward.2} parent=5 // pred_check
      %p9473 = pneg %p9472
    $region78: #{transformer_forward.2} parent=5 // pred_check_branch
      %9475 = sbr.rel (%p9473) target = $region80
    $region79: #{transformer_forward.2} parent=5 // pred_region
      %s9476 = ssub.s32 %s16, 2
    $region80: #{transformer_forward.2} parent=5 // pred_fallthru
      _
  $region6: #{transformer_forward.2} parent=0 // loop_footer
    %s20 = sadd.s32 1, %s16
  $region7: #{transformer_forward.2} parent=0 // loop_footer_branch
    %15 = sbr.rel target = $region3
  $region8: #{transformer_forward.2} parent=0 // loop_exit
    _

</llo_original>
